<compile_context>
chip_gen: v5e
topology: v5e:2x2
jax: 0.10.0
libtpu: 0.0.40
codegen_flags: <defaults>
</compile_context>

<pallas_src>
import numpy as np
import jax
import jax.numpy as jnp
from jax.experimental import pallas as pl
from jax.experimental.pallas import tpu as pltpu

LRELU_SLOPE = 0.2
LN_EPS = 1e-5

# Architecture implied by LayerNorm([32,7,7]) / [64,4,4] / ds_size=2:
#   img_size = 28, channels = 3
#   conv1 3->16  : 28 -> 14          conv2 16->32 : 14 -> 7   + LN(32*7*7)
#   conv3 32->64 :  7 -> 4 + LN(64*4*4)   conv4 64->128 : 4 -> 2
#   Linear(512 -> 1), validity = -|.|

# Row strides (lanes per padded spatial row), all multiples of 128 so every
# in-kernel slab load (3*RS) / store (RS) is lane-aligned (no masked stores).
_RS_IMG, _RS_A2, _RS_A3, _RS_A4, _RS_FEAT = 128, 256, 384, 384, 256
_IMG_LANES = 30 * _RS_IMG     # padded 30x30x3 input  (90 valid + 38 tail / row)
_A2_LANES = 16 * _RS_A2       # padded 16x16x16
_A3_LANES = 9 * _RS_A3        # padded 9x9x32  (288 valid + 96 tail / row)
_A4_LANES = 6 * _RS_A4        # padded 6x6x64
_FEAT_LANES = 2 * _RS_FEAT    # 2x2x128 in (h, w, c) order

_LAYERS = (
    # hin, cin, cout, rs_in,   rs_out,   pad_out
    (28, 3, 16, _RS_IMG, _RS_A2, True),
    (14, 16, 32, _RS_A2, _RS_A3, True),
    (7, 32, 64, _RS_A3, _RS_A4, True),
    (4, 64, 128, _RS_A4, _RS_FEAT, False),
)


# ------------------------------ fused kernel ---------------------------------

def _disc_fused_kernel(img_ref, w1_ref, w2_ref, w3_ref, w4_ref,
                       rb1_ref, rb2_ref, rb3_ref, rb4_ref,
                       g1_ref, be1_ref, g2_ref, be2_ref, wl_ref, bl_ref,
                       out_ref, act2_ref, act3_ref, act4_ref, feat_ref):
    # Scratch is uninitialised and persists across grid steps.  Every valid
    # output row is fully rewritten each step by a full-row-stride store whose
    # halo / alignment-tail lanes are forced to zero by zero weight columns,
    # so only the top/bottom halo rows that are actually *read* downstream
    # (by the next conv or a LayerNorm) need explicit zeroing:
    #   act2 row 0            (read by conv2; act2's bottom row 15 is never read)
    #   act3 rows 0, 8        (read by conv3 and summed by LayerNorm1)
    #   act4 rows 0, 5        (read by conv4 / summed by LayerNorm2)
    def zero_row(ref, rs, row):
        ref[:, pl.ds(row * rs, rs)] = jnp.zeros((ref.shape[0], rs), jnp.float32)

    zero_row(act2_ref, _RS_A2, 0)
    zero_row(act3_ref, _RS_A3, 0)
    zero_row(act3_ref, _RS_A3, 8)
    zero_row(act4_ref, _RS_A4, 0)
    zero_row(act4_ref, _RS_A4, 5)

    def conv_layer(src_ref, w_ref, rb_ref, dst_ref, ho, rs_in, rs_out, pad_dst):
        # 3x3 stride-2 conv + bias + LeakyReLU(0.2), one padded output row per
        # matmul.  The expanded weight already encodes the im2col structure and
        # has zero halo/tail columns, so a full-row store keeps the destination
        # padding at zero.  MXU operands in bf16, accumulation in f32.
        w = w_ref[...]            # bf16 [3*rs_in, rs_out]
        rb = rb_ref[...]          # f32  [1, rs_out] (zeros on halo/tail lanes)
        row_off = 1 if pad_dst else 0
        for oh in range(ho):      # <= 14 static iterations
            rows = src_ref[:, pl.ds(2 * oh * rs_in, 3 * rs_in)]
            acc = jnp.dot(rows.astype(jnp.bfloat16), w,
                          preferred_element_type=jnp.float32)
            acc = acc + rb
            acc = jnp.where(acc > 0, acc, LRELU_SLOPE * acc)
            dst_ref[:, pl.ds((oh + row_off) * rs_out, rs_out)] = acc

    def layer_norm(ref, g_ref, b_ref, n_valid):
        # LayerNorm over the valid (non-halo) features, applied in place on the
        # padded layout: pads are zero so they drop out of the sums, and
        # gamma/beta are zero there so they stay zero afterwards.  f32 math.
        x = ref[...]
        mean = jnp.sum(x, axis=1, keepdims=True) * (1.0 / n_valid)
        var = jnp.sum(x * x, axis=1, keepdims=True) * (1.0 / n_valid) - mean * mean
        inv = jax.lax.rsqrt(jnp.maximum(var, 0.0) + LN_EPS)
        ref[...] = (x - mean) * inv * g_ref[...] + b_ref[...]

    conv_layer(img_ref, w1_ref, rb1_ref, act2_ref, 14, _RS_IMG, _RS_A2, True)
    conv_layer(act2_ref, w2_ref, rb2_ref, act3_ref, 7, _RS_A2, _RS_A3, True)
    layer_norm(act3_ref, g1_ref, be1_ref, 32 * 7 * 7)
    conv_layer(act3_ref, w3_ref, rb3_ref, act4_ref, 4, _RS_A3, _RS_A4, True)
    layer_norm(act4_ref, g2_ref, be2_ref, 64 * 4 * 4)
    conv_layer(act4_ref, w4_ref, rb4_ref, feat_ref, 2, _RS_A4, _RS_FEAT, False)

    # adv_layer (512 -> 1) as VPU multiply + lane reduction, then -|.|.
    feat = feat_ref[...]
    y = jnp.sum(feat * wl_ref[...], axis=1, keepdims=True) + bl_ref[...]
    out_ref[...] = -jnp.abs(y)


# --------------------------- host-side weight prep ---------------------------

def _round_up(x, m):
    return (x + m - 1) // m * m


def _make_row_weight(w_hwio, hin, rs_in, rs_out, pad_out):
    """Expand a 3x3/stride-2 conv weight into the per-output-row matmul matrix.

    row index    = kh * rs_in + wp * cin + ci     (wp = padded input column)
    column index = (cout if pad_out else 0) + j * cout + co   (j = output col)
    Unused rows / columns (destination halo + 128-lane alignment tail) stay 0.
    """
    w = np.asarray(w_hwio, np.float32)            # [3, 3, cin, cout]
    cin, cout = w.shape[2], w.shape[3]
    wo = (hin - 1) // 2 + 1
    off = cout if pad_out else 0
    mat = np.zeros((3, rs_in, rs_out), np.float32)
    for kh in range(3):
        for kw in range(3):
            for j in range(wo):
                wp = 2 * j + kw
                mat[kh, wp * cin:(wp + 1) * cin,
                    off + j * cout: off + (j + 1) * cout] = w[kh, kw]
    return mat.reshape(3 * rs_in, rs_out)


def _make_row_bias(b, hin, rs_out, pad_out):
    b = np.asarray(b, np.float32)
    cout = b.shape[0]
    wo = (hin - 1) // 2 + 1
    off = cout if pad_out else 0
    rb = np.zeros((1, rs_out), np.float32)
    for j in range(wo):
        rb[0, off + j * cout: off + (j + 1) * cout] = b
    return rb


def _make_ln_padded(p_chw, rs):
    """[C, H, W] LayerNorm param -> padded flat (h+1, w+1, c) layout, zeros on pads."""
    p = np.asarray(p_chw, np.float32)
    c, h, w = p.shape
    out = np.zeros((1, (h + 2) * rs), np.float32)
    for hh in range(h):
        for ww in range(w):
            base = (hh + 1) * rs + (ww + 1) * c
            out[0, base:base + c] = p[:, hh, ww]
    return out


def prepare_kernel_params(p):
    """Pre-expand parameters into the fused kernel's VMEM-resident constants."""
    ws = (p["w1"], p["w2"], p["w3"], p["w4"])
    bs = (p["b1"], p["b2"], p["b3"], p["b4"])
    row_w, row_b = [], []
    for (hin, _cin, _cout, rs_in, rs_out, pad_out), w, b in zip(_LAYERS, ws, bs):
        row_w.append(jnp.asarray(
            _make_row_weight(w, hin, rs_in, rs_out, pad_out), jnp.bfloat16))
        row_b.append(jnp.asarray(
            _make_row_bias(b, hin, rs_out, pad_out), jnp.float32))
    ln = (jnp.asarray(_make_ln_padded(p["ln1_g"], _RS_A3), jnp.float32),
          jnp.asarray(_make_ln_padded(p["ln1_b"], _RS_A3), jnp.float32),
          jnp.asarray(_make_ln_padded(p["ln2_g"], _RS_A4), jnp.float32),
          jnp.asarray(_make_ln_padded(p["ln2_b"], _RS_A4), jnp.float32))
    wl = jnp.asarray(p["wl"], jnp.float32).reshape(1, _FEAT_LANES)
    bl = jnp.asarray(p["bl"], jnp.float32).reshape(1, 1)
    return tuple(row_w) + tuple(row_b) + ln + (wl, bl)


# ------------------------------ forward wrapper -------------------------------

def _prep_input(img_nchw, b_pad):
    """NCHW image -> zero-padded, 128-lane row-stride flat NHWC layout, bf16.

    The kernel feeds the MXU bf16 operands anyway, so storing the prepped image
    in bf16 halves the only HBM read of the kernel with no extra precision loss.
    """
    b, c, h, w = img_nchw.shape
    x = jnp.transpose(img_nchw, (0, 2, 3, 1)).astype(jnp.float32)      # NHWC
    x = jnp.pad(x, ((0, b_pad - b), (1, 1), (1, 1), (0, 0)))           # spatial halo
    x = x.reshape(b_pad, h + 2, (w + 2) * c)
    x = jnp.pad(x, ((0, 0), (0, 0), (0, _RS_IMG - (w + 2) * c)))       # lane-align rows
    return x.reshape(b_pad, (h + 2) * _RS_IMG).astype(jnp.bfloat16)


def discriminator_forward(img, kernel_params, *, block_b=128):
    """img: [B, 3, 28, 28] (NCHW, PyTorch convention).  Returns [B, 1], all <= 0."""
    b = img.shape[0]
    block_b = _round_up(block_b, 16)            # bf16 sublane packing
    tb = min(block_b, _round_up(b, 16))
    b_pad = _round_up(b, tb)
    x = _prep_input(img, b_pad)

    in_specs = [pl.BlockSpec((tb, _IMG_LANES), lambda i: (i, 0))]
    in_specs += [pl.BlockSpec(p.shape, lambda i: (0, 0)) for p in kernel_params]

    out = pl.pallas_call(
        _disc_fused_kernel,
        out_shape=jax.ShapeDtypeStruct((b_pad, 1), jnp.float32),
        grid=(b_pad // tb,),
        in_specs=in_specs,
        out_specs=pl.BlockSpec((tb, 1), lambda i: (i, 0)),
        scratch_shapes=[
            pltpu.VMEM((tb, _A2_LANES), jnp.float32),
            pltpu.VMEM((tb, _A3_LANES), jnp.float32),
            pltpu.VMEM((tb, _A4_LANES), jnp.float32),
            pltpu.VMEM((tb, _FEAT_LANES), jnp.float32),
        ],
        compiler_params=pltpu.CompilerParams(
            dimension_semantics=("parallel",),          # shard tiles over v7x's 2 TCs
            vmem_limit_bytes=32 * 1024 * 1024,
        ),
    )(x, *kernel_params)
    return out[:b]


# ------------------------------ params / reference ----------------------------

def init_params(key, channels=3):
    ks = jax.random.split(key, 14)

    def conv_w(k, cin, cout):
        # HWIO layout [3, 3, cin, cout] (PyTorch stores [cout, cin, 3, 3]).
        return jax.random.normal(k, (3, 3, cin, cout), jnp.float32) / np.sqrt(9.0 * cin)

    def vec(k, n, scale=0.01):
        return scale * jax.random.normal(k, (n,), jnp.float32)

    p = {}
    p["w1"], p["b1"] = conv_w(ks[0], channels, 16), vec(ks[1], 16)
    p["w2"], p["b2"] = conv_w(ks[2], 16, 32), vec(ks[3], 32)
    p["ln1_g"] = 1.0 + 0.01 * jax.random.normal(ks[4], (32, 7, 7), jnp.float32)
    p["ln1_b"] = 0.01 * jax.random.normal(ks[5], (32, 7, 7), jnp.float32)
    p["w3"], p["b3"] = conv_w(ks[6], 32, 64), vec(ks[7], 64)
    p["ln2_g"] = 1.0 + 0.01 * jax.random.normal(ks[8], (64, 4, 4), jnp.float32)
    p["ln2_b"] = 0.01 * jax.random.normal(ks[9], (64, 4, 4), jnp.float32)
    p["w4"], p["b4"] = conv_w(ks[10], 64, 128), vec(ks[11], 128)
    # adv_layer weight, flattened in (h, w, c) order of the NHWC conv4 output.
    # TODO(synk): when importing PyTorch-trained weights, permute the Linear
    # weight from NCHW-flatten order (c*4 + h*2 + w) and transpose conv weights.
    p["wl"] = jax.random.normal(ks[12], (512,), jnp.float32) / np.sqrt(512.0)
    p["bl"] = vec(ks[13], 1)
    return p


def reference_forward(img, p):
    """Pure-JAX f32 (highest precision) reference of the same forward pass."""
    x = jnp.transpose(img, (0, 2, 3, 1)).astype(jnp.float32)   # NHWC

    def conv(x, w, b):
        y = jax.lax.conv_general_dilated(
            x, w, window_strides=(2, 2), padding=((1, 1), (1, 1)),
            dimension_numbers=("NHWC", "HWIO", "NHWC"),
            precision=jax.lax.Precision.HIGHEST)
        y = y + b
        return jnp.where(y > 0, y, LRELU_SLOPE * y)

    def ln(x, g_chw, b_chw):
        mean = jnp.mean(x, axis=(1, 2, 3), keepdims=True)
        var = jnp.mean((x - mean) ** 2, axis=(1, 2, 3), keepdims=True)
        g = jnp.transpose(g_chw, (1, 2, 0))[None]
        b = jnp.transpose(b_chw, (1, 2, 0))[None]
        return (x - mean) * jax.lax.rsqrt(var + LN_EPS) * g + b

    x = conv(x, p["w1"], p["b1"])
    x = conv(x, p["w2"], p["b2"])
    x = ln(x, p["ln1_g"], p["ln1_b"])
    x = conv(x, p["w3"], p["b3"])
    x = ln(x, p["ln2_g"], p["ln2_b"])
    x = conv(x, p["w4"], p["b4"])
    flat = x.reshape(x.shape[0], -1)                  # (h, w, c) flatten order
    y = flat @ p["wl"][:, None] + p["bl"][None, :]
    return -jnp.abs(y)


# ------------------------------------ main ------------------------------------

if __name__ == "__main__":
    key = jax.random.PRNGKey(0)
    pkey, xkey = jax.random.split(key)
    params = init_params(pkey, channels=3)
    kparams = prepare_kernel_params(params)

    # img_size = 28 / channels = 3 are implied by the hard-coded LayerNorm shapes.
    img = jax.random.normal(xkey, (32, 3, 28, 28), jnp.float32)

    # block_b=16 -> two grid steps at this small batch (exercises scratch reuse
    # across steps); production default is 128.
    fwd = jax.jit(lambda im: discriminator_forward(im, kparams, block_b=16))
    out = jax.block_until_ready(fwd(img))

    assert out.shape == (32, 1), out.shape
    assert bool(jnp.all(jnp.isfinite(out)))
    assert bool(jnp.all(out <= 0.0)), "validity must be -|.| (non-positive)"

    # Loose tolerance: the kernel uses bf16 MXU operands with f32 accumulation.
    ref = jax.block_until_ready(jax.jit(lambda im: reference_forward(im, params))(img))
    scale = float(jnp.max(jnp.abs(ref)))
    err = float(jnp.max(jnp.abs(out - ref)))
    assert err <= 0.05 + 0.05 * scale, (err, scale)

    print("KERNEL_OK")
</pallas_src>

<mosaic_0001>
module attributes {stable_mosaic.version = 11 : i64} {
  func.func @_disc_fused_kernel(%arg0: i32, %arg1: memref<16x3840xbf16, #tpu.memory_space<vmem>>, %arg2: memref<384x256xbf16, #tpu.memory_space<vmem>>, %arg3: memref<768x384xbf16, #tpu.memory_space<vmem>>, %arg4: memref<1152x384xbf16, #tpu.memory_space<vmem>>, %arg5: memref<1152x256xbf16, #tpu.memory_space<vmem>>, %arg6: memref<1x256xf32, #tpu.memory_space<vmem>>, %arg7: memref<1x384xf32, #tpu.memory_space<vmem>>, %arg8: memref<1x384xf32, #tpu.memory_space<vmem>>, %arg9: memref<1x256xf32, #tpu.memory_space<vmem>>, %arg10: memref<1x3456xf32, #tpu.memory_space<vmem>>, %arg11: memref<1x3456xf32, #tpu.memory_space<vmem>>, %arg12: memref<1x2304xf32, #tpu.memory_space<vmem>>, %arg13: memref<1x2304xf32, #tpu.memory_space<vmem>>, %arg14: memref<1x512xf32, #tpu.memory_space<vmem>>, %arg15: memref<1x1xf32, #tpu.memory_space<vmem>>, %arg16: memref<16x1xf32, #tpu.memory_space<vmem>>, %arg17: memref<16x4096xf32, #tpu.memory_space<vmem>>, %arg18: memref<16x3456xf32, #tpu.memory_space<vmem>>, %arg19: memref<16x2304xf32, #tpu.memory_space<vmem>>, %arg20: memref<16x512xf32, #tpu.memory_space<vmem>>) attributes {dimension_semantics = [#tpu.dimension_semantics<parallel>], iteration_bounds = array<i64: 2>, scalar_prefetch = 0 : i64, scratch_operands = 4 : i64, tpu.core_type = #tpu.core_type<tc>, window_params = [{transform_indices = @transform_0, window_bounds = array<i64: 16, 3840>}, {pipeline_mode = #tpu.pipeline_mode<synchronous>, transform_indices = @transform_1, window_bounds = array<i64: 384, 256>}, {pipeline_mode = #tpu.pipeline_mode<synchronous>, transform_indices = @transform_2, window_bounds = array<i64: 768, 384>}, {pipeline_mode = #tpu.pipeline_mode<synchronous>, transform_indices = @transform_3, window_bounds = array<i64: 1152, 384>}, {pipeline_mode = #tpu.pipeline_mode<synchronous>, transform_indices = @transform_4, window_bounds = array<i64: 1152, 256>}, {pipeline_mode = #tpu.pipeline_mode<synchronous>, transform_indices = @transform_5, window_bounds = array<i64: 1, 256>}, {pipeline_mode = #tpu.pipeline_mode<synchronous>, transform_indices = @transform_6, window_bounds = array<i64: 1, 384>}, {pipeline_mode = #tpu.pipeline_mode<synchronous>, transform_indices = @transform_7, window_bounds = array<i64: 1, 384>}, {pipeline_mode = #tpu.pipeline_mode<synchronous>, transform_indices = @transform_8, window_bounds = array<i64: 1, 256>}, {pipeline_mode = #tpu.pipeline_mode<synchronous>, transform_indices = @transform_9, window_bounds = array<i64: 1, 3456>}, {pipeline_mode = #tpu.pipeline_mode<synchronous>, transform_indices = @transform_10, window_bounds = array<i64: 1, 3456>}, {pipeline_mode = #tpu.pipeline_mode<synchronous>, transform_indices = @transform_11, window_bounds = array<i64: 1, 2304>}, {pipeline_mode = #tpu.pipeline_mode<synchronous>, transform_indices = @transform_12, window_bounds = array<i64: 1, 2304>}, {pipeline_mode = #tpu.pipeline_mode<synchronous>, transform_indices = @transform_13, window_bounds = array<i64: 1, 512>}, {pipeline_mode = #tpu.pipeline_mode<synchronous>, transform_indices = @transform_14, window_bounds = array<i64: 1, 1>}, {transform_indices = @transform_15, window_bounds = array<i64: 16, 1>}]} {
    %cst = arith.constant 0.000000e+00 : f32
    %0 = vector.broadcast %cst : f32 to vector<16x256xf32>
    %c0 = arith.constant 0 : index
    %c0_0 = arith.constant 0 : index
    %1 = vector.load %arg17[%c0, %c0_0] : memref<16x4096xf32, #tpu.memory_space<vmem>>, vector<16x256xf32>
    tpu.vector_store %arg17[%c0, %c0_0], %0 {strides = array<i32>} : memref<16x4096xf32, #tpu.memory_space<vmem>>, vector<16x256xf32>,
    %cst_1 = arith.constant 0.000000e+00 : f32
    %2 = vector.broadcast %cst_1 : f32 to vector<16x384xf32>
    %c0_2 = arith.constant 0 : index
    %c0_3 = arith.constant 0 : index
    %3 = vector.load %arg18[%c0_2, %c0_3] : memref<16x3456xf32, #tpu.memory_space<vmem>>, vector<16x384xf32>
    tpu.vector_store %arg18[%c0_2, %c0_3], %2 {strides = array<i32>} : memref<16x3456xf32, #tpu.memory_space<vmem>>, vector<16x384xf32>,
    %cst_4 = arith.constant 0.000000e+00 : f32
    %4 = vector.broadcast %cst_4 : f32 to vector<16x384xf32>
    %c0_5 = arith.constant 0 : index
    %c3072 = arith.constant 3072 : index
    %5 = vector.load %arg18[%c0_5, %c3072] : memref<16x3456xf32, #tpu.memory_space<vmem>>, vector<16x384xf32>
    tpu.vector_store %arg18[%c0_5, %c3072], %4 {strides = array<i32>} : memref<16x3456xf32, #tpu.memory_space<vmem>>, vector<16x384xf32>,
    %cst_6 = arith.constant 0.000000e+00 : f32
    %6 = vector.broadcast %cst_6 : f32 to vector<16x384xf32>
    %c0_7 = arith.constant 0 : index
    %c0_8 = arith.constant 0 : index
    %7 = vector.load %arg19[%c0_7, %c0_8] : memref<16x2304xf32, #tpu.memory_space<vmem>>, vector<16x384xf32>
    tpu.vector_store %arg19[%c0_7, %c0_8], %6 {strides = array<i32>} : memref<16x2304xf32, #tpu.memory_space<vmem>>, vector<16x384xf32>,
    %cst_9 = arith.constant 0.000000e+00 : f32
    %8 = vector.broadcast %cst_9 : f32 to vector<16x384xf32>
    %c0_10 = arith.constant 0 : index
    %c1920 = arith.constant 1920 : index
    %9 = vector.load %arg19[%c0_10, %c1920] : memref<16x2304xf32, #tpu.memory_space<vmem>>, vector<16x384xf32>
    tpu.vector_store %arg19[%c0_10, %c1920], %8 {strides = array<i32>} : memref<16x2304xf32, #tpu.memory_space<vmem>>, vector<16x384xf32>,
    %c0_11 = arith.constant 0 : index
    %c0_12 = arith.constant 0 : index
    %10 = vector.load %arg2[%c0_11, %c0_12] : memref<384x256xbf16, #tpu.memory_space<vmem>>, vector<384x256xbf16>
    %c0_13 = arith.constant 0 : index
    %c0_14 = arith.constant 0 : index
    %11 = vector.load %arg6[%c0_13, %c0_14] : memref<1x256xf32, #tpu.memory_space<vmem>>, vector<1x256xf32>
    %c0_15 = arith.constant 0 : index
    %c0_16 = arith.constant 0 : index
    %12 = vector.load %arg1[%c0_15, %c0_16] : memref<16x3840xbf16, #tpu.memory_space<vmem>>, vector<16x384xbf16>
    %cst_17 = arith.constant dense<0.000000e+00> : vector<16x256xf32>
    %13 = tpu.matmul %12, %10, %cst_17 {dimension_numbers = #tpu.dot_dimension_numbers<[1], [0], [0], [1], [0, 0, 1, 1], [], []>} : vector<16x384xbf16>, vector<384x256xbf16>, vector<16x256xf32> -> vector<16x256xf32>
    %14 = vector.broadcast %11 : vector<1x256xf32> to vector<16x256xf32>
    %15 = arith.addf %13, %14 : vector<16x256xf32>
    %cst_18 = arith.constant 0.000000e+00 : f32
    %16 = vector.broadcast %cst_18 : f32 to vector<16x256xf32>
    %17 = arith.cmpf ogt, %15, %16 : vector<16x256xf32>
    %cst_19 = arith.constant 2.000000e-01 : f32
    %18 = vector.broadcast %cst_19 : f32 to vector<16x256xf32>
    %19 = arith.mulf %18, %15 : vector<16x256xf32>
    %20 = arith.select %17, %15, %19 : vector<16x256xi1>, vector<16x256xf32>
    %c0_20 = arith.constant 0 : index
    %c256 = arith.constant 256 : index
    %21 = vector.load %arg17[%c0_20, %c256] : memref<16x4096xf32, #tpu.memory_space<vmem>>, vector<16x256xf32>
    tpu.vector_store %arg17[%c0_20, %c256], %20 {strides = array<i32>} : memref<16x4096xf32, #tpu.memory_space<vmem>>, vector<16x256xf32>,
    %c0_21 = arith.constant 0 : index
    %c256_22 = arith.constant 256 : index
    %22 = vector.load %arg1[%c0_21, %c256_22] : memref<16x3840xbf16, #tpu.memory_space<vmem>>, vector<16x384xbf16>
    %cst_23 = arith.constant dense<0.000000e+00> : vector<16x256xf32>
    %23 = tpu.matmul %22, %10, %cst_23 {dimension_numbers = #tpu.dot_dimension_numbers<[1], [0], [0], [1], [0, 0, 1, 1], [], []>} : vector<16x384xbf16>, vector<384x256xbf16>, vector<16x256xf32> -> vector<16x256xf32>
    %24 = vector.broadcast %11 : vector<1x256xf32> to vector<16x256xf32>
    %25 = arith.addf %23, %24 : vector<16x256xf32>
    %cst_24 = arith.constant 0.000000e+00 : f32
    %26 = vector.broadcast %cst_24 : f32 to vector<16x256xf32>
    %27 = arith.cmpf ogt, %25, %26 : vector<16x256xf32>
    %cst_25 = arith.constant 2.000000e-01 : f32
    %28 = vector.broadcast %cst_25 : f32 to vector<16x256xf32>
    %29 = arith.mulf %28, %25 : vector<16x256xf32>
    %30 = arith.select %27, %25, %29 : vector<16x256xi1>, vector<16x256xf32>
    %c0_26 = arith.constant 0 : index
    %c512 = arith.constant 512 : index
    %31 = vector.load %arg17[%c0_26, %c512] : memref<16x4096xf32, #tpu.memory_space<vmem>>, vector<16x256xf32>
    tpu.vector_store %arg17[%c0_26, %c512], %30 {strides = array<i32>} : memref<16x4096xf32, #tpu.memory_space<vmem>>, vector<16x256xf32>,
    %c0_27 = arith.constant 0 : index
    %c512_28 = arith.constant 512 : index
    %32 = vector.load %arg1[%c0_27, %c512_28] : memref<16x3840xbf16, #tpu.memory_space<vmem>>, vector<16x384xbf16>
    %cst_29 = arith.constant dense<0.000000e+00> : vector<16x256xf32>
    %33 = tpu.matmul %32, %10, %cst_29 {dimension_numbers = #tpu.dot_dimension_numbers<[1], [0], [0], [1], [0, 0, 1, 1], [], []>} : vector<16x384xbf16>, vector<384x256xbf16>, vector<16x256xf32> -> vector<16x256xf32>
    %34 = vector.broadcast %11 : vector<1x256xf32> to vector<16x256xf32>
    %35 = arith.addf %33, %34 : vector<16x256xf32>
    %cst_30 = arith.constant 0.000000e+00 : f32
    %36 = vector.broadcast %cst_30 : f32 to vector<16x256xf32>
    %37 = arith.cmpf ogt, %35, %36 : vector<16x256xf32>
    %cst_31 = arith.constant 2.000000e-01 : f32
    %38 = vector.broadcast %cst_31 : f32 to vector<16x256xf32>
    %39 = arith.mulf %38, %35 : vector<16x256xf32>
    %40 = arith.select %37, %35, %39 : vector<16x256xi1>, vector<16x256xf32>
    %c0_32 = arith.constant 0 : index
    %c768 = arith.constant 768 : index
    %41 = vector.load %arg17[%c0_32, %c768] : memref<16x4096xf32, #tpu.memory_space<vmem>>, vector<16x256xf32>
    tpu.vector_store %arg17[%c0_32, %c768], %40 {strides = array<i32>} : memref<16x4096xf32, #tpu.memory_space<vmem>>, vector<16x256xf32>,
    %c0_33 = arith.constant 0 : index
    %c768_34 = arith.constant 768 : index
    %42 = vector.load %arg1[%c0_33, %c768_34] : memref<16x3840xbf16, #tpu.memory_space<vmem>>, vector<16x384xbf16>
    %cst_35 = arith.constant dense<0.000000e+00> : vector<16x256xf32>
    %43 = tpu.matmul %42, %10, %cst_35 {dimension_numbers = #tpu.dot_dimension_numbers<[1], [0], [0], [1], [0, 0, 1, 1], [], []>} : vector<16x384xbf16>, vector<384x256xbf16>, vector<16x256xf32> -> vector<16x256xf32>
    %44 = vector.broadcast %11 : vector<1x256xf32> to vector<16x256xf32>
    %45 = arith.addf %43, %44 : vector<16x256xf32>
    %cst_36 = arith.constant 0.000000e+00 : f32
    %46 = vector.broadcast %cst_36 : f32 to vector<16x256xf32>
    %47 = arith.cmpf ogt, %45, %46 : vector<16x256xf32>
    %cst_37 = arith.constant 2.000000e-01 : f32
    %48 = vector.broadcast %cst_37 : f32 to vector<16x256xf32>
    %49 = arith.mulf %48, %45 : vector<16x256xf32>
    %50 = arith.select %47, %45, %49 : vector<16x256xi1>, vector<16x256xf32>
    %c0_38 = arith.constant 0 : index
    %c1024 = arith.constant 1024 : index
    %51 = vector.load %arg17[%c0_38, %c1024] : memref<16x4096xf32, #tpu.memory_space<vmem>>, vector<16x256xf32>
    tpu.vector_store %arg17[%c0_38, %c1024], %50 {strides = array<i32>} : memref<16x4096xf32, #tpu.memory_space<vmem>>, vector<16x256xf32>,
    %c0_39 = arith.constant 0 : index
    %c1024_40 = arith.constant 1024 : index
    %52 = vector.load %arg1[%c0_39, %c1024_40] : memref<16x3840xbf16, #tpu.memory_space<vmem>>, vector<16x384xbf16>
    %cst_41 = arith.constant dense<0.000000e+00> : vector<16x256xf32>
    %53 = tpu.matmul %52, %10, %cst_41 {dimension_numbers = #tpu.dot_dimension_numbers<[1], [0], [0], [1], [0, 0, 1, 1], [], []>} : vector<16x384xbf16>, vector<384x256xbf16>, vector<16x256xf32> -> vector<16x256xf32>
    %54 = vector.broadcast %11 : vector<1x256xf32> to vector<16x256xf32>
    %55 = arith.addf %53, %54 : vector<16x256xf32>
    %cst_42 = arith.constant 0.000000e+00 : f32
    %56 = vector.broadcast %cst_42 : f32 to vector<16x256xf32>
    %57 = arith.cmpf ogt, %55, %56 : vector<16x256xf32>
    %cst_43 = arith.constant 2.000000e-01 : f32
    %58 = vector.broadcast %cst_43 : f32 to vector<16x256xf32>
    %59 = arith.mulf %58, %55 : vector<16x256xf32>
    %60 = arith.select %57, %55, %59 : vector<16x256xi1>, vector<16x256xf32>
    %c0_44 = arith.constant 0 : index
    %c1280 = arith.constant 1280 : index
    %61 = vector.load %arg17[%c0_44, %c1280] : memref<16x4096xf32, #tpu.memory_space<vmem>>, vector<16x256xf32>
    tpu.vector_store %arg17[%c0_44, %c1280], %60 {strides = array<i32>} : memref<16x4096xf32, #tpu.memory_space<vmem>>, vector<16x256xf32>,
    %c0_45 = arith.constant 0 : index
    %c1280_46 = arith.constant 1280 : index
    %62 = vector.load %arg1[%c0_45, %c1280_46] : memref<16x3840xbf16, #tpu.memory_space<vmem>>, vector<16x384xbf16>
    %cst_47 = arith.constant dense<0.000000e+00> : vector<16x256xf32>
    %63 = tpu.matmul %62, %10, %cst_47 {dimension_numbers = #tpu.dot_dimension_numbers<[1], [0], [0], [1], [0, 0, 1, 1], [], []>} : vector<16x384xbf16>, vector<384x256xbf16>, vector<16x256xf32> -> vector<16x256xf32>
    %64 = vector.broadcast %11 : vector<1x256xf32> to vector<16x256xf32>
    %65 = arith.addf %63, %64 : vector<16x256xf32>
    %cst_48 = arith.constant 0.000000e+00 : f32
    %66 = vector.broadcast %cst_48 : f32 to vector<16x256xf32>
    %67 = arith.cmpf ogt, %65, %66 : vector<16x256xf32>
    %cst_49 = arith.constant 2.000000e-01 : f32
    %68 = vector.broadcast %cst_49 : f32 to vector<16x256xf32>
    %69 = arith.mulf %68, %65 : vector<16x256xf32>
    %70 = arith.select %67, %65, %69 : vector<16x256xi1>, vector<16x256xf32>
    %c0_50 = arith.constant 0 : index
    %c1536 = arith.constant 1536 : index
    %71 = vector.load %arg17[%c0_50, %c1536] : memref<16x4096xf32, #tpu.memory_space<vmem>>, vector<16x256xf32>
    tpu.vector_store %arg17[%c0_50, %c1536], %70 {strides = array<i32>} : memref<16x4096xf32, #tpu.memory_space<vmem>>, vector<16x256xf32>,
    %c0_51 = arith.constant 0 : index
    %c1536_52 = arith.constant 1536 : index
    %72 = vector.load %arg1[%c0_51, %c1536_52] : memref<16x3840xbf16, #tpu.memory_space<vmem>>, vector<16x384xbf16>
    %cst_53 = arith.constant dense<0.000000e+00> : vector<16x256xf32>
    %73 = tpu.matmul %72, %10, %cst_53 {dimension_numbers = #tpu.dot_dimension_numbers<[1], [0], [0], [1], [0, 0, 1, 1], [], []>} : vector<16x384xbf16>, vector<384x256xbf16>, vector<16x256xf32> -> vector<16x256xf32>
    %74 = vector.broadcast %11 : vector<1x256xf32> to vector<16x256xf32>
    %75 = arith.addf %73, %74 : vector<16x256xf32>
    %cst_54 = arith.constant 0.000000e+00 : f32
    %76 = vector.broadcast %cst_54 : f32 to vector<16x256xf32>
    %77 = arith.cmpf ogt, %75, %76 : vector<16x256xf32>
    %cst_55 = arith.constant 2.000000e-01 : f32
    %78 = vector.broadcast %cst_55 : f32 to vector<16x256xf32>
    %79 = arith.mulf %78, %75 : vector<16x256xf32>
    %80 = arith.select %77, %75, %79 : vector<16x256xi1>, vector<16x256xf32>
    %c0_56 = arith.constant 0 : index
    %c1792 = arith.constant 1792 : index
    %81 = vector.load %arg17[%c0_56, %c1792] : memref<16x4096xf32, #tpu.memory_space<vmem>>, vector<16x256xf32>
    tpu.vector_store %arg17[%c0_56, %c1792], %80 {strides = array<i32>} : memref<16x4096xf32, #tpu.memory_space<vmem>>, vector<16x256xf32>,
    %c0_57 = arith.constant 0 : index
    %c1792_58 = arith.constant 1792 : index
    %82 = vector.load %arg1[%c0_57, %c1792_58] : memref<16x3840xbf16, #tpu.memory_space<vmem>>, vector<16x384xbf16>
    %cst_59 = arith.constant dense<0.000000e+00> : vector<16x256xf32>
    %83 = tpu.matmul %82, %10, %cst_59 {dimension_numbers = #tpu.dot_dimension_numbers<[1], [0], [0], [1], [0, 0, 1, 1], [], []>} : vector<16x384xbf16>, vector<384x256xbf16>, vector<16x256xf32> -> vector<16x256xf32>
    %84 = vector.broadcast %11 : vector<1x256xf32> to vector<16x256xf32>
    %85 = arith.addf %83, %84 : vector<16x256xf32>
    %cst_60 = arith.constant 0.000000e+00 : f32
    %86 = vector.broadcast %cst_60 : f32 to vector<16x256xf32>
    %87 = arith.cmpf ogt, %85, %86 : vector<16x256xf32>
    %cst_61 = arith.constant 2.000000e-01 : f32
    %88 = vector.broadcast %cst_61 : f32 to vector<16x256xf32>
    %89 = arith.mulf %88, %85 : vector<16x256xf32>
    %90 = arith.select %87, %85, %89 : vector<16x256xi1>, vector<16x256xf32>
    %c0_62 = arith.constant 0 : index
    %c2048 = arith.constant 2048 : index
    %91 = vector.load %arg17[%c0_62, %c2048] : memref<16x4096xf32, #tpu.memory_space<vmem>>, vector<16x256xf32>
    tpu.vector_store %arg17[%c0_62, %c2048], %90 {strides = array<i32>} : memref<16x4096xf32, #tpu.memory_space<vmem>>, vector<16x256xf32>,
    %c0_63 = arith.constant 0 : index
    %c2048_64 = arith.constant 2048 : index
    %92 = vector.load %arg1[%c0_63, %c2048_64] : memref<16x3840xbf16, #tpu.memory_space<vmem>>, vector<16x384xbf16>
    %cst_65 = arith.constant dense<0.000000e+00> : vector<16x256xf32>
    %93 = tpu.matmul %92, %10, %cst_65 {dimension_numbers = #tpu.dot_dimension_numbers<[1], [0], [0], [1], [0, 0, 1, 1], [], []>} : vector<16x384xbf16>, vector<384x256xbf16>, vector<16x256xf32> -> vector<16x256xf32>
    %94 = vector.broadcast %11 : vector<1x256xf32> to vector<16x256xf32>
    %95 = arith.addf %93, %94 : vector<16x256xf32>
    %cst_66 = arith.constant 0.000000e+00 : f32
    %96 = vector.broadcast %cst_66 : f32 to vector<16x256xf32>
    %97 = arith.cmpf ogt, %95, %96 : vector<16x256xf32>
    %cst_67 = arith.constant 2.000000e-01 : f32
    %98 = vector.broadcast %cst_67 : f32 to vector<16x256xf32>
    %99 = arith.mulf %98, %95 : vector<16x256xf32>
    %100 = arith.select %97, %95, %99 : vector<16x256xi1>, vector<16x256xf32>
    %c0_68 = arith.constant 0 : index
    %c2304 = arith.constant 2304 : index
    %101 = vector.load %arg17[%c0_68, %c2304] : memref<16x4096xf32, #tpu.memory_space<vmem>>, vector<16x256xf32>
    tpu.vector_store %arg17[%c0_68, %c2304], %100 {strides = array<i32>} : memref<16x4096xf32, #tpu.memory_space<vmem>>, vector<16x256xf32>,
    %c0_69 = arith.constant 0 : index
    %c2304_70 = arith.constant 2304 : index
    %102 = vector.load %arg1[%c0_69, %c2304_70] : memref<16x3840xbf16, #tpu.memory_space<vmem>>, vector<16x384xbf16>
    %cst_71 = arith.constant dense<0.000000e+00> : vector<16x256xf32>
    %103 = tpu.matmul %102, %10, %cst_71 {dimension_numbers = #tpu.dot_dimension_numbers<[1], [0], [0], [1], [0, 0, 1, 1], [], []>} : vector<16x384xbf16>, vector<384x256xbf16>, vector<16x256xf32> -> vector<16x256xf32>
    %104 = vector.broadcast %11 : vector<1x256xf32> to vector<16x256xf32>
    %105 = arith.addf %103, %104 : vector<16x256xf32>
    %cst_72 = arith.constant 0.000000e+00 : f32
    %106 = vector.broadcast %cst_72 : f32 to vector<16x256xf32>
    %107 = arith.cmpf ogt, %105, %106 : vector<16x256xf32>
    %cst_73 = arith.constant 2.000000e-01 : f32
    %108 = vector.broadcast %cst_73 : f32 to vector<16x256xf32>
    %109 = arith.mulf %108, %105 : vector<16x256xf32>
    %110 = arith.select %107, %105, %109 : vector<16x256xi1>, vector<16x256xf32>
    %c0_74 = arith.constant 0 : index
    %c2560 = arith.constant 2560 : index
    %111 = vector.load %arg17[%c0_74, %c2560] : memref<16x4096xf32, #tpu.memory_space<vmem>>, vector<16x256xf32>
    tpu.vector_store %arg17[%c0_74, %c2560], %110 {strides = array<i32>} : memref<16x4096xf32, #tpu.memory_space<vmem>>, vector<16x256xf32>,
    %c0_75 = arith.constant 0 : index
    %c2560_76 = arith.constant 2560 : index
    %112 = vector.load %arg1[%c0_75, %c2560_76] : memref<16x3840xbf16, #tpu.memory_space<vmem>>, vector<16x384xbf16>
    %cst_77 = arith.constant dense<0.000000e+00> : vector<16x256xf32>
    %113 = tpu.matmul %112, %10, %cst_77 {dimension_numbers = #tpu.dot_dimension_numbers<[1], [0], [0], [1], [0, 0, 1, 1], [], []>} : vector<16x384xbf16>, vector<384x256xbf16>, vector<16x256xf32> -> vector<16x256xf32>
    %114 = vector.broadcast %11 : vector<1x256xf32> to vector<16x256xf32>
    %115 = arith.addf %113, %114 : vector<16x256xf32>
    %cst_78 = arith.constant 0.000000e+00 : f32
    %116 = vector.broadcast %cst_78 : f32 to vector<16x256xf32>
    %117 = arith.cmpf ogt, %115, %116 : vector<16x256xf32>
    %cst_79 = arith.constant 2.000000e-01 : f32
    %118 = vector.broadcast %cst_79 : f32 to vector<16x256xf32>
    %119 = arith.mulf %118, %115 : vector<16x256xf32>
    %120 = arith.select %117, %115, %119 : vector<16x256xi1>, vector<16x256xf32>
    %c0_80 = arith.constant 0 : index
    %c2816 = arith.constant 2816 : index
    %121 = vector.load %arg17[%c0_80, %c2816] : memref<16x4096xf32, #tpu.memory_space<vmem>>, vector<16x256xf32>
    tpu.vector_store %arg17[%c0_80, %c2816], %120 {strides = array<i32>} : memref<16x4096xf32, #tpu.memory_space<vmem>>, vector<16x256xf32>,
    %c0_81 = arith.constant 0 : index
    %c2816_82 = arith.constant 2816 : index
    %122 = vector.load %arg1[%c0_81, %c2816_82] : memref<16x3840xbf16, #tpu.memory_space<vmem>>, vector<16x384xbf16>
    %cst_83 = arith.constant dense<0.000000e+00> : vector<16x256xf32>
    %123 = tpu.matmul %122, %10, %cst_83 {dimension_numbers = #tpu.dot_dimension_numbers<[1], [0], [0], [1], [0, 0, 1, 1], [], []>} : vector<16x384xbf16>, vector<384x256xbf16>, vector<16x256xf32> -> vector<16x256xf32>
    %124 = vector.broadcast %11 : vector<1x256xf32> to vector<16x256xf32>
    %125 = arith.addf %123, %124 : vector<16x256xf32>
    %cst_84 = arith.constant 0.000000e+00 : f32
    %126 = vector.broadcast %cst_84 : f32 to vector<16x256xf32>
    %127 = arith.cmpf ogt, %125, %126 : vector<16x256xf32>
    %cst_85 = arith.constant 2.000000e-01 : f32
    %128 = vector.broadcast %cst_85 : f32 to vector<16x256xf32>
    %129 = arith.mulf %128, %125 : vector<16x256xf32>
    %130 = arith.select %127, %125, %129 : vector<16x256xi1>, vector<16x256xf32>
    %c0_86 = arith.constant 0 : index
    %c3072_87 = arith.constant 3072 : index
    %131 = vector.load %arg17[%c0_86, %c3072_87] : memref<16x4096xf32, #tpu.memory_space<vmem>>, vector<16x256xf32>
    tpu.vector_store %arg17[%c0_86, %c3072_87], %130 {strides = array<i32>} : memref<16x4096xf32, #tpu.memory_space<vmem>>, vector<16x256xf32>,
    %c0_88 = arith.constant 0 : index
    %c3072_89 = arith.constant 3072 : index
    %132 = vector.load %arg1[%c0_88, %c3072_89] : memref<16x3840xbf16, #tpu.memory_space<vmem>>, vector<16x384xbf16>
    %cst_90 = arith.constant dense<0.000000e+00> : vector<16x256xf32>
    %133 = tpu.matmul %132, %10, %cst_90 {dimension_numbers = #tpu.dot_dimension_numbers<[1], [0], [0], [1], [0, 0, 1, 1], [], []>} : vector<16x384xbf16>, vector<384x256xbf16>, vector<16x256xf32> -> vector<16x256xf32>
    %134 = vector.broadcast %11 : vector<1x256xf32> to vector<16x256xf32>
    %135 = arith.addf %133, %134 : vector<16x256xf32>
    %cst_91 = arith.constant 0.000000e+00 : f32
    %136 = vector.broadcast %cst_91 : f32 to vector<16x256xf32>
    %137 = arith.cmpf ogt, %135, %136 : vector<16x256xf32>
    %cst_92 = arith.constant 2.000000e-01 : f32
    %138 = vector.broadcast %cst_92 : f32 to vector<16x256xf32>
    %139 = arith.mulf %138, %135 : vector<16x256xf32>
    %140 = arith.select %137, %135, %139 : vector<16x256xi1>, vector<16x256xf32>
    %c0_93 = arith.constant 0 : index
    %c3328 = arith.constant 3328 : index
    %141 = vector.load %arg17[%c0_93, %c3328] : memref<16x4096xf32, #tpu.memory_space<vmem>>, vector<16x256xf32>
    tpu.vector_store %arg17[%c0_93, %c3328], %140 {strides = array<i32>} : memref<16x4096xf32, #tpu.memory_space<vmem>>, vector<16x256xf32>,
    %c0_94 = arith.constant 0 : index
    %c3328_95 = arith.constant 3328 : index
    %142 = vector.load %arg1[%c0_94, %c3328_95] : memref<16x3840xbf16, #tpu.memory_space<vmem>>, vector<16x384xbf16>
    %cst_96 = arith.constant dense<0.000000e+00> : vector<16x256xf32>
    %143 = tpu.matmul %142, %10, %cst_96 {dimension_numbers = #tpu.dot_dimension_numbers<[1], [0], [0], [1], [0, 0, 1, 1], [], []>} : vector<16x384xbf16>, vector<384x256xbf16>, vector<16x256xf32> -> vector<16x256xf32>
    %144 = vector.broadcast %11 : vector<1x256xf32> to vector<16x256xf32>
    %145 = arith.addf %143, %144 : vector<16x256xf32>
    %cst_97 = arith.constant 0.000000e+00 : f32
    %146 = vector.broadcast %cst_97 : f32 to vector<16x256xf32>
    %147 = arith.cmpf ogt, %145, %146 : vector<16x256xf32>
    %cst_98 = arith.constant 2.000000e-01 : f32
    %148 = vector.broadcast %cst_98 : f32 to vector<16x256xf32>
    %149 = arith.mulf %148, %145 : vector<16x256xf32>
    %150 = arith.select %147, %145, %149 : vector<16x256xi1>, vector<16x256xf32>
    %c0_99 = arith.constant 0 : index
    %c3584 = arith.constant 3584 : index
    %151 = vector.load %arg17[%c0_99, %c3584] : memref<16x4096xf32, #tpu.memory_space<vmem>>, vector<16x256xf32>
    tpu.vector_store %arg17[%c0_99, %c3584], %150 {strides = array<i32>} : memref<16x4096xf32, #tpu.memory_space<vmem>>, vector<16x256xf32>,
    %c0_100 = arith.constant 0 : index
    %c0_101 = arith.constant 0 : index
    %152 = vector.load %arg3[%c0_100, %c0_101] : memref<768x384xbf16, #tpu.memory_space<vmem>>, vector<768x384xbf16>
    %c0_102 = arith.constant 0 : index
    %c0_103 = arith.constant 0 : index
    %153 = vector.load %arg7[%c0_102, %c0_103] : memref<1x384xf32, #tpu.memory_space<vmem>>, vector<1x384xf32>
    %c0_104 = arith.constant 0 : index
    %c0_105 = arith.constant 0 : index
    %154 = vector.load %arg17[%c0_104, %c0_105] : memref<16x4096xf32, #tpu.memory_space<vmem>>, vector<16x768xf32>
    %155 = arith.truncf %154 : vector<16x768xf32> to vector<16x768xbf16>
    %cst_106 = arith.constant dense<0.000000e+00> : vector<16x384xf32>
    %156 = tpu.matmul %155, %152, %cst_106 {dimension_numbers = #tpu.dot_dimension_numbers<[1], [0], [0], [1], [0, 0, 1, 1], [], []>} : vector<16x768xbf16>, vector<768x384xbf16>, vector<16x384xf32> -> vector<16x384xf32>
    %157 = vector.broadcast %153 : vector<1x384xf32> to vector<16x384xf32>
    %158 = arith.addf %156, %157 : vector<16x384xf32>
    %cst_107 = arith.constant 0.000000e+00 : f32
    %159 = vector.broadcast %cst_107 : f32 to vector<16x384xf32>
    %160 = arith.cmpf ogt, %158, %159 : vector<16x384xf32>
    %cst_108 = arith.constant 2.000000e-01 : f32
    %161 = vector.broadcast %cst_108 : f32 to vector<16x384xf32>
    %162 = arith.mulf %161, %158 : vector<16x384xf32>
    %163 = arith.select %160, %158, %162 : vector<16x384xi1>, vector<16x384xf32>
    %c0_109 = arith.constant 0 : index
    %c384 = arith.constant 384 : index
    %164 = vector.load %arg18[%c0_109, %c384] : memref<16x3456xf32, #tpu.memory_space<vmem>>, vector<16x384xf32>
    tpu.vector_store %arg18[%c0_109, %c384], %163 {strides = array<i32>} : memref<16x3456xf32, #tpu.memory_space<vmem>>, vector<16x384xf32>,
    %c0_110 = arith.constant 0 : index
    %c512_111 = arith.constant 512 : index
    %165 = vector.load %arg17[%c0_110, %c512_111] : memref<16x4096xf32, #tpu.memory_space<vmem>>, vector<16x768xf32>
    %166 = arith.truncf %165 : vector<16x768xf32> to vector<16x768xbf16>
    %cst_112 = arith.constant dense<0.000000e+00> : vector<16x384xf32>
    %167 = tpu.matmul %166, %152, %cst_112 {dimension_numbers = #tpu.dot_dimension_numbers<[1], [0], [0], [1], [0, 0, 1, 1], [], []>} : vector<16x768xbf16>, vector<768x384xbf16>, vector<16x384xf32> -> vector<16x384xf32>
    %168 = vector.broadcast %153 : vector<1x384xf32> to vector<16x384xf32>
    %169 = arith.addf %167, %168 : vector<16x384xf32>
    %cst_113 = arith.constant 0.000000e+00 : f32
    %170 = vector.broadcast %cst_113 : f32 to vector<16x384xf32>
    %171 = arith.cmpf ogt, %169, %170 : vector<16x384xf32>
    %cst_114 = arith.constant 2.000000e-01 : f32
    %172 = vector.broadcast %cst_114 : f32 to vector<16x384xf32>
    %173 = arith.mulf %172, %169 : vector<16x384xf32>
    %174 = arith.select %171, %169, %173 : vector<16x384xi1>, vector<16x384xf32>
    %c0_115 = arith.constant 0 : index
    %c768_116 = arith.constant 768 : index
    %175 = vector.load %arg18[%c0_115, %c768_116] : memref<16x3456xf32, #tpu.memory_space<vmem>>, vector<16x384xf32>
    tpu.vector_store %arg18[%c0_115, %c768_116], %174 {strides = array<i32>} : memref<16x3456xf32, #tpu.memory_space<vmem>>, vector<16x384xf32>,
    %c0_117 = arith.constant 0 : index
    %c1024_118 = arith.constant 1024 : index
    %176 = vector.load %arg17[%c0_117, %c1024_118] : memref<16x4096xf32, #tpu.memory_space<vmem>>, vector<16x768xf32>
    %177 = arith.truncf %176 : vector<16x768xf32> to vector<16x768xbf16>
    %cst_119 = arith.constant dense<0.000000e+00> : vector<16x384xf32>
    %178 = tpu.matmul %177, %152, %cst_119 {dimension_numbers = #tpu.dot_dimension_numbers<[1], [0], [0], [1], [0, 0, 1, 1], [], []>} : vector<16x768xbf16>, vector<768x384xbf16>, vector<16x384xf32> -> vector<16x384xf32>
    %179 = vector.broadcast %153 : vector<1x384xf32> to vector<16x384xf32>
    %180 = arith.addf %178, %179 : vector<16x384xf32>
    %cst_120 = arith.constant 0.000000e+00 : f32
    %181 = vector.broadcast %cst_120 : f32 to vector<16x384xf32>
    %182 = arith.cmpf ogt, %180, %181 : vector<16x384xf32>
    %cst_121 = arith.constant 2.000000e-01 : f32
    %183 = vector.broadcast %cst_121 : f32 to vector<16x384xf32>
    %184 = arith.mulf %183, %180 : vector<16x384xf32>
    %185 = arith.select %182, %180, %184 : vector<16x384xi1>, vector<16x384xf32>
    %c0_122 = arith.constant 0 : index
    %c1152 = arith.constant 1152 : index
    %186 = vector.load %arg18[%c0_122, %c1152] : memref<16x3456xf32, #tpu.memory_space<vmem>>, vector<16x384xf32>
    tpu.vector_store %arg18[%c0_122, %c1152], %185 {strides = array<i32>} : memref<16x3456xf32, #tpu.memory_space<vmem>>, vector<16x384xf32>,
    %c0_123 = arith.constant 0 : index
    %c1536_124 = arith.constant 1536 : index
    %187 = vector.load %arg17[%c0_123, %c1536_124] : memref<16x4096xf32, #tpu.memory_space<vmem>>, vector<16x768xf32>
    %188 = arith.truncf %187 : vector<16x768xf32> to vector<16x768xbf16>
    %cst_125 = arith.constant dense<0.000000e+00> : vector<16x384xf32>
    %189 = tpu.matmul %188, %152, %cst_125 {dimension_numbers = #tpu.dot_dimension_numbers<[1], [0], [0], [1], [0, 0, 1, 1], [], []>} : vector<16x768xbf16>, vector<768x384xbf16>, vector<16x384xf32> -> vector<16x384xf32>
    %190 = vector.broadcast %153 : vector<1x384xf32> to vector<16x384xf32>
    %191 = arith.addf %189, %190 : vector<16x384xf32>
    %cst_126 = arith.constant 0.000000e+00 : f32
    %192 = vector.broadcast %cst_126 : f32 to vector<16x384xf32>
    %193 = arith.cmpf ogt, %191, %192 : vector<16x384xf32>
    %cst_127 = arith.constant 2.000000e-01 : f32
    %194 = vector.broadcast %cst_127 : f32 to vector<16x384xf32>
    %195 = arith.mulf %194, %191 : vector<16x384xf32>
    %196 = arith.select %193, %191, %195 : vector<16x384xi1>, vector<16x384xf32>
    %c0_128 = arith.constant 0 : index
    %c1536_129 = arith.constant 1536 : index
    %197 = vector.load %arg18[%c0_128, %c1536_129] : memref<16x3456xf32, #tpu.memory_space<vmem>>, vector<16x384xf32>
    tpu.vector_store %arg18[%c0_128, %c1536_129], %196 {strides = array<i32>} : memref<16x3456xf32, #tpu.memory_space<vmem>>, vector<16x384xf32>,
    %c0_130 = arith.constant 0 : index
    %c2048_131 = arith.constant 2048 : index
    %198 = vector.load %arg17[%c0_130, %c2048_131] : memref<16x4096xf32, #tpu.memory_space<vmem>>, vector<16x768xf32>
    %199 = arith.truncf %198 : vector<16x768xf32> to vector<16x768xbf16>
    %cst_132 = arith.constant dense<0.000000e+00> : vector<16x384xf32>
    %200 = tpu.matmul %199, %152, %cst_132 {dimension_numbers = #tpu.dot_dimension_numbers<[1], [0], [0], [1], [0, 0, 1, 1], [], []>} : vector<16x768xbf16>, vector<768x384xbf16>, vector<16x384xf32> -> vector<16x384xf32>
    %201 = vector.broadcast %153 : vector<1x384xf32> to vector<16x384xf32>
    %202 = arith.addf %200, %201 : vector<16x384xf32>
    %cst_133 = arith.constant 0.000000e+00 : f32
    %203 = vector.broadcast %cst_133 : f32 to vector<16x384xf32>
    %204 = arith.cmpf ogt, %202, %203 : vector<16x384xf32>
    %cst_134 = arith.constant 2.000000e-01 : f32
    %205 = vector.broadcast %cst_134 : f32 to vector<16x384xf32>
    %206 = arith.mulf %205, %202 : vector<16x384xf32>
    %207 = arith.select %204, %202, %206 : vector<16x384xi1>, vector<16x384xf32>
    %c0_135 = arith.constant 0 : index
    %c1920_136 = arith.constant 1920 : index
    %208 = vector.load %arg18[%c0_135, %c1920_136] : memref<16x3456xf32, #tpu.memory_space<vmem>>, vector<16x384xf32>
    tpu.vector_store %arg18[%c0_135, %c1920_136], %207 {strides = array<i32>} : memref<16x3456xf32, #tpu.memory_space<vmem>>, vector<16x384xf32>,
    %c0_137 = arith.constant 0 : index
    %c2560_138 = arith.constant 2560 : index
    %209 = vector.load %arg17[%c0_137, %c2560_138] : memref<16x4096xf32, #tpu.memory_space<vmem>>, vector<16x768xf32>
    %210 = arith.truncf %209 : vector<16x768xf32> to vector<16x768xbf16>
    %cst_139 = arith.constant dense<0.000000e+00> : vector<16x384xf32>
    %211 = tpu.matmul %210, %152, %cst_139 {dimension_numbers = #tpu.dot_dimension_numbers<[1], [0], [0], [1], [0, 0, 1, 1], [], []>} : vector<16x768xbf16>, vector<768x384xbf16>, vector<16x384xf32> -> vector<16x384xf32>
    %212 = vector.broadcast %153 : vector<1x384xf32> to vector<16x384xf32>
    %213 = arith.addf %211, %212 : vector<16x384xf32>
    %cst_140 = arith.constant 0.000000e+00 : f32
    %214 = vector.broadcast %cst_140 : f32 to vector<16x384xf32>
    %215 = arith.cmpf ogt, %213, %214 : vector<16x384xf32>
    %cst_141 = arith.constant 2.000000e-01 : f32
    %216 = vector.broadcast %cst_141 : f32 to vector<16x384xf32>
    %217 = arith.mulf %216, %213 : vector<16x384xf32>
    %218 = arith.select %215, %213, %217 : vector<16x384xi1>, vector<16x384xf32>
    %c0_142 = arith.constant 0 : index
    %c2304_143 = arith.constant 2304 : index
    %219 = vector.load %arg18[%c0_142, %c2304_143] : memref<16x3456xf32, #tpu.memory_space<vmem>>, vector<16x384xf32>
    tpu.vector_store %arg18[%c0_142, %c2304_143], %218 {strides = array<i32>} : memref<16x3456xf32, #tpu.memory_space<vmem>>, vector<16x384xf32>,
    %c0_144 = arith.constant 0 : index
    %c3072_145 = arith.constant 3072 : index
    %220 = vector.load %arg17[%c0_144, %c3072_145] : memref<16x4096xf32, #tpu.memory_space<vmem>>, vector<16x768xf32>
    %221 = arith.truncf %220 : vector<16x768xf32> to vector<16x768xbf16>
    %cst_146 = arith.constant dense<0.000000e+00> : vector<16x384xf32>
    %222 = tpu.matmul %221, %152, %cst_146 {dimension_numbers = #tpu.dot_dimension_numbers<[1], [0], [0], [1], [0, 0, 1, 1], [], []>} : vector<16x768xbf16>, vector<768x384xbf16>, vector<16x384xf32> -> vector<16x384xf32>
    %223 = vector.broadcast %153 : vector<1x384xf32> to vector<16x384xf32>
    %224 = arith.addf %222, %223 : vector<16x384xf32>
    %cst_147 = arith.constant 0.000000e+00 : f32
    %225 = vector.broadcast %cst_147 : f32 to vector<16x384xf32>
    %226 = arith.cmpf ogt, %224, %225 : vector<16x384xf32>
    %cst_148 = arith.constant 2.000000e-01 : f32
    %227 = vector.broadcast %cst_148 : f32 to vector<16x384xf32>
    %228 = arith.mulf %227, %224 : vector<16x384xf32>
    %229 = arith.select %226, %224, %228 : vector<16x384xi1>, vector<16x384xf32>
    %c0_149 = arith.constant 0 : index
    %c2688 = arith.constant 2688 : index
    %230 = vector.load %arg18[%c0_149, %c2688] : memref<16x3456xf32, #tpu.memory_space<vmem>>, vector<16x384xf32>
    tpu.vector_store %arg18[%c0_149, %c2688], %229 {strides = array<i32>} : memref<16x3456xf32, #tpu.memory_space<vmem>>, vector<16x384xf32>,
    %c0_150 = arith.constant 0 : index
    %c0_151 = arith.constant 0 : index
    %231 = vector.load %arg18[%c0_150, %c0_151] : memref<16x3456xf32, #tpu.memory_space<vmem>>, vector<16x3456xf32>
    %cst_152 = arith.constant dense<0.000000e+00> : vector<16xf32>
    %232 = vector.multi_reduction <add>, %231, %cst_152 [1] : vector<16x3456xf32> to vector<16xf32>
    %233 = vector.shape_cast %232 : vector<16xf32> to vector<16x1xf32>
    %cst_153 = arith.constant 6.37755089E-4 : f32
    %234 = vector.broadcast %cst_153 : f32 to vector<16x1xf32>
    %235 = arith.mulf %233, %234 : vector<16x1xf32>
    %236 = arith.mulf %231, %231 : vector<16x3456xf32>
    %cst_154 = arith.constant dense<0.000000e+00> : vector<16xf32>
    %237 = vector.multi_reduction <add>, %236, %cst_154 [1] : vector<16x3456xf32> to vector<16xf32>
    %238 = vector.shape_cast %237 : vector<16xf32> to vector<16x1xf32>
    %cst_155 = arith.constant 6.37755089E-4 : f32
    %239 = vector.broadcast %cst_155 : f32 to vector<16x1xf32>
    %240 = arith.mulf %238, %239 : vector<16x1xf32>
    %241 = arith.mulf %235, %235 : vector<16x1xf32>
    %242 = arith.subf %240, %241 : vector<16x1xf32>
    %cst_156 = arith.constant 0.000000e+00 : f32
    %243 = vector.broadcast %cst_156 : f32 to vector<16x1xf32>
    %244 = arith.maximumf %242, %243 : vector<16x1xf32>
    %cst_157 = arith.constant 9.99999974E-6 : f32
    %245 = vector.broadcast %cst_157 : f32 to vector<16x1xf32>
    %246 = arith.addf %244, %245 : vector<16x1xf32>
    %247 = math.rsqrt %246 : vector<16x1xf32>
    %248 = vector.broadcast %235 : vector<16x1xf32> to vector<16x3456xf32>
    %249 = arith.subf %231, %248 : vector<16x3456xf32>
    %250 = vector.broadcast %247 : vector<16x1xf32> to vector<16x3456xf32>
    %251 = arith.mulf %249, %250 : vector<16x3456xf32>
    %c0_158 = arith.constant 0 : index
    %c0_159 = arith.constant 0 : index
    %252 = vector.load %arg10[%c0_158, %c0_159] : memref<1x3456xf32, #tpu.memory_space<vmem>>, vector<1x3456xf32>
    %253 = vector.broadcast %252 : vector<1x3456xf32> to vector<16x3456xf32>
    %254 = arith.mulf %251, %253 : vector<16x3456xf32>
    %c0_160 = arith.constant 0 : index
    %c0_161 = arith.constant 0 : index
    %255 = vector.load %arg11[%c0_160, %c0_161] : memref<1x3456xf32, #tpu.memory_space<vmem>>, vector<1x3456xf32>
    %256 = vector.broadcast %255 : vector<1x3456xf32> to vector<16x3456xf32>
    %257 = arith.addf %254, %256 : vector<16x3456xf32>
    %c0_162 = arith.constant 0 : index
    %c0_163 = arith.constant 0 : index
    %258 = vector.load %arg18[%c0_162, %c0_163] : memref<16x3456xf32, #tpu.memory_space<vmem>>, vector<16x3456xf32>
    tpu.vector_store %arg18[%c0_162, %c0_163], %257 {strides = array<i32>} : memref<16x3456xf32, #tpu.memory_space<vmem>>, vector<16x3456xf32>,
    %c0_164 = arith.constant 0 : index
    %c0_165 = arith.constant 0 : index
    %259 = vector.load %arg4[%c0_164, %c0_165] : memref<1152x384xbf16, #tpu.memory_space<vmem>>, vector<1152x384xbf16>
    %c0_166 = arith.constant 0 : index
    %c0_167 = arith.constant 0 : index
    %260 = vector.load %arg8[%c0_166, %c0_167] : memref<1x384xf32, #tpu.memory_space<vmem>>, vector<1x384xf32>
    %c0_168 = arith.constant 0 : index
    %c0_169 = arith.constant 0 : index
    %261 = vector.load %arg18[%c0_168, %c0_169] : memref<16x3456xf32, #tpu.memory_space<vmem>>, vector<16x1152xf32>
    %262 = arith.truncf %261 : vector<16x1152xf32> to vector<16x1152xbf16>
    %cst_170 = arith.constant dense<0.000000e+00> : vector<16x384xf32>
    %263 = tpu.matmul %262, %259, %cst_170 {dimension_numbers = #tpu.dot_dimension_numbers<[1], [0], [0], [1], [0, 0, 1, 1], [], []>} : vector<16x1152xbf16>, vector<1152x384xbf16>, vector<16x384xf32> -> vector<16x384xf32>
    %264 = vector.broadcast %260 : vector<1x384xf32> to vector<16x384xf32>
    %265 = arith.addf %263, %264 : vector<16x384xf32>
    %cst_171 = arith.constant 0.000000e+00 : f32
    %266 = vector.broadcast %cst_171 : f32 to vector<16x384xf32>
    %267 = arith.cmpf ogt, %265, %266 : vector<16x384xf32>
    %cst_172 = arith.constant 2.000000e-01 : f32
    %268 = vector.broadcast %cst_172 : f32 to vector<16x384xf32>
    %269 = arith.mulf %268, %265 : vector<16x384xf32>
    %270 = arith.select %267, %265, %269 : vector<16x384xi1>, vector<16x384xf32>
    %c0_173 = arith.constant 0 : index
    %c384_174 = arith.constant 384 : index
    %271 = vector.load %arg19[%c0_173, %c384_174] : memref<16x2304xf32, #tpu.memory_space<vmem>>, vector<16x384xf32>
    tpu.vector_store %arg19[%c0_173, %c384_174], %270 {strides = array<i32>} : memref<16x2304xf32, #tpu.memory_space<vmem>>, vector<16x384xf32>,
    %c0_175 = arith.constant 0 : index
    %c768_176 = arith.constant 768 : index
    %272 = vector.load %arg18[%c0_175, %c768_176] : memref<16x3456xf32, #tpu.memory_space<vmem>>, vector<16x1152xf32>
    %273 = arith.truncf %272 : vector<16x1152xf32> to vector<16x1152xbf16>
    %cst_177 = arith.constant dense<0.000000e+00> : vector<16x384xf32>
    %274 = tpu.matmul %273, %259, %cst_177 {dimension_numbers = #tpu.dot_dimension_numbers<[1], [0], [0], [1], [0, 0, 1, 1], [], []>} : vector<16x1152xbf16>, vector<1152x384xbf16>, vector<16x384xf32> -> vector<16x384xf32>
    %275 = vector.broadcast %260 : vector<1x384xf32> to vector<16x384xf32>
    %276 = arith.addf %274, %275 : vector<16x384xf32>
    %cst_178 = arith.constant 0.000000e+00 : f32
    %277 = vector.broadcast %cst_178 : f32 to vector<16x384xf32>
    %278 = arith.cmpf ogt, %276, %277 : vector<16x384xf32>
    %cst_179 = arith.constant 2.000000e-01 : f32
    %279 = vector.broadcast %cst_179 : f32 to vector<16x384xf32>
    %280 = arith.mulf %279, %276 : vector<16x384xf32>
    %281 = arith.select %278, %276, %280 : vector<16x384xi1>, vector<16x384xf32>
    %c0_180 = arith.constant 0 : index
    %c768_181 = arith.constant 768 : index
    %282 = vector.load %arg19[%c0_180, %c768_181] : memref<16x2304xf32, #tpu.memory_space<vmem>>, vector<16x384xf32>
    tpu.vector_store %arg19[%c0_180, %c768_181], %281 {strides = array<i32>} : memref<16x2304xf32, #tpu.memory_space<vmem>>, vector<16x384xf32>,
    %c0_182 = arith.constant 0 : index
    %c1536_183 = arith.constant 1536 : index
    %283 = vector.load %arg18[%c0_182, %c1536_183] : memref<16x3456xf32, #tpu.memory_space<vmem>>, vector<16x1152xf32>
    %284 = arith.truncf %283 : vector<16x1152xf32> to vector<16x1152xbf16>
    %cst_184 = arith.constant dense<0.000000e+00> : vector<16x384xf32>
    %285 = tpu.matmul %284, %259, %cst_184 {dimension_numbers = #tpu.dot_dimension_numbers<[1], [0], [0], [1], [0, 0, 1, 1], [], []>} : vector<16x1152xbf16>, vector<1152x384xbf16>, vector<16x384xf32> -> vector<16x384xf32>
    %286 = vector.broadcast %260 : vector<1x384xf32> to vector<16x384xf32>
    %287 = arith.addf %285, %286 : vector<16x384xf32>
    %cst_185 = arith.constant 0.000000e+00 : f32
    %288 = vector.broadcast %cst_185 : f32 to vector<16x384xf32>
    %289 = arith.cmpf ogt, %287, %288 : vector<16x384xf32>
    %cst_186 = arith.constant 2.000000e-01 : f32
    %290 = vector.broadcast %cst_186 : f32 to vector<16x384xf32>
    %291 = arith.mulf %290, %287 : vector<16x384xf32>
    %292 = arith.select %289, %287, %291 : vector<16x384xi1>, vector<16x384xf32>
    %c0_187 = arith.constant 0 : index
    %c1152_188 = arith.constant 1152 : index
    %293 = vector.load %arg19[%c0_187, %c1152_188] : memref<16x2304xf32, #tpu.memory_space<vmem>>, vector<16x384xf32>
    tpu.vector_store %arg19[%c0_187, %c1152_188], %292 {strides = array<i32>} : memref<16x2304xf32, #tpu.memory_space<vmem>>, vector<16x384xf32>,
    %c0_189 = arith.constant 0 : index
    %c2304_190 = arith.constant 2304 : index
    %294 = vector.load %arg18[%c0_189, %c2304_190] : memref<16x3456xf32, #tpu.memory_space<vmem>>, vector<16x1152xf32>
    %295 = arith.truncf %294 : vector<16x1152xf32> to vector<16x1152xbf16>
    %cst_191 = arith.constant dense<0.000000e+00> : vector<16x384xf32>
    %296 = tpu.matmul %295, %259, %cst_191 {dimension_numbers = #tpu.dot_dimension_numbers<[1], [0], [0], [1], [0, 0, 1, 1], [], []>} : vector<16x1152xbf16>, vector<1152x384xbf16>, vector<16x384xf32> -> vector<16x384xf32>
    %297 = vector.broadcast %260 : vector<1x384xf32> to vector<16x384xf32>
    %298 = arith.addf %296, %297 : vector<16x384xf32>
    %cst_192 = arith.constant 0.000000e+00 : f32
    %299 = vector.broadcast %cst_192 : f32 to vector<16x384xf32>
    %300 = arith.cmpf ogt, %298, %299 : vector<16x384xf32>
    %cst_193 = arith.constant 2.000000e-01 : f32
    %301 = vector.broadcast %cst_193 : f32 to vector<16x384xf32>
    %302 = arith.mulf %301, %298 : vector<16x384xf32>
    %303 = arith.select %300, %298, %302 : vector<16x384xi1>, vector<16x384xf32>
    %c0_194 = arith.constant 0 : index
    %c1536_195 = arith.constant 1536 : index
    %304 = vector.load %arg19[%c0_194, %c1536_195] : memref<16x2304xf32, #tpu.memory_space<vmem>>, vector<16x384xf32>
    tpu.vector_store %arg19[%c0_194, %c1536_195], %303 {strides = array<i32>} : memref<16x2304xf32, #tpu.memory_space<vmem>>, vector<16x384xf32>,
    %c0_196 = arith.constant 0 : index
    %c0_197 = arith.constant 0 : index
    %305 = vector.load %arg19[%c0_196, %c0_197] : memref<16x2304xf32, #tpu.memory_space<vmem>>, vector<16x2304xf32>
    %cst_198 = arith.constant dense<0.000000e+00> : vector<16xf32>
    %306 = vector.multi_reduction <add>, %305, %cst_198 [1] : vector<16x2304xf32> to vector<16xf32>
    %307 = vector.shape_cast %306 : vector<16xf32> to vector<16x1xf32>
    %cst_199 = arith.constant 9.765625E-4 : f32
    %308 = vector.broadcast %cst_199 : f32 to vector<16x1xf32>
    %309 = arith.mulf %307, %308 : vector<16x1xf32>
    %310 = arith.mulf %305, %305 : vector<16x2304xf32>
    %cst_200 = arith.constant dense<0.000000e+00> : vector<16xf32>
    %311 = vector.multi_reduction <add>, %310, %cst_200 [1] : vector<16x2304xf32> to vector<16xf32>
    %312 = vector.shape_cast %311 : vector<16xf32> to vector<16x1xf32>
    %cst_201 = arith.constant 9.765625E-4 : f32
    %313 = vector.broadcast %cst_201 : f32 to vector<16x1xf32>
    %314 = arith.mulf %312, %313 : vector<16x1xf32>
    %315 = arith.mulf %309, %309 : vector<16x1xf32>
    %316 = arith.subf %314, %315 : vector<16x1xf32>
    %cst_202 = arith.constant 0.000000e+00 : f32
    %317 = vector.broadcast %cst_202 : f32 to vector<16x1xf32>
    %318 = arith.maximumf %316, %317 : vector<16x1xf32>
    %cst_203 = arith.constant 9.99999974E-6 : f32
    %319 = vector.broadcast %cst_203 : f32 to vector<16x1xf32>
    %320 = arith.addf %318, %319 : vector<16x1xf32>
    %321 = math.rsqrt %320 : vector<16x1xf32>
    %322 = vector.broadcast %309 : vector<16x1xf32> to vector<16x2304xf32>
    %323 = arith.subf %305, %322 : vector<16x2304xf32>
    %324 = vector.broadcast %321 : vector<16x1xf32> to vector<16x2304xf32>
    %325 = arith.mulf %323, %324 : vector<16x2304xf32>
    %c0_204 = arith.constant 0 : index
    %c0_205 = arith.constant 0 : index
    %326 = vector.load %arg12[%c0_204, %c0_205] : memref<1x2304xf32, #tpu.memory_space<vmem>>, vector<1x2304xf32>
    %327 = vector.broadcast %326 : vector<1x2304xf32> to vector<16x2304xf32>
    %328 = arith.mulf %325, %327 : vector<16x2304xf32>
    %c0_206 = arith.constant 0 : index
    %c0_207 = arith.constant 0 : index
    %329 = vector.load %arg13[%c0_206, %c0_207] : memref<1x2304xf32, #tpu.memory_space<vmem>>, vector<1x2304xf32>
    %330 = vector.broadcast %329 : vector<1x2304xf32> to vector<16x2304xf32>
    %331 = arith.addf %328, %330 : vector<16x2304xf32>
    %c0_208 = arith.constant 0 : index
    %c0_209 = arith.constant 0 : index
    %332 = vector.load %arg19[%c0_208, %c0_209] : memref<16x2304xf32, #tpu.memory_space<vmem>>, vector<16x2304xf32>
    tpu.vector_store %arg19[%c0_208, %c0_209], %331 {strides = array<i32>} : memref<16x2304xf32, #tpu.memory_space<vmem>>, vector<16x2304xf32>,
    %c0_210 = arith.constant 0 : index
    %c0_211 = arith.constant 0 : index
    %333 = vector.load %arg5[%c0_210, %c0_211] : memref<1152x256xbf16, #tpu.memory_space<vmem>>, vector<1152x256xbf16>
    %c0_212 = arith.constant 0 : index
    %c0_213 = arith.constant 0 : index
    %334 = vector.load %arg9[%c0_212, %c0_213] : memref<1x256xf32, #tpu.memory_space<vmem>>, vector<1x256xf32>
    %c0_214 = arith.constant 0 : index
    %c0_215 = arith.constant 0 : index
    %335 = vector.load %arg19[%c0_214, %c0_215] : memref<16x2304xf32, #tpu.memory_space<vmem>>, vector<16x1152xf32>
    %336 = arith.truncf %335 : vector<16x1152xf32> to vector<16x1152xbf16>
    %cst_216 = arith.constant dense<0.000000e+00> : vector<16x256xf32>
    %337 = tpu.matmul %336, %333, %cst_216 {dimension_numbers = #tpu.dot_dimension_numbers<[1], [0], [0], [1], [0, 0, 1, 1], [], []>} : vector<16x1152xbf16>, vector<1152x256xbf16>, vector<16x256xf32> -> vector<16x256xf32>
    %338 = vector.broadcast %334 : vector<1x256xf32> to vector<16x256xf32>
    %339 = arith.addf %337, %338 : vector<16x256xf32>
    %cst_217 = arith.constant 0.000000e+00 : f32
    %340 = vector.broadcast %cst_217 : f32 to vector<16x256xf32>
    %341 = arith.cmpf ogt, %339, %340 : vector<16x256xf32>
    %cst_218 = arith.constant 2.000000e-01 : f32
    %342 = vector.broadcast %cst_218 : f32 to vector<16x256xf32>
    %343 = arith.mulf %342, %339 : vector<16x256xf32>
    %344 = arith.select %341, %339, %343 : vector<16x256xi1>, vector<16x256xf32>
    %c0_219 = arith.constant 0 : index
    %c0_220 = arith.constant 0 : index
    %345 = vector.load %arg20[%c0_219, %c0_220] : memref<16x512xf32, #tpu.memory_space<vmem>>, vector<16x256xf32>
    tpu.vector_store %arg20[%c0_219, %c0_220], %344 {strides = array<i32>} : memref<16x512xf32, #tpu.memory_space<vmem>>, vector<16x256xf32>,
    %c0_221 = arith.constant 0 : index
    %c768_222 = arith.constant 768 : index
    %346 = vector.load %arg19[%c0_221, %c768_222] : memref<16x2304xf32, #tpu.memory_space<vmem>>, vector<16x1152xf32>
    %347 = arith.truncf %346 : vector<16x1152xf32> to vector<16x1152xbf16>
    %cst_223 = arith.constant dense<0.000000e+00> : vector<16x256xf32>
    %348 = tpu.matmul %347, %333, %cst_223 {dimension_numbers = #tpu.dot_dimension_numbers<[1], [0], [0], [1], [0, 0, 1, 1], [], []>} : vector<16x1152xbf16>, vector<1152x256xbf16>, vector<16x256xf32> -> vector<16x256xf32>
    %349 = vector.broadcast %334 : vector<1x256xf32> to vector<16x256xf32>
    %350 = arith.addf %348, %349 : vector<16x256xf32>
    %cst_224 = arith.constant 0.000000e+00 : f32
    %351 = vector.broadcast %cst_224 : f32 to vector<16x256xf32>
    %352 = arith.cmpf ogt, %350, %351 : vector<16x256xf32>
    %cst_225 = arith.constant 2.000000e-01 : f32
    %353 = vector.broadcast %cst_225 : f32 to vector<16x256xf32>
    %354 = arith.mulf %353, %350 : vector<16x256xf32>
    %355 = arith.select %352, %350, %354 : vector<16x256xi1>, vector<16x256xf32>
    %c0_226 = arith.constant 0 : index
    %c256_227 = arith.constant 256 : index
    %356 = vector.load %arg20[%c0_226, %c256_227] : memref<16x512xf32, #tpu.memory_space<vmem>>, vector<16x256xf32>
    tpu.vector_store %arg20[%c0_226, %c256_227], %355 {strides = array<i32>} : memref<16x512xf32, #tpu.memory_space<vmem>>, vector<16x256xf32>,
    %c0_228 = arith.constant 0 : index
    %c0_229 = arith.constant 0 : index
    %357 = vector.load %arg20[%c0_228, %c0_229] : memref<16x512xf32, #tpu.memory_space<vmem>>, vector<16x512xf32>
    %c0_230 = arith.constant 0 : index
    %c0_231 = arith.constant 0 : index
    %358 = vector.load %arg14[%c0_230, %c0_231] : memref<1x512xf32, #tpu.memory_space<vmem>>, vector<1x512xf32>
    %359 = vector.broadcast %358 : vector<1x512xf32> to vector<16x512xf32>
    %360 = arith.mulf %357, %359 : vector<16x512xf32>
    %cst_232 = arith.constant dense<0.000000e+00> : vector<16xf32>
    %361 = vector.multi_reduction <add>, %360, %cst_232 [1] : vector<16x512xf32> to vector<16xf32>
    %362 = vector.shape_cast %361 : vector<16xf32> to vector<16x1xf32>
    %c0_233 = arith.constant 0 : index
    %c0_234 = arith.constant 0 : index
    %363 = vector.load %arg15[%c0_233, %c0_234] : memref<1x1xf32, #tpu.memory_space<vmem>>, vector<1x1xf32>
    %364 = vector.broadcast %363 : vector<1x1xf32> to vector<16x1xf32>
    %365 = arith.addf %362, %364 : vector<16x1xf32>
    %366 = math.absf %365 : vector<16x1xf32>
    %cst_235 = arith.constant 0.000000e+00 : f32
    %367 = vector.broadcast %cst_235 : f32 to vector<16x1xf32>
    %368 = arith.subf %367, %366 : vector<16x1xf32>
    %c0_236 = arith.constant 0 : index
    %c0_237 = arith.constant 0 : index
    %369 = vector.load %arg16[%c0_236, %c0_237] : memref<16x1xf32, #tpu.memory_space<vmem>>, vector<16x1xf32>
    tpu.vector_store %arg16[%c0_236, %c0_237], %368 {strides = array<i32>} : memref<16x1xf32, #tpu.memory_space<vmem>>, vector<16x1xf32>,
    return
  }
  func.func @transform_0(%arg0: i32) -> (i32, i32) {
    %c0_i32 = arith.constant 0 : i32
    %c0_i32_0 = arith.constant 0 : i32
    return %arg0, %c0_i32 : i32, i32
  }
  func.func @transform_1(%arg0: i32) -> (i32, i32) {
    %c0_i32 = arith.constant 0 : i32
    %c0_i32_0 = arith.constant 0 : i32
    %c0_i32_1 = arith.constant 0 : i32
    return %c0_i32, %c0_i32_0 : i32, i32
  }
  func.func @transform_2(%arg0: i32) -> (i32, i32) {
    %c0_i32 = arith.constant 0 : i32
    %c0_i32_0 = arith.constant 0 : i32
    %c0_i32_1 = arith.constant 0 : i32
    return %c0_i32, %c0_i32_0 : i32, i32
  }
  func.func @transform_3(%arg0: i32) -> (i32, i32) {
    %c0_i32 = arith.constant 0 : i32
    %c0_i32_0 = arith.constant 0 : i32
    %c0_i32_1 = arith.constant 0 : i32
    return %c0_i32, %c0_i32_0 : i32, i32
  }
  func.func @transform_4(%arg0: i32) -> (i32, i32) {
    %c0_i32 = arith.constant 0 : i32
    %c0_i32_0 = arith.constant 0 : i32
    %c0_i32_1 = arith.constant 0 : i32
    return %c0_i32, %c0_i32_0 : i32, i32
  }
  func.func @transform_5(%arg0: i32) -> (i32, i32) {
    %c0_i32 = arith.constant 0 : i32
    %c0_i32_0 = arith.constant 0 : i32
    %c0_i32_1 = arith.constant 0 : i32
    return %c0_i32, %c0_i32_0 : i32, i32
  }
  func.func @transform_6(%arg0: i32) -> (i32, i32) {
    %c0_i32 = arith.constant 0 : i32
    %c0_i32_0 = arith.constant 0 : i32
    %c0_i32_1 = arith.constant 0 : i32
    return %c0_i32, %c0_i32_0 : i32, i32
  }
  func.func @transform_7(%arg0: i32) -> (i32, i32) {
    %c0_i32 = arith.constant 0 : i32
    %c0_i32_0 = arith.constant 0 : i32
    %c0_i32_1 = arith.constant 0 : i32
    return %c0_i32, %c0_i32_0 : i32, i32
  }
  func.func @transform_8(%arg0: i32) -> (i32, i32) {
    %c0_i32 = arith.constant 0 : i32
    %c0_i32_0 = arith.constant 0 : i32
    %c0_i32_1 = arith.constant 0 : i32
    return %c0_i32, %c0_i32_0 : i32, i32
  }
  func.func @transform_9(%arg0: i32) -> (i32, i32) {
    %c0_i32 = arith.constant 0 : i32
    %c0_i32_0 = arith.constant 0 : i32
    %c0_i32_1 = arith.constant 0 : i32
    return %c0_i32, %c0_i32_0 : i32, i32
  }
  func.func @transform_10(%arg0: i32) -> (i32, i32) {
    %c0_i32 = arith.constant 0 : i32
    %c0_i32_0 = arith.constant 0 : i32
    %c0_i32_1 = arith.constant 0 : i32
    return %c0_i32, %c0_i32_0 : i32, i32
  }
  func.func @transform_11(%arg0: i32) -> (i32, i32) {
    %c0_i32 = arith.constant 0 : i32
    %c0_i32_0 = arith.constant 0 : i32
    %c0_i32_1 = arith.constant 0 : i32
    return %c0_i32, %c0_i32_0 : i32, i32
  }
  func.func @transform_12(%arg0: i32) -> (i32, i32) {
    %c0_i32 = arith.constant 0 : i32
    %c0_i32_0 = arith.constant 0 : i32
    %c0_i32_1 = arith.constant 0 : i32
    return %c0_i32, %c0_i32_0 : i32, i32
  }
  func.func @transform_13(%arg0: i32) -> (i32, i32) {
    %c0_i32 = arith.constant 0 : i32
    %c0_i32_0 = arith.constant 0 : i32
    %c0_i32_1 = arith.constant 0 : i32
    return %c0_i32, %c0_i32_0 : i32, i32
  }
  func.func @transform_14(%arg0: i32) -> (i32, i32) {
    %c0_i32 = arith.constant 0 : i32
    %c0_i32_0 = arith.constant 0 : i32
    %c0_i32_1 = arith.constant 0 : i32
    return %c0_i32, %c0_i32_0 : i32, i32
  }
  func.func @transform_15(%arg0: i32) -> (i32, i32) {
    %c0_i32 = arith.constant 0 : i32
    %c0_i32_0 = arith.constant 0 : i32
    return %arg0, %c0_i32 : i32, i32
  }
}

</mosaic_0001>

<llo_original>
// kernel: _lambda_.1
$region0: #{_lambda_.1}
  #allocation0 [shape = 'u32[]', space=smem, size = 0x4, offset = 0x4, fixed_abs, tag = 'smem constant byte address 0x4 - core index']
  #allocation1 [shape = 'u32[72,128]{1,0:T(1,128)}', space=vmem, size = 0x9000, scoped, tag = 'internal scratch']
  #allocation2 [shape = 'f32[16,4096]{1,0:T(8,128)}', space=vmem, size = 0x40000, scoped, tag = 'scratch operand']
  #allocation3 [shape = 'f32[16,3456]{1,0:T(8,128)}', space=vmem, size = 0x36000, scoped, tag = 'scratch operand']
  #allocation4 [shape = 'f32[16,2304]{1,0:T(8,128)}', space=vmem, size = 0x24000, scoped, tag = 'scratch operand']
  #allocation5 [shape = 'f32[16,512]{1,0:T(8,128)}', space=vmem, size = 0x8000, scoped, tag = 'scratch operand']
  #allocation6 [shape = 'f32[1,1]{1,0:T(1,128)S(1)}', space=vmem, size = 0x200, scoped, tag = 'scoped memory for _lambda_.1']
  %s0 = inlined_call_operand.vmem [shape: bf16[32,3840], index: 0, kind: input, shape index: {}]
  %s1 = inlined_call_operand.vmem [shape: bf16[384,256], index: 1, kind: input, shape index: {}]
  %s2 = inlined_call_operand.vmem [shape: bf16[768,384], index: 2, kind: input, shape index: {}]
  %s3 = inlined_call_operand.vmem [shape: bf16[1152,384], index: 3, kind: input, shape index: {}]
  %s4 = inlined_call_operand.vmem [shape: bf16[1152,256], index: 4, kind: input, shape index: {}]
  %s5 = inlined_call_operand.vmem [shape: f32[1,256], index: 5, kind: input, shape index: {}]
  %s6 = inlined_call_operand.vmem [shape: f32[1,384], index: 6, kind: input, shape index: {}]
  %s7 = inlined_call_operand.vmem [shape: f32[1,384], index: 7, kind: input, shape index: {}]
  %s8 = inlined_call_operand.vmem [shape: f32[1,256], index: 8, kind: input, shape index: {}]
  %s9 = inlined_call_operand.vmem [shape: f32[1,3456], index: 9, kind: input, shape index: {}]
  %s10 = inlined_call_operand.vmem [shape: f32[1,3456], index: 10, kind: input, shape index: {}]
  %s11 = inlined_call_operand.vmem [shape: f32[1,2304], index: 11, kind: input, shape index: {}]
  %s12 = inlined_call_operand.vmem [shape: f32[1,2304], index: 12, kind: input, shape index: {}]
  %s13 = inlined_call_operand.vmem [shape: f32[1,512], index: 13, kind: input, shape index: {}]
  %s14 = inlined_call_operand.<no memory space> [shape: f32[1,1], index: 14, kind: input, shape index: {}]
  %s15 = inlined_call_operand.vmem [shape: f32[32,1], index: 15, kind: output, shape index: {}]
  %s16 = sld [smem:[#allocation0]]
  $region93: #{_lambda_.1} parent=0
    _
  %s18 = ssub.s32 1, %s16
  %s19 = scalar_select 0, %s18, %s16
  %v20 = vstv %s14
  %21 = vst [vmem:[#allocation6] sm:$0x1] %v20
  loop: start=0, step=1, limit=4
  $region2: #{_lambda_.1} parent=0 // loop_pre_header
    _
  $region3: #{_lambda_.1} parent=0 // loop_header
    %s23 = sphi 0, %s27
    %p24 = scmp.ge.s32.totalorder %s23, 4
    %s33 = sphi 0, %s35
    %s36 = sphi 0, %s33
    %s37 = sphi 0, %s36
    %s53 = sphi 0, %s37
    %s57 = sphi 0, %s57
    %s59 = sphi 0, %s57
    %s60 = sphi 0, %s59
    %s74 = sphi 0, %s60
    %s78 = sphi 0, %s78
    %s80 = sphi 0, %s78
    %s81 = sphi 0, %s80
    %s95 = sphi 0, %s81
    %s99 = sphi 0, %s99
    %s101 = sphi 0, %s99
    %s102 = sphi 0, %s101
    %s116 = sphi 0, %s102
    %s120 = sphi 0, %s120
    %s122 = sphi 0, %s120
    %s123 = sphi 0, %s122
    %s137 = sphi 0, %s123
    %s141 = sphi 0, %s141
    %s143 = sphi 0, %s141
    %s144 = sphi 0, %s143
    %s158 = sphi 0, %s144
    %s162 = sphi 0, %s162
    %s164 = sphi 0, %s162
    %s165 = sphi 0, %s164
    %s179 = sphi 0, %s165
    %s183 = sphi 0, %s183
    %s185 = sphi 0, %s183
    %s186 = sphi 0, %s185
    %s200 = sphi 0, %s186
    %s204 = sphi 0, %s204
    %s206 = sphi 0, %s204
    %s207 = sphi 0, %s206
    %s221 = sphi 0, %s207
    %s225 = sphi 0, %s225
    %s227 = sphi 0, %s225
    %s228 = sphi 0, %s227
    %s242 = sphi 0, %s228
    %s246 = sphi 0, %s246
    %s248 = sphi 0, %s246
    %s249 = sphi 0, %s248
    %s263 = sphi 0, %s249
    %s267 = sphi 0, %s267
    %s269 = sphi 0, %s267
    %s270 = sphi 0, %s269
    %s284 = sphi 0, %s270
    %s288 = sphi 0, %s288
    %s290 = sphi 0, %s288
    %s291 = sphi 0, %s290
    %s305 = sphi 0, %s291
    %s309 = sphi 0, %s309
    %s311 = sphi 0, %s309
    %s312 = sphi 0, %s311
    %s326 = sphi 0, %s312
    %s330 = sphi 0, %s330
    %s332 = sphi 0, %s330
    %s333 = sphi 0, %s332
    %s347 = sphi 0, %s333
    %s353 = sphi 0, %s355
    %s356 = sphi 0, %s353
    %s357 = sphi 0, %s356
    %s373 = sphi 0, %s357
  $region4: #{_lambda_.1} parent=0 // loop_header_branch
    %26 = sbr.rel (%p24) target = $region8
  $region5: #{_lambda_.1} parent=0 // loop_body
    %s28 = ssub.s32 %s23, 1
    %s29 = ssub.s32 %s23, 2
    %s30 = sadd.s32 %s23, 1
    %s31 = ssub.s32 %s23, %s30
    %p32 = scmp.eq.s32.totalorder %s31, 0
    %s34 = sadd.s32 %s33, 1
    %s35 = scalar_select %p32, %s33, %s34
    %p38 = pneg %p32
    %p39 = scmp.eq.s32.totalorder %s23, 1
    %p40 = por %p38, %p39
    %p41 = scmp.ne.s32.totalorder %s33, %s36
    %p42 = scmp.eq.s32.totalorder %s23, 0
    %p43 = por %p41, %p42
    %p44 = scmp.ne.s32.totalorder %s33, %s36
    %p45 = scmp.eq.s32.totalorder %s28, 1
    %p46 = por %p44, %p45
    %p47 = scmp.ne.s32.totalorder %s36, %s37
    %p48 = scmp.eq.s32.totalorder %s28, 0
    %p49 = por %p47, %p48
    %p50 = scmp.ne.s32.totalorder %s36, %s37
    %p51 = scmp.eq.s32.totalorder %s29, 1
    %p52 = por %p50, %p51
    %p54 = scmp.ne.s32.totalorder %s37, %s53
    %p55 = scmp.eq.s32.totalorder %s29, 0
    %p56 = por %p54, %p55
    %s58 = sadd.s32 %s57, 1
    %p61 = scmp.eq.s32.totalorder %s23, 1
    %p62 = scmp.ne.s32.totalorder %s57, %s59
    %p63 = scmp.eq.s32.totalorder %s23, 0
    %p64 = por %p62, %p63
    %p65 = scmp.ne.s32.totalorder %s57, %s59
    %p66 = scmp.eq.s32.totalorder %s28, 1
    %p67 = por %p65, %p66
    %p68 = scmp.ne.s32.totalorder %s59, %s60
    %p69 = scmp.eq.s32.totalorder %s28, 0
    %p70 = por %p68, %p69
    %p71 = scmp.ne.s32.totalorder %s59, %s60
    %p72 = scmp.eq.s32.totalorder %s29, 1
    %p73 = por %p71, %p72
    %p75 = scmp.ne.s32.totalorder %s60, %s74
    %p76 = scmp.eq.s32.totalorder %s29, 0
    %p77 = por %p75, %p76
    %s79 = sadd.s32 %s78, 1
    %p82 = scmp.eq.s32.totalorder %s23, 1
    %p83 = scmp.ne.s32.totalorder %s78, %s80
    %p84 = scmp.eq.s32.totalorder %s23, 0
    %p85 = por %p83, %p84
    %p86 = scmp.ne.s32.totalorder %s78, %s80
    %p87 = scmp.eq.s32.totalorder %s28, 1
    %p88 = por %p86, %p87
    %p89 = scmp.ne.s32.totalorder %s80, %s81
    %p90 = scmp.eq.s32.totalorder %s28, 0
    %p91 = por %p89, %p90
    %p92 = scmp.ne.s32.totalorder %s80, %s81
    %p93 = scmp.eq.s32.totalorder %s29, 1
    %p94 = por %p92, %p93
    %p96 = scmp.ne.s32.totalorder %s81, %s95
    %p97 = scmp.eq.s32.totalorder %s29, 0
    %p98 = por %p96, %p97
    %s100 = sadd.s32 %s99, 1
    %p103 = scmp.eq.s32.totalorder %s23, 1
    %p104 = scmp.ne.s32.totalorder %s99, %s101
    %p105 = scmp.eq.s32.totalorder %s23, 0
    %p106 = por %p104, %p105
    %p107 = scmp.ne.s32.totalorder %s99, %s101
    %p108 = scmp.eq.s32.totalorder %s28, 1
    %p109 = por %p107, %p108
    %p110 = scmp.ne.s32.totalorder %s101, %s102
    %p111 = scmp.eq.s32.totalorder %s28, 0
    %p112 = por %p110, %p111
    %p113 = scmp.ne.s32.totalorder %s101, %s102
    %p114 = scmp.eq.s32.totalorder %s29, 1
    %p115 = por %p113, %p114
    %p117 = scmp.ne.s32.totalorder %s102, %s116
    %p118 = scmp.eq.s32.totalorder %s29, 0
    %p119 = por %p117, %p118
    %s121 = sadd.s32 %s120, 1
    %p124 = scmp.eq.s32.totalorder %s23, 1
    %p125 = scmp.ne.s32.totalorder %s120, %s122
    %p126 = scmp.eq.s32.totalorder %s23, 0
    %p127 = por %p125, %p126
    %p128 = scmp.ne.s32.totalorder %s120, %s122
    %p129 = scmp.eq.s32.totalorder %s28, 1
    %p130 = por %p128, %p129
    %p131 = scmp.ne.s32.totalorder %s122, %s123
    %p132 = scmp.eq.s32.totalorder %s28, 0
    %p133 = por %p131, %p132
    %p134 = scmp.ne.s32.totalorder %s122, %s123
    %p135 = scmp.eq.s32.totalorder %s29, 1
    %p136 = por %p134, %p135
    %p138 = scmp.ne.s32.totalorder %s123, %s137
    %p139 = scmp.eq.s32.totalorder %s29, 0
    %p140 = por %p138, %p139
    %s142 = sadd.s32 %s141, 1
    %p145 = scmp.eq.s32.totalorder %s23, 1
    %p146 = scmp.ne.s32.totalorder %s141, %s143
    %p147 = scmp.eq.s32.totalorder %s23, 0
    %p148 = por %p146, %p147
    %p149 = scmp.ne.s32.totalorder %s141, %s143
    %p150 = scmp.eq.s32.totalorder %s28, 1
    %p151 = por %p149, %p150
    %p152 = scmp.ne.s32.totalorder %s143, %s144
    %p153 = scmp.eq.s32.totalorder %s28, 0
    %p154 = por %p152, %p153
    %p155 = scmp.ne.s32.totalorder %s143, %s144
    %p156 = scmp.eq.s32.totalorder %s29, 1
    %p157 = por %p155, %p156
    %p159 = scmp.ne.s32.totalorder %s144, %s158
    %p160 = scmp.eq.s32.totalorder %s29, 0
    %p161 = por %p159, %p160
    %s163 = sadd.s32 %s162, 1
    %p166 = scmp.eq.s32.totalorder %s23, 1
    %p167 = scmp.ne.s32.totalorder %s162, %s164
    %p168 = scmp.eq.s32.totalorder %s23, 0
    %p169 = por %p167, %p168
    %p170 = scmp.ne.s32.totalorder %s162, %s164
    %p171 = scmp.eq.s32.totalorder %s28, 1
    %p172 = por %p170, %p171
    %p173 = scmp.ne.s32.totalorder %s164, %s165
    %p174 = scmp.eq.s32.totalorder %s28, 0
    %p175 = por %p173, %p174
    %p176 = scmp.ne.s32.totalorder %s164, %s165
    %p177 = scmp.eq.s32.totalorder %s29, 1
    %p178 = por %p176, %p177
    %p180 = scmp.ne.s32.totalorder %s165, %s179
    %p181 = scmp.eq.s32.totalorder %s29, 0
    %p182 = por %p180, %p181
    %s184 = sadd.s32 %s183, 1
    %p187 = scmp.eq.s32.totalorder %s23, 1
    %p188 = scmp.ne.s32.totalorder %s183, %s185
    %p189 = scmp.eq.s32.totalorder %s23, 0
    %p190 = por %p188, %p189
    %p191 = scmp.ne.s32.totalorder %s183, %s185
    %p192 = scmp.eq.s32.totalorder %s28, 1
    %p193 = por %p191, %p192
    %p194 = scmp.ne.s32.totalorder %s185, %s186
    %p195 = scmp.eq.s32.totalorder %s28, 0
    %p196 = por %p194, %p195
    %p197 = scmp.ne.s32.totalorder %s185, %s186
    %p198 = scmp.eq.s32.totalorder %s29, 1
    %p199 = por %p197, %p198
    %p201 = scmp.ne.s32.totalorder %s186, %s200
    %p202 = scmp.eq.s32.totalorder %s29, 0
    %p203 = por %p201, %p202
    %s205 = sadd.s32 %s204, 1
    %p208 = scmp.eq.s32.totalorder %s23, 1
    %p209 = scmp.ne.s32.totalorder %s204, %s206
    %p210 = scmp.eq.s32.totalorder %s23, 0
    %p211 = por %p209, %p210
    %p212 = scmp.ne.s32.totalorder %s204, %s206
    %p213 = scmp.eq.s32.totalorder %s28, 1
    %p214 = por %p212, %p213
    %p215 = scmp.ne.s32.totalorder %s206, %s207
    %p216 = scmp.eq.s32.totalorder %s28, 0
    %p217 = por %p215, %p216
    %p218 = scmp.ne.s32.totalorder %s206, %s207
    %p219 = scmp.eq.s32.totalorder %s29, 1
    %p220 = por %p218, %p219
    %p222 = scmp.ne.s32.totalorder %s207, %s221
    %p223 = scmp.eq.s32.totalorder %s29, 0
    %p224 = por %p222, %p223
    %s226 = sadd.s32 %s225, 1
    %p229 = scmp.eq.s32.totalorder %s23, 1
    %p230 = scmp.ne.s32.totalorder %s225, %s227
    %p231 = scmp.eq.s32.totalorder %s23, 0
    %p232 = por %p230, %p231
    %p233 = scmp.ne.s32.totalorder %s225, %s227
    %p234 = scmp.eq.s32.totalorder %s28, 1
    %p235 = por %p233, %p234
    %p236 = scmp.ne.s32.totalorder %s227, %s228
    %p237 = scmp.eq.s32.totalorder %s28, 0
    %p238 = por %p236, %p237
    %p239 = scmp.ne.s32.totalorder %s227, %s228
    %p240 = scmp.eq.s32.totalorder %s29, 1
    %p241 = por %p239, %p240
    %p243 = scmp.ne.s32.totalorder %s228, %s242
    %p244 = scmp.eq.s32.totalorder %s29, 0
    %p245 = por %p243, %p244
    %s247 = sadd.s32 %s246, 1
    %p250 = scmp.eq.s32.totalorder %s23, 1
    %p251 = scmp.ne.s32.totalorder %s246, %s248
    %p252 = scmp.eq.s32.totalorder %s23, 0
    %p253 = por %p251, %p252
    %p254 = scmp.ne.s32.totalorder %s246, %s248
    %p255 = scmp.eq.s32.totalorder %s28, 1
    %p256 = por %p254, %p255
    %p257 = scmp.ne.s32.totalorder %s248, %s249
    %p258 = scmp.eq.s32.totalorder %s28, 0
    %p259 = por %p257, %p258
    %p260 = scmp.ne.s32.totalorder %s248, %s249
    %p261 = scmp.eq.s32.totalorder %s29, 1
    %p262 = por %p260, %p261
    %p264 = scmp.ne.s32.totalorder %s249, %s263
    %p265 = scmp.eq.s32.totalorder %s29, 0
    %p266 = por %p264, %p265
    %s268 = sadd.s32 %s267, 1
    %p271 = scmp.eq.s32.totalorder %s23, 1
    %p272 = scmp.ne.s32.totalorder %s267, %s269
    %p273 = scmp.eq.s32.totalorder %s23, 0
    %p274 = por %p272, %p273
    %p275 = scmp.ne.s32.totalorder %s267, %s269
    %p276 = scmp.eq.s32.totalorder %s28, 1
    %p277 = por %p275, %p276
    %p278 = scmp.ne.s32.totalorder %s269, %s270
    %p279 = scmp.eq.s32.totalorder %s28, 0
    %p280 = por %p278, %p279
    %p281 = scmp.ne.s32.totalorder %s269, %s270
    %p282 = scmp.eq.s32.totalorder %s29, 1
    %p283 = por %p281, %p282
    %p285 = scmp.ne.s32.totalorder %s270, %s284
    %p286 = scmp.eq.s32.totalorder %s29, 0
    %p287 = por %p285, %p286
    %s289 = sadd.s32 %s288, 1
    %p292 = scmp.eq.s32.totalorder %s23, 1
    %p293 = scmp.ne.s32.totalorder %s288, %s290
    %p294 = scmp.eq.s32.totalorder %s23, 0
    %p295 = por %p293, %p294
    %p296 = scmp.ne.s32.totalorder %s288, %s290
    %p297 = scmp.eq.s32.totalorder %s28, 1
    %p298 = por %p296, %p297
    %p299 = scmp.ne.s32.totalorder %s290, %s291
    %p300 = scmp.eq.s32.totalorder %s28, 0
    %p301 = por %p299, %p300
    %p302 = scmp.ne.s32.totalorder %s290, %s291
    %p303 = scmp.eq.s32.totalorder %s29, 1
    %p304 = por %p302, %p303
    %p306 = scmp.ne.s32.totalorder %s291, %s305
    %p307 = scmp.eq.s32.totalorder %s29, 0
    %p308 = por %p306, %p307
    %s310 = sadd.s32 %s309, 1
    %p313 = scmp.eq.s32.totalorder %s23, 1
    %p314 = scmp.ne.s32.totalorder %s309, %s311
    %p315 = scmp.eq.s32.totalorder %s23, 0
    %p316 = por %p314, %p315
    %p317 = scmp.ne.s32.totalorder %s309, %s311
    %p318 = scmp.eq.s32.totalorder %s28, 1
    %p319 = por %p317, %p318
    %p320 = scmp.ne.s32.totalorder %s311, %s312
    %p321 = scmp.eq.s32.totalorder %s28, 0
    %p322 = por %p320, %p321
    %p323 = scmp.ne.s32.totalorder %s311, %s312
    %p324 = scmp.eq.s32.totalorder %s29, 1
    %p325 = por %p323, %p324
    %p327 = scmp.ne.s32.totalorder %s312, %s326
    %p328 = scmp.eq.s32.totalorder %s29, 0
    %p329 = por %p327, %p328
    %s331 = sadd.s32 %s330, 1
    %p334 = scmp.eq.s32.totalorder %s23, 1
    %p335 = scmp.ne.s32.totalorder %s330, %s332
    %p336 = scmp.eq.s32.totalorder %s23, 0
    %p337 = por %p335, %p336
    %p338 = scmp.ne.s32.totalorder %s330, %s332
    %p339 = scmp.eq.s32.totalorder %s28, 1
    %p340 = por %p338, %p339
    %p341 = scmp.ne.s32.totalorder %s332, %s333
    %p342 = scmp.eq.s32.totalorder %s28, 0
    %p343 = por %p341, %p342
    %p344 = scmp.ne.s32.totalorder %s332, %s333
    %p345 = scmp.eq.s32.totalorder %s29, 1
    %p346 = por %p344, %p345
    %p348 = scmp.ne.s32.totalorder %s333, %s347
    %p349 = scmp.eq.s32.totalorder %s29, 0
    %p350 = por %p348, %p349
    %s351 = ssub.s32 %s23, %s30
    %p352 = scmp.eq.s32.totalorder %s351, 0
    %s354 = sadd.s32 %s353, 1
    %s355 = scalar_select %p352, %s353, %s354
    %p358 = pneg %p352
    %p359 = scmp.eq.s32.totalorder %s23, 1
    %p360 = por %p358, %p359
    %p361 = scmp.ne.s32.totalorder %s353, %s356
    %p362 = scmp.eq.s32.totalorder %s23, 0
    %p363 = por %p361, %p362
    %p364 = scmp.ne.s32.totalorder %s353, %s356
    %p365 = scmp.eq.s32.totalorder %s28, 1
    %p366 = por %p364, %p365
    %p367 = scmp.ne.s32.totalorder %s356, %s357
    %p368 = scmp.eq.s32.totalorder %s28, 0
    %p369 = por %p367, %p368
    %p370 = scmp.ne.s32.totalorder %s356, %s357
    %p371 = scmp.eq.s32.totalorder %s29, 1
    %p372 = por %p370, %p371
    %p374 = scmp.ne.s32.totalorder %s357, %s373
    %p375 = scmp.eq.s32.totalorder %s29, 0
    %p376 = por %p374, %p375
    %p377 = scmp.le.s32.totalorder 1, %s23
    %p378 = scmp.lt.s32.totalorder %s23, 3
    %p379 = pnand %p377, %p378
    %p380 = pneg %p379
    // Predicated region
    $region9: #{_lambda_.1} parent=5 // pred_check
      _
    $region10: #{_lambda_.1} parent=5 // pred_check_branch
      %382 = sbr.rel (%p379) target = $region12
    $region11: #{_lambda_.1} parent=5 // pred_region
      %s383 = ssub.s32 %s23, 1
      // Predicated region
      $region13: #{_lambda_.1} parent=11 // pred_check
        %p384 = pneg %p70
      $region14: #{_lambda_.1} parent=11 // pred_check_branch
        %386 = sbr.rel (%p384) target = $region16
      $region15: #{_lambda_.1} parent=11 // pred_region
        _
      $region16: #{_lambda_.1} parent=11 // pred_fallthru
        _
      // Predicated region
      $region17: #{_lambda_.1} parent=11 // pred_check
        %p387 = pneg %p91
      $region18: #{_lambda_.1} parent=11 // pred_check_branch
        %389 = sbr.rel (%p387) target = $region20
      $region19: #{_lambda_.1} parent=11 // pred_region
        _
      $region20: #{_lambda_.1} parent=11 // pred_fallthru
        _
      // Predicated region
      $region21: #{_lambda_.1} parent=11 // pred_check
        %p390 = pneg %p112
      $region22: #{_lambda_.1} parent=11 // pred_check_branch
        %392 = sbr.rel (%p390) target = $region24
      $region23: #{_lambda_.1} parent=11 // pred_region
        _
      $region24: #{_lambda_.1} parent=11 // pred_fallthru
        _
      // Predicated region
      $region25: #{_lambda_.1} parent=11 // pred_check
        %p393 = pneg %p133
      $region26: #{_lambda_.1} parent=11 // pred_check_branch
        %395 = sbr.rel (%p393) target = $region28
      $region27: #{_lambda_.1} parent=11 // pred_region
        _
      $region28: #{_lambda_.1} parent=11 // pred_fallthru
        _
      // Predicated region
      $region29: #{_lambda_.1} parent=11 // pred_check
        %p396 = pneg %p154
      $region30: #{_lambda_.1} parent=11 // pred_check_branch
        %398 = sbr.rel (%p396) target = $region32
      $region31: #{_lambda_.1} parent=11 // pred_region
        _
      $region32: #{_lambda_.1} parent=11 // pred_fallthru
        _
      // Predicated region
      $region33: #{_lambda_.1} parent=11 // pred_check
        %p399 = pneg %p175
      $region34: #{_lambda_.1} parent=11 // pred_check_branch
        %401 = sbr.rel (%p399) target = $region36
      $region35: #{_lambda_.1} parent=11 // pred_region
        _
      $region36: #{_lambda_.1} parent=11 // pred_fallthru
        _
      // Predicated region
      $region37: #{_lambda_.1} parent=11 // pred_check
        %p402 = pneg %p196
      $region38: #{_lambda_.1} parent=11 // pred_check_branch
        %404 = sbr.rel (%p402) target = $region40
      $region39: #{_lambda_.1} parent=11 // pred_region
        _
      $region40: #{_lambda_.1} parent=11 // pred_fallthru
        _
      // Predicated region
      $region41: #{_lambda_.1} parent=11 // pred_check
        %p405 = pneg %p217
      $region42: #{_lambda_.1} parent=11 // pred_check_branch
        %407 = sbr.rel (%p405) target = $region44
      $region43: #{_lambda_.1} parent=11 // pred_region
        _
      $region44: #{_lambda_.1} parent=11 // pred_fallthru
        _
      // Predicated region
      $region45: #{_lambda_.1} parent=11 // pred_check
        %p408 = pneg %p238
      $region46: #{_lambda_.1} parent=11 // pred_check_branch
        %410 = sbr.rel (%p408) target = $region48
      $region47: #{_lambda_.1} parent=11 // pred_region
        _
      $region48: #{_lambda_.1} parent=11 // pred_fallthru
        _
      // Predicated region
      $region49: #{_lambda_.1} parent=11 // pred_check
        %p411 = pneg %p259
      $region50: #{_lambda_.1} parent=11 // pred_check_branch
        %413 = sbr.rel (%p411) target = $region52
      $region51: #{_lambda_.1} parent=11 // pred_region
        _
      $region52: #{_lambda_.1} parent=11 // pred_fallthru
        _
      // Predicated region
      $region53: #{_lambda_.1} parent=11 // pred_check
        %p414 = pneg %p280
      $region54: #{_lambda_.1} parent=11 // pred_check_branch
        %416 = sbr.rel (%p414) target = $region56
      $region55: #{_lambda_.1} parent=11 // pred_region
        _
      $region56: #{_lambda_.1} parent=11 // pred_fallthru
        _
      // Predicated region
      $region57: #{_lambda_.1} parent=11 // pred_check
        %p417 = pneg %p301
      $region58: #{_lambda_.1} parent=11 // pred_check_branch
        %419 = sbr.rel (%p417) target = $region60
      $region59: #{_lambda_.1} parent=11 // pred_region
        _
      $region60: #{_lambda_.1} parent=11 // pred_fallthru
        _
      // Predicated region
      $region61: #{_lambda_.1} parent=11 // pred_check
        %p420 = pneg %p322
      $region62: #{_lambda_.1} parent=11 // pred_check_branch
        %422 = sbr.rel (%p420) target = $region64
      $region63: #{_lambda_.1} parent=11 // pred_region
        _
      $region64: #{_lambda_.1} parent=11 // pred_fallthru
        _
      // Predicated region
      $region65: #{_lambda_.1} parent=11 // pred_check
        %p423 = pneg %p343
      $region66: #{_lambda_.1} parent=11 // pred_check_branch
        %425 = sbr.rel (%p423) target = $region68
      $region67: #{_lambda_.1} parent=11 // pred_region
        _
      $region68: #{_lambda_.1} parent=11 // pred_fallthru
        _
    $region12: #{_lambda_.1} parent=5 // pred_fallthru
      _
    %p426 = scmp.lt.s32.totalorder %s23, 2
    // Predicated region
    $region69: #{_lambda_.1} parent=5 // pred_check
      %p427 = pneg %p426
    $region70: #{_lambda_.1} parent=5 // pred_check_branch
      %429 = sbr.rel (%p427) target = $region72
    $region71: #{_lambda_.1} parent=5 // pred_region
      // Predicated region
      $region73: #{_lambda_.1} parent=71 // pred_check
        %p430 = pneg %p43
      $region74: #{_lambda_.1} parent=71 // pred_check_branch
        %432 = sbr.rel (%p430) target = $region76
      $region75: #{_lambda_.1} parent=71 // pred_region
        %s433 = smul.u32 2, %s23
        %p434 = scmp.lt.s32.totalorder %s433, 3
        %s435 = scalar_select %p434, %s433, 3
        %s436 = smul.addr %s435, 30
        %s437 = smul.addr %s436, 4
        %s438 = scalar_lea.vmem %s0, %s437
        %s439 = smul.u32 2, %s23
      $region76: #{_lambda_.1} parent=71 // pred_fallthru
        _
    $region72: #{_lambda_.1} parent=5 // pred_fallthru
      _
    %p440 = scmp.le.s32.totalorder 1, %s23
    %p441 = scmp.lt.s32.totalorder %s23, 3
    %p442 = pnand %p440, %p441
    %p443 = pneg %p442
    // Predicated region
    $region77: #{_lambda_.1} parent=5 // pred_check
      _
    $region78: #{_lambda_.1} parent=5 // pred_check_branch
      %445 = sbr.rel (%p442) target = $region80
    $region79: #{_lambda_.1} parent=5 // pred_region
      %s446 = ssub.s32 %s23, 1
      %s447 = smul.u32 2, %s28
      %p448 = scmp.lt.s32.totalorder %s447, 3
      %s449 = scalar_select %p448, %s447, 3
      %s450 = smul.addr %s449, 30
      %s451 = smul.addr %s450, 4
      %s452 = scalar_lea.vmem %s0, %s451
      %p453 = pneg %p49
      %p454 = pneg %p46
      %p455 = pneg %p70
      %p456 = pneg %p67
      %p457 = pneg %p91
      %p458 = pneg %p88
      %p459 = pneg %p112
      %p460 = pneg %p109
      %p461 = pneg %p133
      %p462 = pneg %p130
      %p463 = pneg %p154
      %p464 = pneg %p151
      %p465 = pneg %p175
      %p466 = pneg %p172
      %p467 = pneg %p196
      %p468 = pneg %p193
      %p469 = pneg %p217
      %p470 = pneg %p214
      %p471 = pneg %p238
      %p472 = pneg %p235
      %p473 = pneg %p259
      %p474 = pneg %p256
      %p475 = pneg %p280
      %p476 = pneg %p277
      %p477 = pneg %p301
      %p478 = pneg %p298
      %p479 = pneg %p322
      %p480 = pneg %p319
      %p481 = pneg %p343
      %p482 = pneg %p340
      %p483 = pneg %p369
      %p484 = pneg %p366
      %s485 = smul.u32 2, %s28
      %p486 = scmp.lt.s32.totalorder %s485, 3
      %s487 = scalar_select %p486, %s485, 3
      %s488 = smul.addr %s487, 8
      %s489 = scalar_lea.vmem %s15, %s488
      %s490 = smul.u32 2, %s28
      %p491 = scmp.lt.s32.totalorder %s490, 3
      %s492 = scalar_select %p491, %s490, 3
      %s493 = smul.addr %s492, 30
      %s494 = smul.addr %s493, 4
      %s495 = scalar_lea.vmem %s0, %s494
      %s496 = smul.u32 2, %s28
      %s497 = smul.u32 2, %s28
      %p498 = scmp.lt.s32.totalorder %s497, 3
      %s499 = scalar_select %p498, %s497, 3
      %s500 = smul.addr %s499, 8
      %s501 = scalar_lea.vmem %s15, %s500
      %s502 = smul.u32 2, %s28
      %503 = vst [vmem:[#allocation2] sm:$0xff] 0.0
      %504 = vst [vmem:[#allocation2 + $0x8] sm:$0xff] 0.0
      %505 = vst [vmem:[#allocation2 + $0x100] sm:$0xff] 0.0
      %506 = vst [vmem:[#allocation2 + $0x108] sm:$0xff] 0.0
      %507 = vst [vmem:[#allocation3] sm:$0xff] 0.0
      %508 = vst [vmem:[#allocation3 + $0x8] sm:$0xff] 0.0
      %509 = vst [vmem:[#allocation3 + $0x10] sm:$0xff] 0.0
      %510 = vst [vmem:[#allocation3 + $0xd8] sm:$0xff] 0.0
      %511 = vst [vmem:[#allocation3 + $0xe0] sm:$0xff] 0.0
      %512 = vst [vmem:[#allocation3 + $0xe8] sm:$0xff] 0.0
      %513 = vst [vmem:[#allocation3 + $0xc0] sm:$0xff] 0.0
      %514 = vst [vmem:[#allocation3 + $0xc8] sm:$0xff] 0.0
      %515 = vst [vmem:[#allocation3 + $0xd0] sm:$0xff] 0.0
      %516 = vst [vmem:[#allocation3 + $0x198] sm:$0xff] 0.0
      %517 = vst [vmem:[#allocation3 + $0x1a0] sm:$0xff] 0.0
      %518 = vst [vmem:[#allocation3 + $0x1a8] sm:$0xff] 0.0
      %519 = vst [vmem:[#allocation4] sm:$0xff] 0.0
      %520 = vst [vmem:[#allocation4 + $0x8] sm:$0xff] 0.0
      %521 = vst [vmem:[#allocation4 + $0x10] sm:$0xff] 0.0
      %522 = vst [vmem:[#allocation4 + $0x90] sm:$0xff] 0.0
      %523 = vst [vmem:[#allocation4 + $0x98] sm:$0xff] 0.0
      %524 = vst [vmem:[#allocation4 + $0xa0] sm:$0xff] 0.0
      %525 = vst [vmem:[#allocation4 + $0x78] sm:$0xff] 0.0
      %526 = vst [vmem:[#allocation4 + $0x80] sm:$0xff] 0.0
      %527 = vst [vmem:[#allocation4 + $0x88] sm:$0xff] 0.0
      %528 = vst [vmem:[#allocation4 + $0x108] sm:$0xff] 0.0
      %529 = vst [vmem:[#allocation4 + $0x110] sm:$0xff] 0.0
      %530 = vst [vmem:[#allocation4 + $0x118] sm:$0xff] 0.0
      %v531 = vld [vmem:[%s1] sm:$0xff]
      %v532 = vld [vmem:[%s1 + $0x8] sm:$0xff]
      %v533 = vld [vmem:[%s1 + $0x10] sm:$0xff]
      %v534 = vld [vmem:[%s1 + $0x18] sm:$0xff]
      %v535 = vld [vmem:[%s1 + $0x20] sm:$0xff]
      %v536 = vld [vmem:[%s1 + $0x28] sm:$0xff]
      %v537 = vld [vmem:[%s1 + $0x30] sm:$0xff]
      %v538 = vld [vmem:[%s1 + $0x38] sm:$0xff]
      %v539 = vld [vmem:[%s1 + $0x40] sm:$0xff]
      %v540 = vld [vmem:[%s1 + $0x48] sm:$0xff]
      %v541 = vld [vmem:[%s1 + $0x50] sm:$0xff]
      %v542 = vld [vmem:[%s1 + $0x58] sm:$0xff]
      %v543 = vld [vmem:[%s1 + $0x60] sm:$0xff]
      %v544 = vld [vmem:[%s1 + $0x68] sm:$0xff]
      %v545 = vld [vmem:[%s1 + $0x70] sm:$0xff]
      %v546 = vld [vmem:[%s1 + $0x78] sm:$0xff]
      %v547 = vld [vmem:[%s1 + $0x80] sm:$0xff]
      %v548 = vld [vmem:[%s1 + $0x88] sm:$0xff]
      %v549 = vld [vmem:[%s1 + $0x90] sm:$0xff]
      %v550 = vld [vmem:[%s1 + $0x98] sm:$0xff]
      %v551 = vld [vmem:[%s1 + $0xa0] sm:$0xff]
      %v552 = vld [vmem:[%s1 + $0xa8] sm:$0xff]
      %v553 = vld [vmem:[%s1 + $0xb0] sm:$0xff]
      %v554 = vld [vmem:[%s1 + $0xb8] sm:$0xff]
      %v555 = vld [vmem:[%s1 + $0xc0] sm:$0xff]
      %v556 = vld [vmem:[%s1 + $0xc8] sm:$0xff]
      %v557 = vld [vmem:[%s1 + $0xd0] sm:$0xff]
      %v558 = vld [vmem:[%s1 + $0xd8] sm:$0xff]
      %v559 = vld [vmem:[%s1 + $0xe0] sm:$0xff]
      %v560 = vld [vmem:[%s1 + $0xe8] sm:$0xff]
      %v561 = vld [vmem:[%s1 + $0xf0] sm:$0xff]
      %v562 = vld [vmem:[%s1 + $0xf8] sm:$0xff]
      %v563 = vld [vmem:[%s1 + $0x100] sm:$0xff]
      %v564 = vld [vmem:[%s1 + $0x108] sm:$0xff]
      %v565 = vld [vmem:[%s1 + $0x110] sm:$0xff]
      %v566 = vld [vmem:[%s1 + $0x118] sm:$0xff]
      %v567 = vld [vmem:[%s1 + $0x120] sm:$0xff]
      %v568 = vld [vmem:[%s1 + $0x128] sm:$0xff]
      %v569 = vld [vmem:[%s1 + $0x130] sm:$0xff]
      %v570 = vld [vmem:[%s1 + $0x138] sm:$0xff]
      %v571 = vld [vmem:[%s1 + $0x140] sm:$0xff]
      %v572 = vld [vmem:[%s1 + $0x148] sm:$0xff]
      %v573 = vld [vmem:[%s1 + $0x150] sm:$0xff]
      %v574 = vld [vmem:[%s1 + $0x158] sm:$0xff]
      %v575 = vld [vmem:[%s1 + $0x160] sm:$0xff]
      %v576 = vld [vmem:[%s1 + $0x168] sm:$0xff]
      %v577 = vld [vmem:[%s1 + $0x170] sm:$0xff]
      %v578 = vld [vmem:[%s1 + $0x178] sm:$0xff]
      %v579 = vld [vmem:[%s5] sm:$0x3]
      %v580 = vld [vmem:[%s495] sm:$0xff]
      %v581 = vld [vmem:[%s495 + $0x8] sm:$0xf]
      %v582 = vld [vmem:[%s495 + $0x78] sm:$0xff]
      %v583 = vld [vmem:[%s495 + $0x80] sm:$0xf]
      %v585 = vperm.slane %v579, 0
      %v586 = vperm.slane %v579, 1
      %v593 = vunpack.c.l.b16 %v580
      %v594 = vunpack.c.h.b16 %v580
      %v595 = vunpack.c.l.b16 %v581
      %v596 = vunpack.c.l.b16 %v582
      %v597 = vunpack.c.h.b16 %v582
      %v598 = vunpack.c.l.b16 %v583
      %v599 = vpack.c.b16 %v596, %v593
      %v600 = vpack.c.b16 %v597, %v594
      %v601 = vpack.c.b16 %v598, %v595
      %v653 = vunpack.c.l.b16 %v531
      %v654 = vunpack.c.h.b16 %v531
      %v655 = vunpack.c.l.b16 %v532
      %v656 = vunpack.c.h.b16 %v532
      %v657 = vunpack.c.l.b16 %v533
      %v658 = vunpack.c.h.b16 %v533
      %v659 = vunpack.c.l.b16 %v534
      %v660 = vunpack.c.h.b16 %v534
      %v661 = vunpack.c.l.b16 %v535
      %v662 = vunpack.c.h.b16 %v535
      %v663 = vunpack.c.l.b16 %v536
      %v664 = vunpack.c.h.b16 %v536
      %v665 = vunpack.c.l.b16 %v537
      %v666 = vunpack.c.h.b16 %v537
      %v667 = vunpack.c.l.b16 %v538
      %v668 = vunpack.c.h.b16 %v538
      %v669 = vunpack.c.l.b16 %v539
      %v670 = vunpack.c.h.b16 %v539
      %v671 = vunpack.c.l.b16 %v540
      %v672 = vunpack.c.h.b16 %v540
      %v673 = vunpack.c.l.b16 %v541
      %v674 = vunpack.c.h.b16 %v541
      %v675 = vunpack.c.l.b16 %v542
      %v676 = vunpack.c.h.b16 %v542
      %v677 = vunpack.c.l.b16 %v543
      %v678 = vunpack.c.h.b16 %v543
      %v679 = vunpack.c.l.b16 %v544
      %v680 = vunpack.c.h.b16 %v544
      %v681 = vunpack.c.l.b16 %v545
      %v682 = vunpack.c.h.b16 %v545
      %v683 = vunpack.c.l.b16 %v546
      %v684 = vunpack.c.h.b16 %v546
      %v685 = vunpack.c.l.b16 %v547
      %v686 = vunpack.c.h.b16 %v547
      %v687 = vunpack.c.l.b16 %v548
      %v688 = vunpack.c.h.b16 %v548
      %v689 = vunpack.c.l.b16 %v549
      %v690 = vunpack.c.h.b16 %v549
      %v691 = vunpack.c.l.b16 %v550
      %v692 = vunpack.c.h.b16 %v550
      %v693 = vunpack.c.l.b16 %v551
      %v694 = vunpack.c.h.b16 %v551
      %v695 = vunpack.c.l.b16 %v552
      %v696 = vunpack.c.h.b16 %v552
      %v697 = vunpack.c.l.b16 %v553
      %v698 = vunpack.c.h.b16 %v553
      %v699 = vunpack.c.l.b16 %v554
      %v700 = vunpack.c.h.b16 %v554
      %v701 = vunpack.c.l.b16 %v555
      %v702 = vunpack.c.h.b16 %v555
      %v703 = vunpack.c.l.b16 %v556
      %v704 = vunpack.c.h.b16 %v556
      %v705 = vunpack.c.l.b16 %v557
      %v706 = vunpack.c.h.b16 %v557
      %v707 = vunpack.c.l.b16 %v558
      %v708 = vunpack.c.h.b16 %v558
      %v709 = vunpack.c.l.b16 %v559
      %v710 = vunpack.c.h.b16 %v559
      %v711 = vunpack.c.l.b16 %v560
      %v712 = vunpack.c.h.b16 %v560
      %v713 = vunpack.c.l.b16 %v561
      %v714 = vunpack.c.h.b16 %v561
      %v715 = vunpack.c.l.b16 %v562
      %v716 = vunpack.c.h.b16 %v562
      %v717 = vunpack.c.l.b16 %v563
      %v718 = vunpack.c.h.b16 %v563
      %v719 = vunpack.c.l.b16 %v564
      %v720 = vunpack.c.h.b16 %v564
      %v721 = vunpack.c.l.b16 %v565
      %v722 = vunpack.c.h.b16 %v565
      %v723 = vunpack.c.l.b16 %v566
      %v724 = vunpack.c.h.b16 %v566
      %v725 = vunpack.c.l.b16 %v567
      %v726 = vunpack.c.h.b16 %v567
      %v727 = vunpack.c.l.b16 %v568
      %v728 = vunpack.c.h.b16 %v568
      %v729 = vunpack.c.l.b16 %v569
      %v730 = vunpack.c.h.b16 %v569
      %v731 = vunpack.c.l.b16 %v570
      %v732 = vunpack.c.h.b16 %v570
      %v733 = vunpack.c.l.b16 %v571
      %v734 = vunpack.c.h.b16 %v571
      %v735 = vunpack.c.l.b16 %v572
      %v736 = vunpack.c.h.b16 %v572
      %v737 = vunpack.c.l.b16 %v573
      %v738 = vunpack.c.h.b16 %v573
      %v739 = vunpack.c.l.b16 %v574
      %v740 = vunpack.c.h.b16 %v574
      %v741 = vunpack.c.l.b16 %v575
      %v742 = vunpack.c.h.b16 %v575
      %v743 = vunpack.c.l.b16 %v576
      %v744 = vunpack.c.h.b16 %v576
      %v745 = vunpack.c.l.b16 %v577
      %v746 = vunpack.c.h.b16 %v577
      %v747 = vunpack.c.l.b16 %v578
      %v748 = vunpack.c.h.b16 %v578
      %v749 = vpack.c.b16 %v655, %v653
      %v750 = vpack.c.b16 %v656, %v654
      %v751 = vpack.c.b16 %v659, %v657
      %v752 = vpack.c.b16 %v660, %v658
      %v753 = vpack.c.b16 %v663, %v661
      %v754 = vpack.c.b16 %v664, %v662
      %v755 = vpack.c.b16 %v667, %v665
      %v756 = vpack.c.b16 %v668, %v666
      %v757 = vpack.c.b16 %v671, %v669
      %v758 = vpack.c.b16 %v672, %v670
      %v759 = vpack.c.b16 %v675, %v673
      %v760 = vpack.c.b16 %v676, %v674
      %v761 = vpack.c.b16 %v679, %v677
      %v762 = vpack.c.b16 %v680, %v678
      %v763 = vpack.c.b16 %v683, %v681
      %v764 = vpack.c.b16 %v684, %v682
      %v765 = vpack.c.b16 %v687, %v685
      %v766 = vpack.c.b16 %v688, %v686
      %v767 = vpack.c.b16 %v691, %v689
      %v768 = vpack.c.b16 %v692, %v690
      %v769 = vpack.c.b16 %v695, %v693
      %v770 = vpack.c.b16 %v696, %v694
      %v771 = vpack.c.b16 %v699, %v697
      %v772 = vpack.c.b16 %v700, %v698
      %v773 = vpack.c.b16 %v703, %v701
      %v774 = vpack.c.b16 %v704, %v702
      %v775 = vpack.c.b16 %v707, %v705
      %v776 = vpack.c.b16 %v708, %v706
      %v777 = vpack.c.b16 %v711, %v709
      %v778 = vpack.c.b16 %v712, %v710
      %v779 = vpack.c.b16 %v715, %v713
      %v780 = vpack.c.b16 %v716, %v714
      %v781 = vpack.c.b16 %v719, %v717
      %v782 = vpack.c.b16 %v720, %v718
      %v783 = vpack.c.b16 %v723, %v721
      %v784 = vpack.c.b16 %v724, %v722
      %v785 = vpack.c.b16 %v727, %v725
      %v786 = vpack.c.b16 %v728, %v726
      %v787 = vpack.c.b16 %v731, %v729
      %v788 = vpack.c.b16 %v732, %v730
      %v789 = vpack.c.b16 %v735, %v733
      %v790 = vpack.c.b16 %v736, %v734
      %v791 = vpack.c.b16 %v739, %v737
      %v792 = vpack.c.b16 %v740, %v738
      %v793 = vpack.c.b16 %v743, %v741
      %v794 = vpack.c.b16 %v744, %v742
      %v795 = vpack.c.b16 %v747, %v745
      %v796 = vpack.c.b16 %v748, %v746
      %845 = vmatpush.bf16.msra.mxu0 %v763
      %846 = vmatpush.bf16.msra.mxu0 %v761
      %847 = vmatpush.bf16.msra.mxu0 %v759
      %848 = vmatpush.bf16.msra.mxu0 %v757
      %849 = vmatpush.bf16.msra.mxu0 %v755
      %850 = vmatpush.bf16.msra.mxu0 %v753
      %851 = vmatpush.bf16.msra.mxu0 %v751
      %852 = vmatpush.bf16.msra.mxu0 %v749
      %853 = vmatmul.bf16.gmra.mxu0 %v599
      %v854 = vpop.f32.mrf.mxu0
      %v855 = vadd.f32 %v585, %v854
      %v856 = vpop.f32.mrf.mxu0
      %v857 = vadd.f32 %v585, %v856
      %858 = vdwg.mxu0
      %859 = vmatpush.bf16.msra.mxu0 %v779
      %860 = vmatpush.bf16.msra.mxu0 %v777
      %861 = vmatpush.bf16.msra.mxu0 %v775
      %862 = vmatpush.bf16.msra.mxu0 %v773
      %863 = vmatpush.bf16.msra.mxu0 %v771
      %864 = vmatpush.bf16.msra.mxu0 %v769
      %865 = vmatpush.bf16.msra.mxu0 %v767
      %866 = vmatpush.bf16.msra.mxu0 %v765
      %867 = vmatmul.bf16.gmra.mxu0 %v600
      %v868 = vpop.f32.mrf.mxu0
      %v869 = vadd.f32 %v855, %v868
      %v870 = vpop.f32.mrf.mxu0
      %v871 = vadd.f32 %v857, %v870
      %872 = vdwg.mxu0
      %873 = vmatpush.bf16.msra.mxu0 %v795
      %874 = vmatpush.bf16.msra.mxu0 %v793
      %875 = vmatpush.bf16.msra.mxu0 %v791
      %876 = vmatpush.bf16.msra.mxu0 %v789
      %877 = vmatpush.bf16.msra.mxu0 %v787
      %878 = vmatpush.bf16.msra.mxu0 %v785
      %879 = vmatpush.bf16.msra.mxu0 %v783
      %880 = vmatpush.bf16.msra.mxu0 %v781
      %881 = vmatmul.bf16.gmra.mxu0 %v601
      %v882 = vpop.f32.mrf.mxu0
      %v883 = vadd.f32 %v869, %v882
      %v884 = vpop.f32.mrf.mxu0
      %v885 = vadd.f32 %v871, %v884
      %886 = vdwg.mxu0
      %887 = vmatpush.bf16.msra.mxu0 %v764
      %888 = vmatpush.bf16.msra.mxu0 %v762
      %889 = vmatpush.bf16.msra.mxu0 %v760
      %890 = vmatpush.bf16.msra.mxu0 %v758
      %891 = vmatpush.bf16.msra.mxu0 %v756
      %892 = vmatpush.bf16.msra.mxu0 %v754
      %893 = vmatpush.bf16.msra.mxu0 %v752
      %894 = vmatpush.bf16.msra.mxu0 %v750
      %895 = vmatmul.bf16.gmra.mxu0 %v599
      %v896 = vpop.f32.mrf.mxu0
      %v897 = vadd.f32 %v586, %v896
      %v898 = vpop.f32.mrf.mxu0
      %v899 = vadd.f32 %v586, %v898
      %900 = vdwg.mxu0
      %901 = vmatpush.bf16.msra.mxu0 %v780
      %902 = vmatpush.bf16.msra.mxu0 %v778
      %903 = vmatpush.bf16.msra.mxu0 %v776
      %904 = vmatpush.bf16.msra.mxu0 %v774
      %905 = vmatpush.bf16.msra.mxu0 %v772
      %906 = vmatpush.bf16.msra.mxu0 %v770
      %907 = vmatpush.bf16.msra.mxu0 %v768
      %908 = vmatpush.bf16.msra.mxu0 %v766
      %909 = vmatmul.bf16.gmra.mxu0 %v600
      %v910 = vpop.f32.mrf.mxu0
      %v911 = vadd.f32 %v897, %v910
      %v912 = vpop.f32.mrf.mxu0
      %v913 = vadd.f32 %v899, %v912
      %914 = vdwg.mxu0
      %915 = vmatpush.bf16.msra.mxu0 %v796
      %916 = vmatpush.bf16.msra.mxu0 %v794
      %917 = vmatpush.bf16.msra.mxu0 %v792
      %918 = vmatpush.bf16.msra.mxu0 %v790
      %919 = vmatpush.bf16.msra.mxu0 %v788
      %920 = vmatpush.bf16.msra.mxu0 %v786
      %921 = vmatpush.bf16.msra.mxu0 %v784
      %922 = vmatpush.bf16.msra.mxu0 %v782
      %923 = vmatmul.bf16.gmra.mxu0 %v601
      %v924 = vpop.f32.mrf.mxu0
      %v925 = vadd.f32 %v911, %v924
      %v926 = vpop.f32.mrf.mxu0
      %v927 = vadd.f32 %v913, %v926
      %928 = vdwg.mxu0
      %vm929 = vcmp.gt.f32.partialorder %v883, 0.0
      %vm930 = vcmp.gt.f32.partialorder %v925, 0.0
      %vm931 = vcmp.gt.f32.partialorder %v885, 0.0
      %vm932 = vcmp.gt.f32.partialorder %v927, 0.0
      %v933 = vmul.f32 %v883, 0.2
      %v934 = vmul.f32 %v925, 0.2
      %v935 = vmul.f32 %v885, 0.2
      %v936 = vmul.f32 %v927, 0.2
      %v937 = vsel %vm929, %v883, %v933
      %v938 = vsel %vm930, %v925, %v934
      %v939 = vsel %vm931, %v885, %v935
      %v940 = vsel %vm932, %v927, %v936
      %941 = vst [vmem:[#allocation2 + $0x10] sm:$0xff] %v937
      %942 = vst [vmem:[#allocation2 + $0x18] sm:$0xff] %v938
      %943 = vst [vmem:[#allocation2 + $0x110] sm:$0xff] %v939
      %944 = vst [vmem:[#allocation2 + $0x118] sm:$0xff] %v940
      %v945 = vld [vmem:[%s495 + $0x8] sm:$0xff]
      %v946 = vld [vmem:[%s495 + $0x10] sm:$0xf]
      %v947 = vld [vmem:[%s495 + $0x80] sm:$0xff]
      %v948 = vld [vmem:[%s495 + $0x88] sm:$0xf]
      %v953 = vunpack.c.l.b16 %v945
      %v954 = vunpack.c.h.b16 %v945
      %v955 = vunpack.c.l.b16 %v946
      %v956 = vunpack.c.l.b16 %v947
      %v957 = vunpack.c.h.b16 %v947
      %v958 = vunpack.c.l.b16 %v948
      %v959 = vpack.c.b16 %v956, %v953
      %v960 = vpack.c.b16 %v957, %v954
      %v961 = vpack.c.b16 %v958, %v955
      %965 = vmatpush.bf16.msra.mxu0 %v763
      %966 = vmatpush.bf16.msra.mxu0 %v761
      %967 = vmatpush.bf16.msra.mxu0 %v759
      %968 = vmatpush.bf16.msra.mxu0 %v757
      %969 = vmatpush.bf16.msra.mxu0 %v755
      %970 = vmatpush.bf16.msra.mxu0 %v753
      %971 = vmatpush.bf16.msra.mxu0 %v751
      %972 = vmatpush.bf16.msra.mxu0 %v749
      %973 = vmatmul.bf16.gmra.mxu0 %v959
      %v974 = vpop.f32.mrf.mxu0
      %v975 = vadd.f32 %v585, %v974
      %v976 = vpop.f32.mrf.mxu0
      %v977 = vadd.f32 %v585, %v976
      %978 = vdwg.mxu0
      %979 = vmatpush.bf16.msra.mxu0 %v779
      %980 = vmatpush.bf16.msra.mxu0 %v777
      %981 = vmatpush.bf16.msra.mxu0 %v775
      %982 = vmatpush.bf16.msra.mxu0 %v773
      %983 = vmatpush.bf16.msra.mxu0 %v771
      %984 = vmatpush.bf16.msra.mxu0 %v769
      %985 = vmatpush.bf16.msra.mxu0 %v767
      %986 = vmatpush.bf16.msra.mxu0 %v765
      %987 = vmatmul.bf16.gmra.mxu0 %v960
      %v988 = vpop.f32.mrf.mxu0
      %v989 = vadd.f32 %v975, %v988
      %v990 = vpop.f32.mrf.mxu0
      %v991 = vadd.f32 %v977, %v990
      %992 = vdwg.mxu0
      %993 = vmatpush.bf16.msra.mxu0 %v795
      %994 = vmatpush.bf16.msra.mxu0 %v793
      %995 = vmatpush.bf16.msra.mxu0 %v791
      %996 = vmatpush.bf16.msra.mxu0 %v789
      %997 = vmatpush.bf16.msra.mxu0 %v787
      %998 = vmatpush.bf16.msra.mxu0 %v785
      %999 = vmatpush.bf16.msra.mxu0 %v783
      %1000 = vmatpush.bf16.msra.mxu0 %v781
      %1001 = vmatmul.bf16.gmra.mxu0 %v961
      %v1002 = vpop.f32.mrf.mxu0
      %v1003 = vadd.f32 %v989, %v1002
      %v1004 = vpop.f32.mrf.mxu0
      %v1005 = vadd.f32 %v991, %v1004
      %1006 = vdwg.mxu0
      %1007 = vmatpush.bf16.msra.mxu0 %v764
      %1008 = vmatpush.bf16.msra.mxu0 %v762
      %1009 = vmatpush.bf16.msra.mxu0 %v760
      %1010 = vmatpush.bf16.msra.mxu0 %v758
      %1011 = vmatpush.bf16.msra.mxu0 %v756
      %1012 = vmatpush.bf16.msra.mxu0 %v754
      %1013 = vmatpush.bf16.msra.mxu0 %v752
      %1014 = vmatpush.bf16.msra.mxu0 %v750
      %1015 = vmatmul.bf16.gmra.mxu0 %v959
      %v1016 = vpop.f32.mrf.mxu0
      %v1017 = vadd.f32 %v586, %v1016
      %v1018 = vpop.f32.mrf.mxu0
      %v1019 = vadd.f32 %v586, %v1018
      %1020 = vdwg.mxu0
      %1021 = vmatpush.bf16.msra.mxu0 %v780
      %1022 = vmatpush.bf16.msra.mxu0 %v778
      %1023 = vmatpush.bf16.msra.mxu0 %v776
      %1024 = vmatpush.bf16.msra.mxu0 %v774
      %1025 = vmatpush.bf16.msra.mxu0 %v772
      %1026 = vmatpush.bf16.msra.mxu0 %v770
      %1027 = vmatpush.bf16.msra.mxu0 %v768
      %1028 = vmatpush.bf16.msra.mxu0 %v766
      %1029 = vmatmul.bf16.gmra.mxu0 %v960
      %v1030 = vpop.f32.mrf.mxu0
      %v1031 = vadd.f32 %v1017, %v1030
      %v1032 = vpop.f32.mrf.mxu0
      %v1033 = vadd.f32 %v1019, %v1032
      %1034 = vdwg.mxu0
      %1035 = vmatpush.bf16.msra.mxu0 %v796
      %1036 = vmatpush.bf16.msra.mxu0 %v794
      %1037 = vmatpush.bf16.msra.mxu0 %v792
      %1038 = vmatpush.bf16.msra.mxu0 %v790
      %1039 = vmatpush.bf16.msra.mxu0 %v788
      %1040 = vmatpush.bf16.msra.mxu0 %v786
      %1041 = vmatpush.bf16.msra.mxu0 %v784
      %1042 = vmatpush.bf16.msra.mxu0 %v782
      %1043 = vmatmul.bf16.gmra.mxu0 %v961
      %v1044 = vpop.f32.mrf.mxu0
      %v1045 = vadd.f32 %v1031, %v1044
      %v1046 = vpop.f32.mrf.mxu0
      %v1047 = vadd.f32 %v1033, %v1046
      %1048 = vdwg.mxu0
      %vm1049 = vcmp.gt.f32.partialorder %v1003, 0.0
      %vm1050 = vcmp.gt.f32.partialorder %v1045, 0.0
      %vm1051 = vcmp.gt.f32.partialorder %v1005, 0.0
      %vm1052 = vcmp.gt.f32.partialorder %v1047, 0.0
      %v1053 = vmul.f32 %v1003, 0.2
      %v1054 = vmul.f32 %v1045, 0.2
      %v1055 = vmul.f32 %v1005, 0.2
      %v1056 = vmul.f32 %v1047, 0.2
      %v1057 = vsel %vm1049, %v1003, %v1053
      %v1058 = vsel %vm1050, %v1045, %v1054
      %v1059 = vsel %vm1051, %v1005, %v1055
      %v1060 = vsel %vm1052, %v1047, %v1056
      %1061 = vst [vmem:[#allocation2 + $0x20] sm:$0xff] %v1057
      %1062 = vst [vmem:[#allocation2 + $0x28] sm:$0xff] %v1058
      %1063 = vst [vmem:[#allocation2 + $0x120] sm:$0xff] %v1059
      %1064 = vst [vmem:[#allocation2 + $0x128] sm:$0xff] %v1060
      %v1065 = vld [vmem:[%s495 + $0x10] sm:$0xff]
      %v1066 = vld [vmem:[%s495 + $0x18] sm:$0xf]
      %v1067 = vld [vmem:[%s495 + $0x88] sm:$0xff]
      %v1068 = vld [vmem:[%s495 + $0x90] sm:$0xf]
      %v1073 = vunpack.c.l.b16 %v1065
      %v1074 = vunpack.c.h.b16 %v1065
      %v1075 = vunpack.c.l.b16 %v1066
      %v1076 = vunpack.c.l.b16 %v1067
      %v1077 = vunpack.c.h.b16 %v1067
      %v1078 = vunpack.c.l.b16 %v1068
      %v1079 = vpack.c.b16 %v1076, %v1073
      %v1080 = vpack.c.b16 %v1077, %v1074
      %v1081 = vpack.c.b16 %v1078, %v1075
      %1085 = vmatpush.bf16.msra.mxu0 %v763
      %1086 = vmatpush.bf16.msra.mxu0 %v761
      %1087 = vmatpush.bf16.msra.mxu0 %v759
      %1088 = vmatpush.bf16.msra.mxu0 %v757
      %1089 = vmatpush.bf16.msra.mxu0 %v755
      %1090 = vmatpush.bf16.msra.mxu0 %v753
      %1091 = vmatpush.bf16.msra.mxu0 %v751
      %1092 = vmatpush.bf16.msra.mxu0 %v749
      %1093 = vmatmul.bf16.gmra.mxu0 %v1079
      %v1094 = vpop.f32.mrf.mxu0
      %v1095 = vadd.f32 %v585, %v1094
      %v1096 = vpop.f32.mrf.mxu0
      %v1097 = vadd.f32 %v585, %v1096
      %1098 = vdwg.mxu0
      %1099 = vmatpush.bf16.msra.mxu0 %v779
      %1100 = vmatpush.bf16.msra.mxu0 %v777
      %1101 = vmatpush.bf16.msra.mxu0 %v775
      %1102 = vmatpush.bf16.msra.mxu0 %v773
      %1103 = vmatpush.bf16.msra.mxu0 %v771
      %1104 = vmatpush.bf16.msra.mxu0 %v769
      %1105 = vmatpush.bf16.msra.mxu0 %v767
      %1106 = vmatpush.bf16.msra.mxu0 %v765
      %1107 = vmatmul.bf16.gmra.mxu0 %v1080
      %v1108 = vpop.f32.mrf.mxu0
      %v1109 = vadd.f32 %v1095, %v1108
      %v1110 = vpop.f32.mrf.mxu0
      %v1111 = vadd.f32 %v1097, %v1110
      %1112 = vdwg.mxu0
      %1113 = vmatpush.bf16.msra.mxu0 %v795
      %1114 = vmatpush.bf16.msra.mxu0 %v793
      %1115 = vmatpush.bf16.msra.mxu0 %v791
      %1116 = vmatpush.bf16.msra.mxu0 %v789
      %1117 = vmatpush.bf16.msra.mxu0 %v787
      %1118 = vmatpush.bf16.msra.mxu0 %v785
      %1119 = vmatpush.bf16.msra.mxu0 %v783
      %1120 = vmatpush.bf16.msra.mxu0 %v781
      %1121 = vmatmul.bf16.gmra.mxu0 %v1081
      %v1122 = vpop.f32.mrf.mxu0
      %v1123 = vadd.f32 %v1109, %v1122
      %v1124 = vpop.f32.mrf.mxu0
      %v1125 = vadd.f32 %v1111, %v1124
      %1126 = vdwg.mxu0
      %1127 = vmatpush.bf16.msra.mxu0 %v764
      %1128 = vmatpush.bf16.msra.mxu0 %v762
      %1129 = vmatpush.bf16.msra.mxu0 %v760
      %1130 = vmatpush.bf16.msra.mxu0 %v758
      %1131 = vmatpush.bf16.msra.mxu0 %v756
      %1132 = vmatpush.bf16.msra.mxu0 %v754
      %1133 = vmatpush.bf16.msra.mxu0 %v752
      %1134 = vmatpush.bf16.msra.mxu0 %v750
      %1135 = vmatmul.bf16.gmra.mxu0 %v1079
      %v1136 = vpop.f32.mrf.mxu0
      %v1137 = vadd.f32 %v586, %v1136
      %v1138 = vpop.f32.mrf.mxu0
      %v1139 = vadd.f32 %v586, %v1138
      %1140 = vdwg.mxu0
      %1141 = vmatpush.bf16.msra.mxu0 %v780
      %1142 = vmatpush.bf16.msra.mxu0 %v778
      %1143 = vmatpush.bf16.msra.mxu0 %v776
      %1144 = vmatpush.bf16.msra.mxu0 %v774
      %1145 = vmatpush.bf16.msra.mxu0 %v772
      %1146 = vmatpush.bf16.msra.mxu0 %v770
      %1147 = vmatpush.bf16.msra.mxu0 %v768
      %1148 = vmatpush.bf16.msra.mxu0 %v766
      %1149 = vmatmul.bf16.gmra.mxu0 %v1080
      %v1150 = vpop.f32.mrf.mxu0
      %v1151 = vadd.f32 %v1137, %v1150
      %v1152 = vpop.f32.mrf.mxu0
      %v1153 = vadd.f32 %v1139, %v1152
      %1154 = vdwg.mxu0
      %1155 = vmatpush.bf16.msra.mxu0 %v796
      %1156 = vmatpush.bf16.msra.mxu0 %v794
      %1157 = vmatpush.bf16.msra.mxu0 %v792
      %1158 = vmatpush.bf16.msra.mxu0 %v790
      %1159 = vmatpush.bf16.msra.mxu0 %v788
      %1160 = vmatpush.bf16.msra.mxu0 %v786
      %1161 = vmatpush.bf16.msra.mxu0 %v784
      %1162 = vmatpush.bf16.msra.mxu0 %v782
      %1163 = vmatmul.bf16.gmra.mxu0 %v1081
      %v1164 = vpop.f32.mrf.mxu0
      %v1165 = vadd.f32 %v1151, %v1164
      %v1166 = vpop.f32.mrf.mxu0
      %v1167 = vadd.f32 %v1153, %v1166
      %1168 = vdwg.mxu0
      %vm1169 = vcmp.gt.f32.partialorder %v1123, 0.0
      %vm1170 = vcmp.gt.f32.partialorder %v1165, 0.0
      %vm1171 = vcmp.gt.f32.partialorder %v1125, 0.0
      %vm1172 = vcmp.gt.f32.partialorder %v1167, 0.0
      %v1173 = vmul.f32 %v1123, 0.2
      %v1174 = vmul.f32 %v1165, 0.2
      %v1175 = vmul.f32 %v1125, 0.2
      %v1176 = vmul.f32 %v1167, 0.2
      %v1177 = vsel %vm1169, %v1123, %v1173
      %v1178 = vsel %vm1170, %v1165, %v1174
      %v1179 = vsel %vm1171, %v1125, %v1175
      %v1180 = vsel %vm1172, %v1167, %v1176
      %1181 = vst [vmem:[#allocation2 + $0x30] sm:$0xff] %v1177
      %1182 = vst [vmem:[#allocation2 + $0x38] sm:$0xff] %v1178
      %1183 = vst [vmem:[#allocation2 + $0x130] sm:$0xff] %v1179
      %1184 = vst [vmem:[#allocation2 + $0x138] sm:$0xff] %v1180
      %v1185 = vld [vmem:[%s495 + $0x18] sm:$0xff]
      %v1186 = vld [vmem:[%s495 + $0x20] sm:$0xf]
      %v1187 = vld [vmem:[%s495 + $0x90] sm:$0xff]
      %v1188 = vld [vmem:[%s495 + $0x98] sm:$0xf]
      %v1193 = vunpack.c.l.b16 %v1185
      %v1194 = vunpack.c.h.b16 %v1185
      %v1195 = vunpack.c.l.b16 %v1186
      %v1196 = vunpack.c.l.b16 %v1187
      %v1197 = vunpack.c.h.b16 %v1187
      %v1198 = vunpack.c.l.b16 %v1188
      %v1199 = vpack.c.b16 %v1196, %v1193
      %v1200 = vpack.c.b16 %v1197, %v1194
      %v1201 = vpack.c.b16 %v1198, %v1195
      %1205 = vmatpush.bf16.msra.mxu0 %v763
      %1206 = vmatpush.bf16.msra.mxu0 %v761
      %1207 = vmatpush.bf16.msra.mxu0 %v759
      %1208 = vmatpush.bf16.msra.mxu0 %v757
      %1209 = vmatpush.bf16.msra.mxu0 %v755
      %1210 = vmatpush.bf16.msra.mxu0 %v753
      %1211 = vmatpush.bf16.msra.mxu0 %v751
      %1212 = vmatpush.bf16.msra.mxu0 %v749
      %1213 = vmatmul.bf16.gmra.mxu0 %v1199
      %v1214 = vpop.f32.mrf.mxu0
      %v1215 = vadd.f32 %v585, %v1214
      %v1216 = vpop.f32.mrf.mxu0
      %v1217 = vadd.f32 %v585, %v1216
      %1218 = vdwg.mxu0
      %1219 = vmatpush.bf16.msra.mxu0 %v779
      %1220 = vmatpush.bf16.msra.mxu0 %v777
      %1221 = vmatpush.bf16.msra.mxu0 %v775
      %1222 = vmatpush.bf16.msra.mxu0 %v773
      %1223 = vmatpush.bf16.msra.mxu0 %v771
      %1224 = vmatpush.bf16.msra.mxu0 %v769
      %1225 = vmatpush.bf16.msra.mxu0 %v767
      %1226 = vmatpush.bf16.msra.mxu0 %v765
      %1227 = vmatmul.bf16.gmra.mxu0 %v1200
      %v1228 = vpop.f32.mrf.mxu0
      %v1229 = vadd.f32 %v1215, %v1228
      %v1230 = vpop.f32.mrf.mxu0
      %v1231 = vadd.f32 %v1217, %v1230
      %1232 = vdwg.mxu0
      %1233 = vmatpush.bf16.msra.mxu0 %v795
      %1234 = vmatpush.bf16.msra.mxu0 %v793
      %1235 = vmatpush.bf16.msra.mxu0 %v791
      %1236 = vmatpush.bf16.msra.mxu0 %v789
      %1237 = vmatpush.bf16.msra.mxu0 %v787
      %1238 = vmatpush.bf16.msra.mxu0 %v785
      %1239 = vmatpush.bf16.msra.mxu0 %v783
      %1240 = vmatpush.bf16.msra.mxu0 %v781
      %1241 = vmatmul.bf16.gmra.mxu0 %v1201
      %v1242 = vpop.f32.mrf.mxu0
      %v1243 = vadd.f32 %v1229, %v1242
      %v1244 = vpop.f32.mrf.mxu0
      %v1245 = vadd.f32 %v1231, %v1244
      %1246 = vdwg.mxu0
      %1247 = vmatpush.bf16.msra.mxu0 %v764
      %1248 = vmatpush.bf16.msra.mxu0 %v762
      %1249 = vmatpush.bf16.msra.mxu0 %v760
      %1250 = vmatpush.bf16.msra.mxu0 %v758
      %1251 = vmatpush.bf16.msra.mxu0 %v756
      %1252 = vmatpush.bf16.msra.mxu0 %v754
      %1253 = vmatpush.bf16.msra.mxu0 %v752
      %1254 = vmatpush.bf16.msra.mxu0 %v750
      %1255 = vmatmul.bf16.gmra.mxu0 %v1199
      %v1256 = vpop.f32.mrf.mxu0
      %v1257 = vadd.f32 %v586, %v1256
      %v1258 = vpop.f32.mrf.mxu0
      %v1259 = vadd.f32 %v586, %v1258
      %1260 = vdwg.mxu0
      %1261 = vmatpush.bf16.msra.mxu0 %v780
      %1262 = vmatpush.bf16.msra.mxu0 %v778
      %1263 = vmatpush.bf16.msra.mxu0 %v776
      %1264 = vmatpush.bf16.msra.mxu0 %v774
      %1265 = vmatpush.bf16.msra.mxu0 %v772
      %1266 = vmatpush.bf16.msra.mxu0 %v770
      %1267 = vmatpush.bf16.msra.mxu0 %v768
      %1268 = vmatpush.bf16.msra.mxu0 %v766
      %1269 = vmatmul.bf16.gmra.mxu0 %v1200
      %v1270 = vpop.f32.mrf.mxu0
      %v1271 = vadd.f32 %v1257, %v1270
      %v1272 = vpop.f32.mrf.mxu0
      %v1273 = vadd.f32 %v1259, %v1272
      %1274 = vdwg.mxu0
      %1275 = vmatpush.bf16.msra.mxu0 %v796
      %1276 = vmatpush.bf16.msra.mxu0 %v794
      %1277 = vmatpush.bf16.msra.mxu0 %v792
      %1278 = vmatpush.bf16.msra.mxu0 %v790
      %1279 = vmatpush.bf16.msra.mxu0 %v788
      %1280 = vmatpush.bf16.msra.mxu0 %v786
      %1281 = vmatpush.bf16.msra.mxu0 %v784
      %1282 = vmatpush.bf16.msra.mxu0 %v782
      %1283 = vmatmul.bf16.gmra.mxu0 %v1201
      %v1284 = vpop.f32.mrf.mxu0
      %v1285 = vadd.f32 %v1271, %v1284
      %v1286 = vpop.f32.mrf.mxu0
      %v1287 = vadd.f32 %v1273, %v1286
      %1288 = vdwg.mxu0
      %vm1289 = vcmp.gt.f32.partialorder %v1243, 0.0
      %vm1290 = vcmp.gt.f32.partialorder %v1285, 0.0
      %vm1291 = vcmp.gt.f32.partialorder %v1245, 0.0
      %vm1292 = vcmp.gt.f32.partialorder %v1287, 0.0
      %v1293 = vmul.f32 %v1243, 0.2
      %v1294 = vmul.f32 %v1285, 0.2
      %v1295 = vmul.f32 %v1245, 0.2
      %v1296 = vmul.f32 %v1287, 0.2
      %v1297 = vsel %vm1289, %v1243, %v1293
      %v1298 = vsel %vm1290, %v1285, %v1294
      %v1299 = vsel %vm1291, %v1245, %v1295
      %v1300 = vsel %vm1292, %v1287, %v1296
      %1301 = vst [vmem:[#allocation2 + $0x40] sm:$0xff] %v1297
      %1302 = vst [vmem:[#allocation2 + $0x48] sm:$0xff] %v1298
      %1303 = vst [vmem:[#allocation2 + $0x140] sm:$0xff] %v1299
      %1304 = vst [vmem:[#allocation2 + $0x148] sm:$0xff] %v1300
      %v1305 = vld [vmem:[%s495 + $0x20] sm:$0xff]
      %v1306 = vld [vmem:[%s495 + $0x28] sm:$0xf]
      %v1307 = vld [vmem:[%s495 + $0x98] sm:$0xff]
      %v1308 = vld [vmem:[%s495 + $0xa0] sm:$0xf]
      %v1313 = vunpack.c.l.b16 %v1305
      %v1314 = vunpack.c.h.b16 %v1305
      %v1315 = vunpack.c.l.b16 %v1306
      %v1316 = vunpack.c.l.b16 %v1307
      %v1317 = vunpack.c.h.b16 %v1307
      %v1318 = vunpack.c.l.b16 %v1308
      %v1319 = vpack.c.b16 %v1316, %v1313
      %v1320 = vpack.c.b16 %v1317, %v1314
      %v1321 = vpack.c.b16 %v1318, %v1315
      %1325 = vmatpush.bf16.msra.mxu0 %v763
      %1326 = vmatpush.bf16.msra.mxu0 %v761
      %1327 = vmatpush.bf16.msra.mxu0 %v759
      %1328 = vmatpush.bf16.msra.mxu0 %v757
      %1329 = vmatpush.bf16.msra.mxu0 %v755
      %1330 = vmatpush.bf16.msra.mxu0 %v753
      %1331 = vmatpush.bf16.msra.mxu0 %v751
      %1332 = vmatpush.bf16.msra.mxu0 %v749
      %1333 = vmatmul.bf16.gmra.mxu0 %v1319
      %v1334 = vpop.f32.mrf.mxu0
      %v1335 = vadd.f32 %v585, %v1334
      %v1336 = vpop.f32.mrf.mxu0
      %v1337 = vadd.f32 %v585, %v1336
      %1338 = vdwg.mxu0
      %1339 = vmatpush.bf16.msra.mxu0 %v779
      %1340 = vmatpush.bf16.msra.mxu0 %v777
      %1341 = vmatpush.bf16.msra.mxu0 %v775
      %1342 = vmatpush.bf16.msra.mxu0 %v773
      %1343 = vmatpush.bf16.msra.mxu0 %v771
      %1344 = vmatpush.bf16.msra.mxu0 %v769
      %1345 = vmatpush.bf16.msra.mxu0 %v767
      %1346 = vmatpush.bf16.msra.mxu0 %v765
      %1347 = vmatmul.bf16.gmra.mxu0 %v1320
      %v1348 = vpop.f32.mrf.mxu0
      %v1349 = vadd.f32 %v1335, %v1348
      %v1350 = vpop.f32.mrf.mxu0
      %v1351 = vadd.f32 %v1337, %v1350
      %1352 = vdwg.mxu0
      %1353 = vmatpush.bf16.msra.mxu0 %v795
      %1354 = vmatpush.bf16.msra.mxu0 %v793
      %1355 = vmatpush.bf16.msra.mxu0 %v791
      %1356 = vmatpush.bf16.msra.mxu0 %v789
      %1357 = vmatpush.bf16.msra.mxu0 %v787
      %1358 = vmatpush.bf16.msra.mxu0 %v785
      %1359 = vmatpush.bf16.msra.mxu0 %v783
      %1360 = vmatpush.bf16.msra.mxu0 %v781
      %1361 = vmatmul.bf16.gmra.mxu0 %v1321
      %v1362 = vpop.f32.mrf.mxu0
      %v1363 = vadd.f32 %v1349, %v1362
      %v1364 = vpop.f32.mrf.mxu0
      %v1365 = vadd.f32 %v1351, %v1364
      %1366 = vdwg.mxu0
      %1367 = vmatpush.bf16.msra.mxu0 %v764
      %1368 = vmatpush.bf16.msra.mxu0 %v762
      %1369 = vmatpush.bf16.msra.mxu0 %v760
      %1370 = vmatpush.bf16.msra.mxu0 %v758
      %1371 = vmatpush.bf16.msra.mxu0 %v756
      %1372 = vmatpush.bf16.msra.mxu0 %v754
      %1373 = vmatpush.bf16.msra.mxu0 %v752
      %1374 = vmatpush.bf16.msra.mxu0 %v750
      %1375 = vmatmul.bf16.gmra.mxu0 %v1319
      %v1376 = vpop.f32.mrf.mxu0
      %v1377 = vadd.f32 %v586, %v1376
      %v1378 = vpop.f32.mrf.mxu0
      %v1379 = vadd.f32 %v586, %v1378
      %1380 = vdwg.mxu0
      %1381 = vmatpush.bf16.msra.mxu0 %v780
      %1382 = vmatpush.bf16.msra.mxu0 %v778
      %1383 = vmatpush.bf16.msra.mxu0 %v776
      %1384 = vmatpush.bf16.msra.mxu0 %v774
      %1385 = vmatpush.bf16.msra.mxu0 %v772
      %1386 = vmatpush.bf16.msra.mxu0 %v770
      %1387 = vmatpush.bf16.msra.mxu0 %v768
      %1388 = vmatpush.bf16.msra.mxu0 %v766
      %1389 = vmatmul.bf16.gmra.mxu0 %v1320
      %v1390 = vpop.f32.mrf.mxu0
      %v1391 = vadd.f32 %v1377, %v1390
      %v1392 = vpop.f32.mrf.mxu0
      %v1393 = vadd.f32 %v1379, %v1392
      %1394 = vdwg.mxu0
      %1395 = vmatpush.bf16.msra.mxu0 %v796
      %1396 = vmatpush.bf16.msra.mxu0 %v794
      %1397 = vmatpush.bf16.msra.mxu0 %v792
      %1398 = vmatpush.bf16.msra.mxu0 %v790
      %1399 = vmatpush.bf16.msra.mxu0 %v788
      %1400 = vmatpush.bf16.msra.mxu0 %v786
      %1401 = vmatpush.bf16.msra.mxu0 %v784
      %1402 = vmatpush.bf16.msra.mxu0 %v782
      %1403 = vmatmul.bf16.gmra.mxu0 %v1321
      %v1404 = vpop.f32.mrf.mxu0
      %v1405 = vadd.f32 %v1391, %v1404
      %v1406 = vpop.f32.mrf.mxu0
      %v1407 = vadd.f32 %v1393, %v1406
      %1408 = vdwg.mxu0
      %vm1409 = vcmp.gt.f32.partialorder %v1363, 0.0
      %vm1410 = vcmp.gt.f32.partialorder %v1405, 0.0
      %vm1411 = vcmp.gt.f32.partialorder %v1365, 0.0
      %vm1412 = vcmp.gt.f32.partialorder %v1407, 0.0
      %v1413 = vmul.f32 %v1363, 0.2
      %v1414 = vmul.f32 %v1405, 0.2
      %v1415 = vmul.f32 %v1365, 0.2
      %v1416 = vmul.f32 %v1407, 0.2
      %v1417 = vsel %vm1409, %v1363, %v1413
      %v1418 = vsel %vm1410, %v1405, %v1414
      %v1419 = vsel %vm1411, %v1365, %v1415
      %v1420 = vsel %vm1412, %v1407, %v1416
      %1421 = vst [vmem:[#allocation2 + $0x50] sm:$0xff] %v1417
      %1422 = vst [vmem:[#allocation2 + $0x58] sm:$0xff] %v1418
      %1423 = vst [vmem:[#allocation2 + $0x150] sm:$0xff] %v1419
      %1424 = vst [vmem:[#allocation2 + $0x158] sm:$0xff] %v1420
      %v1425 = vld [vmem:[%s495 + $0x28] sm:$0xff]
      %v1426 = vld [vmem:[%s495 + $0x30] sm:$0xf]
      %v1427 = vld [vmem:[%s495 + $0xa0] sm:$0xff]
      %v1428 = vld [vmem:[%s495 + $0xa8] sm:$0xf]
      %v1433 = vunpack.c.l.b16 %v1425
      %v1434 = vunpack.c.h.b16 %v1425
      %v1435 = vunpack.c.l.b16 %v1426
      %v1436 = vunpack.c.l.b16 %v1427
      %v1437 = vunpack.c.h.b16 %v1427
      %v1438 = vunpack.c.l.b16 %v1428
      %v1439 = vpack.c.b16 %v1436, %v1433
      %v1440 = vpack.c.b16 %v1437, %v1434
      %v1441 = vpack.c.b16 %v1438, %v1435
      %1445 = vmatpush.bf16.msra.mxu0 %v763
      %1446 = vmatpush.bf16.msra.mxu0 %v761
      %1447 = vmatpush.bf16.msra.mxu0 %v759
      %1448 = vmatpush.bf16.msra.mxu0 %v757
      %1449 = vmatpush.bf16.msra.mxu0 %v755
      %1450 = vmatpush.bf16.msra.mxu0 %v753
      %1451 = vmatpush.bf16.msra.mxu0 %v751
      %1452 = vmatpush.bf16.msra.mxu0 %v749
      %1453 = vmatmul.bf16.gmra.mxu0 %v1439
      %v1454 = vpop.f32.mrf.mxu0
      %v1455 = vadd.f32 %v585, %v1454
      %v1456 = vpop.f32.mrf.mxu0
      %v1457 = vadd.f32 %v585, %v1456
      %1458 = vdwg.mxu0
      %1459 = vmatpush.bf16.msra.mxu0 %v779
      %1460 = vmatpush.bf16.msra.mxu0 %v777
      %1461 = vmatpush.bf16.msra.mxu0 %v775
      %1462 = vmatpush.bf16.msra.mxu0 %v773
      %1463 = vmatpush.bf16.msra.mxu0 %v771
      %1464 = vmatpush.bf16.msra.mxu0 %v769
      %1465 = vmatpush.bf16.msra.mxu0 %v767
      %1466 = vmatpush.bf16.msra.mxu0 %v765
      %1467 = vmatmul.bf16.gmra.mxu0 %v1440
      %v1468 = vpop.f32.mrf.mxu0
      %v1469 = vadd.f32 %v1455, %v1468
      %v1470 = vpop.f32.mrf.mxu0
      %v1471 = vadd.f32 %v1457, %v1470
      %1472 = vdwg.mxu0
      %1473 = vmatpush.bf16.msra.mxu0 %v795
      %1474 = vmatpush.bf16.msra.mxu0 %v793
      %1475 = vmatpush.bf16.msra.mxu0 %v791
      %1476 = vmatpush.bf16.msra.mxu0 %v789
      %1477 = vmatpush.bf16.msra.mxu0 %v787
      %1478 = vmatpush.bf16.msra.mxu0 %v785
      %1479 = vmatpush.bf16.msra.mxu0 %v783
      %1480 = vmatpush.bf16.msra.mxu0 %v781
      %1481 = vmatmul.bf16.gmra.mxu0 %v1441
      %v1482 = vpop.f32.mrf.mxu0
      %v1483 = vadd.f32 %v1469, %v1482
      %v1484 = vpop.f32.mrf.mxu0
      %v1485 = vadd.f32 %v1471, %v1484
      %1486 = vdwg.mxu0
      %1487 = vmatpush.bf16.msra.mxu0 %v764
      %1488 = vmatpush.bf16.msra.mxu0 %v762
      %1489 = vmatpush.bf16.msra.mxu0 %v760
      %1490 = vmatpush.bf16.msra.mxu0 %v758
      %1491 = vmatpush.bf16.msra.mxu0 %v756
      %1492 = vmatpush.bf16.msra.mxu0 %v754
      %1493 = vmatpush.bf16.msra.mxu0 %v752
      %1494 = vmatpush.bf16.msra.mxu0 %v750
      %1495 = vmatmul.bf16.gmra.mxu0 %v1439
      %v1496 = vpop.f32.mrf.mxu0
      %v1497 = vadd.f32 %v586, %v1496
      %v1498 = vpop.f32.mrf.mxu0
      %v1499 = vadd.f32 %v586, %v1498
      %1500 = vdwg.mxu0
      %1501 = vmatpush.bf16.msra.mxu0 %v780
      %1502 = vmatpush.bf16.msra.mxu0 %v778
      %1503 = vmatpush.bf16.msra.mxu0 %v776
      %1504 = vmatpush.bf16.msra.mxu0 %v774
      %1505 = vmatpush.bf16.msra.mxu0 %v772
      %1506 = vmatpush.bf16.msra.mxu0 %v770
      %1507 = vmatpush.bf16.msra.mxu0 %v768
      %1508 = vmatpush.bf16.msra.mxu0 %v766
      %1509 = vmatmul.bf16.gmra.mxu0 %v1440
      %v1510 = vpop.f32.mrf.mxu0
      %v1511 = vadd.f32 %v1497, %v1510
      %v1512 = vpop.f32.mrf.mxu0
      %v1513 = vadd.f32 %v1499, %v1512
      %1514 = vdwg.mxu0
      %1515 = vmatpush.bf16.msra.mxu0 %v796
      %1516 = vmatpush.bf16.msra.mxu0 %v794
      %1517 = vmatpush.bf16.msra.mxu0 %v792
      %1518 = vmatpush.bf16.msra.mxu0 %v790
      %1519 = vmatpush.bf16.msra.mxu0 %v788
      %1520 = vmatpush.bf16.msra.mxu0 %v786
      %1521 = vmatpush.bf16.msra.mxu0 %v784
      %1522 = vmatpush.bf16.msra.mxu0 %v782
      %1523 = vmatmul.bf16.gmra.mxu0 %v1441
      %v1524 = vpop.f32.mrf.mxu0
      %v1525 = vadd.f32 %v1511, %v1524
      %v1526 = vpop.f32.mrf.mxu0
      %v1527 = vadd.f32 %v1513, %v1526
      %1528 = vdwg.mxu0
      %vm1529 = vcmp.gt.f32.partialorder %v1483, 0.0
      %vm1530 = vcmp.gt.f32.partialorder %v1525, 0.0
      %vm1531 = vcmp.gt.f32.partialorder %v1485, 0.0
      %vm1532 = vcmp.gt.f32.partialorder %v1527, 0.0
      %v1533 = vmul.f32 %v1483, 0.2
      %v1534 = vmul.f32 %v1525, 0.2
      %v1535 = vmul.f32 %v1485, 0.2
      %v1536 = vmul.f32 %v1527, 0.2
      %v1537 = vsel %vm1529, %v1483, %v1533
      %v1538 = vsel %vm1530, %v1525, %v1534
      %v1539 = vsel %vm1531, %v1485, %v1535
      %v1540 = vsel %vm1532, %v1527, %v1536
      %1541 = vst [vmem:[#allocation2 + $0x60] sm:$0xff] %v1537
      %1542 = vst [vmem:[#allocation2 + $0x68] sm:$0xff] %v1538
      %1543 = vst [vmem:[#allocation2 + $0x160] sm:$0xff] %v1539
      %1544 = vst [vmem:[#allocation2 + $0x168] sm:$0xff] %v1540
      %v1545 = vld [vmem:[%s495 + $0x30] sm:$0xff]
      %v1546 = vld [vmem:[%s495 + $0x38] sm:$0xf]
      %v1547 = vld [vmem:[%s495 + $0xa8] sm:$0xff]
      %v1548 = vld [vmem:[%s495 + $0xb0] sm:$0xf]
      %v1553 = vunpack.c.l.b16 %v1545
      %v1554 = vunpack.c.h.b16 %v1545
      %v1555 = vunpack.c.l.b16 %v1546
      %v1556 = vunpack.c.l.b16 %v1547
      %v1557 = vunpack.c.h.b16 %v1547
      %v1558 = vunpack.c.l.b16 %v1548
      %v1559 = vpack.c.b16 %v1556, %v1553
      %v1560 = vpack.c.b16 %v1557, %v1554
      %v1561 = vpack.c.b16 %v1558, %v1555
      %1565 = vmatpush.bf16.msra.mxu0 %v763
      %1566 = vmatpush.bf16.msra.mxu0 %v761
      %1567 = vmatpush.bf16.msra.mxu0 %v759
      %1568 = vmatpush.bf16.msra.mxu0 %v757
      %1569 = vmatpush.bf16.msra.mxu0 %v755
      %1570 = vmatpush.bf16.msra.mxu0 %v753
      %1571 = vmatpush.bf16.msra.mxu0 %v751
      %1572 = vmatpush.bf16.msra.mxu0 %v749
      %1573 = vmatmul.bf16.gmra.mxu0 %v1559
      %v1574 = vpop.f32.mrf.mxu0
      %v1575 = vadd.f32 %v585, %v1574
      %v1576 = vpop.f32.mrf.mxu0
      %v1577 = vadd.f32 %v585, %v1576
      %1578 = vdwg.mxu0
      %1579 = vmatpush.bf16.msra.mxu0 %v779
      %1580 = vmatpush.bf16.msra.mxu0 %v777
      %1581 = vmatpush.bf16.msra.mxu0 %v775
      %1582 = vmatpush.bf16.msra.mxu0 %v773
      %1583 = vmatpush.bf16.msra.mxu0 %v771
      %1584 = vmatpush.bf16.msra.mxu0 %v769
      %1585 = vmatpush.bf16.msra.mxu0 %v767
      %1586 = vmatpush.bf16.msra.mxu0 %v765
      %1587 = vmatmul.bf16.gmra.mxu0 %v1560
      %v1588 = vpop.f32.mrf.mxu0
      %v1589 = vadd.f32 %v1575, %v1588
      %v1590 = vpop.f32.mrf.mxu0
      %v1591 = vadd.f32 %v1577, %v1590
      %1592 = vdwg.mxu0
      %1593 = vmatpush.bf16.msra.mxu0 %v795
      %1594 = vmatpush.bf16.msra.mxu0 %v793
      %1595 = vmatpush.bf16.msra.mxu0 %v791
      %1596 = vmatpush.bf16.msra.mxu0 %v789
      %1597 = vmatpush.bf16.msra.mxu0 %v787
      %1598 = vmatpush.bf16.msra.mxu0 %v785
      %1599 = vmatpush.bf16.msra.mxu0 %v783
      %1600 = vmatpush.bf16.msra.mxu0 %v781
      %1601 = vmatmul.bf16.gmra.mxu0 %v1561
      %v1602 = vpop.f32.mrf.mxu0
      %v1603 = vadd.f32 %v1589, %v1602
      %v1604 = vpop.f32.mrf.mxu0
      %v1605 = vadd.f32 %v1591, %v1604
      %1606 = vdwg.mxu0
      %1607 = vmatpush.bf16.msra.mxu0 %v764
      %1608 = vmatpush.bf16.msra.mxu0 %v762
      %1609 = vmatpush.bf16.msra.mxu0 %v760
      %1610 = vmatpush.bf16.msra.mxu0 %v758
      %1611 = vmatpush.bf16.msra.mxu0 %v756
      %1612 = vmatpush.bf16.msra.mxu0 %v754
      %1613 = vmatpush.bf16.msra.mxu0 %v752
      %1614 = vmatpush.bf16.msra.mxu0 %v750
      %1615 = vmatmul.bf16.gmra.mxu0 %v1559
      %v1616 = vpop.f32.mrf.mxu0
      %v1617 = vadd.f32 %v586, %v1616
      %v1618 = vpop.f32.mrf.mxu0
      %v1619 = vadd.f32 %v586, %v1618
      %1620 = vdwg.mxu0
      %1621 = vmatpush.bf16.msra.mxu0 %v780
      %1622 = vmatpush.bf16.msra.mxu0 %v778
      %1623 = vmatpush.bf16.msra.mxu0 %v776
      %1624 = vmatpush.bf16.msra.mxu0 %v774
      %1625 = vmatpush.bf16.msra.mxu0 %v772
      %1626 = vmatpush.bf16.msra.mxu0 %v770
      %1627 = vmatpush.bf16.msra.mxu0 %v768
      %1628 = vmatpush.bf16.msra.mxu0 %v766
      %1629 = vmatmul.bf16.gmra.mxu0 %v1560
      %v1630 = vpop.f32.mrf.mxu0
      %v1631 = vadd.f32 %v1617, %v1630
      %v1632 = vpop.f32.mrf.mxu0
      %v1633 = vadd.f32 %v1619, %v1632
      %1634 = vdwg.mxu0
      %1635 = vmatpush.bf16.msra.mxu0 %v796
      %1636 = vmatpush.bf16.msra.mxu0 %v794
      %1637 = vmatpush.bf16.msra.mxu0 %v792
      %1638 = vmatpush.bf16.msra.mxu0 %v790
      %1639 = vmatpush.bf16.msra.mxu0 %v788
      %1640 = vmatpush.bf16.msra.mxu0 %v786
      %1641 = vmatpush.bf16.msra.mxu0 %v784
      %1642 = vmatpush.bf16.msra.mxu0 %v782
      %1643 = vmatmul.bf16.gmra.mxu0 %v1561
      %v1644 = vpop.f32.mrf.mxu0
      %v1645 = vadd.f32 %v1631, %v1644
      %v1646 = vpop.f32.mrf.mxu0
      %v1647 = vadd.f32 %v1633, %v1646
      %1648 = vdwg.mxu0
      %vm1649 = vcmp.gt.f32.partialorder %v1603, 0.0
      %vm1650 = vcmp.gt.f32.partialorder %v1645, 0.0
      %vm1651 = vcmp.gt.f32.partialorder %v1605, 0.0
      %vm1652 = vcmp.gt.f32.partialorder %v1647, 0.0
      %v1653 = vmul.f32 %v1603, 0.2
      %v1654 = vmul.f32 %v1645, 0.2
      %v1655 = vmul.f32 %v1605, 0.2
      %v1656 = vmul.f32 %v1647, 0.2
      %v1657 = vsel %vm1649, %v1603, %v1653
      %v1658 = vsel %vm1650, %v1645, %v1654
      %v1659 = vsel %vm1651, %v1605, %v1655
      %v1660 = vsel %vm1652, %v1647, %v1656
      %1661 = vst [vmem:[#allocation2 + $0x70] sm:$0xff] %v1657
      %1662 = vst [vmem:[#allocation2 + $0x78] sm:$0xff] %v1658
      %1663 = vst [vmem:[#allocation2 + $0x170] sm:$0xff] %v1659
      %1664 = vst [vmem:[#allocation2 + $0x178] sm:$0xff] %v1660
      %v1665 = vld [vmem:[%s495 + $0x38] sm:$0xff]
      %v1666 = vld [vmem:[%s495 + $0x40] sm:$0xf]
      %v1667 = vld [vmem:[%s495 + $0xb0] sm:$0xff]
      %v1668 = vld [vmem:[%s495 + $0xb8] sm:$0xf]
      %v1673 = vunpack.c.l.b16 %v1665
      %v1674 = vunpack.c.h.b16 %v1665
      %v1675 = vunpack.c.l.b16 %v1666
      %v1676 = vunpack.c.l.b16 %v1667
      %v1677 = vunpack.c.h.b16 %v1667
      %v1678 = vunpack.c.l.b16 %v1668
      %v1679 = vpack.c.b16 %v1676, %v1673
      %v1680 = vpack.c.b16 %v1677, %v1674
      %v1681 = vpack.c.b16 %v1678, %v1675
      %1685 = vmatpush.bf16.msra.mxu0 %v763
      %1686 = vmatpush.bf16.msra.mxu0 %v761
      %1687 = vmatpush.bf16.msra.mxu0 %v759
      %1688 = vmatpush.bf16.msra.mxu0 %v757
      %1689 = vmatpush.bf16.msra.mxu0 %v755
      %1690 = vmatpush.bf16.msra.mxu0 %v753
      %1691 = vmatpush.bf16.msra.mxu0 %v751
      %1692 = vmatpush.bf16.msra.mxu0 %v749
      %1693 = vmatmul.bf16.gmra.mxu0 %v1679
      %v1694 = vpop.f32.mrf.mxu0
      %v1695 = vadd.f32 %v585, %v1694
      %v1696 = vpop.f32.mrf.mxu0
      %v1697 = vadd.f32 %v585, %v1696
      %1698 = vdwg.mxu0
      %1699 = vmatpush.bf16.msra.mxu0 %v779
      %1700 = vmatpush.bf16.msra.mxu0 %v777
      %1701 = vmatpush.bf16.msra.mxu0 %v775
      %1702 = vmatpush.bf16.msra.mxu0 %v773
      %1703 = vmatpush.bf16.msra.mxu0 %v771
      %1704 = vmatpush.bf16.msra.mxu0 %v769
      %1705 = vmatpush.bf16.msra.mxu0 %v767
      %1706 = vmatpush.bf16.msra.mxu0 %v765
      %1707 = vmatmul.bf16.gmra.mxu0 %v1680
      %v1708 = vpop.f32.mrf.mxu0
      %v1709 = vadd.f32 %v1695, %v1708
      %v1710 = vpop.f32.mrf.mxu0
      %v1711 = vadd.f32 %v1697, %v1710
      %1712 = vdwg.mxu0
      %1713 = vmatpush.bf16.msra.mxu0 %v795
      %1714 = vmatpush.bf16.msra.mxu0 %v793
      %1715 = vmatpush.bf16.msra.mxu0 %v791
      %1716 = vmatpush.bf16.msra.mxu0 %v789
      %1717 = vmatpush.bf16.msra.mxu0 %v787
      %1718 = vmatpush.bf16.msra.mxu0 %v785
      %1719 = vmatpush.bf16.msra.mxu0 %v783
      %1720 = vmatpush.bf16.msra.mxu0 %v781
      %1721 = vmatmul.bf16.gmra.mxu0 %v1681
      %v1722 = vpop.f32.mrf.mxu0
      %v1723 = vadd.f32 %v1709, %v1722
      %v1724 = vpop.f32.mrf.mxu0
      %v1725 = vadd.f32 %v1711, %v1724
      %1726 = vdwg.mxu0
      %1727 = vmatpush.bf16.msra.mxu0 %v764
      %1728 = vmatpush.bf16.msra.mxu0 %v762
      %1729 = vmatpush.bf16.msra.mxu0 %v760
      %1730 = vmatpush.bf16.msra.mxu0 %v758
      %1731 = vmatpush.bf16.msra.mxu0 %v756
      %1732 = vmatpush.bf16.msra.mxu0 %v754
      %1733 = vmatpush.bf16.msra.mxu0 %v752
      %1734 = vmatpush.bf16.msra.mxu0 %v750
      %1735 = vmatmul.bf16.gmra.mxu0 %v1679
      %v1736 = vpop.f32.mrf.mxu0
      %v1737 = vadd.f32 %v586, %v1736
      %v1738 = vpop.f32.mrf.mxu0
      %v1739 = vadd.f32 %v586, %v1738
      %1740 = vdwg.mxu0
      %1741 = vmatpush.bf16.msra.mxu0 %v780
      %1742 = vmatpush.bf16.msra.mxu0 %v778
      %1743 = vmatpush.bf16.msra.mxu0 %v776
      %1744 = vmatpush.bf16.msra.mxu0 %v774
      %1745 = vmatpush.bf16.msra.mxu0 %v772
      %1746 = vmatpush.bf16.msra.mxu0 %v770
      %1747 = vmatpush.bf16.msra.mxu0 %v768
      %1748 = vmatpush.bf16.msra.mxu0 %v766
      %1749 = vmatmul.bf16.gmra.mxu0 %v1680
      %v1750 = vpop.f32.mrf.mxu0
      %v1751 = vadd.f32 %v1737, %v1750
      %v1752 = vpop.f32.mrf.mxu0
      %v1753 = vadd.f32 %v1739, %v1752
      %1754 = vdwg.mxu0
      %1755 = vmatpush.bf16.msra.mxu0 %v796
      %1756 = vmatpush.bf16.msra.mxu0 %v794
      %1757 = vmatpush.bf16.msra.mxu0 %v792
      %1758 = vmatpush.bf16.msra.mxu0 %v790
      %1759 = vmatpush.bf16.msra.mxu0 %v788
      %1760 = vmatpush.bf16.msra.mxu0 %v786
      %1761 = vmatpush.bf16.msra.mxu0 %v784
      %1762 = vmatpush.bf16.msra.mxu0 %v782
      %1763 = vmatmul.bf16.gmra.mxu0 %v1681
      %v1764 = vpop.f32.mrf.mxu0
      %v1765 = vadd.f32 %v1751, %v1764
      %v1766 = vpop.f32.mrf.mxu0
      %v1767 = vadd.f32 %v1753, %v1766
      %1768 = vdwg.mxu0
      %vm1769 = vcmp.gt.f32.partialorder %v1723, 0.0
      %vm1770 = vcmp.gt.f32.partialorder %v1765, 0.0
      %vm1771 = vcmp.gt.f32.partialorder %v1725, 0.0
      %vm1772 = vcmp.gt.f32.partialorder %v1767, 0.0
      %v1773 = vmul.f32 %v1723, 0.2
      %v1774 = vmul.f32 %v1765, 0.2
      %v1775 = vmul.f32 %v1725, 0.2
      %v1776 = vmul.f32 %v1767, 0.2
      %v1777 = vsel %vm1769, %v1723, %v1773
      %v1778 = vsel %vm1770, %v1765, %v1774
      %v1779 = vsel %vm1771, %v1725, %v1775
      %v1780 = vsel %vm1772, %v1767, %v1776
      %1781 = vst [vmem:[#allocation2 + $0x80] sm:$0xff] %v1777
      %1782 = vst [vmem:[#allocation2 + $0x88] sm:$0xff] %v1778
      %1783 = vst [vmem:[#allocation2 + $0x180] sm:$0xff] %v1779
      %1784 = vst [vmem:[#allocation2 + $0x188] sm:$0xff] %v1780
      %v1785 = vld [vmem:[%s495 + $0x40] sm:$0xff]
      %v1786 = vld [vmem:[%s495 + $0x48] sm:$0xf]
      %v1787 = vld [vmem:[%s495 + $0xb8] sm:$0xff]
      %v1788 = vld [vmem:[%s495 + $0xc0] sm:$0xf]
      %v1793 = vunpack.c.l.b16 %v1785
      %v1794 = vunpack.c.h.b16 %v1785
      %v1795 = vunpack.c.l.b16 %v1786
      %v1796 = vunpack.c.l.b16 %v1787
      %v1797 = vunpack.c.h.b16 %v1787
      %v1798 = vunpack.c.l.b16 %v1788
      %v1799 = vpack.c.b16 %v1796, %v1793
      %v1800 = vpack.c.b16 %v1797, %v1794
      %v1801 = vpack.c.b16 %v1798, %v1795
      %1805 = vmatpush.bf16.msra.mxu0 %v763
      %1806 = vmatpush.bf16.msra.mxu0 %v761
      %1807 = vmatpush.bf16.msra.mxu0 %v759
      %1808 = vmatpush.bf16.msra.mxu0 %v757
      %1809 = vmatpush.bf16.msra.mxu0 %v755
      %1810 = vmatpush.bf16.msra.mxu0 %v753
      %1811 = vmatpush.bf16.msra.mxu0 %v751
      %1812 = vmatpush.bf16.msra.mxu0 %v749
      %1813 = vmatmul.bf16.gmra.mxu0 %v1799
      %v1814 = vpop.f32.mrf.mxu0
      %v1815 = vadd.f32 %v585, %v1814
      %v1816 = vpop.f32.mrf.mxu0
      %v1817 = vadd.f32 %v585, %v1816
      %1818 = vdwg.mxu0
      %1819 = vmatpush.bf16.msra.mxu0 %v779
      %1820 = vmatpush.bf16.msra.mxu0 %v777
      %1821 = vmatpush.bf16.msra.mxu0 %v775
      %1822 = vmatpush.bf16.msra.mxu0 %v773
      %1823 = vmatpush.bf16.msra.mxu0 %v771
      %1824 = vmatpush.bf16.msra.mxu0 %v769
      %1825 = vmatpush.bf16.msra.mxu0 %v767
      %1826 = vmatpush.bf16.msra.mxu0 %v765
      %1827 = vmatmul.bf16.gmra.mxu0 %v1800
      %v1828 = vpop.f32.mrf.mxu0
      %v1829 = vadd.f32 %v1815, %v1828
      %v1830 = vpop.f32.mrf.mxu0
      %v1831 = vadd.f32 %v1817, %v1830
      %1832 = vdwg.mxu0
      %1833 = vmatpush.bf16.msra.mxu0 %v795
      %1834 = vmatpush.bf16.msra.mxu0 %v793
      %1835 = vmatpush.bf16.msra.mxu0 %v791
      %1836 = vmatpush.bf16.msra.mxu0 %v789
      %1837 = vmatpush.bf16.msra.mxu0 %v787
      %1838 = vmatpush.bf16.msra.mxu0 %v785
      %1839 = vmatpush.bf16.msra.mxu0 %v783
      %1840 = vmatpush.bf16.msra.mxu0 %v781
      %1841 = vmatmul.bf16.gmra.mxu0 %v1801
      %v1842 = vpop.f32.mrf.mxu0
      %v1843 = vadd.f32 %v1829, %v1842
      %v1844 = vpop.f32.mrf.mxu0
      %v1845 = vadd.f32 %v1831, %v1844
      %1846 = vdwg.mxu0
      %1847 = vmatpush.bf16.msra.mxu0 %v764
      %1848 = vmatpush.bf16.msra.mxu0 %v762
      %1849 = vmatpush.bf16.msra.mxu0 %v760
      %1850 = vmatpush.bf16.msra.mxu0 %v758
      %1851 = vmatpush.bf16.msra.mxu0 %v756
      %1852 = vmatpush.bf16.msra.mxu0 %v754
      %1853 = vmatpush.bf16.msra.mxu0 %v752
      %1854 = vmatpush.bf16.msra.mxu0 %v750
      %1855 = vmatmul.bf16.gmra.mxu0 %v1799
      %v1856 = vpop.f32.mrf.mxu0
      %v1857 = vadd.f32 %v586, %v1856
      %v1858 = vpop.f32.mrf.mxu0
      %v1859 = vadd.f32 %v586, %v1858
      %1860 = vdwg.mxu0
      %1861 = vmatpush.bf16.msra.mxu0 %v780
      %1862 = vmatpush.bf16.msra.mxu0 %v778
      %1863 = vmatpush.bf16.msra.mxu0 %v776
      %1864 = vmatpush.bf16.msra.mxu0 %v774
      %1865 = vmatpush.bf16.msra.mxu0 %v772
      %1866 = vmatpush.bf16.msra.mxu0 %v770
      %1867 = vmatpush.bf16.msra.mxu0 %v768
      %1868 = vmatpush.bf16.msra.mxu0 %v766
      %1869 = vmatmul.bf16.gmra.mxu0 %v1800
      %v1870 = vpop.f32.mrf.mxu0
      %v1871 = vadd.f32 %v1857, %v1870
      %v1872 = vpop.f32.mrf.mxu0
      %v1873 = vadd.f32 %v1859, %v1872
      %1874 = vdwg.mxu0
      %1875 = vmatpush.bf16.msra.mxu0 %v796
      %1876 = vmatpush.bf16.msra.mxu0 %v794
      %1877 = vmatpush.bf16.msra.mxu0 %v792
      %1878 = vmatpush.bf16.msra.mxu0 %v790
      %1879 = vmatpush.bf16.msra.mxu0 %v788
      %1880 = vmatpush.bf16.msra.mxu0 %v786
      %1881 = vmatpush.bf16.msra.mxu0 %v784
      %1882 = vmatpush.bf16.msra.mxu0 %v782
      %1883 = vmatmul.bf16.gmra.mxu0 %v1801
      %v1884 = vpop.f32.mrf.mxu0
      %v1885 = vadd.f32 %v1871, %v1884
      %v1886 = vpop.f32.mrf.mxu0
      %v1887 = vadd.f32 %v1873, %v1886
      %1888 = vdwg.mxu0
      %vm1889 = vcmp.gt.f32.partialorder %v1843, 0.0
      %vm1890 = vcmp.gt.f32.partialorder %v1885, 0.0
      %vm1891 = vcmp.gt.f32.partialorder %v1845, 0.0
      %vm1892 = vcmp.gt.f32.partialorder %v1887, 0.0
      %v1893 = vmul.f32 %v1843, 0.2
      %v1894 = vmul.f32 %v1885, 0.2
      %v1895 = vmul.f32 %v1845, 0.2
      %v1896 = vmul.f32 %v1887, 0.2
      %v1897 = vsel %vm1889, %v1843, %v1893
      %v1898 = vsel %vm1890, %v1885, %v1894
      %v1899 = vsel %vm1891, %v1845, %v1895
      %v1900 = vsel %vm1892, %v1887, %v1896
      %1901 = vst [vmem:[#allocation2 + $0x90] sm:$0xff] %v1897
      %1902 = vst [vmem:[#allocation2 + $0x98] sm:$0xff] %v1898
      %1903 = vst [vmem:[#allocation2 + $0x190] sm:$0xff] %v1899
      %1904 = vst [vmem:[#allocation2 + $0x198] sm:$0xff] %v1900
      %v1905 = vld [vmem:[%s495 + $0x48] sm:$0xff]
      %v1906 = vld [vmem:[%s495 + $0x50] sm:$0xf]
      %v1907 = vld [vmem:[%s495 + $0xc0] sm:$0xff]
      %v1908 = vld [vmem:[%s495 + $0xc8] sm:$0xf]
      %v1913 = vunpack.c.l.b16 %v1905
      %v1914 = vunpack.c.h.b16 %v1905
      %v1915 = vunpack.c.l.b16 %v1906
      %v1916 = vunpack.c.l.b16 %v1907
      %v1917 = vunpack.c.h.b16 %v1907
      %v1918 = vunpack.c.l.b16 %v1908
      %v1919 = vpack.c.b16 %v1916, %v1913
      %v1920 = vpack.c.b16 %v1917, %v1914
      %v1921 = vpack.c.b16 %v1918, %v1915
      %1925 = vmatpush.bf16.msra.mxu0 %v763
      %1926 = vmatpush.bf16.msra.mxu0 %v761
      %1927 = vmatpush.bf16.msra.mxu0 %v759
      %1928 = vmatpush.bf16.msra.mxu0 %v757
      %1929 = vmatpush.bf16.msra.mxu0 %v755
      %1930 = vmatpush.bf16.msra.mxu0 %v753
      %1931 = vmatpush.bf16.msra.mxu0 %v751
      %1932 = vmatpush.bf16.msra.mxu0 %v749
      %1933 = vmatmul.bf16.gmra.mxu0 %v1919
      %v1934 = vpop.f32.mrf.mxu0
      %v1935 = vadd.f32 %v585, %v1934
      %v1936 = vpop.f32.mrf.mxu0
      %v1937 = vadd.f32 %v585, %v1936
      %1938 = vdwg.mxu0
      %1939 = vmatpush.bf16.msra.mxu0 %v779
      %1940 = vmatpush.bf16.msra.mxu0 %v777
      %1941 = vmatpush.bf16.msra.mxu0 %v775
      %1942 = vmatpush.bf16.msra.mxu0 %v773
      %1943 = vmatpush.bf16.msra.mxu0 %v771
      %1944 = vmatpush.bf16.msra.mxu0 %v769
      %1945 = vmatpush.bf16.msra.mxu0 %v767
      %1946 = vmatpush.bf16.msra.mxu0 %v765
      %1947 = vmatmul.bf16.gmra.mxu0 %v1920
      %v1948 = vpop.f32.mrf.mxu0
      %v1949 = vadd.f32 %v1935, %v1948
      %v1950 = vpop.f32.mrf.mxu0
      %v1951 = vadd.f32 %v1937, %v1950
      %1952 = vdwg.mxu0
      %1953 = vmatpush.bf16.msra.mxu0 %v795
      %1954 = vmatpush.bf16.msra.mxu0 %v793
      %1955 = vmatpush.bf16.msra.mxu0 %v791
      %1956 = vmatpush.bf16.msra.mxu0 %v789
      %1957 = vmatpush.bf16.msra.mxu0 %v787
      %1958 = vmatpush.bf16.msra.mxu0 %v785
      %1959 = vmatpush.bf16.msra.mxu0 %v783
      %1960 = vmatpush.bf16.msra.mxu0 %v781
      %1961 = vmatmul.bf16.gmra.mxu0 %v1921
      %v1962 = vpop.f32.mrf.mxu0
      %v1963 = vadd.f32 %v1949, %v1962
      %v1964 = vpop.f32.mrf.mxu0
      %v1965 = vadd.f32 %v1951, %v1964
      %1966 = vdwg.mxu0
      %1967 = vmatpush.bf16.msra.mxu0 %v764
      %1968 = vmatpush.bf16.msra.mxu0 %v762
      %1969 = vmatpush.bf16.msra.mxu0 %v760
      %1970 = vmatpush.bf16.msra.mxu0 %v758
      %1971 = vmatpush.bf16.msra.mxu0 %v756
      %1972 = vmatpush.bf16.msra.mxu0 %v754
      %1973 = vmatpush.bf16.msra.mxu0 %v752
      %1974 = vmatpush.bf16.msra.mxu0 %v750
      %1975 = vmatmul.bf16.gmra.mxu0 %v1919
      %v1976 = vpop.f32.mrf.mxu0
      %v1977 = vadd.f32 %v586, %v1976
      %v1978 = vpop.f32.mrf.mxu0
      %v1979 = vadd.f32 %v586, %v1978
      %1980 = vdwg.mxu0
      %1981 = vmatpush.bf16.msra.mxu0 %v780
      %1982 = vmatpush.bf16.msra.mxu0 %v778
      %1983 = vmatpush.bf16.msra.mxu0 %v776
      %1984 = vmatpush.bf16.msra.mxu0 %v774
      %1985 = vmatpush.bf16.msra.mxu0 %v772
      %1986 = vmatpush.bf16.msra.mxu0 %v770
      %1987 = vmatpush.bf16.msra.mxu0 %v768
      %1988 = vmatpush.bf16.msra.mxu0 %v766
      %1989 = vmatmul.bf16.gmra.mxu0 %v1920
      %v1990 = vpop.f32.mrf.mxu0
      %v1991 = vadd.f32 %v1977, %v1990
      %v1992 = vpop.f32.mrf.mxu0
      %v1993 = vadd.f32 %v1979, %v1992
      %1994 = vdwg.mxu0
      %1995 = vmatpush.bf16.msra.mxu0 %v796
      %1996 = vmatpush.bf16.msra.mxu0 %v794
      %1997 = vmatpush.bf16.msra.mxu0 %v792
      %1998 = vmatpush.bf16.msra.mxu0 %v790
      %1999 = vmatpush.bf16.msra.mxu0 %v788
      %2000 = vmatpush.bf16.msra.mxu0 %v786
      %2001 = vmatpush.bf16.msra.mxu0 %v784
      %2002 = vmatpush.bf16.msra.mxu0 %v782
      %2003 = vmatmul.bf16.gmra.mxu0 %v1921
      %v2004 = vpop.f32.mrf.mxu0
      %v2005 = vadd.f32 %v1991, %v2004
      %v2006 = vpop.f32.mrf.mxu0
      %v2007 = vadd.f32 %v1993, %v2006
      %2008 = vdwg.mxu0
      %vm2009 = vcmp.gt.f32.partialorder %v1963, 0.0
      %vm2010 = vcmp.gt.f32.partialorder %v2005, 0.0
      %vm2011 = vcmp.gt.f32.partialorder %v1965, 0.0
      %vm2012 = vcmp.gt.f32.partialorder %v2007, 0.0
      %v2013 = vmul.f32 %v1963, 0.2
      %v2014 = vmul.f32 %v2005, 0.2
      %v2015 = vmul.f32 %v1965, 0.2
      %v2016 = vmul.f32 %v2007, 0.2
      %v2017 = vsel %vm2009, %v1963, %v2013
      %v2018 = vsel %vm2010, %v2005, %v2014
      %v2019 = vsel %vm2011, %v1965, %v2015
      %v2020 = vsel %vm2012, %v2007, %v2016
      %2021 = vst [vmem:[#allocation2 + $0xa0] sm:$0xff] %v2017
      %2022 = vst [vmem:[#allocation2 + $0xa8] sm:$0xff] %v2018
      %2023 = vst [vmem:[#allocation2 + $0x1a0] sm:$0xff] %v2019
      %2024 = vst [vmem:[#allocation2 + $0x1a8] sm:$0xff] %v2020
      %v2025 = vld [vmem:[%s495 + $0x50] sm:$0xff]
      %v2026 = vld [vmem:[%s495 + $0x58] sm:$0xf]
      %v2027 = vld [vmem:[%s495 + $0xc8] sm:$0xff]
      %v2028 = vld [vmem:[%s495 + $0xd0] sm:$0xf]
      %v2033 = vunpack.c.l.b16 %v2025
      %v2034 = vunpack.c.h.b16 %v2025
      %v2035 = vunpack.c.l.b16 %v2026
      %v2036 = vunpack.c.l.b16 %v2027
      %v2037 = vunpack.c.h.b16 %v2027
      %v2038 = vunpack.c.l.b16 %v2028
      %v2039 = vpack.c.b16 %v2036, %v2033
      %v2040 = vpack.c.b16 %v2037, %v2034
      %v2041 = vpack.c.b16 %v2038, %v2035
      %2045 = vmatpush.bf16.msra.mxu0 %v763
      %2046 = vmatpush.bf16.msra.mxu0 %v761
      %2047 = vmatpush.bf16.msra.mxu0 %v759
      %2048 = vmatpush.bf16.msra.mxu0 %v757
      %2049 = vmatpush.bf16.msra.mxu0 %v755
      %2050 = vmatpush.bf16.msra.mxu0 %v753
      %2051 = vmatpush.bf16.msra.mxu0 %v751
      %2052 = vmatpush.bf16.msra.mxu0 %v749
      %2053 = vmatmul.bf16.gmra.mxu0 %v2039
      %v2054 = vpop.f32.mrf.mxu0
      %v2055 = vadd.f32 %v585, %v2054
      %v2056 = vpop.f32.mrf.mxu0
      %v2057 = vadd.f32 %v585, %v2056
      %2058 = vdwg.mxu0
      %2059 = vmatpush.bf16.msra.mxu0 %v779
      %2060 = vmatpush.bf16.msra.mxu0 %v777
      %2061 = vmatpush.bf16.msra.mxu0 %v775
      %2062 = vmatpush.bf16.msra.mxu0 %v773
      %2063 = vmatpush.bf16.msra.mxu0 %v771
      %2064 = vmatpush.bf16.msra.mxu0 %v769
      %2065 = vmatpush.bf16.msra.mxu0 %v767
      %2066 = vmatpush.bf16.msra.mxu0 %v765
      %2067 = vmatmul.bf16.gmra.mxu0 %v2040
      %v2068 = vpop.f32.mrf.mxu0
      %v2069 = vadd.f32 %v2055, %v2068
      %v2070 = vpop.f32.mrf.mxu0
      %v2071 = vadd.f32 %v2057, %v2070
      %2072 = vdwg.mxu0
      %2073 = vmatpush.bf16.msra.mxu0 %v795
      %2074 = vmatpush.bf16.msra.mxu0 %v793
      %2075 = vmatpush.bf16.msra.mxu0 %v791
      %2076 = vmatpush.bf16.msra.mxu0 %v789
      %2077 = vmatpush.bf16.msra.mxu0 %v787
      %2078 = vmatpush.bf16.msra.mxu0 %v785
      %2079 = vmatpush.bf16.msra.mxu0 %v783
      %2080 = vmatpush.bf16.msra.mxu0 %v781
      %2081 = vmatmul.bf16.gmra.mxu0 %v2041
      %v2082 = vpop.f32.mrf.mxu0
      %v2083 = vadd.f32 %v2069, %v2082
      %v2084 = vpop.f32.mrf.mxu0
      %v2085 = vadd.f32 %v2071, %v2084
      %2086 = vdwg.mxu0
      %2087 = vmatpush.bf16.msra.mxu0 %v764
      %2088 = vmatpush.bf16.msra.mxu0 %v762
      %2089 = vmatpush.bf16.msra.mxu0 %v760
      %2090 = vmatpush.bf16.msra.mxu0 %v758
      %2091 = vmatpush.bf16.msra.mxu0 %v756
      %2092 = vmatpush.bf16.msra.mxu0 %v754
      %2093 = vmatpush.bf16.msra.mxu0 %v752
      %2094 = vmatpush.bf16.msra.mxu0 %v750
      %2095 = vmatmul.bf16.gmra.mxu0 %v2039
      %v2096 = vpop.f32.mrf.mxu0
      %v2097 = vadd.f32 %v586, %v2096
      %v2098 = vpop.f32.mrf.mxu0
      %v2099 = vadd.f32 %v586, %v2098
      %2100 = vdwg.mxu0
      %2101 = vmatpush.bf16.msra.mxu0 %v780
      %2102 = vmatpush.bf16.msra.mxu0 %v778
      %2103 = vmatpush.bf16.msra.mxu0 %v776
      %2104 = vmatpush.bf16.msra.mxu0 %v774
      %2105 = vmatpush.bf16.msra.mxu0 %v772
      %2106 = vmatpush.bf16.msra.mxu0 %v770
      %2107 = vmatpush.bf16.msra.mxu0 %v768
      %2108 = vmatpush.bf16.msra.mxu0 %v766
      %2109 = vmatmul.bf16.gmra.mxu0 %v2040
      %v2110 = vpop.f32.mrf.mxu0
      %v2111 = vadd.f32 %v2097, %v2110
      %v2112 = vpop.f32.mrf.mxu0
      %v2113 = vadd.f32 %v2099, %v2112
      %2114 = vdwg.mxu0
      %2115 = vmatpush.bf16.msra.mxu0 %v796
      %2116 = vmatpush.bf16.msra.mxu0 %v794
      %2117 = vmatpush.bf16.msra.mxu0 %v792
      %2118 = vmatpush.bf16.msra.mxu0 %v790
      %2119 = vmatpush.bf16.msra.mxu0 %v788
      %2120 = vmatpush.bf16.msra.mxu0 %v786
      %2121 = vmatpush.bf16.msra.mxu0 %v784
      %2122 = vmatpush.bf16.msra.mxu0 %v782
      %2123 = vmatmul.bf16.gmra.mxu0 %v2041
      %v2124 = vpop.f32.mrf.mxu0
      %v2125 = vadd.f32 %v2111, %v2124
      %v2126 = vpop.f32.mrf.mxu0
      %v2127 = vadd.f32 %v2113, %v2126
      %2128 = vdwg.mxu0
      %vm2129 = vcmp.gt.f32.partialorder %v2083, 0.0
      %vm2130 = vcmp.gt.f32.partialorder %v2125, 0.0
      %vm2131 = vcmp.gt.f32.partialorder %v2085, 0.0
      %vm2132 = vcmp.gt.f32.partialorder %v2127, 0.0
      %v2133 = vmul.f32 %v2083, 0.2
      %v2134 = vmul.f32 %v2125, 0.2
      %v2135 = vmul.f32 %v2085, 0.2
      %v2136 = vmul.f32 %v2127, 0.2
      %v2137 = vsel %vm2129, %v2083, %v2133
      %v2138 = vsel %vm2130, %v2125, %v2134
      %v2139 = vsel %vm2131, %v2085, %v2135
      %v2140 = vsel %vm2132, %v2127, %v2136
      %2141 = vst [vmem:[#allocation2 + $0xb0] sm:$0xff] %v2137
      %2142 = vst [vmem:[#allocation2 + $0xb8] sm:$0xff] %v2138
      %2143 = vst [vmem:[#allocation2 + $0x1b0] sm:$0xff] %v2139
      %2144 = vst [vmem:[#allocation2 + $0x1b8] sm:$0xff] %v2140
      %v2145 = vld [vmem:[%s495 + $0x58] sm:$0xff]
      %v2146 = vld [vmem:[%s495 + $0x60] sm:$0xf]
      %v2147 = vld [vmem:[%s495 + $0xd0] sm:$0xff]
      %v2148 = vld [vmem:[%s495 + $0xd8] sm:$0xf]
      %v2153 = vunpack.c.l.b16 %v2145
      %v2154 = vunpack.c.h.b16 %v2145
      %v2155 = vunpack.c.l.b16 %v2146
      %v2156 = vunpack.c.l.b16 %v2147
      %v2157 = vunpack.c.h.b16 %v2147
      %v2158 = vunpack.c.l.b16 %v2148
      %v2159 = vpack.c.b16 %v2156, %v2153
      %v2160 = vpack.c.b16 %v2157, %v2154
      %v2161 = vpack.c.b16 %v2158, %v2155
      %2165 = vmatpush.bf16.msra.mxu0 %v763
      %2166 = vmatpush.bf16.msra.mxu0 %v761
      %2167 = vmatpush.bf16.msra.mxu0 %v759
      %2168 = vmatpush.bf16.msra.mxu0 %v757
      %2169 = vmatpush.bf16.msra.mxu0 %v755
      %2170 = vmatpush.bf16.msra.mxu0 %v753
      %2171 = vmatpush.bf16.msra.mxu0 %v751
      %2172 = vmatpush.bf16.msra.mxu0 %v749
      %2173 = vmatmul.bf16.gmra.mxu0 %v2159
      %v2174 = vpop.f32.mrf.mxu0
      %v2175 = vadd.f32 %v585, %v2174
      %v2176 = vpop.f32.mrf.mxu0
      %v2177 = vadd.f32 %v585, %v2176
      %2178 = vdwg.mxu0
      %2179 = vmatpush.bf16.msra.mxu0 %v779
      %2180 = vmatpush.bf16.msra.mxu0 %v777
      %2181 = vmatpush.bf16.msra.mxu0 %v775
      %2182 = vmatpush.bf16.msra.mxu0 %v773
      %2183 = vmatpush.bf16.msra.mxu0 %v771
      %2184 = vmatpush.bf16.msra.mxu0 %v769
      %2185 = vmatpush.bf16.msra.mxu0 %v767
      %2186 = vmatpush.bf16.msra.mxu0 %v765
      %2187 = vmatmul.bf16.gmra.mxu0 %v2160
      %v2188 = vpop.f32.mrf.mxu0
      %v2189 = vadd.f32 %v2175, %v2188
      %v2190 = vpop.f32.mrf.mxu0
      %v2191 = vadd.f32 %v2177, %v2190
      %2192 = vdwg.mxu0
      %2193 = vmatpush.bf16.msra.mxu0 %v795
      %2194 = vmatpush.bf16.msra.mxu0 %v793
      %2195 = vmatpush.bf16.msra.mxu0 %v791
      %2196 = vmatpush.bf16.msra.mxu0 %v789
      %2197 = vmatpush.bf16.msra.mxu0 %v787
      %2198 = vmatpush.bf16.msra.mxu0 %v785
      %2199 = vmatpush.bf16.msra.mxu0 %v783
      %2200 = vmatpush.bf16.msra.mxu0 %v781
      %2201 = vmatmul.bf16.gmra.mxu0 %v2161
      %v2202 = vpop.f32.mrf.mxu0
      %v2203 = vadd.f32 %v2189, %v2202
      %v2204 = vpop.f32.mrf.mxu0
      %v2205 = vadd.f32 %v2191, %v2204
      %2206 = vdwg.mxu0
      %2207 = vmatpush.bf16.msra.mxu0 %v764
      %2208 = vmatpush.bf16.msra.mxu0 %v762
      %2209 = vmatpush.bf16.msra.mxu0 %v760
      %2210 = vmatpush.bf16.msra.mxu0 %v758
      %2211 = vmatpush.bf16.msra.mxu0 %v756
      %2212 = vmatpush.bf16.msra.mxu0 %v754
      %2213 = vmatpush.bf16.msra.mxu0 %v752
      %2214 = vmatpush.bf16.msra.mxu0 %v750
      %2215 = vmatmul.bf16.gmra.mxu0 %v2159
      %v2216 = vpop.f32.mrf.mxu0
      %v2217 = vadd.f32 %v586, %v2216
      %v2218 = vpop.f32.mrf.mxu0
      %v2219 = vadd.f32 %v586, %v2218
      %2220 = vdwg.mxu0
      %2221 = vmatpush.bf16.msra.mxu0 %v780
      %2222 = vmatpush.bf16.msra.mxu0 %v778
      %2223 = vmatpush.bf16.msra.mxu0 %v776
      %2224 = vmatpush.bf16.msra.mxu0 %v774
      %2225 = vmatpush.bf16.msra.mxu0 %v772
      %2226 = vmatpush.bf16.msra.mxu0 %v770
      %2227 = vmatpush.bf16.msra.mxu0 %v768
      %2228 = vmatpush.bf16.msra.mxu0 %v766
      %2229 = vmatmul.bf16.gmra.mxu0 %v2160
      %v2230 = vpop.f32.mrf.mxu0
      %v2231 = vadd.f32 %v2217, %v2230
      %v2232 = vpop.f32.mrf.mxu0
      %v2233 = vadd.f32 %v2219, %v2232
      %2234 = vdwg.mxu0
      %2235 = vmatpush.bf16.msra.mxu0 %v796
      %2236 = vmatpush.bf16.msra.mxu0 %v794
      %2237 = vmatpush.bf16.msra.mxu0 %v792
      %2238 = vmatpush.bf16.msra.mxu0 %v790
      %2239 = vmatpush.bf16.msra.mxu0 %v788
      %2240 = vmatpush.bf16.msra.mxu0 %v786
      %2241 = vmatpush.bf16.msra.mxu0 %v784
      %2242 = vmatpush.bf16.msra.mxu0 %v782
      %2243 = vmatmul.bf16.gmra.mxu0 %v2161
      %v2244 = vpop.f32.mrf.mxu0
      %v2245 = vadd.f32 %v2231, %v2244
      %v2246 = vpop.f32.mrf.mxu0
      %v2247 = vadd.f32 %v2233, %v2246
      %2248 = vdwg.mxu0
      %vm2249 = vcmp.gt.f32.partialorder %v2203, 0.0
      %vm2250 = vcmp.gt.f32.partialorder %v2245, 0.0
      %vm2251 = vcmp.gt.f32.partialorder %v2205, 0.0
      %vm2252 = vcmp.gt.f32.partialorder %v2247, 0.0
      %v2253 = vmul.f32 %v2203, 0.2
      %v2254 = vmul.f32 %v2245, 0.2
      %v2255 = vmul.f32 %v2205, 0.2
      %v2256 = vmul.f32 %v2247, 0.2
      %v2257 = vsel %vm2249, %v2203, %v2253
      %v2258 = vsel %vm2250, %v2245, %v2254
      %v2259 = vsel %vm2251, %v2205, %v2255
      %v2260 = vsel %vm2252, %v2247, %v2256
      %2261 = vst [vmem:[#allocation2 + $0xc0] sm:$0xff] %v2257
      %2262 = vst [vmem:[#allocation2 + $0xc8] sm:$0xff] %v2258
      %2263 = vst [vmem:[#allocation2 + $0x1c0] sm:$0xff] %v2259
      %2264 = vst [vmem:[#allocation2 + $0x1c8] sm:$0xff] %v2260
      %v2265 = vld [vmem:[%s495 + $0x60] sm:$0xff]
      %v2266 = vld [vmem:[%s495 + $0x68] sm:$0xf]
      %v2267 = vld [vmem:[%s495 + $0xd8] sm:$0xff]
      %v2268 = vld [vmem:[%s495 + $0xe0] sm:$0xf]
      %v2273 = vunpack.c.l.b16 %v2265
      %v2274 = vunpack.c.h.b16 %v2265
      %v2275 = vunpack.c.l.b16 %v2266
      %v2276 = vunpack.c.l.b16 %v2267
      %v2277 = vunpack.c.h.b16 %v2267
      %v2278 = vunpack.c.l.b16 %v2268
      %v2279 = vpack.c.b16 %v2276, %v2273
      %v2280 = vpack.c.b16 %v2277, %v2274
      %v2281 = vpack.c.b16 %v2278, %v2275
      %2285 = vmatpush.bf16.msra.mxu0 %v763
      %2286 = vmatpush.bf16.msra.mxu0 %v761
      %2287 = vmatpush.bf16.msra.mxu0 %v759
      %2288 = vmatpush.bf16.msra.mxu0 %v757
      %2289 = vmatpush.bf16.msra.mxu0 %v755
      %2290 = vmatpush.bf16.msra.mxu0 %v753
      %2291 = vmatpush.bf16.msra.mxu0 %v751
      %2292 = vmatpush.bf16.msra.mxu0 %v749
      %2293 = vmatmul.bf16.gmra.mxu0 %v2279
      %v2294 = vpop.f32.mrf.mxu0
      %v2295 = vadd.f32 %v585, %v2294
      %v2296 = vpop.f32.mrf.mxu0
      %v2297 = vadd.f32 %v585, %v2296
      %2298 = vdwg.mxu0
      %2299 = vmatpush.bf16.msra.mxu0 %v779
      %2300 = vmatpush.bf16.msra.mxu0 %v777
      %2301 = vmatpush.bf16.msra.mxu0 %v775
      %2302 = vmatpush.bf16.msra.mxu0 %v773
      %2303 = vmatpush.bf16.msra.mxu0 %v771
      %2304 = vmatpush.bf16.msra.mxu0 %v769
      %2305 = vmatpush.bf16.msra.mxu0 %v767
      %2306 = vmatpush.bf16.msra.mxu0 %v765
      %2307 = vmatmul.bf16.gmra.mxu0 %v2280
      %v2308 = vpop.f32.mrf.mxu0
      %v2309 = vadd.f32 %v2295, %v2308
      %v2310 = vpop.f32.mrf.mxu0
      %v2311 = vadd.f32 %v2297, %v2310
      %2312 = vdwg.mxu0
      %2313 = vmatpush.bf16.msra.mxu0 %v795
      %2314 = vmatpush.bf16.msra.mxu0 %v793
      %2315 = vmatpush.bf16.msra.mxu0 %v791
      %2316 = vmatpush.bf16.msra.mxu0 %v789
      %2317 = vmatpush.bf16.msra.mxu0 %v787
      %2318 = vmatpush.bf16.msra.mxu0 %v785
      %2319 = vmatpush.bf16.msra.mxu0 %v783
      %2320 = vmatpush.bf16.msra.mxu0 %v781
      %2321 = vmatmul.bf16.gmra.mxu0 %v2281
      %v2322 = vpop.f32.mrf.mxu0
      %v2323 = vadd.f32 %v2309, %v2322
      %v2324 = vpop.f32.mrf.mxu0
      %v2325 = vadd.f32 %v2311, %v2324
      %2326 = vdwg.mxu0
      %2327 = vmatpush.bf16.msra.mxu0 %v764
      %2328 = vmatpush.bf16.msra.mxu0 %v762
      %2329 = vmatpush.bf16.msra.mxu0 %v760
      %2330 = vmatpush.bf16.msra.mxu0 %v758
      %2331 = vmatpush.bf16.msra.mxu0 %v756
      %2332 = vmatpush.bf16.msra.mxu0 %v754
      %2333 = vmatpush.bf16.msra.mxu0 %v752
      %2334 = vmatpush.bf16.msra.mxu0 %v750
      %2335 = vmatmul.bf16.gmra.mxu0 %v2279
      %v2336 = vpop.f32.mrf.mxu0
      %v2337 = vadd.f32 %v586, %v2336
      %v2338 = vpop.f32.mrf.mxu0
      %v2339 = vadd.f32 %v586, %v2338
      %2340 = vdwg.mxu0
      %2341 = vmatpush.bf16.msra.mxu0 %v780
      %2342 = vmatpush.bf16.msra.mxu0 %v778
      %2343 = vmatpush.bf16.msra.mxu0 %v776
      %2344 = vmatpush.bf16.msra.mxu0 %v774
      %2345 = vmatpush.bf16.msra.mxu0 %v772
      %2346 = vmatpush.bf16.msra.mxu0 %v770
      %2347 = vmatpush.bf16.msra.mxu0 %v768
      %2348 = vmatpush.bf16.msra.mxu0 %v766
      %2349 = vmatmul.bf16.gmra.mxu0 %v2280
      %v2350 = vpop.f32.mrf.mxu0
      %v2351 = vadd.f32 %v2337, %v2350
      %v2352 = vpop.f32.mrf.mxu0
      %v2353 = vadd.f32 %v2339, %v2352
      %2354 = vdwg.mxu0
      %2355 = vmatpush.bf16.msra.mxu0 %v796
      %2356 = vmatpush.bf16.msra.mxu0 %v794
      %2357 = vmatpush.bf16.msra.mxu0 %v792
      %2358 = vmatpush.bf16.msra.mxu0 %v790
      %2359 = vmatpush.bf16.msra.mxu0 %v788
      %2360 = vmatpush.bf16.msra.mxu0 %v786
      %2361 = vmatpush.bf16.msra.mxu0 %v784
      %2362 = vmatpush.bf16.msra.mxu0 %v782
      %2363 = vmatmul.bf16.gmra.mxu0 %v2281
      %v2364 = vpop.f32.mrf.mxu0
      %v2365 = vadd.f32 %v2351, %v2364
      %v2366 = vpop.f32.mrf.mxu0
      %v2367 = vadd.f32 %v2353, %v2366
      %2368 = vdwg.mxu0
      %vm2369 = vcmp.gt.f32.partialorder %v2323, 0.0
      %vm2370 = vcmp.gt.f32.partialorder %v2365, 0.0
      %vm2371 = vcmp.gt.f32.partialorder %v2325, 0.0
      %vm2372 = vcmp.gt.f32.partialorder %v2367, 0.0
      %v2373 = vmul.f32 %v2323, 0.2
      %v2374 = vmul.f32 %v2365, 0.2
      %v2375 = vmul.f32 %v2325, 0.2
      %v2376 = vmul.f32 %v2367, 0.2
      %v2377 = vsel %vm2369, %v2323, %v2373
      %v2378 = vsel %vm2370, %v2365, %v2374
      %v2379 = vsel %vm2371, %v2325, %v2375
      %v2380 = vsel %vm2372, %v2367, %v2376
      %2381 = vst [vmem:[#allocation2 + $0xd0] sm:$0xff] %v2377
      %2382 = vst [vmem:[#allocation2 + $0xd8] sm:$0xff] %v2378
      %2383 = vst [vmem:[#allocation2 + $0x1d0] sm:$0xff] %v2379
      %2384 = vst [vmem:[#allocation2 + $0x1d8] sm:$0xff] %v2380
      %v2385 = vld [vmem:[%s495 + $0x68] sm:$0xff]
      %v2386 = vld [vmem:[%s495 + $0x70] sm:$0xf]
      %v2387 = vld [vmem:[%s495 + $0xe0] sm:$0xff]
      %v2388 = vld [vmem:[%s495 + $0xe8] sm:$0xf]
      %v2393 = vunpack.c.l.b16 %v2385
      %v2394 = vunpack.c.h.b16 %v2385
      %v2395 = vunpack.c.l.b16 %v2386
      %v2396 = vunpack.c.l.b16 %v2387
      %v2397 = vunpack.c.h.b16 %v2387
      %v2398 = vunpack.c.l.b16 %v2388
      %v2399 = vpack.c.b16 %v2396, %v2393
      %v2400 = vpack.c.b16 %v2397, %v2394
      %v2401 = vpack.c.b16 %v2398, %v2395
      %2405 = vmatpush.bf16.msra.mxu0 %v763
      %2406 = vmatpush.bf16.msra.mxu0 %v761
      %2407 = vmatpush.bf16.msra.mxu0 %v759
      %2408 = vmatpush.bf16.msra.mxu0 %v757
      %2409 = vmatpush.bf16.msra.mxu0 %v755
      %2410 = vmatpush.bf16.msra.mxu0 %v753
      %2411 = vmatpush.bf16.msra.mxu0 %v751
      %2412 = vmatpush.bf16.msra.mxu0 %v749
      %2413 = vmatmul.bf16.gmra.mxu0 %v2399
      %v2414 = vpop.f32.mrf.mxu0
      %v2415 = vadd.f32 %v585, %v2414
      %v2416 = vpop.f32.mrf.mxu0
      %v2417 = vadd.f32 %v585, %v2416
      %2418 = vdwg.mxu0
      %2419 = vmatpush.bf16.msra.mxu0 %v779
      %2420 = vmatpush.bf16.msra.mxu0 %v777
      %2421 = vmatpush.bf16.msra.mxu0 %v775
      %2422 = vmatpush.bf16.msra.mxu0 %v773
      %2423 = vmatpush.bf16.msra.mxu0 %v771
      %2424 = vmatpush.bf16.msra.mxu0 %v769
      %2425 = vmatpush.bf16.msra.mxu0 %v767
      %2426 = vmatpush.bf16.msra.mxu0 %v765
      %2427 = vmatmul.bf16.gmra.mxu0 %v2400
      %v2428 = vpop.f32.mrf.mxu0
      %v2429 = vadd.f32 %v2415, %v2428
      %v2430 = vpop.f32.mrf.mxu0
      %v2431 = vadd.f32 %v2417, %v2430
      %2432 = vdwg.mxu0
      %2433 = vmatpush.bf16.msra.mxu0 %v795
      %2434 = vmatpush.bf16.msra.mxu0 %v793
      %2435 = vmatpush.bf16.msra.mxu0 %v791
      %2436 = vmatpush.bf16.msra.mxu0 %v789
      %2437 = vmatpush.bf16.msra.mxu0 %v787
      %2438 = vmatpush.bf16.msra.mxu0 %v785
      %2439 = vmatpush.bf16.msra.mxu0 %v783
      %2440 = vmatpush.bf16.msra.mxu0 %v781
      %2441 = vmatmul.bf16.gmra.mxu0 %v2401
      %v2442 = vpop.f32.mrf.mxu0
      %v2443 = vadd.f32 %v2429, %v2442
      %v2444 = vpop.f32.mrf.mxu0
      %v2445 = vadd.f32 %v2431, %v2444
      %2446 = vdwg.mxu0
      %2447 = vmatpush.bf16.msra.mxu0 %v764
      %2448 = vmatpush.bf16.msra.mxu0 %v762
      %2449 = vmatpush.bf16.msra.mxu0 %v760
      %2450 = vmatpush.bf16.msra.mxu0 %v758
      %2451 = vmatpush.bf16.msra.mxu0 %v756
      %2452 = vmatpush.bf16.msra.mxu0 %v754
      %2453 = vmatpush.bf16.msra.mxu0 %v752
      %2454 = vmatpush.bf16.msra.mxu0 %v750
      %2455 = vmatmul.bf16.gmra.mxu0 %v2399
      %v2456 = vpop.f32.mrf.mxu0
      %v2457 = vadd.f32 %v586, %v2456
      %v2458 = vpop.f32.mrf.mxu0
      %v2459 = vadd.f32 %v586, %v2458
      %2460 = vdwg.mxu0
      %2461 = vmatpush.bf16.msra.mxu0 %v780
      %2462 = vmatpush.bf16.msra.mxu0 %v778
      %2463 = vmatpush.bf16.msra.mxu0 %v776
      %2464 = vmatpush.bf16.msra.mxu0 %v774
      %2465 = vmatpush.bf16.msra.mxu0 %v772
      %2466 = vmatpush.bf16.msra.mxu0 %v770
      %2467 = vmatpush.bf16.msra.mxu0 %v768
      %2468 = vmatpush.bf16.msra.mxu0 %v766
      %2469 = vmatmul.bf16.gmra.mxu0 %v2400
      %v2470 = vpop.f32.mrf.mxu0
      %v2471 = vadd.f32 %v2457, %v2470
      %v2472 = vpop.f32.mrf.mxu0
      %v2473 = vadd.f32 %v2459, %v2472
      %2474 = vdwg.mxu0
      %2475 = vmatpush.bf16.msra.mxu0 %v796
      %2476 = vmatpush.bf16.msra.mxu0 %v794
      %2477 = vmatpush.bf16.msra.mxu0 %v792
      %2478 = vmatpush.bf16.msra.mxu0 %v790
      %2479 = vmatpush.bf16.msra.mxu0 %v788
      %2480 = vmatpush.bf16.msra.mxu0 %v786
      %2481 = vmatpush.bf16.msra.mxu0 %v784
      %2482 = vmatpush.bf16.msra.mxu0 %v782
      %2483 = vmatmul.bf16.gmra.mxu0 %v2401
      %v2484 = vpop.f32.mrf.mxu0
      %v2485 = vadd.f32 %v2471, %v2484
      %v2486 = vpop.f32.mrf.mxu0
      %v2487 = vadd.f32 %v2473, %v2486
      %2488 = vdwg.mxu0
      %vm2489 = vcmp.gt.f32.partialorder %v2443, 0.0
      %vm2490 = vcmp.gt.f32.partialorder %v2485, 0.0
      %vm2491 = vcmp.gt.f32.partialorder %v2445, 0.0
      %vm2492 = vcmp.gt.f32.partialorder %v2487, 0.0
      %v2493 = vmul.f32 %v2443, 0.2
      %v2494 = vmul.f32 %v2485, 0.2
      %v2495 = vmul.f32 %v2445, 0.2
      %v2496 = vmul.f32 %v2487, 0.2
      %v2497 = vsel %vm2489, %v2443, %v2493
      %v2498 = vsel %vm2490, %v2485, %v2494
      %v2499 = vsel %vm2491, %v2445, %v2495
      %v2500 = vsel %vm2492, %v2487, %v2496
      %2501 = vst [vmem:[#allocation2 + $0xe0] sm:$0xff] %v2497
      %2502 = vst [vmem:[#allocation2 + $0xe8] sm:$0xff] %v2498
      %2503 = vst [vmem:[#allocation2 + $0x1e0] sm:$0xff] %v2499
      %2504 = vst [vmem:[#allocation2 + $0x1e8] sm:$0xff] %v2500
      %v2505 = vld [vmem:[%s2] sm:$0xff]
      %v2506 = vld [vmem:[%s2 + $0x8] sm:$0xf]
      %v2507 = vld [vmem:[%s2 + $0xc] sm:$0xff]
      %v2508 = vld [vmem:[%s2 + $0x14] sm:$0xf]
      %v2509 = vld [vmem:[%s2 + $0x18] sm:$0xff]
      %v2510 = vld [vmem:[%s2 + $0x20] sm:$0xf]
      %v2511 = vld [vmem:[%s2 + $0x24] sm:$0xff]
      %v2512 = vld [vmem:[%s2 + $0x2c] sm:$0xf]
      %v2513 = vld [vmem:[%s2 + $0x30] sm:$0xff]
      %v2514 = vld [vmem:[%s2 + $0x38] sm:$0xf]
      %v2515 = vld [vmem:[%s2 + $0x3c] sm:$0xff]
      %v2516 = vld [vmem:[%s2 + $0x44] sm:$0xf]
      %v2517 = vld [vmem:[%s2 + $0x48] sm:$0xff]
      %v2518 = vld [vmem:[%s2 + $0x50] sm:$0xf]
      %v2519 = vld [vmem:[%s2 + $0x54] sm:$0xff]
      %v2520 = vld [vmem:[%s2 + $0x5c] sm:$0xf]
      %v2521 = vld [vmem:[%s2 + $0x60] sm:$0xff]
      %v2522 = vld [vmem:[%s2 + $0x68] sm:$0xf]
      %v2523 = vld [vmem:[%s2 + $0x6c] sm:$0xff]
      %v2524 = vld [vmem:[%s2 + $0x74] sm:$0xf]
      %v2525 = vld [vmem:[%s2 + $0x78] sm:$0xff]
      %v2526 = vld [vmem:[%s2 + $0x80] sm:$0xf]
      %v2527 = vld [vmem:[%s2 + $0x84] sm:$0xff]
      %v2528 = vld [vmem:[%s2 + $0x8c] sm:$0xf]
      %v2529 = vld [vmem:[%s2 + $0x90] sm:$0xff]
      %v2530 = vld [vmem:[%s2 + $0x98] sm:$0xf]
      %v2531 = vld [vmem:[%s2 + $0x9c] sm:$0xff]
      %v2532 = vld [vmem:[%s2 + $0xa4] sm:$0xf]
      %v2533 = vld [vmem:[%s2 + $0xa8] sm:$0xff]
      %v2534 = vld [vmem:[%s2 + $0xb0] sm:$0xf]
      %v2535 = vld [vmem:[%s2 + $0xb4] sm:$0xff]
      %v2536 = vld [vmem:[%s2 + $0xbc] sm:$0xf]
      %v2537 = vld [vmem:[%s2 + $0xc0] sm:$0xff]
      %v2538 = vld [vmem:[%s2 + $0xc8] sm:$0xf]
      %v2539 = vld [vmem:[%s2 + $0xcc] sm:$0xff]
      %v2540 = vld [vmem:[%s2 + $0xd4] sm:$0xf]
      %v2541 = vld [vmem:[%s2 + $0xd8] sm:$0xff]
      %v2542 = vld [vmem:[%s2 + $0xe0] sm:$0xf]
      %v2543 = vld [vmem:[%s2 + $0xe4] sm:$0xff]
      %v2544 = vld [vmem:[%s2 + $0xec] sm:$0xf]
      %v2545 = vld [vmem:[%s2 + $0xf0] sm:$0xff]
      %v2546 = vld [vmem:[%s2 + $0xf8] sm:$0xf]
      %v2547 = vld [vmem:[%s2 + $0xfc] sm:$0xff]
      %v2548 = vld [vmem:[%s2 + $0x104] sm:$0xf]
      %v2549 = vld [vmem:[%s2 + $0x108] sm:$0xff]
      %v2550 = vld [vmem:[%s2 + $0x110] sm:$0xf]
      %v2551 = vld [vmem:[%s2 + $0x114] sm:$0xff]
      %v2552 = vld [vmem:[%s2 + $0x11c] sm:$0xf]
      %v2553 = vld [vmem:[%s2 + $0x120] sm:$0xff]
      %v2554 = vld [vmem:[%s2 + $0x128] sm:$0xf]
      %v2555 = vld [vmem:[%s2 + $0x12c] sm:$0xff]
      %v2556 = vld [vmem:[%s2 + $0x134] sm:$0xf]
      %v2557 = vld [vmem:[%s2 + $0x138] sm:$0xff]
      %v2558 = vld [vmem:[%s2 + $0x140] sm:$0xf]
      %v2559 = vld [vmem:[%s2 + $0x144] sm:$0xff]
      %v2560 = vld [vmem:[%s2 + $0x14c] sm:$0xf]
      %v2561 = vld [vmem:[%s2 + $0x150] sm:$0xff]
      %v2562 = vld [vmem:[%s2 + $0x158] sm:$0xf]
      %v2563 = vld [vmem:[%s2 + $0x15c] sm:$0xff]
      %v2564 = vld [vmem:[%s2 + $0x164] sm:$0xf]
      %v2565 = vld [vmem:[%s2 + $0x168] sm:$0xff]
      %v2566 = vld [vmem:[%s2 + $0x170] sm:$0xf]
      %v2567 = vld [vmem:[%s2 + $0x174] sm:$0xff]
      %v2568 = vld [vmem:[%s2 + $0x17c] sm:$0xf]
      %v2569 = vld [vmem:[%s2 + $0x180] sm:$0xff]
      %v2570 = vld [vmem:[%s2 + $0x188] sm:$0xf]
      %v2571 = vld [vmem:[%s2 + $0x18c] sm:$0xff]
      %v2572 = vld [vmem:[%s2 + $0x194] sm:$0xf]
      %v2573 = vld [vmem:[%s2 + $0x198] sm:$0xff]
      %v2574 = vld [vmem:[%s2 + $0x1a0] sm:$0xf]
      %v2575 = vld [vmem:[%s2 + $0x1a4] sm:$0xff]
      %v2576 = vld [vmem:[%s2 + $0x1ac] sm:$0xf]
      %v2577 = vld [vmem:[%s2 + $0x1b0] sm:$0xff]
      %v2578 = vld [vmem:[%s2 + $0x1b8] sm:$0xf]
      %v2579 = vld [vmem:[%s2 + $0x1bc] sm:$0xff]
      %v2580 = vld [vmem:[%s2 + $0x1c4] sm:$0xf]
      %v2581 = vld [vmem:[%s2 + $0x1c8] sm:$0xff]
      %v2582 = vld [vmem:[%s2 + $0x1d0] sm:$0xf]
      %v2583 = vld [vmem:[%s2 + $0x1d4] sm:$0xff]
      %v2584 = vld [vmem:[%s2 + $0x1dc] sm:$0xf]
      %v2585 = vld [vmem:[%s2 + $0x1e0] sm:$0xff]
      %v2586 = vld [vmem:[%s2 + $0x1e8] sm:$0xf]
      %v2587 = vld [vmem:[%s2 + $0x1ec] sm:$0xff]
      %v2588 = vld [vmem:[%s2 + $0x1f4] sm:$0xf]
      %v2589 = vld [vmem:[%s2 + $0x1f8] sm:$0xff]
      %v2590 = vld [vmem:[%s2 + $0x200] sm:$0xf]
      %v2591 = vld [vmem:[%s2 + $0x204] sm:$0xff]
      %v2592 = vld [vmem:[%s2 + $0x20c] sm:$0xf]
      %v2593 = vld [vmem:[%s2 + $0x210] sm:$0xff]
      %v2594 = vld [vmem:[%s2 + $0x218] sm:$0xf]
      %v2595 = vld [vmem:[%s2 + $0x21c] sm:$0xff]
      %v2596 = vld [vmem:[%s2 + $0x224] sm:$0xf]
      %v2597 = vld [vmem:[%s2 + $0x228] sm:$0xff]
      %v2598 = vld [vmem:[%s2 + $0x230] sm:$0xf]
      %v2599 = vld [vmem:[%s2 + $0x234] sm:$0xff]
      %v2600 = vld [vmem:[%s2 + $0x23c] sm:$0xf]
      %v2601 = vld [vmem:[%s2 + $0x240] sm:$0xff]
      %v2602 = vld [vmem:[%s2 + $0x248] sm:$0xf]
      %v2603 = vld [vmem:[%s2 + $0x24c] sm:$0xff]
      %v2604 = vld [vmem:[%s2 + $0x254] sm:$0xf]
      %v2605 = vld [vmem:[%s2 + $0x258] sm:$0xff]
      %v2606 = vld [vmem:[%s2 + $0x260] sm:$0xf]
      %v2607 = vld [vmem:[%s2 + $0x264] sm:$0xff]
      %v2608 = vld [vmem:[%s2 + $0x26c] sm:$0xf]
      %v2609 = vld [vmem:[%s2 + $0x270] sm:$0xff]
      %v2610 = vld [vmem:[%s2 + $0x278] sm:$0xf]
      %v2611 = vld [vmem:[%s2 + $0x27c] sm:$0xff]
      %v2612 = vld [vmem:[%s2 + $0x284] sm:$0xf]
      %v2613 = vld [vmem:[%s2 + $0x288] sm:$0xff]
      %v2614 = vld [vmem:[%s2 + $0x290] sm:$0xf]
      %v2615 = vld [vmem:[%s2 + $0x294] sm:$0xff]
      %v2616 = vld [vmem:[%s2 + $0x29c] sm:$0xf]
      %v2617 = vld [vmem:[%s2 + $0x2a0] sm:$0xff]
      %v2618 = vld [vmem:[%s2 + $0x2a8] sm:$0xf]
      %v2619 = vld [vmem:[%s2 + $0x2ac] sm:$0xff]
      %v2620 = vld [vmem:[%s2 + $0x2b4] sm:$0xf]
      %v2621 = vld [vmem:[%s2 + $0x2b8] sm:$0xff]
      %v2622 = vld [vmem:[%s2 + $0x2c0] sm:$0xf]
      %v2623 = vld [vmem:[%s2 + $0x2c4] sm:$0xff]
      %v2624 = vld [vmem:[%s2 + $0x2cc] sm:$0xf]
      %v2625 = vld [vmem:[%s2 + $0x2d0] sm:$0xff]
      %v2626 = vld [vmem:[%s2 + $0x2d8] sm:$0xf]
      %v2627 = vld [vmem:[%s2 + $0x2dc] sm:$0xff]
      %v2628 = vld [vmem:[%s2 + $0x2e4] sm:$0xf]
      %v2629 = vld [vmem:[%s2 + $0x2e8] sm:$0xff]
      %v2630 = vld [vmem:[%s2 + $0x2f0] sm:$0xf]
      %v2631 = vld [vmem:[%s2 + $0x2f4] sm:$0xff]
      %v2632 = vld [vmem:[%s2 + $0x2fc] sm:$0xf]
      %v2633 = vld [vmem:[%s2 + $0x300] sm:$0xff]
      %v2634 = vld [vmem:[%s2 + $0x308] sm:$0xf]
      %v2635 = vld [vmem:[%s2 + $0x30c] sm:$0xff]
      %v2636 = vld [vmem:[%s2 + $0x314] sm:$0xf]
      %v2637 = vld [vmem:[%s2 + $0x318] sm:$0xff]
      %v2638 = vld [vmem:[%s2 + $0x320] sm:$0xf]
      %v2639 = vld [vmem:[%s2 + $0x324] sm:$0xff]
      %v2640 = vld [vmem:[%s2 + $0x32c] sm:$0xf]
      %v2641 = vld [vmem:[%s2 + $0x330] sm:$0xff]
      %v2642 = vld [vmem:[%s2 + $0x338] sm:$0xf]
      %v2643 = vld [vmem:[%s2 + $0x33c] sm:$0xff]
      %v2644 = vld [vmem:[%s2 + $0x344] sm:$0xf]
      %v2645 = vld [vmem:[%s2 + $0x348] sm:$0xff]
      %v2646 = vld [vmem:[%s2 + $0x350] sm:$0xf]
      %v2647 = vld [vmem:[%s2 + $0x354] sm:$0xff]
      %v2648 = vld [vmem:[%s2 + $0x35c] sm:$0xf]
      %v2649 = vld [vmem:[%s2 + $0x360] sm:$0xff]
      %v2650 = vld [vmem:[%s2 + $0x368] sm:$0xf]
      %v2651 = vld [vmem:[%s2 + $0x36c] sm:$0xff]
      %v2652 = vld [vmem:[%s2 + $0x374] sm:$0xf]
      %v2653 = vld [vmem:[%s2 + $0x378] sm:$0xff]
      %v2654 = vld [vmem:[%s2 + $0x380] sm:$0xf]
      %v2655 = vld [vmem:[%s2 + $0x384] sm:$0xff]
      %v2656 = vld [vmem:[%s2 + $0x38c] sm:$0xf]
      %v2657 = vld [vmem:[%s2 + $0x390] sm:$0xff]
      %v2658 = vld [vmem:[%s2 + $0x398] sm:$0xf]
      %v2659 = vld [vmem:[%s2 + $0x39c] sm:$0xff]
      %v2660 = vld [vmem:[%s2 + $0x3a4] sm:$0xf]
      %v2661 = vld [vmem:[%s2 + $0x3a8] sm:$0xff]
      %v2662 = vld [vmem:[%s2 + $0x3b0] sm:$0xf]
      %v2663 = vld [vmem:[%s2 + $0x3b4] sm:$0xff]
      %v2664 = vld [vmem:[%s2 + $0x3bc] sm:$0xf]
      %v2665 = vld [vmem:[%s2 + $0x3c0] sm:$0xff]
      %v2666 = vld [vmem:[%s2 + $0x3c8] sm:$0xf]
      %v2667 = vld [vmem:[%s2 + $0x3cc] sm:$0xff]
      %v2668 = vld [vmem:[%s2 + $0x3d4] sm:$0xf]
      %v2669 = vld [vmem:[%s2 + $0x3d8] sm:$0xff]
      %v2670 = vld [vmem:[%s2 + $0x3e0] sm:$0xf]
      %v2671 = vld [vmem:[%s2 + $0x3e4] sm:$0xff]
      %v2672 = vld [vmem:[%s2 + $0x3ec] sm:$0xf]
      %v2673 = vld [vmem:[%s2 + $0x3f0] sm:$0xff]
      %v2674 = vld [vmem:[%s2 + $0x3f8] sm:$0xf]
      %v2675 = vld [vmem:[%s2 + $0x3fc] sm:$0xff]
      %v2676 = vld [vmem:[%s2 + $0x404] sm:$0xf]
      %v2677 = vld [vmem:[%s2 + $0x408] sm:$0xff]
      %v2678 = vld [vmem:[%s2 + $0x410] sm:$0xf]
      %v2679 = vld [vmem:[%s2 + $0x414] sm:$0xff]
      %v2680 = vld [vmem:[%s2 + $0x41c] sm:$0xf]
      %v2681 = vld [vmem:[%s2 + $0x420] sm:$0xff]
      %v2682 = vld [vmem:[%s2 + $0x428] sm:$0xf]
      %v2683 = vld [vmem:[%s2 + $0x42c] sm:$0xff]
      %v2684 = vld [vmem:[%s2 + $0x434] sm:$0xf]
      %v2685 = vld [vmem:[%s2 + $0x438] sm:$0xff]
      %v2686 = vld [vmem:[%s2 + $0x440] sm:$0xf]
      %v2687 = vld [vmem:[%s2 + $0x444] sm:$0xff]
      %v2688 = vld [vmem:[%s2 + $0x44c] sm:$0xf]
      %v2689 = vld [vmem:[%s2 + $0x450] sm:$0xff]
      %v2690 = vld [vmem:[%s2 + $0x458] sm:$0xf]
      %v2691 = vld [vmem:[%s2 + $0x45c] sm:$0xff]
      %v2692 = vld [vmem:[%s2 + $0x464] sm:$0xf]
      %v2693 = vld [vmem:[%s2 + $0x468] sm:$0xff]
      %v2694 = vld [vmem:[%s2 + $0x470] sm:$0xf]
      %v2695 = vld [vmem:[%s2 + $0x474] sm:$0xff]
      %v2696 = vld [vmem:[%s2 + $0x47c] sm:$0xf]
      %v2697 = vld [vmem:[%s6] sm:$0x7]
      %v2698 = vld [vmem:[#allocation2] sm:$0xff]
      %v2699 = vld [vmem:[#allocation2 + $0x8] sm:$0xff]
      %v2700 = vld [vmem:[#allocation2 + $0x10] sm:$0xff]
      %v2701 = vld [vmem:[#allocation2 + $0x18] sm:$0xff]
      %v2702 = vld [vmem:[#allocation2 + $0x20] sm:$0xff]
      %v2703 = vld [vmem:[#allocation2 + $0x28] sm:$0xff]
      %v2704 = vld [vmem:[#allocation2 + $0x100] sm:$0xff]
      %v2705 = vld [vmem:[#allocation2 + $0x108] sm:$0xff]
      %v2706 = vld [vmem:[#allocation2 + $0x110] sm:$0xff]
      %v2707 = vld [vmem:[#allocation2 + $0x118] sm:$0xff]
      %v2708 = vld [vmem:[#allocation2 + $0x120] sm:$0xff]
      %v2709 = vld [vmem:[#allocation2 + $0x128] sm:$0xff]
      %v2710 = vpack.c.bf16 %v2704, %v2698
      %v2711 = vpack.c.bf16 %v2705, %v2699
      %v2712 = vpack.c.bf16 %v2706, %v2700
      %v2713 = vpack.c.bf16 %v2707, %v2701
      %v2714 = vpack.c.bf16 %v2708, %v2702
      %v2715 = vpack.c.bf16 %v2709, %v2703
      %v2717 = vperm.slane %v2697, 0
      %v2718 = vperm.slane %v2697, 1
      %v2719 = vperm.slane %v2697, 2
      %v2915 = vunpack.c.l.b16 %v2505
      %v2916 = vunpack.c.h.b16 %v2505
      %v2917 = vunpack.c.l.b16 %v2506
      %v2918 = vunpack.c.l.b16 %v2507
      %v2919 = vunpack.c.h.b16 %v2507
      %v2920 = vunpack.c.l.b16 %v2508
      %v2921 = vunpack.c.l.b16 %v2509
      %v2922 = vunpack.c.h.b16 %v2509
      %v2923 = vunpack.c.l.b16 %v2510
      %v2924 = vunpack.c.l.b16 %v2511
      %v2925 = vunpack.c.h.b16 %v2511
      %v2926 = vunpack.c.l.b16 %v2512
      %v2927 = vunpack.c.l.b16 %v2513
      %v2928 = vunpack.c.h.b16 %v2513
      %v2929 = vunpack.c.l.b16 %v2514
      %v2930 = vunpack.c.l.b16 %v2515
      %v2931 = vunpack.c.h.b16 %v2515
      %v2932 = vunpack.c.l.b16 %v2516
      %v2933 = vunpack.c.l.b16 %v2517
      %v2934 = vunpack.c.h.b16 %v2517
      %v2935 = vunpack.c.l.b16 %v2518
      %v2936 = vunpack.c.l.b16 %v2519
      %v2937 = vunpack.c.h.b16 %v2519
      %v2938 = vunpack.c.l.b16 %v2520
      %v2939 = vunpack.c.l.b16 %v2521
      %v2940 = vunpack.c.h.b16 %v2521
      %v2941 = vunpack.c.l.b16 %v2522
      %v2942 = vunpack.c.l.b16 %v2523
      %v2943 = vunpack.c.h.b16 %v2523
      %v2944 = vunpack.c.l.b16 %v2524
      %v2945 = vunpack.c.l.b16 %v2525
      %v2946 = vunpack.c.h.b16 %v2525
      %v2947 = vunpack.c.l.b16 %v2526
      %v2948 = vunpack.c.l.b16 %v2527
      %v2949 = vunpack.c.h.b16 %v2527
      %v2950 = vunpack.c.l.b16 %v2528
      %v2951 = vunpack.c.l.b16 %v2529
      %v2952 = vunpack.c.h.b16 %v2529
      %v2953 = vunpack.c.l.b16 %v2530
      %v2954 = vunpack.c.l.b16 %v2531
      %v2955 = vunpack.c.h.b16 %v2531
      %v2956 = vunpack.c.l.b16 %v2532
      %v2957 = vunpack.c.l.b16 %v2533
      %v2958 = vunpack.c.h.b16 %v2533
      %v2959 = vunpack.c.l.b16 %v2534
      %v2960 = vunpack.c.l.b16 %v2535
      %v2961 = vunpack.c.h.b16 %v2535
      %v2962 = vunpack.c.l.b16 %v2536
      %v2963 = vunpack.c.l.b16 %v2537
      %v2964 = vunpack.c.h.b16 %v2537
      %v2965 = vunpack.c.l.b16 %v2538
      %v2966 = vunpack.c.l.b16 %v2539
      %v2967 = vunpack.c.h.b16 %v2539
      %v2968 = vunpack.c.l.b16 %v2540
      %v2969 = vunpack.c.l.b16 %v2541
      %v2970 = vunpack.c.h.b16 %v2541
      %v2971 = vunpack.c.l.b16 %v2542
      %v2972 = vunpack.c.l.b16 %v2543
      %v2973 = vunpack.c.h.b16 %v2543
      %v2974 = vunpack.c.l.b16 %v2544
      %v2975 = vunpack.c.l.b16 %v2545
      %v2976 = vunpack.c.h.b16 %v2545
      %v2977 = vunpack.c.l.b16 %v2546
      %v2978 = vunpack.c.l.b16 %v2547
      %v2979 = vunpack.c.h.b16 %v2547
      %v2980 = vunpack.c.l.b16 %v2548
      %v2981 = vunpack.c.l.b16 %v2549
      %v2982 = vunpack.c.h.b16 %v2549
      %v2983 = vunpack.c.l.b16 %v2550
      %v2984 = vunpack.c.l.b16 %v2551
      %v2985 = vunpack.c.h.b16 %v2551
      %v2986 = vunpack.c.l.b16 %v2552
      %v2987 = vunpack.c.l.b16 %v2553
      %v2988 = vunpack.c.h.b16 %v2553
      %v2989 = vunpack.c.l.b16 %v2554
      %v2990 = vunpack.c.l.b16 %v2555
      %v2991 = vunpack.c.h.b16 %v2555
      %v2992 = vunpack.c.l.b16 %v2556
      %v2993 = vunpack.c.l.b16 %v2557
      %v2994 = vunpack.c.h.b16 %v2557
      %v2995 = vunpack.c.l.b16 %v2558
      %v2996 = vunpack.c.l.b16 %v2559
      %v2997 = vunpack.c.h.b16 %v2559
      %v2998 = vunpack.c.l.b16 %v2560
      %v2999 = vunpack.c.l.b16 %v2561
      %v3000 = vunpack.c.h.b16 %v2561
      %v3001 = vunpack.c.l.b16 %v2562
      %v3002 = vunpack.c.l.b16 %v2563
      %v3003 = vunpack.c.h.b16 %v2563
      %v3004 = vunpack.c.l.b16 %v2564
      %v3005 = vunpack.c.l.b16 %v2565
      %v3006 = vunpack.c.h.b16 %v2565
      %v3007 = vunpack.c.l.b16 %v2566
      %v3008 = vunpack.c.l.b16 %v2567
      %v3009 = vunpack.c.h.b16 %v2567
      %v3010 = vunpack.c.l.b16 %v2568
      %v3011 = vunpack.c.l.b16 %v2569
      %v3012 = vunpack.c.h.b16 %v2569
      %v3013 = vunpack.c.l.b16 %v2570
      %v3014 = vunpack.c.l.b16 %v2571
      %v3015 = vunpack.c.h.b16 %v2571
      %v3016 = vunpack.c.l.b16 %v2572
      %v3017 = vunpack.c.l.b16 %v2573
      %v3018 = vunpack.c.h.b16 %v2573
      %v3019 = vunpack.c.l.b16 %v2574
      %v3020 = vunpack.c.l.b16 %v2575
      %v3021 = vunpack.c.h.b16 %v2575
      %v3022 = vunpack.c.l.b16 %v2576
      %v3023 = vunpack.c.l.b16 %v2577
      %v3024 = vunpack.c.h.b16 %v2577
      %v3025 = vunpack.c.l.b16 %v2578
      %v3026 = vunpack.c.l.b16 %v2579
      %v3027 = vunpack.c.h.b16 %v2579
      %v3028 = vunpack.c.l.b16 %v2580
      %v3029 = vunpack.c.l.b16 %v2581
      %v3030 = vunpack.c.h.b16 %v2581
      %v3031 = vunpack.c.l.b16 %v2582
      %v3032 = vunpack.c.l.b16 %v2583
      %v3033 = vunpack.c.h.b16 %v2583
      %v3034 = vunpack.c.l.b16 %v2584
      %v3035 = vunpack.c.l.b16 %v2585
      %v3036 = vunpack.c.h.b16 %v2585
      %v3037 = vunpack.c.l.b16 %v2586
      %v3038 = vunpack.c.l.b16 %v2587
      %v3039 = vunpack.c.h.b16 %v2587
      %v3040 = vunpack.c.l.b16 %v2588
      %v3041 = vunpack.c.l.b16 %v2589
      %v3042 = vunpack.c.h.b16 %v2589
      %v3043 = vunpack.c.l.b16 %v2590
      %v3044 = vunpack.c.l.b16 %v2591
      %v3045 = vunpack.c.h.b16 %v2591
      %v3046 = vunpack.c.l.b16 %v2592
      %v3047 = vunpack.c.l.b16 %v2593
      %v3048 = vunpack.c.h.b16 %v2593
      %v3049 = vunpack.c.l.b16 %v2594
      %v3050 = vunpack.c.l.b16 %v2595
      %v3051 = vunpack.c.h.b16 %v2595
      %v3052 = vunpack.c.l.b16 %v2596
      %v3053 = vunpack.c.l.b16 %v2597
      %v3054 = vunpack.c.h.b16 %v2597
      %v3055 = vunpack.c.l.b16 %v2598
      %v3056 = vunpack.c.l.b16 %v2599
      %v3057 = vunpack.c.h.b16 %v2599
      %v3058 = vunpack.c.l.b16 %v2600
      %v3059 = vunpack.c.l.b16 %v2601
      %v3060 = vunpack.c.h.b16 %v2601
      %v3061 = vunpack.c.l.b16 %v2602
      %v3062 = vunpack.c.l.b16 %v2603
      %v3063 = vunpack.c.h.b16 %v2603
      %v3064 = vunpack.c.l.b16 %v2604
      %v3065 = vunpack.c.l.b16 %v2605
      %v3066 = vunpack.c.h.b16 %v2605
      %v3067 = vunpack.c.l.b16 %v2606
      %v3068 = vunpack.c.l.b16 %v2607
      %v3069 = vunpack.c.h.b16 %v2607
      %v3070 = vunpack.c.l.b16 %v2608
      %v3071 = vunpack.c.l.b16 %v2609
      %v3072 = vunpack.c.h.b16 %v2609
      %v3073 = vunpack.c.l.b16 %v2610
      %v3074 = vunpack.c.l.b16 %v2611
      %v3075 = vunpack.c.h.b16 %v2611
      %v3076 = vunpack.c.l.b16 %v2612
      %v3077 = vunpack.c.l.b16 %v2613
      %v3078 = vunpack.c.h.b16 %v2613
      %v3079 = vunpack.c.l.b16 %v2614
      %v3080 = vunpack.c.l.b16 %v2615
      %v3081 = vunpack.c.h.b16 %v2615
      %v3082 = vunpack.c.l.b16 %v2616
      %v3083 = vunpack.c.l.b16 %v2617
      %v3084 = vunpack.c.h.b16 %v2617
      %v3085 = vunpack.c.l.b16 %v2618
      %v3086 = vunpack.c.l.b16 %v2619
      %v3087 = vunpack.c.h.b16 %v2619
      %v3088 = vunpack.c.l.b16 %v2620
      %v3089 = vunpack.c.l.b16 %v2621
      %v3090 = vunpack.c.h.b16 %v2621
      %v3091 = vunpack.c.l.b16 %v2622
      %v3092 = vunpack.c.l.b16 %v2623
      %v3093 = vunpack.c.h.b16 %v2623
      %v3094 = vunpack.c.l.b16 %v2624
      %v3095 = vunpack.c.l.b16 %v2625
      %v3096 = vunpack.c.h.b16 %v2625
      %v3097 = vunpack.c.l.b16 %v2626
      %v3098 = vunpack.c.l.b16 %v2627
      %v3099 = vunpack.c.h.b16 %v2627
      %v3100 = vunpack.c.l.b16 %v2628
      %v3101 = vunpack.c.l.b16 %v2629
      %v3102 = vunpack.c.h.b16 %v2629
      %v3103 = vunpack.c.l.b16 %v2630
      %v3104 = vunpack.c.l.b16 %v2631
      %v3105 = vunpack.c.h.b16 %v2631
      %v3106 = vunpack.c.l.b16 %v2632
      %v3107 = vunpack.c.l.b16 %v2633
      %v3108 = vunpack.c.h.b16 %v2633
      %v3109 = vunpack.c.l.b16 %v2634
      %v3110 = vunpack.c.l.b16 %v2635
      %v3111 = vunpack.c.h.b16 %v2635
      %v3112 = vunpack.c.l.b16 %v2636
      %v3113 = vunpack.c.l.b16 %v2637
      %v3114 = vunpack.c.h.b16 %v2637
      %v3115 = vunpack.c.l.b16 %v2638
      %v3116 = vunpack.c.l.b16 %v2639
      %v3117 = vunpack.c.h.b16 %v2639
      %v3118 = vunpack.c.l.b16 %v2640
      %v3119 = vunpack.c.l.b16 %v2641
      %v3120 = vunpack.c.h.b16 %v2641
      %v3121 = vunpack.c.l.b16 %v2642
      %v3122 = vunpack.c.l.b16 %v2643
      %v3123 = vunpack.c.h.b16 %v2643
      %v3124 = vunpack.c.l.b16 %v2644
      %v3125 = vunpack.c.l.b16 %v2645
      %v3126 = vunpack.c.h.b16 %v2645
      %v3127 = vunpack.c.l.b16 %v2646
      %v3128 = vunpack.c.l.b16 %v2647
      %v3129 = vunpack.c.h.b16 %v2647
      %v3130 = vunpack.c.l.b16 %v2648
      %v3131 = vunpack.c.l.b16 %v2649
      %v3132 = vunpack.c.h.b16 %v2649
      %v3133 = vunpack.c.l.b16 %v2650
      %v3134 = vunpack.c.l.b16 %v2651
      %v3135 = vunpack.c.h.b16 %v2651
      %v3136 = vunpack.c.l.b16 %v2652
      %v3137 = vunpack.c.l.b16 %v2653
      %v3138 = vunpack.c.h.b16 %v2653
      %v3139 = vunpack.c.l.b16 %v2654
      %v3140 = vunpack.c.l.b16 %v2655
      %v3141 = vunpack.c.h.b16 %v2655
      %v3142 = vunpack.c.l.b16 %v2656
      %v3143 = vunpack.c.l.b16 %v2657
      %v3144 = vunpack.c.h.b16 %v2657
      %v3145 = vunpack.c.l.b16 %v2658
      %v3146 = vunpack.c.l.b16 %v2659
      %v3147 = vunpack.c.h.b16 %v2659
      %v3148 = vunpack.c.l.b16 %v2660
      %v3149 = vunpack.c.l.b16 %v2661
      %v3150 = vunpack.c.h.b16 %v2661
      %v3151 = vunpack.c.l.b16 %v2662
      %v3152 = vunpack.c.l.b16 %v2663
      %v3153 = vunpack.c.h.b16 %v2663
      %v3154 = vunpack.c.l.b16 %v2664
      %v3155 = vunpack.c.l.b16 %v2665
      %v3156 = vunpack.c.h.b16 %v2665
      %v3157 = vunpack.c.l.b16 %v2666
      %v3158 = vunpack.c.l.b16 %v2667
      %v3159 = vunpack.c.h.b16 %v2667
      %v3160 = vunpack.c.l.b16 %v2668
      %v3161 = vunpack.c.l.b16 %v2669
      %v3162 = vunpack.c.h.b16 %v2669
      %v3163 = vunpack.c.l.b16 %v2670
      %v3164 = vunpack.c.l.b16 %v2671
      %v3165 = vunpack.c.h.b16 %v2671
      %v3166 = vunpack.c.l.b16 %v2672
      %v3167 = vunpack.c.l.b16 %v2673
      %v3168 = vunpack.c.h.b16 %v2673
      %v3169 = vunpack.c.l.b16 %v2674
      %v3170 = vunpack.c.l.b16 %v2675
      %v3171 = vunpack.c.h.b16 %v2675
      %v3172 = vunpack.c.l.b16 %v2676
      %v3173 = vunpack.c.l.b16 %v2677
      %v3174 = vunpack.c.h.b16 %v2677
      %v3175 = vunpack.c.l.b16 %v2678
      %v3176 = vunpack.c.l.b16 %v2679
      %v3177 = vunpack.c.h.b16 %v2679
      %v3178 = vunpack.c.l.b16 %v2680
      %v3179 = vunpack.c.l.b16 %v2681
      %v3180 = vunpack.c.h.b16 %v2681
      %v3181 = vunpack.c.l.b16 %v2682
      %v3182 = vunpack.c.l.b16 %v2683
      %v3183 = vunpack.c.h.b16 %v2683
      %v3184 = vunpack.c.l.b16 %v2684
      %v3185 = vunpack.c.l.b16 %v2685
      %v3186 = vunpack.c.h.b16 %v2685
      %v3187 = vunpack.c.l.b16 %v2686
      %v3188 = vunpack.c.l.b16 %v2687
      %v3189 = vunpack.c.h.b16 %v2687
      %v3190 = vunpack.c.l.b16 %v2688
      %v3191 = vunpack.c.l.b16 %v2689
      %v3192 = vunpack.c.h.b16 %v2689
      %v3193 = vunpack.c.l.b16 %v2690
      %v3194 = vunpack.c.l.b16 %v2691
      %v3195 = vunpack.c.h.b16 %v2691
      %v3196 = vunpack.c.l.b16 %v2692
      %v3197 = vunpack.c.l.b16 %v2693
      %v3198 = vunpack.c.h.b16 %v2693
      %v3199 = vunpack.c.l.b16 %v2694
      %v3200 = vunpack.c.l.b16 %v2695
      %v3201 = vunpack.c.h.b16 %v2695
      %v3202 = vunpack.c.l.b16 %v2696
      %v3203 = vpack.c.b16 %v2918, %v2915
      %v3204 = vpack.c.b16 %v2919, %v2916
      %v3205 = vpack.c.b16 %v2920, %v2917
      %v3206 = vpack.c.b16 %v2924, %v2921
      %v3207 = vpack.c.b16 %v2925, %v2922
      %v3208 = vpack.c.b16 %v2926, %v2923
      %v3209 = vpack.c.b16 %v2930, %v2927
      %v3210 = vpack.c.b16 %v2931, %v2928
      %v3211 = vpack.c.b16 %v2932, %v2929
      %v3212 = vpack.c.b16 %v2936, %v2933
      %v3213 = vpack.c.b16 %v2937, %v2934
      %v3214 = vpack.c.b16 %v2938, %v2935
      %v3215 = vpack.c.b16 %v2942, %v2939
      %v3216 = vpack.c.b16 %v2943, %v2940
      %v3217 = vpack.c.b16 %v2944, %v2941
      %v3218 = vpack.c.b16 %v2948, %v2945
      %v3219 = vpack.c.b16 %v2949, %v2946
      %v3220 = vpack.c.b16 %v2950, %v2947
      %v3221 = vpack.c.b16 %v2954, %v2951
      %v3222 = vpack.c.b16 %v2955, %v2952
      %v3223 = vpack.c.b16 %v2956, %v2953
      %v3224 = vpack.c.b16 %v2960, %v2957
      %v3225 = vpack.c.b16 %v2961, %v2958
      %v3226 = vpack.c.b16 %v2962, %v2959
      %v3227 = vpack.c.b16 %v2966, %v2963
      %v3228 = vpack.c.b16 %v2967, %v2964
      %v3229 = vpack.c.b16 %v2968, %v2965
      %v3230 = vpack.c.b16 %v2972, %v2969
      %v3231 = vpack.c.b16 %v2973, %v2970
      %v3232 = vpack.c.b16 %v2974, %v2971
      %v3233 = vpack.c.b16 %v2978, %v2975
      %v3234 = vpack.c.b16 %v2979, %v2976
      %v3235 = vpack.c.b16 %v2980, %v2977
      %v3236 = vpack.c.b16 %v2984, %v2981
      %v3237 = vpack.c.b16 %v2985, %v2982
      %v3238 = vpack.c.b16 %v2986, %v2983
      %v3239 = vpack.c.b16 %v2990, %v2987
      %v3240 = vpack.c.b16 %v2991, %v2988
      %v3241 = vpack.c.b16 %v2992, %v2989
      %v3242 = vpack.c.b16 %v2996, %v2993
      %v3243 = vpack.c.b16 %v2997, %v2994
      %v3244 = vpack.c.b16 %v2998, %v2995
      %v3245 = vpack.c.b16 %v3002, %v2999
      %v3246 = vpack.c.b16 %v3003, %v3000
      %v3247 = vpack.c.b16 %v3004, %v3001
      %v3248 = vpack.c.b16 %v3008, %v3005
      %v3249 = vpack.c.b16 %v3009, %v3006
      %v3250 = vpack.c.b16 %v3010, %v3007
      %v3251 = vpack.c.b16 %v3014, %v3011
      %v3252 = vpack.c.b16 %v3015, %v3012
      %v3253 = vpack.c.b16 %v3016, %v3013
      %v3254 = vpack.c.b16 %v3020, %v3017
      %v3255 = vpack.c.b16 %v3021, %v3018
      %v3256 = vpack.c.b16 %v3022, %v3019
      %v3257 = vpack.c.b16 %v3026, %v3023
      %v3258 = vpack.c.b16 %v3027, %v3024
      %v3259 = vpack.c.b16 %v3028, %v3025
      %v3260 = vpack.c.b16 %v3032, %v3029
      %v3261 = vpack.c.b16 %v3033, %v3030
      %v3262 = vpack.c.b16 %v3034, %v3031
      %v3263 = vpack.c.b16 %v3038, %v3035
      %v3264 = vpack.c.b16 %v3039, %v3036
      %v3265 = vpack.c.b16 %v3040, %v3037
      %v3266 = vpack.c.b16 %v3044, %v3041
      %v3267 = vpack.c.b16 %v3045, %v3042
      %v3268 = vpack.c.b16 %v3046, %v3043
      %v3269 = vpack.c.b16 %v3050, %v3047
      %v3270 = vpack.c.b16 %v3051, %v3048
      %v3271 = vpack.c.b16 %v3052, %v3049
      %v3272 = vpack.c.b16 %v3056, %v3053
      %v3273 = vpack.c.b16 %v3057, %v3054
      %v3274 = vpack.c.b16 %v3058, %v3055
      %v3275 = vpack.c.b16 %v3062, %v3059
      %v3276 = vpack.c.b16 %v3063, %v3060
      %v3277 = vpack.c.b16 %v3064, %v3061
      %v3278 = vpack.c.b16 %v3068, %v3065
      %v3279 = vpack.c.b16 %v3069, %v3066
      %v3280 = vpack.c.b16 %v3070, %v3067
      %v3281 = vpack.c.b16 %v3074, %v3071
      %v3282 = vpack.c.b16 %v3075, %v3072
      %v3283 = vpack.c.b16 %v3076, %v3073
      %v3284 = vpack.c.b16 %v3080, %v3077
      %v3285 = vpack.c.b16 %v3081, %v3078
      %v3286 = vpack.c.b16 %v3082, %v3079
      %v3287 = vpack.c.b16 %v3086, %v3083
      %v3288 = vpack.c.b16 %v3087, %v3084
      %v3289 = vpack.c.b16 %v3088, %v3085
      %v3290 = vpack.c.b16 %v3092, %v3089
      %v3291 = vpack.c.b16 %v3093, %v3090
      %v3292 = vpack.c.b16 %v3094, %v3091
      %v3293 = vpack.c.b16 %v3098, %v3095
      %v3294 = vpack.c.b16 %v3099, %v3096
      %v3295 = vpack.c.b16 %v3100, %v3097
      %v3296 = vpack.c.b16 %v3104, %v3101
      %v3297 = vpack.c.b16 %v3105, %v3102
      %v3298 = vpack.c.b16 %v3106, %v3103
      %v3299 = vpack.c.b16 %v3110, %v3107
      %v3300 = vpack.c.b16 %v3111, %v3108
      %v3301 = vpack.c.b16 %v3112, %v3109
      %v3302 = vpack.c.b16 %v3116, %v3113
      %v3303 = vpack.c.b16 %v3117, %v3114
      %v3304 = vpack.c.b16 %v3118, %v3115
      %v3305 = vpack.c.b16 %v3122, %v3119
      %v3306 = vpack.c.b16 %v3123, %v3120
      %v3307 = vpack.c.b16 %v3124, %v3121
      %v3308 = vpack.c.b16 %v3128, %v3125
      %v3309 = vpack.c.b16 %v3129, %v3126
      %v3310 = vpack.c.b16 %v3130, %v3127
      %v3311 = vpack.c.b16 %v3134, %v3131
      %v3312 = vpack.c.b16 %v3135, %v3132
      %v3313 = vpack.c.b16 %v3136, %v3133
      %v3314 = vpack.c.b16 %v3140, %v3137
      %v3315 = vpack.c.b16 %v3141, %v3138
      %v3316 = vpack.c.b16 %v3142, %v3139
      %v3317 = vpack.c.b16 %v3146, %v3143
      %v3318 = vpack.c.b16 %v3147, %v3144
      %v3319 = vpack.c.b16 %v3148, %v3145
      %v3320 = vpack.c.b16 %v3152, %v3149
      %v3321 = vpack.c.b16 %v3153, %v3150
      %v3322 = vpack.c.b16 %v3154, %v3151
      %v3323 = vpack.c.b16 %v3158, %v3155
      %v3324 = vpack.c.b16 %v3159, %v3156
      %v3325 = vpack.c.b16 %v3160, %v3157
      %v3326 = vpack.c.b16 %v3164, %v3161
      %v3327 = vpack.c.b16 %v3165, %v3162
      %v3328 = vpack.c.b16 %v3166, %v3163
      %v3329 = vpack.c.b16 %v3170, %v3167
      %v3330 = vpack.c.b16 %v3171, %v3168
      %v3331 = vpack.c.b16 %v3172, %v3169
      %v3332 = vpack.c.b16 %v3176, %v3173
      %v3333 = vpack.c.b16 %v3177, %v3174
      %v3334 = vpack.c.b16 %v3178, %v3175
      %v3335 = vpack.c.b16 %v3182, %v3179
      %v3336 = vpack.c.b16 %v3183, %v3180
      %v3337 = vpack.c.b16 %v3184, %v3181
      %v3338 = vpack.c.b16 %v3188, %v3185
      %v3339 = vpack.c.b16 %v3189, %v3186
      %v3340 = vpack.c.b16 %v3190, %v3187
      %v3341 = vpack.c.b16 %v3194, %v3191
      %v3342 = vpack.c.b16 %v3195, %v3192
      %v3343 = vpack.c.b16 %v3196, %v3193
      %v3344 = vpack.c.b16 %v3200, %v3197
      %v3345 = vpack.c.b16 %v3201, %v3198
      %v3346 = vpack.c.b16 %v3202, %v3199
      %3491 = vmatpush.bf16.msra.mxu0 %v3224
      %3492 = vmatpush.bf16.msra.mxu0 %v3221
      %3493 = vmatpush.bf16.msra.mxu0 %v3218
      %3494 = vmatpush.bf16.msra.mxu0 %v3215
      %3495 = vmatpush.bf16.msra.mxu0 %v3212
      %3496 = vmatpush.bf16.msra.mxu0 %v3209
      %3497 = vmatpush.bf16.msra.mxu0 %v3206
      %3498 = vmatpush.bf16.msra.mxu0 %v3203
      %3499 = vmatmul.bf16.gmra.mxu0 %v2710
      %v3500 = vpop.f32.mrf.mxu0
      %v3501 = vadd.f32 %v2717, %v3500
      %v3502 = vpop.f32.mrf.mxu0
      %v3503 = vadd.f32 %v2717, %v3502
      %3504 = vdwg.mxu0
      %3505 = vmatpush.bf16.msra.mxu0 %v3248
      %3506 = vmatpush.bf16.msra.mxu0 %v3245
      %3507 = vmatpush.bf16.msra.mxu0 %v3242
      %3508 = vmatpush.bf16.msra.mxu0 %v3239
      %3509 = vmatpush.bf16.msra.mxu0 %v3236
      %3510 = vmatpush.bf16.msra.mxu0 %v3233
      %3511 = vmatpush.bf16.msra.mxu0 %v3230
      %3512 = vmatpush.bf16.msra.mxu0 %v3227
      %3513 = vmatmul.bf16.gmra.mxu0 %v2711
      %v3514 = vpop.f32.mrf.mxu0
      %v3515 = vadd.f32 %v3501, %v3514
      %v3516 = vpop.f32.mrf.mxu0
      %v3517 = vadd.f32 %v3503, %v3516
      %3518 = vdwg.mxu0
      %3519 = vmatpush.bf16.msra.mxu0 %v3272
      %3520 = vmatpush.bf16.msra.mxu0 %v3269
      %3521 = vmatpush.bf16.msra.mxu0 %v3266
      %3522 = vmatpush.bf16.msra.mxu0 %v3263
      %3523 = vmatpush.bf16.msra.mxu0 %v3260
      %3524 = vmatpush.bf16.msra.mxu0 %v3257
      %3525 = vmatpush.bf16.msra.mxu0 %v3254
      %3526 = vmatpush.bf16.msra.mxu0 %v3251
      %3527 = vmatmul.bf16.gmra.mxu0 %v2712
      %v3528 = vpop.f32.mrf.mxu0
      %v3529 = vadd.f32 %v3515, %v3528
      %v3530 = vpop.f32.mrf.mxu0
      %v3531 = vadd.f32 %v3517, %v3530
      %3532 = vdwg.mxu0
      %3533 = vmatpush.bf16.msra.mxu0 %v3296
      %3534 = vmatpush.bf16.msra.mxu0 %v3293
      %3535 = vmatpush.bf16.msra.mxu0 %v3290
      %3536 = vmatpush.bf16.msra.mxu0 %v3287
      %3537 = vmatpush.bf16.msra.mxu0 %v3284
      %3538 = vmatpush.bf16.msra.mxu0 %v3281
      %3539 = vmatpush.bf16.msra.mxu0 %v3278
      %3540 = vmatpush.bf16.msra.mxu0 %v3275
      %3541 = vmatmul.bf16.gmra.mxu0 %v2713
      %v3542 = vpop.f32.mrf.mxu0
      %v3543 = vadd.f32 %v3529, %v3542
      %v3544 = vpop.f32.mrf.mxu0
      %v3545 = vadd.f32 %v3531, %v3544
      %3546 = vdwg.mxu0
      %3547 = vmatpush.bf16.msra.mxu0 %v3320
      %3548 = vmatpush.bf16.msra.mxu0 %v3317
      %3549 = vmatpush.bf16.msra.mxu0 %v3314
      %3550 = vmatpush.bf16.msra.mxu0 %v3311
      %3551 = vmatpush.bf16.msra.mxu0 %v3308
      %3552 = vmatpush.bf16.msra.mxu0 %v3305
      %3553 = vmatpush.bf16.msra.mxu0 %v3302
      %3554 = vmatpush.bf16.msra.mxu0 %v3299
      %3555 = vmatmul.bf16.gmra.mxu0 %v2714
      %v3556 = vpop.f32.mrf.mxu0
      %v3557 = vadd.f32 %v3543, %v3556
      %v3558 = vpop.f32.mrf.mxu0
      %v3559 = vadd.f32 %v3545, %v3558
      %3560 = vdwg.mxu0
      %3561 = vmatpush.bf16.msra.mxu0 %v3344
      %3562 = vmatpush.bf16.msra.mxu0 %v3341
      %3563 = vmatpush.bf16.msra.mxu0 %v3338
      %3564 = vmatpush.bf16.msra.mxu0 %v3335
      %3565 = vmatpush.bf16.msra.mxu0 %v3332
      %3566 = vmatpush.bf16.msra.mxu0 %v3329
      %3567 = vmatpush.bf16.msra.mxu0 %v3326
      %3568 = vmatpush.bf16.msra.mxu0 %v3323
      %3569 = vmatmul.bf16.gmra.mxu0 %v2715
      %v3570 = vpop.f32.mrf.mxu0
      %v3571 = vadd.f32 %v3557, %v3570
      %v3572 = vpop.f32.mrf.mxu0
      %v3573 = vadd.f32 %v3559, %v3572
      %3574 = vdwg.mxu0
      %3575 = vmatpush.bf16.msra.mxu0 %v3225
      %3576 = vmatpush.bf16.msra.mxu0 %v3222
      %3577 = vmatpush.bf16.msra.mxu0 %v3219
      %3578 = vmatpush.bf16.msra.mxu0 %v3216
      %3579 = vmatpush.bf16.msra.mxu0 %v3213
      %3580 = vmatpush.bf16.msra.mxu0 %v3210
      %3581 = vmatpush.bf16.msra.mxu0 %v3207
      %3582 = vmatpush.bf16.msra.mxu0 %v3204
      %3583 = vmatmul.bf16.gmra.mxu0 %v2710
      %v3584 = vpop.f32.mrf.mxu0
      %v3585 = vadd.f32 %v2718, %v3584
      %v3586 = vpop.f32.mrf.mxu0
      %v3587 = vadd.f32 %v2718, %v3586
      %3588 = vdwg.mxu0
      %3589 = vmatpush.bf16.msra.mxu0 %v3249
      %3590 = vmatpush.bf16.msra.mxu0 %v3246
      %3591 = vmatpush.bf16.msra.mxu0 %v3243
      %3592 = vmatpush.bf16.msra.mxu0 %v3240
      %3593 = vmatpush.bf16.msra.mxu0 %v3237
      %3594 = vmatpush.bf16.msra.mxu0 %v3234
      %3595 = vmatpush.bf16.msra.mxu0 %v3231
      %3596 = vmatpush.bf16.msra.mxu0 %v3228
      %3597 = vmatmul.bf16.gmra.mxu0 %v2711
      %v3598 = vpop.f32.mrf.mxu0
      %v3599 = vadd.f32 %v3585, %v3598
      %v3600 = vpop.f32.mrf.mxu0
      %v3601 = vadd.f32 %v3587, %v3600
      %3602 = vdwg.mxu0
      %3603 = vmatpush.bf16.msra.mxu0 %v3273
      %3604 = vmatpush.bf16.msra.mxu0 %v3270
      %3605 = vmatpush.bf16.msra.mxu0 %v3267
      %3606 = vmatpush.bf16.msra.mxu0 %v3264
      %3607 = vmatpush.bf16.msra.mxu0 %v3261
      %3608 = vmatpush.bf16.msra.mxu0 %v3258
      %3609 = vmatpush.bf16.msra.mxu0 %v3255
      %3610 = vmatpush.bf16.msra.mxu0 %v3252
      %3611 = vmatmul.bf16.gmra.mxu0 %v2712
      %v3612 = vpop.f32.mrf.mxu0
      %v3613 = vadd.f32 %v3599, %v3612
      %v3614 = vpop.f32.mrf.mxu0
      %v3615 = vadd.f32 %v3601, %v3614
      %3616 = vdwg.mxu0
      %3617 = vmatpush.bf16.msra.mxu0 %v3297
      %3618 = vmatpush.bf16.msra.mxu0 %v3294
      %3619 = vmatpush.bf16.msra.mxu0 %v3291
      %3620 = vmatpush.bf16.msra.mxu0 %v3288
      %3621 = vmatpush.bf16.msra.mxu0 %v3285
      %3622 = vmatpush.bf16.msra.mxu0 %v3282
      %3623 = vmatpush.bf16.msra.mxu0 %v3279
      %3624 = vmatpush.bf16.msra.mxu0 %v3276
      %3625 = vmatmul.bf16.gmra.mxu0 %v2713
      %v3626 = vpop.f32.mrf.mxu0
      %v3627 = vadd.f32 %v3613, %v3626
      %v3628 = vpop.f32.mrf.mxu0
      %v3629 = vadd.f32 %v3615, %v3628
      %3630 = vdwg.mxu0
      %3631 = vmatpush.bf16.msra.mxu0 %v3321
      %3632 = vmatpush.bf16.msra.mxu0 %v3318
      %3633 = vmatpush.bf16.msra.mxu0 %v3315
      %3634 = vmatpush.bf16.msra.mxu0 %v3312
      %3635 = vmatpush.bf16.msra.mxu0 %v3309
      %3636 = vmatpush.bf16.msra.mxu0 %v3306
      %3637 = vmatpush.bf16.msra.mxu0 %v3303
      %3638 = vmatpush.bf16.msra.mxu0 %v3300
      %3639 = vmatmul.bf16.gmra.mxu0 %v2714
      %v3640 = vpop.f32.mrf.mxu0
      %v3641 = vadd.f32 %v3627, %v3640
      %v3642 = vpop.f32.mrf.mxu0
      %v3643 = vadd.f32 %v3629, %v3642
      %3644 = vdwg.mxu0
      %3645 = vmatpush.bf16.msra.mxu0 %v3345
      %3646 = vmatpush.bf16.msra.mxu0 %v3342
      %3647 = vmatpush.bf16.msra.mxu0 %v3339
      %3648 = vmatpush.bf16.msra.mxu0 %v3336
      %3649 = vmatpush.bf16.msra.mxu0 %v3333
      %3650 = vmatpush.bf16.msra.mxu0 %v3330
      %3651 = vmatpush.bf16.msra.mxu0 %v3327
      %3652 = vmatpush.bf16.msra.mxu0 %v3324
      %3653 = vmatmul.bf16.gmra.mxu0 %v2715
      %v3654 = vpop.f32.mrf.mxu0
      %v3655 = vadd.f32 %v3641, %v3654
      %v3656 = vpop.f32.mrf.mxu0
      %v3657 = vadd.f32 %v3643, %v3656
      %3658 = vdwg.mxu0
      %3659 = vmatpush.bf16.msra.mxu0 %v3226
      %3660 = vmatpush.bf16.msra.mxu0 %v3223
      %3661 = vmatpush.bf16.msra.mxu0 %v3220
      %3662 = vmatpush.bf16.msra.mxu0 %v3217
      %3663 = vmatpush.bf16.msra.mxu0 %v3214
      %3664 = vmatpush.bf16.msra.mxu0 %v3211
      %3665 = vmatpush.bf16.msra.mxu0 %v3208
      %3666 = vmatpush.bf16.msra.mxu0 %v3205
      %3667 = vmatmul.bf16.gmra.mxu0 %v2710
      %v3668 = vpop.f32.mrf.mxu0
      %v3669 = vadd.f32 %v2719, %v3668
      %v3670 = vpop.f32.mrf.mxu0
      %v3671 = vadd.f32 %v2719, %v3670
      %3672 = vdwg.mxu0
      %3673 = vmatpush.bf16.msra.mxu0 %v3250
      %3674 = vmatpush.bf16.msra.mxu0 %v3247
      %3675 = vmatpush.bf16.msra.mxu0 %v3244
      %3676 = vmatpush.bf16.msra.mxu0 %v3241
      %3677 = vmatpush.bf16.msra.mxu0 %v3238
      %3678 = vmatpush.bf16.msra.mxu0 %v3235
      %3679 = vmatpush.bf16.msra.mxu0 %v3232
      %3680 = vmatpush.bf16.msra.mxu0 %v3229
      %3681 = vmatmul.bf16.gmra.mxu0 %v2711
      %v3682 = vpop.f32.mrf.mxu0
      %v3683 = vadd.f32 %v3669, %v3682
      %v3684 = vpop.f32.mrf.mxu0
      %v3685 = vadd.f32 %v3671, %v3684
      %3686 = vdwg.mxu0
      %3687 = vmatpush.bf16.msra.mxu0 %v3274
      %3688 = vmatpush.bf16.msra.mxu0 %v3271
      %3689 = vmatpush.bf16.msra.mxu0 %v3268
      %3690 = vmatpush.bf16.msra.mxu0 %v3265
      %3691 = vmatpush.bf16.msra.mxu0 %v3262
      %3692 = vmatpush.bf16.msra.mxu0 %v3259
      %3693 = vmatpush.bf16.msra.mxu0 %v3256
      %3694 = vmatpush.bf16.msra.mxu0 %v3253
      %3695 = vmatmul.bf16.gmra.mxu0 %v2712
      %v3696 = vpop.f32.mrf.mxu0
      %v3697 = vadd.f32 %v3683, %v3696
      %v3698 = vpop.f32.mrf.mxu0
      %v3699 = vadd.f32 %v3685, %v3698
      %3700 = vdwg.mxu0
      %3701 = vmatpush.bf16.msra.mxu0 %v3298
      %3702 = vmatpush.bf16.msra.mxu0 %v3295
      %3703 = vmatpush.bf16.msra.mxu0 %v3292
      %3704 = vmatpush.bf16.msra.mxu0 %v3289
      %3705 = vmatpush.bf16.msra.mxu0 %v3286
      %3706 = vmatpush.bf16.msra.mxu0 %v3283
      %3707 = vmatpush.bf16.msra.mxu0 %v3280
      %3708 = vmatpush.bf16.msra.mxu0 %v3277
      %3709 = vmatmul.bf16.gmra.mxu0 %v2713
      %v3710 = vpop.f32.mrf.mxu0
      %v3711 = vadd.f32 %v3697, %v3710
      %v3712 = vpop.f32.mrf.mxu0
      %v3713 = vadd.f32 %v3699, %v3712
      %3714 = vdwg.mxu0
      %3715 = vmatpush.bf16.msra.mxu0 %v3322
      %3716 = vmatpush.bf16.msra.mxu0 %v3319
      %3717 = vmatpush.bf16.msra.mxu0 %v3316
      %3718 = vmatpush.bf16.msra.mxu0 %v3313
      %3719 = vmatpush.bf16.msra.mxu0 %v3310
      %3720 = vmatpush.bf16.msra.mxu0 %v3307
      %3721 = vmatpush.bf16.msra.mxu0 %v3304
      %3722 = vmatpush.bf16.msra.mxu0 %v3301
      %3723 = vmatmul.bf16.gmra.mxu0 %v2714
      %v3724 = vpop.f32.mrf.mxu0
      %v3725 = vadd.f32 %v3711, %v3724
      %v3726 = vpop.f32.mrf.mxu0
      %v3727 = vadd.f32 %v3713, %v3726
      %3728 = vdwg.mxu0
      %3729 = vmatpush.bf16.msra.mxu0 %v3346
      %3730 = vmatpush.bf16.msra.mxu0 %v3343
      %3731 = vmatpush.bf16.msra.mxu0 %v3340
      %3732 = vmatpush.bf16.msra.mxu0 %v3337
      %3733 = vmatpush.bf16.msra.mxu0 %v3334
      %3734 = vmatpush.bf16.msra.mxu0 %v3331
      %3735 = vmatpush.bf16.msra.mxu0 %v3328
      %3736 = vmatpush.bf16.msra.mxu0 %v3325
      %3737 = vmatmul.bf16.gmra.mxu0 %v2715
      %v3738 = vpop.f32.mrf.mxu0
      %v3739 = vadd.f32 %v3725, %v3738
      %v3740 = vpop.f32.mrf.mxu0
      %v3741 = vadd.f32 %v3727, %v3740
      %3742 = vdwg.mxu0
      %vm3743 = vcmp.gt.f32.partialorder %v3571, 0.0
      %vm3744 = vcmp.gt.f32.partialorder %v3655, 0.0
      %vm3745 = vcmp.gt.f32.partialorder %v3739, 0.0
      %vm3746 = vcmp.gt.f32.partialorder %v3573, 0.0
      %vm3747 = vcmp.gt.f32.partialorder %v3657, 0.0
      %vm3748 = vcmp.gt.f32.partialorder %v3741, 0.0
      %v3749 = vmul.f32 %v3571, 0.2
      %v3750 = vmul.f32 %v3655, 0.2
      %v3751 = vmul.f32 %v3739, 0.2
      %v3752 = vmul.f32 %v3573, 0.2
      %v3753 = vmul.f32 %v3657, 0.2
      %v3754 = vmul.f32 %v3741, 0.2
      %v3755 = vsel %vm3743, %v3571, %v3749
      %v3756 = vsel %vm3744, %v3655, %v3750
      %v3757 = vsel %vm3745, %v3739, %v3751
      %v3758 = vsel %vm3746, %v3573, %v3752
      %v3759 = vsel %vm3747, %v3657, %v3753
      %v3760 = vsel %vm3748, %v3741, %v3754
      %3761 = vst [vmem:[#allocation3 + $0x18] sm:$0xff] %v3755
      %3762 = vst [vmem:[#allocation3 + $0x20] sm:$0xff] %v3756
      %3763 = vst [vmem:[#allocation3 + $0x28] sm:$0xff] %v3757
      %3764 = vst [vmem:[#allocation3 + $0xf0] sm:$0xff] %v3758
      %3765 = vst [vmem:[#allocation3 + $0xf8] sm:$0xff] %v3759
      %3766 = vst [vmem:[#allocation3 + $0x100] sm:$0xff] %v3760
      %v3767 = vld [vmem:[#allocation2 + $0x20] sm:$0xff]
      %v3768 = vld [vmem:[#allocation2 + $0x28] sm:$0xff]
      %v3769 = vld [vmem:[#allocation2 + $0x30] sm:$0xff]
      %v3770 = vld [vmem:[#allocation2 + $0x38] sm:$0xff]
      %v3771 = vld [vmem:[#allocation2 + $0x40] sm:$0xff]
      %v3772 = vld [vmem:[#allocation2 + $0x48] sm:$0xff]
      %v3773 = vld [vmem:[#allocation2 + $0x120] sm:$0xff]
      %v3774 = vld [vmem:[#allocation2 + $0x128] sm:$0xff]
      %v3775 = vld [vmem:[#allocation2 + $0x130] sm:$0xff]
      %v3776 = vld [vmem:[#allocation2 + $0x138] sm:$0xff]
      %v3777 = vld [vmem:[#allocation2 + $0x140] sm:$0xff]
      %v3778 = vld [vmem:[#allocation2 + $0x148] sm:$0xff]
      %v3779 = vpack.c.bf16 %v3773, %v3767
      %v3780 = vpack.c.bf16 %v3774, %v3768
      %v3781 = vpack.c.bf16 %v3775, %v3769
      %v3782 = vpack.c.bf16 %v3776, %v3770
      %v3783 = vpack.c.bf16 %v3777, %v3771
      %v3784 = vpack.c.bf16 %v3778, %v3772
      %3785 = vmatpush.bf16.msra.mxu0 %v3224
      %3786 = vmatpush.bf16.msra.mxu0 %v3221
      %3787 = vmatpush.bf16.msra.mxu0 %v3218
      %3788 = vmatpush.bf16.msra.mxu0 %v3215
      %3789 = vmatpush.bf16.msra.mxu0 %v3212
      %3790 = vmatpush.bf16.msra.mxu0 %v3209
      %3791 = vmatpush.bf16.msra.mxu0 %v3206
      %3792 = vmatpush.bf16.msra.mxu0 %v3203
      %3793 = vmatmul.bf16.gmra.mxu0 %v3779
      %v3794 = vpop.f32.mrf.mxu0
      %v3795 = vadd.f32 %v2717, %v3794
      %v3796 = vpop.f32.mrf.mxu0
      %v3797 = vadd.f32 %v2717, %v3796
      %3798 = vdwg.mxu0
      %3799 = vmatpush.bf16.msra.mxu0 %v3248
      %3800 = vmatpush.bf16.msra.mxu0 %v3245
      %3801 = vmatpush.bf16.msra.mxu0 %v3242
      %3802 = vmatpush.bf16.msra.mxu0 %v3239
      %3803 = vmatpush.bf16.msra.mxu0 %v3236
      %3804 = vmatpush.bf16.msra.mxu0 %v3233
      %3805 = vmatpush.bf16.msra.mxu0 %v3230
      %3806 = vmatpush.bf16.msra.mxu0 %v3227
      %3807 = vmatmul.bf16.gmra.mxu0 %v3780
      %v3808 = vpop.f32.mrf.mxu0
      %v3809 = vadd.f32 %v3795, %v3808
      %v3810 = vpop.f32.mrf.mxu0
      %v3811 = vadd.f32 %v3797, %v3810
      %3812 = vdwg.mxu0
      %3813 = vmatpush.bf16.msra.mxu0 %v3272
      %3814 = vmatpush.bf16.msra.mxu0 %v3269
      %3815 = vmatpush.bf16.msra.mxu0 %v3266
      %3816 = vmatpush.bf16.msra.mxu0 %v3263
      %3817 = vmatpush.bf16.msra.mxu0 %v3260
      %3818 = vmatpush.bf16.msra.mxu0 %v3257
      %3819 = vmatpush.bf16.msra.mxu0 %v3254
      %3820 = vmatpush.bf16.msra.mxu0 %v3251
      %3821 = vmatmul.bf16.gmra.mxu0 %v3781
      %v3822 = vpop.f32.mrf.mxu0
      %v3823 = vadd.f32 %v3809, %v3822
      %v3824 = vpop.f32.mrf.mxu0
      %v3825 = vadd.f32 %v3811, %v3824
      %3826 = vdwg.mxu0
      %3827 = vmatpush.bf16.msra.mxu0 %v3296
      %3828 = vmatpush.bf16.msra.mxu0 %v3293
      %3829 = vmatpush.bf16.msra.mxu0 %v3290
      %3830 = vmatpush.bf16.msra.mxu0 %v3287
      %3831 = vmatpush.bf16.msra.mxu0 %v3284
      %3832 = vmatpush.bf16.msra.mxu0 %v3281
      %3833 = vmatpush.bf16.msra.mxu0 %v3278
      %3834 = vmatpush.bf16.msra.mxu0 %v3275
      %3835 = vmatmul.bf16.gmra.mxu0 %v3782
      %v3836 = vpop.f32.mrf.mxu0
      %v3837 = vadd.f32 %v3823, %v3836
      %v3838 = vpop.f32.mrf.mxu0
      %v3839 = vadd.f32 %v3825, %v3838
      %3840 = vdwg.mxu0
      %3841 = vmatpush.bf16.msra.mxu0 %v3320
      %3842 = vmatpush.bf16.msra.mxu0 %v3317
      %3843 = vmatpush.bf16.msra.mxu0 %v3314
      %3844 = vmatpush.bf16.msra.mxu0 %v3311
      %3845 = vmatpush.bf16.msra.mxu0 %v3308
      %3846 = vmatpush.bf16.msra.mxu0 %v3305
      %3847 = vmatpush.bf16.msra.mxu0 %v3302
      %3848 = vmatpush.bf16.msra.mxu0 %v3299
      %3849 = vmatmul.bf16.gmra.mxu0 %v3783
      %v3850 = vpop.f32.mrf.mxu0
      %v3851 = vadd.f32 %v3837, %v3850
      %v3852 = vpop.f32.mrf.mxu0
      %v3853 = vadd.f32 %v3839, %v3852
      %3854 = vdwg.mxu0
      %3855 = vmatpush.bf16.msra.mxu0 %v3344
      %3856 = vmatpush.bf16.msra.mxu0 %v3341
      %3857 = vmatpush.bf16.msra.mxu0 %v3338
      %3858 = vmatpush.bf16.msra.mxu0 %v3335
      %3859 = vmatpush.bf16.msra.mxu0 %v3332
      %3860 = vmatpush.bf16.msra.mxu0 %v3329
      %3861 = vmatpush.bf16.msra.mxu0 %v3326
      %3862 = vmatpush.bf16.msra.mxu0 %v3323
      %3863 = vmatmul.bf16.gmra.mxu0 %v3784
      %v3864 = vpop.f32.mrf.mxu0
      %v3865 = vadd.f32 %v3851, %v3864
      %v3866 = vpop.f32.mrf.mxu0
      %v3867 = vadd.f32 %v3853, %v3866
      %3868 = vdwg.mxu0
      %3869 = vmatpush.bf16.msra.mxu0 %v3225
      %3870 = vmatpush.bf16.msra.mxu0 %v3222
      %3871 = vmatpush.bf16.msra.mxu0 %v3219
      %3872 = vmatpush.bf16.msra.mxu0 %v3216
      %3873 = vmatpush.bf16.msra.mxu0 %v3213
      %3874 = vmatpush.bf16.msra.mxu0 %v3210
      %3875 = vmatpush.bf16.msra.mxu0 %v3207
      %3876 = vmatpush.bf16.msra.mxu0 %v3204
      %3877 = vmatmul.bf16.gmra.mxu0 %v3779
      %v3878 = vpop.f32.mrf.mxu0
      %v3879 = vadd.f32 %v2718, %v3878
      %v3880 = vpop.f32.mrf.mxu0
      %v3881 = vadd.f32 %v2718, %v3880
      %3882 = vdwg.mxu0
      %3883 = vmatpush.bf16.msra.mxu0 %v3249
      %3884 = vmatpush.bf16.msra.mxu0 %v3246
      %3885 = vmatpush.bf16.msra.mxu0 %v3243
      %3886 = vmatpush.bf16.msra.mxu0 %v3240
      %3887 = vmatpush.bf16.msra.mxu0 %v3237
      %3888 = vmatpush.bf16.msra.mxu0 %v3234
      %3889 = vmatpush.bf16.msra.mxu0 %v3231
      %3890 = vmatpush.bf16.msra.mxu0 %v3228
      %3891 = vmatmul.bf16.gmra.mxu0 %v3780
      %v3892 = vpop.f32.mrf.mxu0
      %v3893 = vadd.f32 %v3879, %v3892
      %v3894 = vpop.f32.mrf.mxu0
      %v3895 = vadd.f32 %v3881, %v3894
      %3896 = vdwg.mxu0
      %3897 = vmatpush.bf16.msra.mxu0 %v3273
      %3898 = vmatpush.bf16.msra.mxu0 %v3270
      %3899 = vmatpush.bf16.msra.mxu0 %v3267
      %3900 = vmatpush.bf16.msra.mxu0 %v3264
      %3901 = vmatpush.bf16.msra.mxu0 %v3261
      %3902 = vmatpush.bf16.msra.mxu0 %v3258
      %3903 = vmatpush.bf16.msra.mxu0 %v3255
      %3904 = vmatpush.bf16.msra.mxu0 %v3252
      %3905 = vmatmul.bf16.gmra.mxu0 %v3781
      %v3906 = vpop.f32.mrf.mxu0
      %v3907 = vadd.f32 %v3893, %v3906
      %v3908 = vpop.f32.mrf.mxu0
      %v3909 = vadd.f32 %v3895, %v3908
      %3910 = vdwg.mxu0
      %3911 = vmatpush.bf16.msra.mxu0 %v3297
      %3912 = vmatpush.bf16.msra.mxu0 %v3294
      %3913 = vmatpush.bf16.msra.mxu0 %v3291
      %3914 = vmatpush.bf16.msra.mxu0 %v3288
      %3915 = vmatpush.bf16.msra.mxu0 %v3285
      %3916 = vmatpush.bf16.msra.mxu0 %v3282
      %3917 = vmatpush.bf16.msra.mxu0 %v3279
      %3918 = vmatpush.bf16.msra.mxu0 %v3276
      %3919 = vmatmul.bf16.gmra.mxu0 %v3782
      %v3920 = vpop.f32.mrf.mxu0
      %v3921 = vadd.f32 %v3907, %v3920
      %v3922 = vpop.f32.mrf.mxu0
      %v3923 = vadd.f32 %v3909, %v3922
      %3924 = vdwg.mxu0
      %3925 = vmatpush.bf16.msra.mxu0 %v3321
      %3926 = vmatpush.bf16.msra.mxu0 %v3318
      %3927 = vmatpush.bf16.msra.mxu0 %v3315
      %3928 = vmatpush.bf16.msra.mxu0 %v3312
      %3929 = vmatpush.bf16.msra.mxu0 %v3309
      %3930 = vmatpush.bf16.msra.mxu0 %v3306
      %3931 = vmatpush.bf16.msra.mxu0 %v3303
      %3932 = vmatpush.bf16.msra.mxu0 %v3300
      %3933 = vmatmul.bf16.gmra.mxu0 %v3783
      %v3934 = vpop.f32.mrf.mxu0
      %v3935 = vadd.f32 %v3921, %v3934
      %v3936 = vpop.f32.mrf.mxu0
      %v3937 = vadd.f32 %v3923, %v3936
      %3938 = vdwg.mxu0
      %3939 = vmatpush.bf16.msra.mxu0 %v3345
      %3940 = vmatpush.bf16.msra.mxu0 %v3342
      %3941 = vmatpush.bf16.msra.mxu0 %v3339
      %3942 = vmatpush.bf16.msra.mxu0 %v3336
      %3943 = vmatpush.bf16.msra.mxu0 %v3333
      %3944 = vmatpush.bf16.msra.mxu0 %v3330
      %3945 = vmatpush.bf16.msra.mxu0 %v3327
      %3946 = vmatpush.bf16.msra.mxu0 %v3324
      %3947 = vmatmul.bf16.gmra.mxu0 %v3784
      %v3948 = vpop.f32.mrf.mxu0
      %v3949 = vadd.f32 %v3935, %v3948
      %v3950 = vpop.f32.mrf.mxu0
      %v3951 = vadd.f32 %v3937, %v3950
      %3952 = vdwg.mxu0
      %3953 = vmatpush.bf16.msra.mxu0 %v3226
      %3954 = vmatpush.bf16.msra.mxu0 %v3223
      %3955 = vmatpush.bf16.msra.mxu0 %v3220
      %3956 = vmatpush.bf16.msra.mxu0 %v3217
      %3957 = vmatpush.bf16.msra.mxu0 %v3214
      %3958 = vmatpush.bf16.msra.mxu0 %v3211
      %3959 = vmatpush.bf16.msra.mxu0 %v3208
      %3960 = vmatpush.bf16.msra.mxu0 %v3205
      %3961 = vmatmul.bf16.gmra.mxu0 %v3779
      %v3962 = vpop.f32.mrf.mxu0
      %v3963 = vadd.f32 %v2719, %v3962
      %v3964 = vpop.f32.mrf.mxu0
      %v3965 = vadd.f32 %v2719, %v3964
      %3966 = vdwg.mxu0
      %3967 = vmatpush.bf16.msra.mxu0 %v3250
      %3968 = vmatpush.bf16.msra.mxu0 %v3247
      %3969 = vmatpush.bf16.msra.mxu0 %v3244
      %3970 = vmatpush.bf16.msra.mxu0 %v3241
      %3971 = vmatpush.bf16.msra.mxu0 %v3238
      %3972 = vmatpush.bf16.msra.mxu0 %v3235
      %3973 = vmatpush.bf16.msra.mxu0 %v3232
      %3974 = vmatpush.bf16.msra.mxu0 %v3229
      %3975 = vmatmul.bf16.gmra.mxu0 %v3780
      %v3976 = vpop.f32.mrf.mxu0
      %v3977 = vadd.f32 %v3963, %v3976
      %v3978 = vpop.f32.mrf.mxu0
      %v3979 = vadd.f32 %v3965, %v3978
      %3980 = vdwg.mxu0
      %3981 = vmatpush.bf16.msra.mxu0 %v3274
      %3982 = vmatpush.bf16.msra.mxu0 %v3271
      %3983 = vmatpush.bf16.msra.mxu0 %v3268
      %3984 = vmatpush.bf16.msra.mxu0 %v3265
      %3985 = vmatpush.bf16.msra.mxu0 %v3262
      %3986 = vmatpush.bf16.msra.mxu0 %v3259
      %3987 = vmatpush.bf16.msra.mxu0 %v3256
      %3988 = vmatpush.bf16.msra.mxu0 %v3253
      %3989 = vmatmul.bf16.gmra.mxu0 %v3781
      %v3990 = vpop.f32.mrf.mxu0
      %v3991 = vadd.f32 %v3977, %v3990
      %v3992 = vpop.f32.mrf.mxu0
      %v3993 = vadd.f32 %v3979, %v3992
      %3994 = vdwg.mxu0
      %3995 = vmatpush.bf16.msra.mxu0 %v3298
      %3996 = vmatpush.bf16.msra.mxu0 %v3295
      %3997 = vmatpush.bf16.msra.mxu0 %v3292
      %3998 = vmatpush.bf16.msra.mxu0 %v3289
      %3999 = vmatpush.bf16.msra.mxu0 %v3286
      %4000 = vmatpush.bf16.msra.mxu0 %v3283
      %4001 = vmatpush.bf16.msra.mxu0 %v3280
      %4002 = vmatpush.bf16.msra.mxu0 %v3277
      %4003 = vmatmul.bf16.gmra.mxu0 %v3782
      %v4004 = vpop.f32.mrf.mxu0
      %v4005 = vadd.f32 %v3991, %v4004
      %v4006 = vpop.f32.mrf.mxu0
      %v4007 = vadd.f32 %v3993, %v4006
      %4008 = vdwg.mxu0
      %4009 = vmatpush.bf16.msra.mxu0 %v3322
      %4010 = vmatpush.bf16.msra.mxu0 %v3319
      %4011 = vmatpush.bf16.msra.mxu0 %v3316
      %4012 = vmatpush.bf16.msra.mxu0 %v3313
      %4013 = vmatpush.bf16.msra.mxu0 %v3310
      %4014 = vmatpush.bf16.msra.mxu0 %v3307
      %4015 = vmatpush.bf16.msra.mxu0 %v3304
      %4016 = vmatpush.bf16.msra.mxu0 %v3301
      %4017 = vmatmul.bf16.gmra.mxu0 %v3783
      %v4018 = vpop.f32.mrf.mxu0
      %v4019 = vadd.f32 %v4005, %v4018
      %v4020 = vpop.f32.mrf.mxu0
      %v4021 = vadd.f32 %v4007, %v4020
      %4022 = vdwg.mxu0
      %4023 = vmatpush.bf16.msra.mxu0 %v3346
      %4024 = vmatpush.bf16.msra.mxu0 %v3343
      %4025 = vmatpush.bf16.msra.mxu0 %v3340
      %4026 = vmatpush.bf16.msra.mxu0 %v3337
      %4027 = vmatpush.bf16.msra.mxu0 %v3334
      %4028 = vmatpush.bf16.msra.mxu0 %v3331
      %4029 = vmatpush.bf16.msra.mxu0 %v3328
      %4030 = vmatpush.bf16.msra.mxu0 %v3325
      %4031 = vmatmul.bf16.gmra.mxu0 %v3784
      %v4032 = vpop.f32.mrf.mxu0
      %v4033 = vadd.f32 %v4019, %v4032
      %v4034 = vpop.f32.mrf.mxu0
      %v4035 = vadd.f32 %v4021, %v4034
      %4036 = vdwg.mxu0
      %vm4037 = vcmp.gt.f32.partialorder %v3865, 0.0
      %vm4038 = vcmp.gt.f32.partialorder %v3949, 0.0
      %vm4039 = vcmp.gt.f32.partialorder %v4033, 0.0
      %vm4040 = vcmp.gt.f32.partialorder %v3867, 0.0
      %vm4041 = vcmp.gt.f32.partialorder %v3951, 0.0
      %vm4042 = vcmp.gt.f32.partialorder %v4035, 0.0
      %v4043 = vmul.f32 %v3865, 0.2
      %v4044 = vmul.f32 %v3949, 0.2
      %v4045 = vmul.f32 %v4033, 0.2
      %v4046 = vmul.f32 %v3867, 0.2
      %v4047 = vmul.f32 %v3951, 0.2
      %v4048 = vmul.f32 %v4035, 0.2
      %v4049 = vsel %vm4037, %v3865, %v4043
      %v4050 = vsel %vm4038, %v3949, %v4044
      %v4051 = vsel %vm4039, %v4033, %v4045
      %v4052 = vsel %vm4040, %v3867, %v4046
      %v4053 = vsel %vm4041, %v3951, %v4047
      %v4054 = vsel %vm4042, %v4035, %v4048
      %4055 = vst [vmem:[#allocation3 + $0x30] sm:$0xff] %v4049
      %4056 = vst [vmem:[#allocation3 + $0x38] sm:$0xff] %v4050
      %4057 = vst [vmem:[#allocation3 + $0x40] sm:$0xff] %v4051
      %4058 = vst [vmem:[#allocation3 + $0x108] sm:$0xff] %v4052
      %4059 = vst [vmem:[#allocation3 + $0x110] sm:$0xff] %v4053
      %4060 = vst [vmem:[#allocation3 + $0x118] sm:$0xff] %v4054
      %v4061 = vld [vmem:[#allocation2 + $0x40] sm:$0xff]
      %v4062 = vld [vmem:[#allocation2 + $0x48] sm:$0xff]
      %v4063 = vld [vmem:[#allocation2 + $0x50] sm:$0xff]
      %v4064 = vld [vmem:[#allocation2 + $0x58] sm:$0xff]
      %v4065 = vld [vmem:[#allocation2 + $0x60] sm:$0xff]
      %v4066 = vld [vmem:[#allocation2 + $0x68] sm:$0xff]
      %v4067 = vld [vmem:[#allocation2 + $0x140] sm:$0xff]
      %v4068 = vld [vmem:[#allocation2 + $0x148] sm:$0xff]
      %v4069 = vld [vmem:[#allocation2 + $0x150] sm:$0xff]
      %v4070 = vld [vmem:[#allocation2 + $0x158] sm:$0xff]
      %v4071 = vld [vmem:[#allocation2 + $0x160] sm:$0xff]
      %v4072 = vld [vmem:[#allocation2 + $0x168] sm:$0xff]
      %v4073 = vpack.c.bf16 %v4067, %v4061
      %v4074 = vpack.c.bf16 %v4068, %v4062
      %v4075 = vpack.c.bf16 %v4069, %v4063
      %v4076 = vpack.c.bf16 %v4070, %v4064
      %v4077 = vpack.c.bf16 %v4071, %v4065
      %v4078 = vpack.c.bf16 %v4072, %v4066
      %4079 = vmatpush.bf16.msra.mxu0 %v3224
      %4080 = vmatpush.bf16.msra.mxu0 %v3221
      %4081 = vmatpush.bf16.msra.mxu0 %v3218
      %4082 = vmatpush.bf16.msra.mxu0 %v3215
      %4083 = vmatpush.bf16.msra.mxu0 %v3212
      %4084 = vmatpush.bf16.msra.mxu0 %v3209
      %4085 = vmatpush.bf16.msra.mxu0 %v3206
      %4086 = vmatpush.bf16.msra.mxu0 %v3203
      %4087 = vmatmul.bf16.gmra.mxu0 %v4073
      %v4088 = vpop.f32.mrf.mxu0
      %v4089 = vadd.f32 %v2717, %v4088
      %v4090 = vpop.f32.mrf.mxu0
      %v4091 = vadd.f32 %v2717, %v4090
      %4092 = vdwg.mxu0
      %4093 = vmatpush.bf16.msra.mxu0 %v3248
      %4094 = vmatpush.bf16.msra.mxu0 %v3245
      %4095 = vmatpush.bf16.msra.mxu0 %v3242
      %4096 = vmatpush.bf16.msra.mxu0 %v3239
      %4097 = vmatpush.bf16.msra.mxu0 %v3236
      %4098 = vmatpush.bf16.msra.mxu0 %v3233
      %4099 = vmatpush.bf16.msra.mxu0 %v3230
      %4100 = vmatpush.bf16.msra.mxu0 %v3227
      %4101 = vmatmul.bf16.gmra.mxu0 %v4074
      %v4102 = vpop.f32.mrf.mxu0
      %v4103 = vadd.f32 %v4089, %v4102
      %v4104 = vpop.f32.mrf.mxu0
      %v4105 = vadd.f32 %v4091, %v4104
      %4106 = vdwg.mxu0
      %4107 = vmatpush.bf16.msra.mxu0 %v3272
      %4108 = vmatpush.bf16.msra.mxu0 %v3269
      %4109 = vmatpush.bf16.msra.mxu0 %v3266
      %4110 = vmatpush.bf16.msra.mxu0 %v3263
      %4111 = vmatpush.bf16.msra.mxu0 %v3260
      %4112 = vmatpush.bf16.msra.mxu0 %v3257
      %4113 = vmatpush.bf16.msra.mxu0 %v3254
      %4114 = vmatpush.bf16.msra.mxu0 %v3251
      %4115 = vmatmul.bf16.gmra.mxu0 %v4075
      %v4116 = vpop.f32.mrf.mxu0
      %v4117 = vadd.f32 %v4103, %v4116
      %v4118 = vpop.f32.mrf.mxu0
      %v4119 = vadd.f32 %v4105, %v4118
      %4120 = vdwg.mxu0
      %4121 = vmatpush.bf16.msra.mxu0 %v3296
      %4122 = vmatpush.bf16.msra.mxu0 %v3293
      %4123 = vmatpush.bf16.msra.mxu0 %v3290
      %4124 = vmatpush.bf16.msra.mxu0 %v3287
      %4125 = vmatpush.bf16.msra.mxu0 %v3284
      %4126 = vmatpush.bf16.msra.mxu0 %v3281
      %4127 = vmatpush.bf16.msra.mxu0 %v3278
      %4128 = vmatpush.bf16.msra.mxu0 %v3275
      %4129 = vmatmul.bf16.gmra.mxu0 %v4076
      %v4130 = vpop.f32.mrf.mxu0
      %v4131 = vadd.f32 %v4117, %v4130
      %v4132 = vpop.f32.mrf.mxu0
      %v4133 = vadd.f32 %v4119, %v4132
      %4134 = vdwg.mxu0
      %4135 = vmatpush.bf16.msra.mxu0 %v3320
      %4136 = vmatpush.bf16.msra.mxu0 %v3317
      %4137 = vmatpush.bf16.msra.mxu0 %v3314
      %4138 = vmatpush.bf16.msra.mxu0 %v3311
      %4139 = vmatpush.bf16.msra.mxu0 %v3308
      %4140 = vmatpush.bf16.msra.mxu0 %v3305
      %4141 = vmatpush.bf16.msra.mxu0 %v3302
      %4142 = vmatpush.bf16.msra.mxu0 %v3299
      %4143 = vmatmul.bf16.gmra.mxu0 %v4077
      %v4144 = vpop.f32.mrf.mxu0
      %v4145 = vadd.f32 %v4131, %v4144
      %v4146 = vpop.f32.mrf.mxu0
      %v4147 = vadd.f32 %v4133, %v4146
      %4148 = vdwg.mxu0
      %4149 = vmatpush.bf16.msra.mxu0 %v3344
      %4150 = vmatpush.bf16.msra.mxu0 %v3341
      %4151 = vmatpush.bf16.msra.mxu0 %v3338
      %4152 = vmatpush.bf16.msra.mxu0 %v3335
      %4153 = vmatpush.bf16.msra.mxu0 %v3332
      %4154 = vmatpush.bf16.msra.mxu0 %v3329
      %4155 = vmatpush.bf16.msra.mxu0 %v3326
      %4156 = vmatpush.bf16.msra.mxu0 %v3323
      %4157 = vmatmul.bf16.gmra.mxu0 %v4078
      %v4158 = vpop.f32.mrf.mxu0
      %v4159 = vadd.f32 %v4145, %v4158
      %v4160 = vpop.f32.mrf.mxu0
      %v4161 = vadd.f32 %v4147, %v4160
      %4162 = vdwg.mxu0
      %4163 = vmatpush.bf16.msra.mxu0 %v3225
      %4164 = vmatpush.bf16.msra.mxu0 %v3222
      %4165 = vmatpush.bf16.msra.mxu0 %v3219
      %4166 = vmatpush.bf16.msra.mxu0 %v3216
      %4167 = vmatpush.bf16.msra.mxu0 %v3213
      %4168 = vmatpush.bf16.msra.mxu0 %v3210
      %4169 = vmatpush.bf16.msra.mxu0 %v3207
      %4170 = vmatpush.bf16.msra.mxu0 %v3204
      %4171 = vmatmul.bf16.gmra.mxu0 %v4073
      %v4172 = vpop.f32.mrf.mxu0
      %v4173 = vadd.f32 %v2718, %v4172
      %v4174 = vpop.f32.mrf.mxu0
      %v4175 = vadd.f32 %v2718, %v4174
      %4176 = vdwg.mxu0
      %4177 = vmatpush.bf16.msra.mxu0 %v3249
      %4178 = vmatpush.bf16.msra.mxu0 %v3246
      %4179 = vmatpush.bf16.msra.mxu0 %v3243
      %4180 = vmatpush.bf16.msra.mxu0 %v3240
      %4181 = vmatpush.bf16.msra.mxu0 %v3237
      %4182 = vmatpush.bf16.msra.mxu0 %v3234
      %4183 = vmatpush.bf16.msra.mxu0 %v3231
      %4184 = vmatpush.bf16.msra.mxu0 %v3228
      %4185 = vmatmul.bf16.gmra.mxu0 %v4074
      %v4186 = vpop.f32.mrf.mxu0
      %v4187 = vadd.f32 %v4173, %v4186
      %v4188 = vpop.f32.mrf.mxu0
      %v4189 = vadd.f32 %v4175, %v4188
      %4190 = vdwg.mxu0
      %4191 = vmatpush.bf16.msra.mxu0 %v3273
      %4192 = vmatpush.bf16.msra.mxu0 %v3270
      %4193 = vmatpush.bf16.msra.mxu0 %v3267
      %4194 = vmatpush.bf16.msra.mxu0 %v3264
      %4195 = vmatpush.bf16.msra.mxu0 %v3261
      %4196 = vmatpush.bf16.msra.mxu0 %v3258
      %4197 = vmatpush.bf16.msra.mxu0 %v3255
      %4198 = vmatpush.bf16.msra.mxu0 %v3252
      %4199 = vmatmul.bf16.gmra.mxu0 %v4075
      %v4200 = vpop.f32.mrf.mxu0
      %v4201 = vadd.f32 %v4187, %v4200
      %v4202 = vpop.f32.mrf.mxu0
      %v4203 = vadd.f32 %v4189, %v4202
      %4204 = vdwg.mxu0
      %4205 = vmatpush.bf16.msra.mxu0 %v3297
      %4206 = vmatpush.bf16.msra.mxu0 %v3294
      %4207 = vmatpush.bf16.msra.mxu0 %v3291
      %4208 = vmatpush.bf16.msra.mxu0 %v3288
      %4209 = vmatpush.bf16.msra.mxu0 %v3285
      %4210 = vmatpush.bf16.msra.mxu0 %v3282
      %4211 = vmatpush.bf16.msra.mxu0 %v3279
      %4212 = vmatpush.bf16.msra.mxu0 %v3276
      %4213 = vmatmul.bf16.gmra.mxu0 %v4076
      %v4214 = vpop.f32.mrf.mxu0
      %v4215 = vadd.f32 %v4201, %v4214
      %v4216 = vpop.f32.mrf.mxu0
      %v4217 = vadd.f32 %v4203, %v4216
      %4218 = vdwg.mxu0
      %4219 = vmatpush.bf16.msra.mxu0 %v3321
      %4220 = vmatpush.bf16.msra.mxu0 %v3318
      %4221 = vmatpush.bf16.msra.mxu0 %v3315
      %4222 = vmatpush.bf16.msra.mxu0 %v3312
      %4223 = vmatpush.bf16.msra.mxu0 %v3309
      %4224 = vmatpush.bf16.msra.mxu0 %v3306
      %4225 = vmatpush.bf16.msra.mxu0 %v3303
      %4226 = vmatpush.bf16.msra.mxu0 %v3300
      %4227 = vmatmul.bf16.gmra.mxu0 %v4077
      %v4228 = vpop.f32.mrf.mxu0
      %v4229 = vadd.f32 %v4215, %v4228
      %v4230 = vpop.f32.mrf.mxu0
      %v4231 = vadd.f32 %v4217, %v4230
      %4232 = vdwg.mxu0
      %4233 = vmatpush.bf16.msra.mxu0 %v3345
      %4234 = vmatpush.bf16.msra.mxu0 %v3342
      %4235 = vmatpush.bf16.msra.mxu0 %v3339
      %4236 = vmatpush.bf16.msra.mxu0 %v3336
      %4237 = vmatpush.bf16.msra.mxu0 %v3333
      %4238 = vmatpush.bf16.msra.mxu0 %v3330
      %4239 = vmatpush.bf16.msra.mxu0 %v3327
      %4240 = vmatpush.bf16.msra.mxu0 %v3324
      %4241 = vmatmul.bf16.gmra.mxu0 %v4078
      %v4242 = vpop.f32.mrf.mxu0
      %v4243 = vadd.f32 %v4229, %v4242
      %v4244 = vpop.f32.mrf.mxu0
      %v4245 = vadd.f32 %v4231, %v4244
      %4246 = vdwg.mxu0
      %4247 = vmatpush.bf16.msra.mxu0 %v3226
      %4248 = vmatpush.bf16.msra.mxu0 %v3223
      %4249 = vmatpush.bf16.msra.mxu0 %v3220
      %4250 = vmatpush.bf16.msra.mxu0 %v3217
      %4251 = vmatpush.bf16.msra.mxu0 %v3214
      %4252 = vmatpush.bf16.msra.mxu0 %v3211
      %4253 = vmatpush.bf16.msra.mxu0 %v3208
      %4254 = vmatpush.bf16.msra.mxu0 %v3205
      %4255 = vmatmul.bf16.gmra.mxu0 %v4073
      %v4256 = vpop.f32.mrf.mxu0
      %v4257 = vadd.f32 %v2719, %v4256
      %v4258 = vpop.f32.mrf.mxu0
      %v4259 = vadd.f32 %v2719, %v4258
      %4260 = vdwg.mxu0
      %4261 = vmatpush.bf16.msra.mxu0 %v3250
      %4262 = vmatpush.bf16.msra.mxu0 %v3247
      %4263 = vmatpush.bf16.msra.mxu0 %v3244
      %4264 = vmatpush.bf16.msra.mxu0 %v3241
      %4265 = vmatpush.bf16.msra.mxu0 %v3238
      %4266 = vmatpush.bf16.msra.mxu0 %v3235
      %4267 = vmatpush.bf16.msra.mxu0 %v3232
      %4268 = vmatpush.bf16.msra.mxu0 %v3229
      %4269 = vmatmul.bf16.gmra.mxu0 %v4074
      %v4270 = vpop.f32.mrf.mxu0
      %v4271 = vadd.f32 %v4257, %v4270
      %v4272 = vpop.f32.mrf.mxu0
      %v4273 = vadd.f32 %v4259, %v4272
      %4274 = vdwg.mxu0
      %4275 = vmatpush.bf16.msra.mxu0 %v3274
      %4276 = vmatpush.bf16.msra.mxu0 %v3271
      %4277 = vmatpush.bf16.msra.mxu0 %v3268
      %4278 = vmatpush.bf16.msra.mxu0 %v3265
      %4279 = vmatpush.bf16.msra.mxu0 %v3262
      %4280 = vmatpush.bf16.msra.mxu0 %v3259
      %4281 = vmatpush.bf16.msra.mxu0 %v3256
      %4282 = vmatpush.bf16.msra.mxu0 %v3253
      %4283 = vmatmul.bf16.gmra.mxu0 %v4075
      %v4284 = vpop.f32.mrf.mxu0
      %v4285 = vadd.f32 %v4271, %v4284
      %v4286 = vpop.f32.mrf.mxu0
      %v4287 = vadd.f32 %v4273, %v4286
      %4288 = vdwg.mxu0
      %4289 = vmatpush.bf16.msra.mxu0 %v3298
      %4290 = vmatpush.bf16.msra.mxu0 %v3295
      %4291 = vmatpush.bf16.msra.mxu0 %v3292
      %4292 = vmatpush.bf16.msra.mxu0 %v3289
      %4293 = vmatpush.bf16.msra.mxu0 %v3286
      %4294 = vmatpush.bf16.msra.mxu0 %v3283
      %4295 = vmatpush.bf16.msra.mxu0 %v3280
      %4296 = vmatpush.bf16.msra.mxu0 %v3277
      %4297 = vmatmul.bf16.gmra.mxu0 %v4076
      %v4298 = vpop.f32.mrf.mxu0
      %v4299 = vadd.f32 %v4285, %v4298
      %v4300 = vpop.f32.mrf.mxu0
      %v4301 = vadd.f32 %v4287, %v4300
      %4302 = vdwg.mxu0
      %4303 = vmatpush.bf16.msra.mxu0 %v3322
      %4304 = vmatpush.bf16.msra.mxu0 %v3319
      %4305 = vmatpush.bf16.msra.mxu0 %v3316
      %4306 = vmatpush.bf16.msra.mxu0 %v3313
      %4307 = vmatpush.bf16.msra.mxu0 %v3310
      %4308 = vmatpush.bf16.msra.mxu0 %v3307
      %4309 = vmatpush.bf16.msra.mxu0 %v3304
      %4310 = vmatpush.bf16.msra.mxu0 %v3301
      %4311 = vmatmul.bf16.gmra.mxu0 %v4077
      %v4312 = vpop.f32.mrf.mxu0
      %v4313 = vadd.f32 %v4299, %v4312
      %v4314 = vpop.f32.mrf.mxu0
      %v4315 = vadd.f32 %v4301, %v4314
      %4316 = vdwg.mxu0
      %4317 = vmatpush.bf16.msra.mxu0 %v3346
      %4318 = vmatpush.bf16.msra.mxu0 %v3343
      %4319 = vmatpush.bf16.msra.mxu0 %v3340
      %4320 = vmatpush.bf16.msra.mxu0 %v3337
      %4321 = vmatpush.bf16.msra.mxu0 %v3334
      %4322 = vmatpush.bf16.msra.mxu0 %v3331
      %4323 = vmatpush.bf16.msra.mxu0 %v3328
      %4324 = vmatpush.bf16.msra.mxu0 %v3325
      %4325 = vmatmul.bf16.gmra.mxu0 %v4078
      %v4326 = vpop.f32.mrf.mxu0
      %v4327 = vadd.f32 %v4313, %v4326
      %v4328 = vpop.f32.mrf.mxu0
      %v4329 = vadd.f32 %v4315, %v4328
      %4330 = vdwg.mxu0
      %vm4331 = vcmp.gt.f32.partialorder %v4159, 0.0
      %vm4332 = vcmp.gt.f32.partialorder %v4243, 0.0
      %vm4333 = vcmp.gt.f32.partialorder %v4327, 0.0
      %vm4334 = vcmp.gt.f32.partialorder %v4161, 0.0
      %vm4335 = vcmp.gt.f32.partialorder %v4245, 0.0
      %vm4336 = vcmp.gt.f32.partialorder %v4329, 0.0
      %v4337 = vmul.f32 %v4159, 0.2
      %v4338 = vmul.f32 %v4243, 0.2
      %v4339 = vmul.f32 %v4327, 0.2
      %v4340 = vmul.f32 %v4161, 0.2
      %v4341 = vmul.f32 %v4245, 0.2
      %v4342 = vmul.f32 %v4329, 0.2
      %v4343 = vsel %vm4331, %v4159, %v4337
      %v4344 = vsel %vm4332, %v4243, %v4338
      %v4345 = vsel %vm4333, %v4327, %v4339
      %v4346 = vsel %vm4334, %v4161, %v4340
      %v4347 = vsel %vm4335, %v4245, %v4341
      %v4348 = vsel %vm4336, %v4329, %v4342
      %4349 = vst [vmem:[#allocation3 + $0x48] sm:$0xff] %v4343
      %4350 = vst [vmem:[#allocation3 + $0x50] sm:$0xff] %v4344
      %4351 = vst [vmem:[#allocation3 + $0x58] sm:$0xff] %v4345
      %4352 = vst [vmem:[#allocation3 + $0x120] sm:$0xff] %v4346
      %4353 = vst [vmem:[#allocation3 + $0x128] sm:$0xff] %v4347
      %4354 = vst [vmem:[#allocation3 + $0x130] sm:$0xff] %v4348
      %v4355 = vld [vmem:[#allocation2 + $0x60] sm:$0xff]
      %v4356 = vld [vmem:[#allocation2 + $0x68] sm:$0xff]
      %v4357 = vld [vmem:[#allocation2 + $0x70] sm:$0xff]
      %v4358 = vld [vmem:[#allocation2 + $0x78] sm:$0xff]
      %v4359 = vld [vmem:[#allocation2 + $0x80] sm:$0xff]
      %v4360 = vld [vmem:[#allocation2 + $0x88] sm:$0xff]
      %v4361 = vld [vmem:[#allocation2 + $0x160] sm:$0xff]
      %v4362 = vld [vmem:[#allocation2 + $0x168] sm:$0xff]
      %v4363 = vld [vmem:[#allocation2 + $0x170] sm:$0xff]
      %v4364 = vld [vmem:[#allocation2 + $0x178] sm:$0xff]
      %v4365 = vld [vmem:[#allocation2 + $0x180] sm:$0xff]
      %v4366 = vld [vmem:[#allocation2 + $0x188] sm:$0xff]
      %v4367 = vpack.c.bf16 %v4361, %v4355
      %v4368 = vpack.c.bf16 %v4362, %v4356
      %v4369 = vpack.c.bf16 %v4363, %v4357
      %v4370 = vpack.c.bf16 %v4364, %v4358
      %v4371 = vpack.c.bf16 %v4365, %v4359
      %v4372 = vpack.c.bf16 %v4366, %v4360
      %4373 = vmatpush.bf16.msra.mxu0 %v3224
      %4374 = vmatpush.bf16.msra.mxu0 %v3221
      %4375 = vmatpush.bf16.msra.mxu0 %v3218
      %4376 = vmatpush.bf16.msra.mxu0 %v3215
      %4377 = vmatpush.bf16.msra.mxu0 %v3212
      %4378 = vmatpush.bf16.msra.mxu0 %v3209
      %4379 = vmatpush.bf16.msra.mxu0 %v3206
      %4380 = vmatpush.bf16.msra.mxu0 %v3203
      %4381 = vmatmul.bf16.gmra.mxu0 %v4367
      %v4382 = vpop.f32.mrf.mxu0
      %v4383 = vadd.f32 %v2717, %v4382
      %v4384 = vpop.f32.mrf.mxu0
      %v4385 = vadd.f32 %v2717, %v4384
      %4386 = vdwg.mxu0
      %4387 = vmatpush.bf16.msra.mxu0 %v3248
      %4388 = vmatpush.bf16.msra.mxu0 %v3245
      %4389 = vmatpush.bf16.msra.mxu0 %v3242
      %4390 = vmatpush.bf16.msra.mxu0 %v3239
      %4391 = vmatpush.bf16.msra.mxu0 %v3236
      %4392 = vmatpush.bf16.msra.mxu0 %v3233
      %4393 = vmatpush.bf16.msra.mxu0 %v3230
      %4394 = vmatpush.bf16.msra.mxu0 %v3227
      %4395 = vmatmul.bf16.gmra.mxu0 %v4368
      %v4396 = vpop.f32.mrf.mxu0
      %v4397 = vadd.f32 %v4383, %v4396
      %v4398 = vpop.f32.mrf.mxu0
      %v4399 = vadd.f32 %v4385, %v4398
      %4400 = vdwg.mxu0
      %4401 = vmatpush.bf16.msra.mxu0 %v3272
      %4402 = vmatpush.bf16.msra.mxu0 %v3269
      %4403 = vmatpush.bf16.msra.mxu0 %v3266
      %4404 = vmatpush.bf16.msra.mxu0 %v3263
      %4405 = vmatpush.bf16.msra.mxu0 %v3260
      %4406 = vmatpush.bf16.msra.mxu0 %v3257
      %4407 = vmatpush.bf16.msra.mxu0 %v3254
      %4408 = vmatpush.bf16.msra.mxu0 %v3251
      %4409 = vmatmul.bf16.gmra.mxu0 %v4369
      %v4410 = vpop.f32.mrf.mxu0
      %v4411 = vadd.f32 %v4397, %v4410
      %v4412 = vpop.f32.mrf.mxu0
      %v4413 = vadd.f32 %v4399, %v4412
      %4414 = vdwg.mxu0
      %4415 = vmatpush.bf16.msra.mxu0 %v3296
      %4416 = vmatpush.bf16.msra.mxu0 %v3293
      %4417 = vmatpush.bf16.msra.mxu0 %v3290
      %4418 = vmatpush.bf16.msra.mxu0 %v3287
      %4419 = vmatpush.bf16.msra.mxu0 %v3284
      %4420 = vmatpush.bf16.msra.mxu0 %v3281
      %4421 = vmatpush.bf16.msra.mxu0 %v3278
      %4422 = vmatpush.bf16.msra.mxu0 %v3275
      %4423 = vmatmul.bf16.gmra.mxu0 %v4370
      %v4424 = vpop.f32.mrf.mxu0
      %v4425 = vadd.f32 %v4411, %v4424
      %v4426 = vpop.f32.mrf.mxu0
      %v4427 = vadd.f32 %v4413, %v4426
      %4428 = vdwg.mxu0
      %4429 = vmatpush.bf16.msra.mxu0 %v3320
      %4430 = vmatpush.bf16.msra.mxu0 %v3317
      %4431 = vmatpush.bf16.msra.mxu0 %v3314
      %4432 = vmatpush.bf16.msra.mxu0 %v3311
      %4433 = vmatpush.bf16.msra.mxu0 %v3308
      %4434 = vmatpush.bf16.msra.mxu0 %v3305
      %4435 = vmatpush.bf16.msra.mxu0 %v3302
      %4436 = vmatpush.bf16.msra.mxu0 %v3299
      %4437 = vmatmul.bf16.gmra.mxu0 %v4371
      %v4438 = vpop.f32.mrf.mxu0
      %v4439 = vadd.f32 %v4425, %v4438
      %v4440 = vpop.f32.mrf.mxu0
      %v4441 = vadd.f32 %v4427, %v4440
      %4442 = vdwg.mxu0
      %4443 = vmatpush.bf16.msra.mxu0 %v3344
      %4444 = vmatpush.bf16.msra.mxu0 %v3341
      %4445 = vmatpush.bf16.msra.mxu0 %v3338
      %4446 = vmatpush.bf16.msra.mxu0 %v3335
      %4447 = vmatpush.bf16.msra.mxu0 %v3332
      %4448 = vmatpush.bf16.msra.mxu0 %v3329
      %4449 = vmatpush.bf16.msra.mxu0 %v3326
      %4450 = vmatpush.bf16.msra.mxu0 %v3323
      %4451 = vmatmul.bf16.gmra.mxu0 %v4372
      %v4452 = vpop.f32.mrf.mxu0
      %v4453 = vadd.f32 %v4439, %v4452
      %v4454 = vpop.f32.mrf.mxu0
      %v4455 = vadd.f32 %v4441, %v4454
      %4456 = vdwg.mxu0
      %4457 = vmatpush.bf16.msra.mxu0 %v3225
      %4458 = vmatpush.bf16.msra.mxu0 %v3222
      %4459 = vmatpush.bf16.msra.mxu0 %v3219
      %4460 = vmatpush.bf16.msra.mxu0 %v3216
      %4461 = vmatpush.bf16.msra.mxu0 %v3213
      %4462 = vmatpush.bf16.msra.mxu0 %v3210
      %4463 = vmatpush.bf16.msra.mxu0 %v3207
      %4464 = vmatpush.bf16.msra.mxu0 %v3204
      %4465 = vmatmul.bf16.gmra.mxu0 %v4367
      %v4466 = vpop.f32.mrf.mxu0
      %v4467 = vadd.f32 %v2718, %v4466
      %v4468 = vpop.f32.mrf.mxu0
      %v4469 = vadd.f32 %v2718, %v4468
      %4470 = vdwg.mxu0
      %4471 = vmatpush.bf16.msra.mxu0 %v3249
      %4472 = vmatpush.bf16.msra.mxu0 %v3246
      %4473 = vmatpush.bf16.msra.mxu0 %v3243
      %4474 = vmatpush.bf16.msra.mxu0 %v3240
      %4475 = vmatpush.bf16.msra.mxu0 %v3237
      %4476 = vmatpush.bf16.msra.mxu0 %v3234
      %4477 = vmatpush.bf16.msra.mxu0 %v3231
      %4478 = vmatpush.bf16.msra.mxu0 %v3228
      %4479 = vmatmul.bf16.gmra.mxu0 %v4368
      %v4480 = vpop.f32.mrf.mxu0
      %v4481 = vadd.f32 %v4467, %v4480
      %v4482 = vpop.f32.mrf.mxu0
      %v4483 = vadd.f32 %v4469, %v4482
      %4484 = vdwg.mxu0
      %4485 = vmatpush.bf16.msra.mxu0 %v3273
      %4486 = vmatpush.bf16.msra.mxu0 %v3270
      %4487 = vmatpush.bf16.msra.mxu0 %v3267
      %4488 = vmatpush.bf16.msra.mxu0 %v3264
      %4489 = vmatpush.bf16.msra.mxu0 %v3261
      %4490 = vmatpush.bf16.msra.mxu0 %v3258
      %4491 = vmatpush.bf16.msra.mxu0 %v3255
      %4492 = vmatpush.bf16.msra.mxu0 %v3252
      %4493 = vmatmul.bf16.gmra.mxu0 %v4369
      %v4494 = vpop.f32.mrf.mxu0
      %v4495 = vadd.f32 %v4481, %v4494
      %v4496 = vpop.f32.mrf.mxu0
      %v4497 = vadd.f32 %v4483, %v4496
      %4498 = vdwg.mxu0
      %4499 = vmatpush.bf16.msra.mxu0 %v3297
      %4500 = vmatpush.bf16.msra.mxu0 %v3294
      %4501 = vmatpush.bf16.msra.mxu0 %v3291
      %4502 = vmatpush.bf16.msra.mxu0 %v3288
      %4503 = vmatpush.bf16.msra.mxu0 %v3285
      %4504 = vmatpush.bf16.msra.mxu0 %v3282
      %4505 = vmatpush.bf16.msra.mxu0 %v3279
      %4506 = vmatpush.bf16.msra.mxu0 %v3276
      %4507 = vmatmul.bf16.gmra.mxu0 %v4370
      %v4508 = vpop.f32.mrf.mxu0
      %v4509 = vadd.f32 %v4495, %v4508
      %v4510 = vpop.f32.mrf.mxu0
      %v4511 = vadd.f32 %v4497, %v4510
      %4512 = vdwg.mxu0
      %4513 = vmatpush.bf16.msra.mxu0 %v3321
      %4514 = vmatpush.bf16.msra.mxu0 %v3318
      %4515 = vmatpush.bf16.msra.mxu0 %v3315
      %4516 = vmatpush.bf16.msra.mxu0 %v3312
      %4517 = vmatpush.bf16.msra.mxu0 %v3309
      %4518 = vmatpush.bf16.msra.mxu0 %v3306
      %4519 = vmatpush.bf16.msra.mxu0 %v3303
      %4520 = vmatpush.bf16.msra.mxu0 %v3300
      %4521 = vmatmul.bf16.gmra.mxu0 %v4371
      %v4522 = vpop.f32.mrf.mxu0
      %v4523 = vadd.f32 %v4509, %v4522
      %v4524 = vpop.f32.mrf.mxu0
      %v4525 = vadd.f32 %v4511, %v4524
      %4526 = vdwg.mxu0
      %4527 = vmatpush.bf16.msra.mxu0 %v3345
      %4528 = vmatpush.bf16.msra.mxu0 %v3342
      %4529 = vmatpush.bf16.msra.mxu0 %v3339
      %4530 = vmatpush.bf16.msra.mxu0 %v3336
      %4531 = vmatpush.bf16.msra.mxu0 %v3333
      %4532 = vmatpush.bf16.msra.mxu0 %v3330
      %4533 = vmatpush.bf16.msra.mxu0 %v3327
      %4534 = vmatpush.bf16.msra.mxu0 %v3324
      %4535 = vmatmul.bf16.gmra.mxu0 %v4372
      %v4536 = vpop.f32.mrf.mxu0
      %v4537 = vadd.f32 %v4523, %v4536
      %v4538 = vpop.f32.mrf.mxu0
      %v4539 = vadd.f32 %v4525, %v4538
      %4540 = vdwg.mxu0
      %4541 = vmatpush.bf16.msra.mxu0 %v3226
      %4542 = vmatpush.bf16.msra.mxu0 %v3223
      %4543 = vmatpush.bf16.msra.mxu0 %v3220
      %4544 = vmatpush.bf16.msra.mxu0 %v3217
      %4545 = vmatpush.bf16.msra.mxu0 %v3214
      %4546 = vmatpush.bf16.msra.mxu0 %v3211
      %4547 = vmatpush.bf16.msra.mxu0 %v3208
      %4548 = vmatpush.bf16.msra.mxu0 %v3205
      %4549 = vmatmul.bf16.gmra.mxu0 %v4367
      %v4550 = vpop.f32.mrf.mxu0
      %v4551 = vadd.f32 %v2719, %v4550
      %v4552 = vpop.f32.mrf.mxu0
      %v4553 = vadd.f32 %v2719, %v4552
      %4554 = vdwg.mxu0
      %4555 = vmatpush.bf16.msra.mxu0 %v3250
      %4556 = vmatpush.bf16.msra.mxu0 %v3247
      %4557 = vmatpush.bf16.msra.mxu0 %v3244
      %4558 = vmatpush.bf16.msra.mxu0 %v3241
      %4559 = vmatpush.bf16.msra.mxu0 %v3238
      %4560 = vmatpush.bf16.msra.mxu0 %v3235
      %4561 = vmatpush.bf16.msra.mxu0 %v3232
      %4562 = vmatpush.bf16.msra.mxu0 %v3229
      %4563 = vmatmul.bf16.gmra.mxu0 %v4368
      %v4564 = vpop.f32.mrf.mxu0
      %v4565 = vadd.f32 %v4551, %v4564
      %v4566 = vpop.f32.mrf.mxu0
      %v4567 = vadd.f32 %v4553, %v4566
      %4568 = vdwg.mxu0
      %4569 = vmatpush.bf16.msra.mxu0 %v3274
      %4570 = vmatpush.bf16.msra.mxu0 %v3271
      %4571 = vmatpush.bf16.msra.mxu0 %v3268
      %4572 = vmatpush.bf16.msra.mxu0 %v3265
      %4573 = vmatpush.bf16.msra.mxu0 %v3262
      %4574 = vmatpush.bf16.msra.mxu0 %v3259
      %4575 = vmatpush.bf16.msra.mxu0 %v3256
      %4576 = vmatpush.bf16.msra.mxu0 %v3253
      %4577 = vmatmul.bf16.gmra.mxu0 %v4369
      %v4578 = vpop.f32.mrf.mxu0
      %v4579 = vadd.f32 %v4565, %v4578
      %v4580 = vpop.f32.mrf.mxu0
      %v4581 = vadd.f32 %v4567, %v4580
      %4582 = vdwg.mxu0
      %4583 = vmatpush.bf16.msra.mxu0 %v3298
      %4584 = vmatpush.bf16.msra.mxu0 %v3295
      %4585 = vmatpush.bf16.msra.mxu0 %v3292
      %4586 = vmatpush.bf16.msra.mxu0 %v3289
      %4587 = vmatpush.bf16.msra.mxu0 %v3286
      %4588 = vmatpush.bf16.msra.mxu0 %v3283
      %4589 = vmatpush.bf16.msra.mxu0 %v3280
      %4590 = vmatpush.bf16.msra.mxu0 %v3277
      %4591 = vmatmul.bf16.gmra.mxu0 %v4370
      %v4592 = vpop.f32.mrf.mxu0
      %v4593 = vadd.f32 %v4579, %v4592
      %v4594 = vpop.f32.mrf.mxu0
      %v4595 = vadd.f32 %v4581, %v4594
      %4596 = vdwg.mxu0
      %4597 = vmatpush.bf16.msra.mxu0 %v3322
      %4598 = vmatpush.bf16.msra.mxu0 %v3319
      %4599 = vmatpush.bf16.msra.mxu0 %v3316
      %4600 = vmatpush.bf16.msra.mxu0 %v3313
      %4601 = vmatpush.bf16.msra.mxu0 %v3310
      %4602 = vmatpush.bf16.msra.mxu0 %v3307
      %4603 = vmatpush.bf16.msra.mxu0 %v3304
      %4604 = vmatpush.bf16.msra.mxu0 %v3301
      %4605 = vmatmul.bf16.gmra.mxu0 %v4371
      %v4606 = vpop.f32.mrf.mxu0
      %v4607 = vadd.f32 %v4593, %v4606
      %v4608 = vpop.f32.mrf.mxu0
      %v4609 = vadd.f32 %v4595, %v4608
      %4610 = vdwg.mxu0
      %4611 = vmatpush.bf16.msra.mxu0 %v3346
      %4612 = vmatpush.bf16.msra.mxu0 %v3343
      %4613 = vmatpush.bf16.msra.mxu0 %v3340
      %4614 = vmatpush.bf16.msra.mxu0 %v3337
      %4615 = vmatpush.bf16.msra.mxu0 %v3334
      %4616 = vmatpush.bf16.msra.mxu0 %v3331
      %4617 = vmatpush.bf16.msra.mxu0 %v3328
      %4618 = vmatpush.bf16.msra.mxu0 %v3325
      %4619 = vmatmul.bf16.gmra.mxu0 %v4372
      %v4620 = vpop.f32.mrf.mxu0
      %v4621 = vadd.f32 %v4607, %v4620
      %v4622 = vpop.f32.mrf.mxu0
      %v4623 = vadd.f32 %v4609, %v4622
      %4624 = vdwg.mxu0
      %vm4625 = vcmp.gt.f32.partialorder %v4453, 0.0
      %vm4626 = vcmp.gt.f32.partialorder %v4537, 0.0
      %vm4627 = vcmp.gt.f32.partialorder %v4621, 0.0
      %vm4628 = vcmp.gt.f32.partialorder %v4455, 0.0
      %vm4629 = vcmp.gt.f32.partialorder %v4539, 0.0
      %vm4630 = vcmp.gt.f32.partialorder %v4623, 0.0
      %v4631 = vmul.f32 %v4453, 0.2
      %v4632 = vmul.f32 %v4537, 0.2
      %v4633 = vmul.f32 %v4621, 0.2
      %v4634 = vmul.f32 %v4455, 0.2
      %v4635 = vmul.f32 %v4539, 0.2
      %v4636 = vmul.f32 %v4623, 0.2
      %v4637 = vsel %vm4625, %v4453, %v4631
      %v4638 = vsel %vm4626, %v4537, %v4632
      %v4639 = vsel %vm4627, %v4621, %v4633
      %v4640 = vsel %vm4628, %v4455, %v4634
      %v4641 = vsel %vm4629, %v4539, %v4635
      %v4642 = vsel %vm4630, %v4623, %v4636
      %4643 = vst [vmem:[#allocation3 + $0x60] sm:$0xff] %v4637
      %4644 = vst [vmem:[#allocation3 + $0x68] sm:$0xff] %v4638
      %4645 = vst [vmem:[#allocation3 + $0x70] sm:$0xff] %v4639
      %4646 = vst [vmem:[#allocation3 + $0x138] sm:$0xff] %v4640
      %4647 = vst [vmem:[#allocation3 + $0x140] sm:$0xff] %v4641
      %4648 = vst [vmem:[#allocation3 + $0x148] sm:$0xff] %v4642
      %v4649 = vld [vmem:[#allocation2 + $0x80] sm:$0xff]
      %v4650 = vld [vmem:[#allocation2 + $0x88] sm:$0xff]
      %v4651 = vld [vmem:[#allocation2 + $0x90] sm:$0xff]
      %v4652 = vld [vmem:[#allocation2 + $0x98] sm:$0xff]
      %v4653 = vld [vmem:[#allocation2 + $0xa0] sm:$0xff]
      %v4654 = vld [vmem:[#allocation2 + $0xa8] sm:$0xff]
      %v4655 = vld [vmem:[#allocation2 + $0x180] sm:$0xff]
      %v4656 = vld [vmem:[#allocation2 + $0x188] sm:$0xff]
      %v4657 = vld [vmem:[#allocation2 + $0x190] sm:$0xff]
      %v4658 = vld [vmem:[#allocation2 + $0x198] sm:$0xff]
      %v4659 = vld [vmem:[#allocation2 + $0x1a0] sm:$0xff]
      %v4660 = vld [vmem:[#allocation2 + $0x1a8] sm:$0xff]
      %v4661 = vpack.c.bf16 %v4655, %v4649
      %v4662 = vpack.c.bf16 %v4656, %v4650
      %v4663 = vpack.c.bf16 %v4657, %v4651
      %v4664 = vpack.c.bf16 %v4658, %v4652
      %v4665 = vpack.c.bf16 %v4659, %v4653
      %v4666 = vpack.c.bf16 %v4660, %v4654
      %4667 = vmatpush.bf16.msra.mxu0 %v3224
      %4668 = vmatpush.bf16.msra.mxu0 %v3221
      %4669 = vmatpush.bf16.msra.mxu0 %v3218
      %4670 = vmatpush.bf16.msra.mxu0 %v3215
      %4671 = vmatpush.bf16.msra.mxu0 %v3212
      %4672 = vmatpush.bf16.msra.mxu0 %v3209
      %4673 = vmatpush.bf16.msra.mxu0 %v3206
      %4674 = vmatpush.bf16.msra.mxu0 %v3203
      %4675 = vmatmul.bf16.gmra.mxu0 %v4661
      %v4676 = vpop.f32.mrf.mxu0
      %v4677 = vadd.f32 %v2717, %v4676
      %v4678 = vpop.f32.mrf.mxu0
      %v4679 = vadd.f32 %v2717, %v4678
      %4680 = vdwg.mxu0
      %4681 = vmatpush.bf16.msra.mxu0 %v3248
      %4682 = vmatpush.bf16.msra.mxu0 %v3245
      %4683 = vmatpush.bf16.msra.mxu0 %v3242
      %4684 = vmatpush.bf16.msra.mxu0 %v3239
      %4685 = vmatpush.bf16.msra.mxu0 %v3236
      %4686 = vmatpush.bf16.msra.mxu0 %v3233
      %4687 = vmatpush.bf16.msra.mxu0 %v3230
      %4688 = vmatpush.bf16.msra.mxu0 %v3227
      %4689 = vmatmul.bf16.gmra.mxu0 %v4662
      %v4690 = vpop.f32.mrf.mxu0
      %v4691 = vadd.f32 %v4677, %v4690
      %v4692 = vpop.f32.mrf.mxu0
      %v4693 = vadd.f32 %v4679, %v4692
      %4694 = vdwg.mxu0
      %4695 = vmatpush.bf16.msra.mxu0 %v3272
      %4696 = vmatpush.bf16.msra.mxu0 %v3269
      %4697 = vmatpush.bf16.msra.mxu0 %v3266
      %4698 = vmatpush.bf16.msra.mxu0 %v3263
      %4699 = vmatpush.bf16.msra.mxu0 %v3260
      %4700 = vmatpush.bf16.msra.mxu0 %v3257
      %4701 = vmatpush.bf16.msra.mxu0 %v3254
      %4702 = vmatpush.bf16.msra.mxu0 %v3251
      %4703 = vmatmul.bf16.gmra.mxu0 %v4663
      %v4704 = vpop.f32.mrf.mxu0
      %v4705 = vadd.f32 %v4691, %v4704
      %v4706 = vpop.f32.mrf.mxu0
      %v4707 = vadd.f32 %v4693, %v4706
      %4708 = vdwg.mxu0
      %4709 = vmatpush.bf16.msra.mxu0 %v3296
      %4710 = vmatpush.bf16.msra.mxu0 %v3293
      %4711 = vmatpush.bf16.msra.mxu0 %v3290
      %4712 = vmatpush.bf16.msra.mxu0 %v3287
      %4713 = vmatpush.bf16.msra.mxu0 %v3284
      %4714 = vmatpush.bf16.msra.mxu0 %v3281
      %4715 = vmatpush.bf16.msra.mxu0 %v3278
      %4716 = vmatpush.bf16.msra.mxu0 %v3275
      %4717 = vmatmul.bf16.gmra.mxu0 %v4664
      %v4718 = vpop.f32.mrf.mxu0
      %v4719 = vadd.f32 %v4705, %v4718
      %v4720 = vpop.f32.mrf.mxu0
      %v4721 = vadd.f32 %v4707, %v4720
      %4722 = vdwg.mxu0
      %4723 = vmatpush.bf16.msra.mxu0 %v3320
      %4724 = vmatpush.bf16.msra.mxu0 %v3317
      %4725 = vmatpush.bf16.msra.mxu0 %v3314
      %4726 = vmatpush.bf16.msra.mxu0 %v3311
      %4727 = vmatpush.bf16.msra.mxu0 %v3308
      %4728 = vmatpush.bf16.msra.mxu0 %v3305
      %4729 = vmatpush.bf16.msra.mxu0 %v3302
      %4730 = vmatpush.bf16.msra.mxu0 %v3299
      %4731 = vmatmul.bf16.gmra.mxu0 %v4665
      %v4732 = vpop.f32.mrf.mxu0
      %v4733 = vadd.f32 %v4719, %v4732
      %v4734 = vpop.f32.mrf.mxu0
      %v4735 = vadd.f32 %v4721, %v4734
      %4736 = vdwg.mxu0
      %4737 = vmatpush.bf16.msra.mxu0 %v3344
      %4738 = vmatpush.bf16.msra.mxu0 %v3341
      %4739 = vmatpush.bf16.msra.mxu0 %v3338
      %4740 = vmatpush.bf16.msra.mxu0 %v3335
      %4741 = vmatpush.bf16.msra.mxu0 %v3332
      %4742 = vmatpush.bf16.msra.mxu0 %v3329
      %4743 = vmatpush.bf16.msra.mxu0 %v3326
      %4744 = vmatpush.bf16.msra.mxu0 %v3323
      %4745 = vmatmul.bf16.gmra.mxu0 %v4666
      %v4746 = vpop.f32.mrf.mxu0
      %v4747 = vadd.f32 %v4733, %v4746
      %v4748 = vpop.f32.mrf.mxu0
      %v4749 = vadd.f32 %v4735, %v4748
      %4750 = vdwg.mxu0
      %4751 = vmatpush.bf16.msra.mxu0 %v3225
      %4752 = vmatpush.bf16.msra.mxu0 %v3222
      %4753 = vmatpush.bf16.msra.mxu0 %v3219
      %4754 = vmatpush.bf16.msra.mxu0 %v3216
      %4755 = vmatpush.bf16.msra.mxu0 %v3213
      %4756 = vmatpush.bf16.msra.mxu0 %v3210
      %4757 = vmatpush.bf16.msra.mxu0 %v3207
      %4758 = vmatpush.bf16.msra.mxu0 %v3204
      %4759 = vmatmul.bf16.gmra.mxu0 %v4661
      %v4760 = vpop.f32.mrf.mxu0
      %v4761 = vadd.f32 %v2718, %v4760
      %v4762 = vpop.f32.mrf.mxu0
      %v4763 = vadd.f32 %v2718, %v4762
      %4764 = vdwg.mxu0
      %4765 = vmatpush.bf16.msra.mxu0 %v3249
      %4766 = vmatpush.bf16.msra.mxu0 %v3246
      %4767 = vmatpush.bf16.msra.mxu0 %v3243
      %4768 = vmatpush.bf16.msra.mxu0 %v3240
      %4769 = vmatpush.bf16.msra.mxu0 %v3237
      %4770 = vmatpush.bf16.msra.mxu0 %v3234
      %4771 = vmatpush.bf16.msra.mxu0 %v3231
      %4772 = vmatpush.bf16.msra.mxu0 %v3228
      %4773 = vmatmul.bf16.gmra.mxu0 %v4662
      %v4774 = vpop.f32.mrf.mxu0
      %v4775 = vadd.f32 %v4761, %v4774
      %v4776 = vpop.f32.mrf.mxu0
      %v4777 = vadd.f32 %v4763, %v4776
      %4778 = vdwg.mxu0
      %4779 = vmatpush.bf16.msra.mxu0 %v3273
      %4780 = vmatpush.bf16.msra.mxu0 %v3270
      %4781 = vmatpush.bf16.msra.mxu0 %v3267
      %4782 = vmatpush.bf16.msra.mxu0 %v3264
      %4783 = vmatpush.bf16.msra.mxu0 %v3261
      %4784 = vmatpush.bf16.msra.mxu0 %v3258
      %4785 = vmatpush.bf16.msra.mxu0 %v3255
      %4786 = vmatpush.bf16.msra.mxu0 %v3252
      %4787 = vmatmul.bf16.gmra.mxu0 %v4663
      %v4788 = vpop.f32.mrf.mxu0
      %v4789 = vadd.f32 %v4775, %v4788
      %v4790 = vpop.f32.mrf.mxu0
      %v4791 = vadd.f32 %v4777, %v4790
      %4792 = vdwg.mxu0
      %4793 = vmatpush.bf16.msra.mxu0 %v3297
      %4794 = vmatpush.bf16.msra.mxu0 %v3294
      %4795 = vmatpush.bf16.msra.mxu0 %v3291
      %4796 = vmatpush.bf16.msra.mxu0 %v3288
      %4797 = vmatpush.bf16.msra.mxu0 %v3285
      %4798 = vmatpush.bf16.msra.mxu0 %v3282
      %4799 = vmatpush.bf16.msra.mxu0 %v3279
      %4800 = vmatpush.bf16.msra.mxu0 %v3276
      %4801 = vmatmul.bf16.gmra.mxu0 %v4664
      %v4802 = vpop.f32.mrf.mxu0
      %v4803 = vadd.f32 %v4789, %v4802
      %v4804 = vpop.f32.mrf.mxu0
      %v4805 = vadd.f32 %v4791, %v4804
      %4806 = vdwg.mxu0
      %4807 = vmatpush.bf16.msra.mxu0 %v3321
      %4808 = vmatpush.bf16.msra.mxu0 %v3318
      %4809 = vmatpush.bf16.msra.mxu0 %v3315
      %4810 = vmatpush.bf16.msra.mxu0 %v3312
      %4811 = vmatpush.bf16.msra.mxu0 %v3309
      %4812 = vmatpush.bf16.msra.mxu0 %v3306
      %4813 = vmatpush.bf16.msra.mxu0 %v3303
      %4814 = vmatpush.bf16.msra.mxu0 %v3300
      %4815 = vmatmul.bf16.gmra.mxu0 %v4665
      %v4816 = vpop.f32.mrf.mxu0
      %v4817 = vadd.f32 %v4803, %v4816
      %v4818 = vpop.f32.mrf.mxu0
      %v4819 = vadd.f32 %v4805, %v4818
      %4820 = vdwg.mxu0
      %4821 = vmatpush.bf16.msra.mxu0 %v3345
      %4822 = vmatpush.bf16.msra.mxu0 %v3342
      %4823 = vmatpush.bf16.msra.mxu0 %v3339
      %4824 = vmatpush.bf16.msra.mxu0 %v3336
      %4825 = vmatpush.bf16.msra.mxu0 %v3333
      %4826 = vmatpush.bf16.msra.mxu0 %v3330
      %4827 = vmatpush.bf16.msra.mxu0 %v3327
      %4828 = vmatpush.bf16.msra.mxu0 %v3324
      %4829 = vmatmul.bf16.gmra.mxu0 %v4666
      %v4830 = vpop.f32.mrf.mxu0
      %v4831 = vadd.f32 %v4817, %v4830
      %v4832 = vpop.f32.mrf.mxu0
      %v4833 = vadd.f32 %v4819, %v4832
      %4834 = vdwg.mxu0
      %4835 = vmatpush.bf16.msra.mxu0 %v3226
      %4836 = vmatpush.bf16.msra.mxu0 %v3223
      %4837 = vmatpush.bf16.msra.mxu0 %v3220
      %4838 = vmatpush.bf16.msra.mxu0 %v3217
      %4839 = vmatpush.bf16.msra.mxu0 %v3214
      %4840 = vmatpush.bf16.msra.mxu0 %v3211
      %4841 = vmatpush.bf16.msra.mxu0 %v3208
      %4842 = vmatpush.bf16.msra.mxu0 %v3205
      %4843 = vmatmul.bf16.gmra.mxu0 %v4661
      %v4844 = vpop.f32.mrf.mxu0
      %v4845 = vadd.f32 %v2719, %v4844
      %v4846 = vpop.f32.mrf.mxu0
      %v4847 = vadd.f32 %v2719, %v4846
      %4848 = vdwg.mxu0
      %4849 = vmatpush.bf16.msra.mxu0 %v3250
      %4850 = vmatpush.bf16.msra.mxu0 %v3247
      %4851 = vmatpush.bf16.msra.mxu0 %v3244
      %4852 = vmatpush.bf16.msra.mxu0 %v3241
      %4853 = vmatpush.bf16.msra.mxu0 %v3238
      %4854 = vmatpush.bf16.msra.mxu0 %v3235
      %4855 = vmatpush.bf16.msra.mxu0 %v3232
      %4856 = vmatpush.bf16.msra.mxu0 %v3229
      %4857 = vmatmul.bf16.gmra.mxu0 %v4662
      %v4858 = vpop.f32.mrf.mxu0
      %v4859 = vadd.f32 %v4845, %v4858
      %v4860 = vpop.f32.mrf.mxu0
      %v4861 = vadd.f32 %v4847, %v4860
      %4862 = vdwg.mxu0
      %4863 = vmatpush.bf16.msra.mxu0 %v3274
      %4864 = vmatpush.bf16.msra.mxu0 %v3271
      %4865 = vmatpush.bf16.msra.mxu0 %v3268
      %4866 = vmatpush.bf16.msra.mxu0 %v3265
      %4867 = vmatpush.bf16.msra.mxu0 %v3262
      %4868 = vmatpush.bf16.msra.mxu0 %v3259
      %4869 = vmatpush.bf16.msra.mxu0 %v3256
      %4870 = vmatpush.bf16.msra.mxu0 %v3253
      %4871 = vmatmul.bf16.gmra.mxu0 %v4663
      %v4872 = vpop.f32.mrf.mxu0
      %v4873 = vadd.f32 %v4859, %v4872
      %v4874 = vpop.f32.mrf.mxu0
      %v4875 = vadd.f32 %v4861, %v4874
      %4876 = vdwg.mxu0
      %4877 = vmatpush.bf16.msra.mxu0 %v3298
      %4878 = vmatpush.bf16.msra.mxu0 %v3295
      %4879 = vmatpush.bf16.msra.mxu0 %v3292
      %4880 = vmatpush.bf16.msra.mxu0 %v3289
      %4881 = vmatpush.bf16.msra.mxu0 %v3286
      %4882 = vmatpush.bf16.msra.mxu0 %v3283
      %4883 = vmatpush.bf16.msra.mxu0 %v3280
      %4884 = vmatpush.bf16.msra.mxu0 %v3277
      %4885 = vmatmul.bf16.gmra.mxu0 %v4664
      %v4886 = vpop.f32.mrf.mxu0
      %v4887 = vadd.f32 %v4873, %v4886
      %v4888 = vpop.f32.mrf.mxu0
      %v4889 = vadd.f32 %v4875, %v4888
      %4890 = vdwg.mxu0
      %4891 = vmatpush.bf16.msra.mxu0 %v3322
      %4892 = vmatpush.bf16.msra.mxu0 %v3319
      %4893 = vmatpush.bf16.msra.mxu0 %v3316
      %4894 = vmatpush.bf16.msra.mxu0 %v3313
      %4895 = vmatpush.bf16.msra.mxu0 %v3310
      %4896 = vmatpush.bf16.msra.mxu0 %v3307
      %4897 = vmatpush.bf16.msra.mxu0 %v3304
      %4898 = vmatpush.bf16.msra.mxu0 %v3301
      %4899 = vmatmul.bf16.gmra.mxu0 %v4665
      %v4900 = vpop.f32.mrf.mxu0
      %v4901 = vadd.f32 %v4887, %v4900
      %v4902 = vpop.f32.mrf.mxu0
      %v4903 = vadd.f32 %v4889, %v4902
      %4904 = vdwg.mxu0
      %4905 = vmatpush.bf16.msra.mxu0 %v3346
      %4906 = vmatpush.bf16.msra.mxu0 %v3343
      %4907 = vmatpush.bf16.msra.mxu0 %v3340
      %4908 = vmatpush.bf16.msra.mxu0 %v3337
      %4909 = vmatpush.bf16.msra.mxu0 %v3334
      %4910 = vmatpush.bf16.msra.mxu0 %v3331
      %4911 = vmatpush.bf16.msra.mxu0 %v3328
      %4912 = vmatpush.bf16.msra.mxu0 %v3325
      %4913 = vmatmul.bf16.gmra.mxu0 %v4666
      %v4914 = vpop.f32.mrf.mxu0
      %v4915 = vadd.f32 %v4901, %v4914
      %v4916 = vpop.f32.mrf.mxu0
      %v4917 = vadd.f32 %v4903, %v4916
      %4918 = vdwg.mxu0
      %vm4919 = vcmp.gt.f32.partialorder %v4747, 0.0
      %vm4920 = vcmp.gt.f32.partialorder %v4831, 0.0
      %vm4921 = vcmp.gt.f32.partialorder %v4915, 0.0
      %vm4922 = vcmp.gt.f32.partialorder %v4749, 0.0
      %vm4923 = vcmp.gt.f32.partialorder %v4833, 0.0
      %vm4924 = vcmp.gt.f32.partialorder %v4917, 0.0
      %v4925 = vmul.f32 %v4747, 0.2
      %v4926 = vmul.f32 %v4831, 0.2
      %v4927 = vmul.f32 %v4915, 0.2
      %v4928 = vmul.f32 %v4749, 0.2
      %v4929 = vmul.f32 %v4833, 0.2
      %v4930 = vmul.f32 %v4917, 0.2
      %v4931 = vsel %vm4919, %v4747, %v4925
      %v4932 = vsel %vm4920, %v4831, %v4926
      %v4933 = vsel %vm4921, %v4915, %v4927
      %v4934 = vsel %vm4922, %v4749, %v4928
      %v4935 = vsel %vm4923, %v4833, %v4929
      %v4936 = vsel %vm4924, %v4917, %v4930
      %4937 = vst [vmem:[#allocation3 + $0x78] sm:$0xff] %v4931
      %4938 = vst [vmem:[#allocation3 + $0x80] sm:$0xff] %v4932
      %4939 = vst [vmem:[#allocation3 + $0x88] sm:$0xff] %v4933
      %4940 = vst [vmem:[#allocation3 + $0x150] sm:$0xff] %v4934
      %4941 = vst [vmem:[#allocation3 + $0x158] sm:$0xff] %v4935
      %4942 = vst [vmem:[#allocation3 + $0x160] sm:$0xff] %v4936
      %v4943 = vld [vmem:[#allocation2 + $0xa0] sm:$0xff]
      %v4944 = vld [vmem:[#allocation2 + $0xa8] sm:$0xff]
      %v4945 = vld [vmem:[#allocation2 + $0xb0] sm:$0xff]
      %v4946 = vld [vmem:[#allocation2 + $0xb8] sm:$0xff]
      %v4947 = vld [vmem:[#allocation2 + $0xc0] sm:$0xff]
      %v4948 = vld [vmem:[#allocation2 + $0xc8] sm:$0xff]
      %v4949 = vld [vmem:[#allocation2 + $0x1a0] sm:$0xff]
      %v4950 = vld [vmem:[#allocation2 + $0x1a8] sm:$0xff]
      %v4951 = vld [vmem:[#allocation2 + $0x1b0] sm:$0xff]
      %v4952 = vld [vmem:[#allocation2 + $0x1b8] sm:$0xff]
      %v4953 = vld [vmem:[#allocation2 + $0x1c0] sm:$0xff]
      %v4954 = vld [vmem:[#allocation2 + $0x1c8] sm:$0xff]
      %v4955 = vpack.c.bf16 %v4949, %v4943
      %v4956 = vpack.c.bf16 %v4950, %v4944
      %v4957 = vpack.c.bf16 %v4951, %v4945
      %v4958 = vpack.c.bf16 %v4952, %v4946
      %v4959 = vpack.c.bf16 %v4953, %v4947
      %v4960 = vpack.c.bf16 %v4954, %v4948
      %4961 = vmatpush.bf16.msra.mxu0 %v3224
      %4962 = vmatpush.bf16.msra.mxu0 %v3221
      %4963 = vmatpush.bf16.msra.mxu0 %v3218
      %4964 = vmatpush.bf16.msra.mxu0 %v3215
      %4965 = vmatpush.bf16.msra.mxu0 %v3212
      %4966 = vmatpush.bf16.msra.mxu0 %v3209
      %4967 = vmatpush.bf16.msra.mxu0 %v3206
      %4968 = vmatpush.bf16.msra.mxu0 %v3203
      %4969 = vmatmul.bf16.gmra.mxu0 %v4955
      %v4970 = vpop.f32.mrf.mxu0
      %v4971 = vadd.f32 %v2717, %v4970
      %v4972 = vpop.f32.mrf.mxu0
      %v4973 = vadd.f32 %v2717, %v4972
      %4974 = vdwg.mxu0
      %4975 = vmatpush.bf16.msra.mxu0 %v3248
      %4976 = vmatpush.bf16.msra.mxu0 %v3245
      %4977 = vmatpush.bf16.msra.mxu0 %v3242
      %4978 = vmatpush.bf16.msra.mxu0 %v3239
      %4979 = vmatpush.bf16.msra.mxu0 %v3236
      %4980 = vmatpush.bf16.msra.mxu0 %v3233
      %4981 = vmatpush.bf16.msra.mxu0 %v3230
      %4982 = vmatpush.bf16.msra.mxu0 %v3227
      %4983 = vmatmul.bf16.gmra.mxu0 %v4956
      %v4984 = vpop.f32.mrf.mxu0
      %v4985 = vadd.f32 %v4971, %v4984
      %v4986 = vpop.f32.mrf.mxu0
      %v4987 = vadd.f32 %v4973, %v4986
      %4988 = vdwg.mxu0
      %4989 = vmatpush.bf16.msra.mxu0 %v3272
      %4990 = vmatpush.bf16.msra.mxu0 %v3269
      %4991 = vmatpush.bf16.msra.mxu0 %v3266
      %4992 = vmatpush.bf16.msra.mxu0 %v3263
      %4993 = vmatpush.bf16.msra.mxu0 %v3260
      %4994 = vmatpush.bf16.msra.mxu0 %v3257
      %4995 = vmatpush.bf16.msra.mxu0 %v3254
      %4996 = vmatpush.bf16.msra.mxu0 %v3251
      %4997 = vmatmul.bf16.gmra.mxu0 %v4957
      %v4998 = vpop.f32.mrf.mxu0
      %v4999 = vadd.f32 %v4985, %v4998
      %v5000 = vpop.f32.mrf.mxu0
      %v5001 = vadd.f32 %v4987, %v5000
      %5002 = vdwg.mxu0
      %5003 = vmatpush.bf16.msra.mxu0 %v3296
      %5004 = vmatpush.bf16.msra.mxu0 %v3293
      %5005 = vmatpush.bf16.msra.mxu0 %v3290
      %5006 = vmatpush.bf16.msra.mxu0 %v3287
      %5007 = vmatpush.bf16.msra.mxu0 %v3284
      %5008 = vmatpush.bf16.msra.mxu0 %v3281
      %5009 = vmatpush.bf16.msra.mxu0 %v3278
      %5010 = vmatpush.bf16.msra.mxu0 %v3275
      %5011 = vmatmul.bf16.gmra.mxu0 %v4958
      %v5012 = vpop.f32.mrf.mxu0
      %v5013 = vadd.f32 %v4999, %v5012
      %v5014 = vpop.f32.mrf.mxu0
      %v5015 = vadd.f32 %v5001, %v5014
      %5016 = vdwg.mxu0
      %5017 = vmatpush.bf16.msra.mxu0 %v3320
      %5018 = vmatpush.bf16.msra.mxu0 %v3317
      %5019 = vmatpush.bf16.msra.mxu0 %v3314
      %5020 = vmatpush.bf16.msra.mxu0 %v3311
      %5021 = vmatpush.bf16.msra.mxu0 %v3308
      %5022 = vmatpush.bf16.msra.mxu0 %v3305
      %5023 = vmatpush.bf16.msra.mxu0 %v3302
      %5024 = vmatpush.bf16.msra.mxu0 %v3299
      %5025 = vmatmul.bf16.gmra.mxu0 %v4959
      %v5026 = vpop.f32.mrf.mxu0
      %v5027 = vadd.f32 %v5013, %v5026
      %v5028 = vpop.f32.mrf.mxu0
      %v5029 = vadd.f32 %v5015, %v5028
      %5030 = vdwg.mxu0
      %5031 = vmatpush.bf16.msra.mxu0 %v3344
      %5032 = vmatpush.bf16.msra.mxu0 %v3341
      %5033 = vmatpush.bf16.msra.mxu0 %v3338
      %5034 = vmatpush.bf16.msra.mxu0 %v3335
      %5035 = vmatpush.bf16.msra.mxu0 %v3332
      %5036 = vmatpush.bf16.msra.mxu0 %v3329
      %5037 = vmatpush.bf16.msra.mxu0 %v3326
      %5038 = vmatpush.bf16.msra.mxu0 %v3323
      %5039 = vmatmul.bf16.gmra.mxu0 %v4960
      %v5040 = vpop.f32.mrf.mxu0
      %v5041 = vadd.f32 %v5027, %v5040
      %v5042 = vpop.f32.mrf.mxu0
      %v5043 = vadd.f32 %v5029, %v5042
      %5044 = vdwg.mxu0
      %5045 = vmatpush.bf16.msra.mxu0 %v3225
      %5046 = vmatpush.bf16.msra.mxu0 %v3222
      %5047 = vmatpush.bf16.msra.mxu0 %v3219
      %5048 = vmatpush.bf16.msra.mxu0 %v3216
      %5049 = vmatpush.bf16.msra.mxu0 %v3213
      %5050 = vmatpush.bf16.msra.mxu0 %v3210
      %5051 = vmatpush.bf16.msra.mxu0 %v3207
      %5052 = vmatpush.bf16.msra.mxu0 %v3204
      %5053 = vmatmul.bf16.gmra.mxu0 %v4955
      %v5054 = vpop.f32.mrf.mxu0
      %v5055 = vadd.f32 %v2718, %v5054
      %v5056 = vpop.f32.mrf.mxu0
      %v5057 = vadd.f32 %v2718, %v5056
      %5058 = vdwg.mxu0
      %5059 = vmatpush.bf16.msra.mxu0 %v3249
      %5060 = vmatpush.bf16.msra.mxu0 %v3246
      %5061 = vmatpush.bf16.msra.mxu0 %v3243
      %5062 = vmatpush.bf16.msra.mxu0 %v3240
      %5063 = vmatpush.bf16.msra.mxu0 %v3237
      %5064 = vmatpush.bf16.msra.mxu0 %v3234
      %5065 = vmatpush.bf16.msra.mxu0 %v3231
      %5066 = vmatpush.bf16.msra.mxu0 %v3228
      %5067 = vmatmul.bf16.gmra.mxu0 %v4956
      %v5068 = vpop.f32.mrf.mxu0
      %v5069 = vadd.f32 %v5055, %v5068
      %v5070 = vpop.f32.mrf.mxu0
      %v5071 = vadd.f32 %v5057, %v5070
      %5072 = vdwg.mxu0
      %5073 = vmatpush.bf16.msra.mxu0 %v3273
      %5074 = vmatpush.bf16.msra.mxu0 %v3270
      %5075 = vmatpush.bf16.msra.mxu0 %v3267
      %5076 = vmatpush.bf16.msra.mxu0 %v3264
      %5077 = vmatpush.bf16.msra.mxu0 %v3261
      %5078 = vmatpush.bf16.msra.mxu0 %v3258
      %5079 = vmatpush.bf16.msra.mxu0 %v3255
      %5080 = vmatpush.bf16.msra.mxu0 %v3252
      %5081 = vmatmul.bf16.gmra.mxu0 %v4957
      %v5082 = vpop.f32.mrf.mxu0
      %v5083 = vadd.f32 %v5069, %v5082
      %v5084 = vpop.f32.mrf.mxu0
      %v5085 = vadd.f32 %v5071, %v5084
      %5086 = vdwg.mxu0
      %5087 = vmatpush.bf16.msra.mxu0 %v3297
      %5088 = vmatpush.bf16.msra.mxu0 %v3294
      %5089 = vmatpush.bf16.msra.mxu0 %v3291
      %5090 = vmatpush.bf16.msra.mxu0 %v3288
      %5091 = vmatpush.bf16.msra.mxu0 %v3285
      %5092 = vmatpush.bf16.msra.mxu0 %v3282
      %5093 = vmatpush.bf16.msra.mxu0 %v3279
      %5094 = vmatpush.bf16.msra.mxu0 %v3276
      %5095 = vmatmul.bf16.gmra.mxu0 %v4958
      %v5096 = vpop.f32.mrf.mxu0
      %v5097 = vadd.f32 %v5083, %v5096
      %v5098 = vpop.f32.mrf.mxu0
      %v5099 = vadd.f32 %v5085, %v5098
      %5100 = vdwg.mxu0
      %5101 = vmatpush.bf16.msra.mxu0 %v3321
      %5102 = vmatpush.bf16.msra.mxu0 %v3318
      %5103 = vmatpush.bf16.msra.mxu0 %v3315
      %5104 = vmatpush.bf16.msra.mxu0 %v3312
      %5105 = vmatpush.bf16.msra.mxu0 %v3309
      %5106 = vmatpush.bf16.msra.mxu0 %v3306
      %5107 = vmatpush.bf16.msra.mxu0 %v3303
      %5108 = vmatpush.bf16.msra.mxu0 %v3300
      %5109 = vmatmul.bf16.gmra.mxu0 %v4959
      %v5110 = vpop.f32.mrf.mxu0
      %v5111 = vadd.f32 %v5097, %v5110
      %v5112 = vpop.f32.mrf.mxu0
      %v5113 = vadd.f32 %v5099, %v5112
      %5114 = vdwg.mxu0
      %5115 = vmatpush.bf16.msra.mxu0 %v3345
      %5116 = vmatpush.bf16.msra.mxu0 %v3342
      %5117 = vmatpush.bf16.msra.mxu0 %v3339
      %5118 = vmatpush.bf16.msra.mxu0 %v3336
      %5119 = vmatpush.bf16.msra.mxu0 %v3333
      %5120 = vmatpush.bf16.msra.mxu0 %v3330
      %5121 = vmatpush.bf16.msra.mxu0 %v3327
      %5122 = vmatpush.bf16.msra.mxu0 %v3324
      %5123 = vmatmul.bf16.gmra.mxu0 %v4960
      %v5124 = vpop.f32.mrf.mxu0
      %v5125 = vadd.f32 %v5111, %v5124
      %v5126 = vpop.f32.mrf.mxu0
      %v5127 = vadd.f32 %v5113, %v5126
      %5128 = vdwg.mxu0
      %5129 = vmatpush.bf16.msra.mxu0 %v3226
      %5130 = vmatpush.bf16.msra.mxu0 %v3223
      %5131 = vmatpush.bf16.msra.mxu0 %v3220
      %5132 = vmatpush.bf16.msra.mxu0 %v3217
      %5133 = vmatpush.bf16.msra.mxu0 %v3214
      %5134 = vmatpush.bf16.msra.mxu0 %v3211
      %5135 = vmatpush.bf16.msra.mxu0 %v3208
      %5136 = vmatpush.bf16.msra.mxu0 %v3205
      %5137 = vmatmul.bf16.gmra.mxu0 %v4955
      %v5138 = vpop.f32.mrf.mxu0
      %v5139 = vadd.f32 %v2719, %v5138
      %v5140 = vpop.f32.mrf.mxu0
      %v5141 = vadd.f32 %v2719, %v5140
      %5142 = vdwg.mxu0
      %5143 = vmatpush.bf16.msra.mxu0 %v3250
      %5144 = vmatpush.bf16.msra.mxu0 %v3247
      %5145 = vmatpush.bf16.msra.mxu0 %v3244
      %5146 = vmatpush.bf16.msra.mxu0 %v3241
      %5147 = vmatpush.bf16.msra.mxu0 %v3238
      %5148 = vmatpush.bf16.msra.mxu0 %v3235
      %5149 = vmatpush.bf16.msra.mxu0 %v3232
      %5150 = vmatpush.bf16.msra.mxu0 %v3229
      %5151 = vmatmul.bf16.gmra.mxu0 %v4956
      %v5152 = vpop.f32.mrf.mxu0
      %v5153 = vadd.f32 %v5139, %v5152
      %v5154 = vpop.f32.mrf.mxu0
      %v5155 = vadd.f32 %v5141, %v5154
      %5156 = vdwg.mxu0
      %5157 = vmatpush.bf16.msra.mxu0 %v3274
      %5158 = vmatpush.bf16.msra.mxu0 %v3271
      %5159 = vmatpush.bf16.msra.mxu0 %v3268
      %5160 = vmatpush.bf16.msra.mxu0 %v3265
      %5161 = vmatpush.bf16.msra.mxu0 %v3262
      %5162 = vmatpush.bf16.msra.mxu0 %v3259
      %5163 = vmatpush.bf16.msra.mxu0 %v3256
      %5164 = vmatpush.bf16.msra.mxu0 %v3253
      %5165 = vmatmul.bf16.gmra.mxu0 %v4957
      %v5166 = vpop.f32.mrf.mxu0
      %v5167 = vadd.f32 %v5153, %v5166
      %v5168 = vpop.f32.mrf.mxu0
      %v5169 = vadd.f32 %v5155, %v5168
      %5170 = vdwg.mxu0
      %5171 = vmatpush.bf16.msra.mxu0 %v3298
      %5172 = vmatpush.bf16.msra.mxu0 %v3295
      %5173 = vmatpush.bf16.msra.mxu0 %v3292
      %5174 = vmatpush.bf16.msra.mxu0 %v3289
      %5175 = vmatpush.bf16.msra.mxu0 %v3286
      %5176 = vmatpush.bf16.msra.mxu0 %v3283
      %5177 = vmatpush.bf16.msra.mxu0 %v3280
      %5178 = vmatpush.bf16.msra.mxu0 %v3277
      %5179 = vmatmul.bf16.gmra.mxu0 %v4958
      %v5180 = vpop.f32.mrf.mxu0
      %v5181 = vadd.f32 %v5167, %v5180
      %v5182 = vpop.f32.mrf.mxu0
      %v5183 = vadd.f32 %v5169, %v5182
      %5184 = vdwg.mxu0
      %5185 = vmatpush.bf16.msra.mxu0 %v3322
      %5186 = vmatpush.bf16.msra.mxu0 %v3319
      %5187 = vmatpush.bf16.msra.mxu0 %v3316
      %5188 = vmatpush.bf16.msra.mxu0 %v3313
      %5189 = vmatpush.bf16.msra.mxu0 %v3310
      %5190 = vmatpush.bf16.msra.mxu0 %v3307
      %5191 = vmatpush.bf16.msra.mxu0 %v3304
      %5192 = vmatpush.bf16.msra.mxu0 %v3301
      %5193 = vmatmul.bf16.gmra.mxu0 %v4959
      %v5194 = vpop.f32.mrf.mxu0
      %v5195 = vadd.f32 %v5181, %v5194
      %v5196 = vpop.f32.mrf.mxu0
      %v5197 = vadd.f32 %v5183, %v5196
      %5198 = vdwg.mxu0
      %5199 = vmatpush.bf16.msra.mxu0 %v3346
      %5200 = vmatpush.bf16.msra.mxu0 %v3343
      %5201 = vmatpush.bf16.msra.mxu0 %v3340
      %5202 = vmatpush.bf16.msra.mxu0 %v3337
      %5203 = vmatpush.bf16.msra.mxu0 %v3334
      %5204 = vmatpush.bf16.msra.mxu0 %v3331
      %5205 = vmatpush.bf16.msra.mxu0 %v3328
      %5206 = vmatpush.bf16.msra.mxu0 %v3325
      %5207 = vmatmul.bf16.gmra.mxu0 %v4960
      %v5208 = vpop.f32.mrf.mxu0
      %v5209 = vadd.f32 %v5195, %v5208
      %v5210 = vpop.f32.mrf.mxu0
      %v5211 = vadd.f32 %v5197, %v5210
      %5212 = vdwg.mxu0
      %vm5213 = vcmp.gt.f32.partialorder %v5041, 0.0
      %vm5214 = vcmp.gt.f32.partialorder %v5125, 0.0
      %vm5215 = vcmp.gt.f32.partialorder %v5209, 0.0
      %vm5216 = vcmp.gt.f32.partialorder %v5043, 0.0
      %vm5217 = vcmp.gt.f32.partialorder %v5127, 0.0
      %vm5218 = vcmp.gt.f32.partialorder %v5211, 0.0
      %v5219 = vmul.f32 %v5041, 0.2
      %v5220 = vmul.f32 %v5125, 0.2
      %v5221 = vmul.f32 %v5209, 0.2
      %v5222 = vmul.f32 %v5043, 0.2
      %v5223 = vmul.f32 %v5127, 0.2
      %v5224 = vmul.f32 %v5211, 0.2
      %v5225 = vsel %vm5213, %v5041, %v5219
      %v5226 = vsel %vm5214, %v5125, %v5220
      %v5227 = vsel %vm5215, %v5209, %v5221
      %v5228 = vsel %vm5216, %v5043, %v5222
      %v5229 = vsel %vm5217, %v5127, %v5223
      %v5230 = vsel %vm5218, %v5211, %v5224
      %5231 = vst [vmem:[#allocation3 + $0x90] sm:$0xff] %v5225
      %5232 = vst [vmem:[#allocation3 + $0x98] sm:$0xff] %v5226
      %5233 = vst [vmem:[#allocation3 + $0xa0] sm:$0xff] %v5227
      %5234 = vst [vmem:[#allocation3 + $0x168] sm:$0xff] %v5228
      %5235 = vst [vmem:[#allocation3 + $0x170] sm:$0xff] %v5229
      %5236 = vst [vmem:[#allocation3 + $0x178] sm:$0xff] %v5230
      %v5237 = vld [vmem:[#allocation2 + $0xc0] sm:$0xff]
      %v5238 = vld [vmem:[#allocation2 + $0xc8] sm:$0xff]
      %v5239 = vld [vmem:[#allocation2 + $0xd0] sm:$0xff]
      %v5240 = vld [vmem:[#allocation2 + $0xd8] sm:$0xff]
      %v5241 = vld [vmem:[#allocation2 + $0xe0] sm:$0xff]
      %v5242 = vld [vmem:[#allocation2 + $0xe8] sm:$0xff]
      %v5243 = vld [vmem:[#allocation2 + $0x1c0] sm:$0xff]
      %v5244 = vld [vmem:[#allocation2 + $0x1c8] sm:$0xff]
      %v5245 = vld [vmem:[#allocation2 + $0x1d0] sm:$0xff]
      %v5246 = vld [vmem:[#allocation2 + $0x1d8] sm:$0xff]
      %v5247 = vld [vmem:[#allocation2 + $0x1e0] sm:$0xff]
      %v5248 = vld [vmem:[#allocation2 + $0x1e8] sm:$0xff]
      %v5249 = vpack.c.bf16 %v5243, %v5237
      %v5250 = vpack.c.bf16 %v5244, %v5238
      %v5251 = vpack.c.bf16 %v5245, %v5239
      %v5252 = vpack.c.bf16 %v5246, %v5240
      %v5253 = vpack.c.bf16 %v5247, %v5241
      %v5254 = vpack.c.bf16 %v5248, %v5242
      %5255 = vmatpush.bf16.msra.mxu0 %v3224
      %5256 = vmatpush.bf16.msra.mxu0 %v3221
      %5257 = vmatpush.bf16.msra.mxu0 %v3218
      %5258 = vmatpush.bf16.msra.mxu0 %v3215
      %5259 = vmatpush.bf16.msra.mxu0 %v3212
      %5260 = vmatpush.bf16.msra.mxu0 %v3209
      %5261 = vmatpush.bf16.msra.mxu0 %v3206
      %5262 = vmatpush.bf16.msra.mxu0 %v3203
      %5263 = vmatmul.bf16.gmra.mxu0 %v5249
      %v5264 = vpop.f32.mrf.mxu0
      %v5265 = vadd.f32 %v2717, %v5264
      %v5266 = vpop.f32.mrf.mxu0
      %v5267 = vadd.f32 %v2717, %v5266
      %5268 = vdwg.mxu0
      %5269 = vmatpush.bf16.msra.mxu0 %v3248
      %5270 = vmatpush.bf16.msra.mxu0 %v3245
      %5271 = vmatpush.bf16.msra.mxu0 %v3242
      %5272 = vmatpush.bf16.msra.mxu0 %v3239
      %5273 = vmatpush.bf16.msra.mxu0 %v3236
      %5274 = vmatpush.bf16.msra.mxu0 %v3233
      %5275 = vmatpush.bf16.msra.mxu0 %v3230
      %5276 = vmatpush.bf16.msra.mxu0 %v3227
      %5277 = vmatmul.bf16.gmra.mxu0 %v5250
      %v5278 = vpop.f32.mrf.mxu0
      %v5279 = vadd.f32 %v5265, %v5278
      %v5280 = vpop.f32.mrf.mxu0
      %v5281 = vadd.f32 %v5267, %v5280
      %5282 = vdwg.mxu0
      %5283 = vmatpush.bf16.msra.mxu0 %v3272
      %5284 = vmatpush.bf16.msra.mxu0 %v3269
      %5285 = vmatpush.bf16.msra.mxu0 %v3266
      %5286 = vmatpush.bf16.msra.mxu0 %v3263
      %5287 = vmatpush.bf16.msra.mxu0 %v3260
      %5288 = vmatpush.bf16.msra.mxu0 %v3257
      %5289 = vmatpush.bf16.msra.mxu0 %v3254
      %5290 = vmatpush.bf16.msra.mxu0 %v3251
      %5291 = vmatmul.bf16.gmra.mxu0 %v5251
      %v5292 = vpop.f32.mrf.mxu0
      %v5293 = vadd.f32 %v5279, %v5292
      %v5294 = vpop.f32.mrf.mxu0
      %v5295 = vadd.f32 %v5281, %v5294
      %5296 = vdwg.mxu0
      %5297 = vmatpush.bf16.msra.mxu0 %v3296
      %5298 = vmatpush.bf16.msra.mxu0 %v3293
      %5299 = vmatpush.bf16.msra.mxu0 %v3290
      %5300 = vmatpush.bf16.msra.mxu0 %v3287
      %5301 = vmatpush.bf16.msra.mxu0 %v3284
      %5302 = vmatpush.bf16.msra.mxu0 %v3281
      %5303 = vmatpush.bf16.msra.mxu0 %v3278
      %5304 = vmatpush.bf16.msra.mxu0 %v3275
      %5305 = vmatmul.bf16.gmra.mxu0 %v5252
      %v5306 = vpop.f32.mrf.mxu0
      %v5307 = vadd.f32 %v5293, %v5306
      %v5308 = vpop.f32.mrf.mxu0
      %v5309 = vadd.f32 %v5295, %v5308
      %5310 = vdwg.mxu0
      %5311 = vmatpush.bf16.msra.mxu0 %v3320
      %5312 = vmatpush.bf16.msra.mxu0 %v3317
      %5313 = vmatpush.bf16.msra.mxu0 %v3314
      %5314 = vmatpush.bf16.msra.mxu0 %v3311
      %5315 = vmatpush.bf16.msra.mxu0 %v3308
      %5316 = vmatpush.bf16.msra.mxu0 %v3305
      %5317 = vmatpush.bf16.msra.mxu0 %v3302
      %5318 = vmatpush.bf16.msra.mxu0 %v3299
      %5319 = vmatmul.bf16.gmra.mxu0 %v5253
      %v5320 = vpop.f32.mrf.mxu0
      %v5321 = vadd.f32 %v5307, %v5320
      %v5322 = vpop.f32.mrf.mxu0
      %v5323 = vadd.f32 %v5309, %v5322
      %5324 = vdwg.mxu0
      %5325 = vmatpush.bf16.msra.mxu0 %v3344
      %5326 = vmatpush.bf16.msra.mxu0 %v3341
      %5327 = vmatpush.bf16.msra.mxu0 %v3338
      %5328 = vmatpush.bf16.msra.mxu0 %v3335
      %5329 = vmatpush.bf16.msra.mxu0 %v3332
      %5330 = vmatpush.bf16.msra.mxu0 %v3329
      %5331 = vmatpush.bf16.msra.mxu0 %v3326
      %5332 = vmatpush.bf16.msra.mxu0 %v3323
      %5333 = vmatmul.bf16.gmra.mxu0 %v5254
      %v5334 = vpop.f32.mrf.mxu0
      %v5335 = vadd.f32 %v5321, %v5334
      %v5336 = vpop.f32.mrf.mxu0
      %v5337 = vadd.f32 %v5323, %v5336
      %5338 = vdwg.mxu0
      %5339 = vmatpush.bf16.msra.mxu0 %v3225
      %5340 = vmatpush.bf16.msra.mxu0 %v3222
      %5341 = vmatpush.bf16.msra.mxu0 %v3219
      %5342 = vmatpush.bf16.msra.mxu0 %v3216
      %5343 = vmatpush.bf16.msra.mxu0 %v3213
      %5344 = vmatpush.bf16.msra.mxu0 %v3210
      %5345 = vmatpush.bf16.msra.mxu0 %v3207
      %5346 = vmatpush.bf16.msra.mxu0 %v3204
      %5347 = vmatmul.bf16.gmra.mxu0 %v5249
      %v5348 = vpop.f32.mrf.mxu0
      %v5349 = vadd.f32 %v2718, %v5348
      %v5350 = vpop.f32.mrf.mxu0
      %v5351 = vadd.f32 %v2718, %v5350
      %5352 = vdwg.mxu0
      %5353 = vmatpush.bf16.msra.mxu0 %v3249
      %5354 = vmatpush.bf16.msra.mxu0 %v3246
      %5355 = vmatpush.bf16.msra.mxu0 %v3243
      %5356 = vmatpush.bf16.msra.mxu0 %v3240
      %5357 = vmatpush.bf16.msra.mxu0 %v3237
      %5358 = vmatpush.bf16.msra.mxu0 %v3234
      %5359 = vmatpush.bf16.msra.mxu0 %v3231
      %5360 = vmatpush.bf16.msra.mxu0 %v3228
      %5361 = vmatmul.bf16.gmra.mxu0 %v5250
      %v5362 = vpop.f32.mrf.mxu0
      %v5363 = vadd.f32 %v5349, %v5362
      %v5364 = vpop.f32.mrf.mxu0
      %v5365 = vadd.f32 %v5351, %v5364
      %5366 = vdwg.mxu0
      %5367 = vmatpush.bf16.msra.mxu0 %v3273
      %5368 = vmatpush.bf16.msra.mxu0 %v3270
      %5369 = vmatpush.bf16.msra.mxu0 %v3267
      %5370 = vmatpush.bf16.msra.mxu0 %v3264
      %5371 = vmatpush.bf16.msra.mxu0 %v3261
      %5372 = vmatpush.bf16.msra.mxu0 %v3258
      %5373 = vmatpush.bf16.msra.mxu0 %v3255
      %5374 = vmatpush.bf16.msra.mxu0 %v3252
      %5375 = vmatmul.bf16.gmra.mxu0 %v5251
      %v5376 = vpop.f32.mrf.mxu0
      %v5377 = vadd.f32 %v5363, %v5376
      %v5378 = vpop.f32.mrf.mxu0
      %v5379 = vadd.f32 %v5365, %v5378
      %5380 = vdwg.mxu0
      %5381 = vmatpush.bf16.msra.mxu0 %v3297
      %5382 = vmatpush.bf16.msra.mxu0 %v3294
      %5383 = vmatpush.bf16.msra.mxu0 %v3291
      %5384 = vmatpush.bf16.msra.mxu0 %v3288
      %5385 = vmatpush.bf16.msra.mxu0 %v3285
      %5386 = vmatpush.bf16.msra.mxu0 %v3282
      %5387 = vmatpush.bf16.msra.mxu0 %v3279
      %5388 = vmatpush.bf16.msra.mxu0 %v3276
      %5389 = vmatmul.bf16.gmra.mxu0 %v5252
      %v5390 = vpop.f32.mrf.mxu0
      %v5391 = vadd.f32 %v5377, %v5390
      %v5392 = vpop.f32.mrf.mxu0
      %v5393 = vadd.f32 %v5379, %v5392
      %5394 = vdwg.mxu0
      %5395 = vmatpush.bf16.msra.mxu0 %v3321
      %5396 = vmatpush.bf16.msra.mxu0 %v3318
      %5397 = vmatpush.bf16.msra.mxu0 %v3315
      %5398 = vmatpush.bf16.msra.mxu0 %v3312
      %5399 = vmatpush.bf16.msra.mxu0 %v3309
      %5400 = vmatpush.bf16.msra.mxu0 %v3306
      %5401 = vmatpush.bf16.msra.mxu0 %v3303
      %5402 = vmatpush.bf16.msra.mxu0 %v3300
      %5403 = vmatmul.bf16.gmra.mxu0 %v5253
      %v5404 = vpop.f32.mrf.mxu0
      %v5405 = vadd.f32 %v5391, %v5404
      %v5406 = vpop.f32.mrf.mxu0
      %v5407 = vadd.f32 %v5393, %v5406
      %5408 = vdwg.mxu0
      %5409 = vmatpush.bf16.msra.mxu0 %v3345
      %5410 = vmatpush.bf16.msra.mxu0 %v3342
      %5411 = vmatpush.bf16.msra.mxu0 %v3339
      %5412 = vmatpush.bf16.msra.mxu0 %v3336
      %5413 = vmatpush.bf16.msra.mxu0 %v3333
      %5414 = vmatpush.bf16.msra.mxu0 %v3330
      %5415 = vmatpush.bf16.msra.mxu0 %v3327
      %5416 = vmatpush.bf16.msra.mxu0 %v3324
      %5417 = vmatmul.bf16.gmra.mxu0 %v5254
      %v5418 = vpop.f32.mrf.mxu0
      %v5419 = vadd.f32 %v5405, %v5418
      %v5420 = vpop.f32.mrf.mxu0
      %v5421 = vadd.f32 %v5407, %v5420
      %5422 = vdwg.mxu0
      %5423 = vmatpush.bf16.msra.mxu0 %v3226
      %5424 = vmatpush.bf16.msra.mxu0 %v3223
      %5425 = vmatpush.bf16.msra.mxu0 %v3220
      %5426 = vmatpush.bf16.msra.mxu0 %v3217
      %5427 = vmatpush.bf16.msra.mxu0 %v3214
      %5428 = vmatpush.bf16.msra.mxu0 %v3211
      %5429 = vmatpush.bf16.msra.mxu0 %v3208
      %5430 = vmatpush.bf16.msra.mxu0 %v3205
      %5431 = vmatmul.bf16.gmra.mxu0 %v5249
      %v5432 = vpop.f32.mrf.mxu0
      %v5433 = vadd.f32 %v2719, %v5432
      %v5434 = vpop.f32.mrf.mxu0
      %v5435 = vadd.f32 %v2719, %v5434
      %5436 = vdwg.mxu0
      %5437 = vmatpush.bf16.msra.mxu0 %v3250
      %5438 = vmatpush.bf16.msra.mxu0 %v3247
      %5439 = vmatpush.bf16.msra.mxu0 %v3244
      %5440 = vmatpush.bf16.msra.mxu0 %v3241
      %5441 = vmatpush.bf16.msra.mxu0 %v3238
      %5442 = vmatpush.bf16.msra.mxu0 %v3235
      %5443 = vmatpush.bf16.msra.mxu0 %v3232
      %5444 = vmatpush.bf16.msra.mxu0 %v3229
      %5445 = vmatmul.bf16.gmra.mxu0 %v5250
      %v5446 = vpop.f32.mrf.mxu0
      %v5447 = vadd.f32 %v5433, %v5446
      %v5448 = vpop.f32.mrf.mxu0
      %v5449 = vadd.f32 %v5435, %v5448
      %5450 = vdwg.mxu0
      %5451 = vmatpush.bf16.msra.mxu0 %v3274
      %5452 = vmatpush.bf16.msra.mxu0 %v3271
      %5453 = vmatpush.bf16.msra.mxu0 %v3268
      %5454 = vmatpush.bf16.msra.mxu0 %v3265
      %5455 = vmatpush.bf16.msra.mxu0 %v3262
      %5456 = vmatpush.bf16.msra.mxu0 %v3259
      %5457 = vmatpush.bf16.msra.mxu0 %v3256
      %5458 = vmatpush.bf16.msra.mxu0 %v3253
      %5459 = vmatmul.bf16.gmra.mxu0 %v5251
      %v5460 = vpop.f32.mrf.mxu0
      %v5461 = vadd.f32 %v5447, %v5460
      %v5462 = vpop.f32.mrf.mxu0
      %v5463 = vadd.f32 %v5449, %v5462
      %5464 = vdwg.mxu0
      %5465 = vmatpush.bf16.msra.mxu0 %v3298
      %5466 = vmatpush.bf16.msra.mxu0 %v3295
      %5467 = vmatpush.bf16.msra.mxu0 %v3292
      %5468 = vmatpush.bf16.msra.mxu0 %v3289
      %5469 = vmatpush.bf16.msra.mxu0 %v3286
      %5470 = vmatpush.bf16.msra.mxu0 %v3283
      %5471 = vmatpush.bf16.msra.mxu0 %v3280
      %5472 = vmatpush.bf16.msra.mxu0 %v3277
      %5473 = vmatmul.bf16.gmra.mxu0 %v5252
      %v5474 = vpop.f32.mrf.mxu0
      %v5475 = vadd.f32 %v5461, %v5474
      %v5476 = vpop.f32.mrf.mxu0
      %v5477 = vadd.f32 %v5463, %v5476
      %5478 = vdwg.mxu0
      %5479 = vmatpush.bf16.msra.mxu0 %v3322
      %5480 = vmatpush.bf16.msra.mxu0 %v3319
      %5481 = vmatpush.bf16.msra.mxu0 %v3316
      %5482 = vmatpush.bf16.msra.mxu0 %v3313
      %5483 = vmatpush.bf16.msra.mxu0 %v3310
      %5484 = vmatpush.bf16.msra.mxu0 %v3307
      %5485 = vmatpush.bf16.msra.mxu0 %v3304
      %5486 = vmatpush.bf16.msra.mxu0 %v3301
      %5487 = vmatmul.bf16.gmra.mxu0 %v5253
      %v5488 = vpop.f32.mrf.mxu0
      %v5489 = vadd.f32 %v5475, %v5488
      %v5490 = vpop.f32.mrf.mxu0
      %v5491 = vadd.f32 %v5477, %v5490
      %5492 = vdwg.mxu0
      %5493 = vmatpush.bf16.msra.mxu0 %v3346
      %5494 = vmatpush.bf16.msra.mxu0 %v3343
      %5495 = vmatpush.bf16.msra.mxu0 %v3340
      %5496 = vmatpush.bf16.msra.mxu0 %v3337
      %5497 = vmatpush.bf16.msra.mxu0 %v3334
      %5498 = vmatpush.bf16.msra.mxu0 %v3331
      %5499 = vmatpush.bf16.msra.mxu0 %v3328
      %5500 = vmatpush.bf16.msra.mxu0 %v3325
      %5501 = vmatmul.bf16.gmra.mxu0 %v5254
      %v5502 = vpop.f32.mrf.mxu0
      %v5503 = vadd.f32 %v5489, %v5502
      %v5504 = vpop.f32.mrf.mxu0
      %v5505 = vadd.f32 %v5491, %v5504
      %5506 = vdwg.mxu0
      %vm5507 = vcmp.gt.f32.partialorder %v5335, 0.0
      %vm5508 = vcmp.gt.f32.partialorder %v5419, 0.0
      %vm5509 = vcmp.gt.f32.partialorder %v5503, 0.0
      %vm5510 = vcmp.gt.f32.partialorder %v5337, 0.0
      %vm5511 = vcmp.gt.f32.partialorder %v5421, 0.0
      %vm5512 = vcmp.gt.f32.partialorder %v5505, 0.0
      %v5513 = vmul.f32 %v5335, 0.2
      %v5514 = vmul.f32 %v5419, 0.2
      %v5515 = vmul.f32 %v5503, 0.2
      %v5516 = vmul.f32 %v5337, 0.2
      %v5517 = vmul.f32 %v5421, 0.2
      %v5518 = vmul.f32 %v5505, 0.2
      %v5519 = vsel %vm5507, %v5335, %v5513
      %v5520 = vsel %vm5508, %v5419, %v5514
      %v5521 = vsel %vm5509, %v5503, %v5515
      %v5522 = vsel %vm5510, %v5337, %v5516
      %v5523 = vsel %vm5511, %v5421, %v5517
      %v5524 = vsel %vm5512, %v5505, %v5518
      %5525 = vst [vmem:[#allocation3 + $0xa8] sm:$0xff] %v5519
      %5526 = vst [vmem:[#allocation3 + $0xb0] sm:$0xff] %v5520
      %5527 = vst [vmem:[#allocation3 + $0xb8] sm:$0xff] %v5521
      %5528 = vst [vmem:[#allocation3 + $0x180] sm:$0xff] %v5522
      %5529 = vst [vmem:[#allocation3 + $0x188] sm:$0xff] %v5523
      %5530 = vst [vmem:[#allocation3 + $0x190] sm:$0xff] %v5524
      %v5531 = vld [vmem:[#allocation3] sm:$0xff]
      %v5532 = vld [vmem:[#allocation3 + $0x8] sm:$0xff]
      %v5533 = vld [vmem:[#allocation3 + $0x10] sm:$0xff]
      %v5534 = vld [vmem:[#allocation3 + $0x18] sm:$0xff]
      %v5535 = vld [vmem:[#allocation3 + $0x20] sm:$0xff]
      %v5536 = vld [vmem:[#allocation3 + $0x28] sm:$0xff]
      %v5537 = vld [vmem:[#allocation3 + $0x30] sm:$0xff]
      %v5538 = vld [vmem:[#allocation3 + $0x38] sm:$0xff]
      %v5539 = vld [vmem:[#allocation3 + $0x40] sm:$0xff]
      %v5540 = vld [vmem:[#allocation3 + $0x48] sm:$0xff]
      %v5541 = vld [vmem:[#allocation3 + $0x50] sm:$0xff]
      %v5542 = vld [vmem:[#allocation3 + $0x58] sm:$0xff]
      %v5543 = vld [vmem:[#allocation3 + $0x60] sm:$0xff]
      %v5544 = vld [vmem:[#allocation3 + $0x68] sm:$0xff]
      %v5545 = vld [vmem:[#allocation3 + $0x70] sm:$0xff]
      %v5546 = vld [vmem:[#allocation3 + $0x78] sm:$0xff]
      %v5547 = vld [vmem:[#allocation3 + $0x80] sm:$0xff]
      %v5548 = vld [vmem:[#allocation3 + $0x88] sm:$0xff]
      %v5549 = vld [vmem:[#allocation3 + $0x90] sm:$0xff]
      %v5550 = vld [vmem:[#allocation3 + $0x98] sm:$0xff]
      %v5551 = vld [vmem:[#allocation3 + $0xa0] sm:$0xff]
      %v5552 = vld [vmem:[#allocation3 + $0xa8] sm:$0xff]
      %v5553 = vld [vmem:[#allocation3 + $0xb0] sm:$0xff]
      %v5554 = vld [vmem:[#allocation3 + $0xb8] sm:$0xff]
      %v5555 = vld [vmem:[#allocation3 + $0xc0] sm:$0xff]
      %v5556 = vld [vmem:[#allocation3 + $0xc8] sm:$0xff]
      %v5557 = vld [vmem:[#allocation3 + $0xd0] sm:$0xff]
      %v5558 = vld [vmem:[#allocation3 + $0xd8] sm:$0xff]
      %v5559 = vld [vmem:[#allocation3 + $0xe0] sm:$0xff]
      %v5560 = vld [vmem:[#allocation3 + $0xe8] sm:$0xff]
      %v5561 = vld [vmem:[#allocation3 + $0xf0] sm:$0xff]
      %v5562 = vld [vmem:[#allocation3 + $0xf8] sm:$0xff]
      %v5563 = vld [vmem:[#allocation3 + $0x100] sm:$0xff]
      %v5564 = vld [vmem:[#allocation3 + $0x108] sm:$0xff]
      %v5565 = vld [vmem:[#allocation3 + $0x110] sm:$0xff]
      %v5566 = vld [vmem:[#allocation3 + $0x118] sm:$0xff]
      %v5567 = vld [vmem:[#allocation3 + $0x120] sm:$0xff]
      %v5568 = vld [vmem:[#allocation3 + $0x128] sm:$0xff]
      %v5569 = vld [vmem:[#allocation3 + $0x130] sm:$0xff]
      %v5570 = vld [vmem:[#allocation3 + $0x138] sm:$0xff]
      %v5571 = vld [vmem:[#allocation3 + $0x140] sm:$0xff]
      %v5572 = vld [vmem:[#allocation3 + $0x148] sm:$0xff]
      %v5573 = vld [vmem:[#allocation3 + $0x150] sm:$0xff]
      %v5574 = vld [vmem:[#allocation3 + $0x158] sm:$0xff]
      %v5575 = vld [vmem:[#allocation3 + $0x160] sm:$0xff]
      %v5576 = vld [vmem:[#allocation3 + $0x168] sm:$0xff]
      %v5577 = vld [vmem:[#allocation3 + $0x170] sm:$0xff]
      %v5578 = vld [vmem:[#allocation3 + $0x178] sm:$0xff]
      %v5579 = vld [vmem:[#allocation3 + $0x180] sm:$0xff]
      %v5580 = vld [vmem:[#allocation3 + $0x188] sm:$0xff]
      %v5581 = vld [vmem:[#allocation3 + $0x190] sm:$0xff]
      %v5582 = vld [vmem:[#allocation3 + $0x198] sm:$0xff]
      %v5583 = vld [vmem:[#allocation3 + $0x1a0] sm:$0xff]
      %v5584 = vld [vmem:[#allocation3 + $0x1a8] sm:$0xff]
      %v5585 = vadd.f32 %v5531, %v5532
      %v5586 = vadd.f32 %v5585, %v5533
      %v5587 = vadd.f32 %v5586, %v5534
      %v5588 = vadd.f32 %v5587, %v5535
      %v5589 = vadd.f32 %v5588, %v5536
      %v5590 = vadd.f32 %v5589, %v5537
      %v5591 = vadd.f32 %v5590, %v5538
      %v5592 = vadd.f32 %v5591, %v5539
      %v5593 = vadd.f32 %v5592, %v5540
      %v5594 = vadd.f32 %v5593, %v5541
      %v5595 = vadd.f32 %v5594, %v5542
      %v5596 = vadd.f32 %v5595, %v5543
      %v5597 = vadd.f32 %v5596, %v5544
      %v5598 = vadd.f32 %v5597, %v5545
      %v5599 = vadd.f32 %v5598, %v5546
      %v5600 = vadd.f32 %v5599, %v5547
      %v5601 = vadd.f32 %v5600, %v5548
      %v5602 = vadd.f32 %v5601, %v5549
      %v5603 = vadd.f32 %v5602, %v5550
      %v5604 = vadd.f32 %v5603, %v5551
      %v5605 = vadd.f32 %v5604, %v5552
      %v5606 = vadd.f32 %v5605, %v5553
      %v5607 = vadd.f32 %v5606, %v5554
      %v5608 = vadd.f32 %v5607, %v5555
      %v5609 = vadd.f32 %v5608, %v5556
      %v5610 = vadd.f32 %v5609, %v5557
      %5611 = vadd.xlane.f32.xlu0 %v5610
      %v5612 = vpop.xlane.xlu0 %5611
      %v5613 = vadd.f32 %v5558, %v5559
      %v5614 = vadd.f32 %v5613, %v5560
      %v5615 = vadd.f32 %v5614, %v5561
      %v5616 = vadd.f32 %v5615, %v5562
      %v5617 = vadd.f32 %v5616, %v5563
      %v5618 = vadd.f32 %v5617, %v5564
      %v5619 = vadd.f32 %v5618, %v5565
      %v5620 = vadd.f32 %v5619, %v5566
      %v5621 = vadd.f32 %v5620, %v5567
      %v5622 = vadd.f32 %v5621, %v5568
      %v5623 = vadd.f32 %v5622, %v5569
      %v5624 = vadd.f32 %v5623, %v5570
      %v5625 = vadd.f32 %v5624, %v5571
      %v5626 = vadd.f32 %v5625, %v5572
      %v5627 = vadd.f32 %v5626, %v5573
      %v5628 = vadd.f32 %v5627, %v5574
      %v5629 = vadd.f32 %v5628, %v5575
      %v5630 = vadd.f32 %v5629, %v5576
      %v5631 = vadd.f32 %v5630, %v5577
      %v5632 = vadd.f32 %v5631, %v5578
      %v5633 = vadd.f32 %v5632, %v5579
      %v5634 = vadd.f32 %v5633, %v5580
      %v5635 = vadd.f32 %v5634, %v5581
      %v5636 = vadd.f32 %v5635, %v5582
      %v5637 = vadd.f32 %v5636, %v5583
      %v5638 = vadd.f32 %v5637, %v5584
      %5639 = vadd.xlane.f32.xlu0 %v5638
      %v5640 = vpop.xlane.xlu0 %5639
      %v5641 = vmul.f32 %v5612, 0.0006377551
      %v5642 = vmul.f32 %v5640, 0.0006377551
      %v5643 = vmul.f32 %v5531, %v5531
      %v5644 = vmul.f32 %v5532, %v5532
      %v5645 = vmul.f32 %v5533, %v5533
      %v5646 = vmul.f32 %v5534, %v5534
      %v5647 = vmul.f32 %v5535, %v5535
      %v5648 = vmul.f32 %v5536, %v5536
      %v5649 = vmul.f32 %v5537, %v5537
      %v5650 = vmul.f32 %v5538, %v5538
      %v5651 = vmul.f32 %v5539, %v5539
      %v5652 = vmul.f32 %v5540, %v5540
      %v5653 = vmul.f32 %v5541, %v5541
      %v5654 = vmul.f32 %v5542, %v5542
      %v5655 = vmul.f32 %v5543, %v5543
      %v5656 = vmul.f32 %v5544, %v5544
      %v5657 = vmul.f32 %v5545, %v5545
      %v5658 = vmul.f32 %v5546, %v5546
      %v5659 = vmul.f32 %v5547, %v5547
      %v5660 = vmul.f32 %v5548, %v5548
      %v5661 = vmul.f32 %v5549, %v5549
      %v5662 = vmul.f32 %v5550, %v5550
      %v5663 = vmul.f32 %v5551, %v5551
      %v5664 = vmul.f32 %v5552, %v5552
      %v5665 = vmul.f32 %v5553, %v5553
      %v5666 = vmul.f32 %v5554, %v5554
      %v5667 = vmul.f32 %v5555, %v5555
      %v5668 = vmul.f32 %v5556, %v5556
      %v5669 = vmul.f32 %v5557, %v5557
      %v5670 = vmul.f32 %v5558, %v5558
      %v5671 = vmul.f32 %v5559, %v5559
      %v5672 = vmul.f32 %v5560, %v5560
      %v5673 = vmul.f32 %v5561, %v5561
      %v5674 = vmul.f32 %v5562, %v5562
      %v5675 = vmul.f32 %v5563, %v5563
      %v5676 = vmul.f32 %v5564, %v5564
      %v5677 = vmul.f32 %v5565, %v5565
      %v5678 = vmul.f32 %v5566, %v5566
      %v5679 = vmul.f32 %v5567, %v5567
      %v5680 = vmul.f32 %v5568, %v5568
      %v5681 = vmul.f32 %v5569, %v5569
      %v5682 = vmul.f32 %v5570, %v5570
      %v5683 = vmul.f32 %v5571, %v5571
      %v5684 = vmul.f32 %v5572, %v5572
      %v5685 = vmul.f32 %v5573, %v5573
      %v5686 = vmul.f32 %v5574, %v5574
      %v5687 = vmul.f32 %v5575, %v5575
      %v5688 = vmul.f32 %v5576, %v5576
      %v5689 = vmul.f32 %v5577, %v5577
      %v5690 = vmul.f32 %v5578, %v5578
      %v5691 = vmul.f32 %v5579, %v5579
      %v5692 = vmul.f32 %v5580, %v5580
      %v5693 = vmul.f32 %v5581, %v5581
      %v5694 = vmul.f32 %v5582, %v5582
      %v5695 = vmul.f32 %v5583, %v5583
      %v5696 = vmul.f32 %v5584, %v5584
      %v5697 = vadd.f32 %v5643, %v5644
      %v5698 = vadd.f32 %v5697, %v5645
      %v5699 = vadd.f32 %v5698, %v5646
      %v5700 = vadd.f32 %v5699, %v5647
      %v5701 = vadd.f32 %v5700, %v5648
      %v5702 = vadd.f32 %v5701, %v5649
      %v5703 = vadd.f32 %v5702, %v5650
      %v5704 = vadd.f32 %v5703, %v5651
      %v5705 = vadd.f32 %v5704, %v5652
      %v5706 = vadd.f32 %v5705, %v5653
      %v5707 = vadd.f32 %v5706, %v5654
      %v5708 = vadd.f32 %v5707, %v5655
      %v5709 = vadd.f32 %v5708, %v5656
      %v5710 = vadd.f32 %v5709, %v5657
      %v5711 = vadd.f32 %v5710, %v5658
      %v5712 = vadd.f32 %v5711, %v5659
      %v5713 = vadd.f32 %v5712, %v5660
      %v5714 = vadd.f32 %v5713, %v5661
      %v5715 = vadd.f32 %v5714, %v5662
      %v5716 = vadd.f32 %v5715, %v5663
      %v5717 = vadd.f32 %v5716, %v5664
      %v5718 = vadd.f32 %v5717, %v5665
      %v5719 = vadd.f32 %v5718, %v5666
      %v5720 = vadd.f32 %v5719, %v5667
      %v5721 = vadd.f32 %v5720, %v5668
      %v5722 = vadd.f32 %v5721, %v5669
      %5723 = vadd.xlane.f32.xlu0 %v5722
      %v5724 = vpop.xlane.xlu0 %5723
      %v5725 = vadd.f32 %v5670, %v5671
      %v5726 = vadd.f32 %v5725, %v5672
      %v5727 = vadd.f32 %v5726, %v5673
      %v5728 = vadd.f32 %v5727, %v5674
      %v5729 = vadd.f32 %v5728, %v5675
      %v5730 = vadd.f32 %v5729, %v5676
      %v5731 = vadd.f32 %v5730, %v5677
      %v5732 = vadd.f32 %v5731, %v5678
      %v5733 = vadd.f32 %v5732, %v5679
      %v5734 = vadd.f32 %v5733, %v5680
      %v5735 = vadd.f32 %v5734, %v5681
      %v5736 = vadd.f32 %v5735, %v5682
      %v5737 = vadd.f32 %v5736, %v5683
      %v5738 = vadd.f32 %v5737, %v5684
      %v5739 = vadd.f32 %v5738, %v5685
      %v5740 = vadd.f32 %v5739, %v5686
      %v5741 = vadd.f32 %v5740, %v5687
      %v5742 = vadd.f32 %v5741, %v5688
      %v5743 = vadd.f32 %v5742, %v5689
      %v5744 = vadd.f32 %v5743, %v5690
      %v5745 = vadd.f32 %v5744, %v5691
      %v5746 = vadd.f32 %v5745, %v5692
      %v5747 = vadd.f32 %v5746, %v5693
      %v5748 = vadd.f32 %v5747, %v5694
      %v5749 = vadd.f32 %v5748, %v5695
      %v5750 = vadd.f32 %v5749, %v5696
      %5751 = vadd.xlane.f32.xlu0 %v5750
      %v5752 = vpop.xlane.xlu0 %5751
      %v5753 = vmul.f32 %v5724, 0.0006377551
      %v5754 = vmul.f32 %v5752, 0.0006377551
      %v5755 = vmul.f32 %v5641, %v5641
      %v5756 = vmul.f32 %v5642, %v5642
      %v5757 = vsub.f32 %v5753, %v5755
      %v5758 = vsub.f32 %v5754, %v5756
      %v5759 = vmax.f32 %v5757, 0.0
      %v5760 = vmax.f32 %v5758, 0.0
      %v5761 = vadd.f32 %v5759, 1e-05
      %v5762 = vadd.f32 %v5760, 1e-05
      %v5763 = vrsqrt.pop %v5761
      %v5764 = vmul.f32 %v5763, %v5761
      %v5765 = vmul.f32 %v5764, %v5763
      %v5766 = vmul.f32 0.5, %v5765
      %v5767 = vsub.f32 1.5, %v5766
      %v5768 = vmul.f32 %v5763, %v5767
      %vm5769 = vweird.f32 %v5761
      %vm5770 = vweird.f32 %v5763
      %vm5771 = vmor %vm5769, %vm5770
      %v5772 = vsel %vm5771, %v5763, %v5768
      %v5773 = vrsqrt.pop %v5762
      %v5774 = vmul.f32 %v5773, %v5762
      %v5775 = vmul.f32 %v5774, %v5773
      %v5776 = vmul.f32 0.5, %v5775
      %v5777 = vsub.f32 1.5, %v5776
      %v5778 = vmul.f32 %v5773, %v5777
      %vm5779 = vweird.f32 %v5762
      %vm5780 = vweird.f32 %v5773
      %vm5781 = vmor %vm5779, %vm5780
      %v5782 = vsel %vm5781, %v5773, %v5778
      %v5783 = vsub.f32 %v5531, %v5641
      %v5784 = vsub.f32 %v5532, %v5641
      %v5785 = vsub.f32 %v5533, %v5641
      %v5786 = vsub.f32 %v5534, %v5641
      %v5787 = vsub.f32 %v5535, %v5641
      %v5788 = vsub.f32 %v5536, %v5641
      %v5789 = vsub.f32 %v5537, %v5641
      %v5790 = vsub.f32 %v5538, %v5641
      %v5791 = vsub.f32 %v5539, %v5641
      %v5792 = vsub.f32 %v5540, %v5641
      %v5793 = vsub.f32 %v5541, %v5641
      %v5794 = vsub.f32 %v5542, %v5641
      %v5795 = vsub.f32 %v5543, %v5641
      %v5796 = vsub.f32 %v5544, %v5641
      %v5797 = vsub.f32 %v5545, %v5641
      %v5798 = vsub.f32 %v5546, %v5641
      %v5799 = vsub.f32 %v5547, %v5641
      %v5800 = vsub.f32 %v5548, %v5641
      %v5801 = vsub.f32 %v5549, %v5641
      %v5802 = vsub.f32 %v5550, %v5641
      %v5803 = vsub.f32 %v5551, %v5641
      %v5804 = vsub.f32 %v5552, %v5641
      %v5805 = vsub.f32 %v5553, %v5641
      %v5806 = vsub.f32 %v5554, %v5641
      %v5807 = vsub.f32 %v5555, %v5641
      %v5808 = vsub.f32 %v5556, %v5641
      %v5809 = vsub.f32 %v5557, %v5641
      %v5810 = vsub.f32 %v5558, %v5642
      %v5811 = vsub.f32 %v5559, %v5642
      %v5812 = vsub.f32 %v5560, %v5642
      %v5813 = vsub.f32 %v5561, %v5642
      %v5814 = vsub.f32 %v5562, %v5642
      %v5815 = vsub.f32 %v5563, %v5642
      %v5816 = vsub.f32 %v5564, %v5642
      %v5817 = vsub.f32 %v5565, %v5642
      %v5818 = vsub.f32 %v5566, %v5642
      %v5819 = vsub.f32 %v5567, %v5642
      %v5820 = vsub.f32 %v5568, %v5642
      %v5821 = vsub.f32 %v5569, %v5642
      %v5822 = vsub.f32 %v5570, %v5642
      %v5823 = vsub.f32 %v5571, %v5642
      %v5824 = vsub.f32 %v5572, %v5642
      %v5825 = vsub.f32 %v5573, %v5642
      %v5826 = vsub.f32 %v5574, %v5642
      %v5827 = vsub.f32 %v5575, %v5642
      %v5828 = vsub.f32 %v5576, %v5642
      %v5829 = vsub.f32 %v5577, %v5642
      %v5830 = vsub.f32 %v5578, %v5642
      %v5831 = vsub.f32 %v5579, %v5642
      %v5832 = vsub.f32 %v5580, %v5642
      %v5833 = vsub.f32 %v5581, %v5642
      %v5834 = vsub.f32 %v5582, %v5642
      %v5835 = vsub.f32 %v5583, %v5642
      %v5836 = vsub.f32 %v5584, %v5642
      %v5837 = vmul.f32 %v5783, %v5772
      %v5838 = vmul.f32 %v5784, %v5772
      %v5839 = vmul.f32 %v5785, %v5772
      %v5840 = vmul.f32 %v5786, %v5772
      %v5841 = vmul.f32 %v5787, %v5772
      %v5842 = vmul.f32 %v5788, %v5772
      %v5843 = vmul.f32 %v5789, %v5772
      %v5844 = vmul.f32 %v5790, %v5772
      %v5845 = vmul.f32 %v5791, %v5772
      %v5846 = vmul.f32 %v5792, %v5772
      %v5847 = vmul.f32 %v5793, %v5772
      %v5848 = vmul.f32 %v5794, %v5772
      %v5849 = vmul.f32 %v5795, %v5772
      %v5850 = vmul.f32 %v5796, %v5772
      %v5851 = vmul.f32 %v5797, %v5772
      %v5852 = vmul.f32 %v5798, %v5772
      %v5853 = vmul.f32 %v5799, %v5772
      %v5854 = vmul.f32 %v5800, %v5772
      %v5855 = vmul.f32 %v5801, %v5772
      %v5856 = vmul.f32 %v5802, %v5772
      %v5857 = vmul.f32 %v5803, %v5772
      %v5858 = vmul.f32 %v5804, %v5772
      %v5859 = vmul.f32 %v5805, %v5772
      %v5860 = vmul.f32 %v5806, %v5772
      %v5861 = vmul.f32 %v5807, %v5772
      %v5862 = vmul.f32 %v5808, %v5772
      %v5863 = vmul.f32 %v5809, %v5772
      %v5864 = vmul.f32 %v5810, %v5782
      %v5865 = vmul.f32 %v5811, %v5782
      %v5866 = vmul.f32 %v5812, %v5782
      %v5867 = vmul.f32 %v5813, %v5782
      %v5868 = vmul.f32 %v5814, %v5782
      %v5869 = vmul.f32 %v5815, %v5782
      %v5870 = vmul.f32 %v5816, %v5782
      %v5871 = vmul.f32 %v5817, %v5782
      %v5872 = vmul.f32 %v5818, %v5782
      %v5873 = vmul.f32 %v5819, %v5782
      %v5874 = vmul.f32 %v5820, %v5782
      %v5875 = vmul.f32 %v5821, %v5782
      %v5876 = vmul.f32 %v5822, %v5782
      %v5877 = vmul.f32 %v5823, %v5782
      %v5878 = vmul.f32 %v5824, %v5782
      %v5879 = vmul.f32 %v5825, %v5782
      %v5880 = vmul.f32 %v5826, %v5782
      %v5881 = vmul.f32 %v5827, %v5782
      %v5882 = vmul.f32 %v5828, %v5782
      %v5883 = vmul.f32 %v5829, %v5782
      %v5884 = vmul.f32 %v5830, %v5782
      %v5885 = vmul.f32 %v5831, %v5782
      %v5886 = vmul.f32 %v5832, %v5782
      %v5887 = vmul.f32 %v5833, %v5782
      %v5888 = vmul.f32 %v5834, %v5782
      %v5889 = vmul.f32 %v5835, %v5782
      %v5890 = vmul.f32 %v5836, %v5782
      %v5891 = vld [vmem:[%s9] sm:$0xff]
      %v5892 = vld [vmem:[%s9 + $0x8] sm:$0xff]
      %v5893 = vld [vmem:[%s9 + $0x10] sm:$0xff]
      %v5894 = vld [vmem:[%s9 + $0x18] sm:$0x7]
      %v5899 = vperm.slane %v5891, 0
      %v5900 = vperm.slane %v5891, 1
      %v5901 = vperm.slane %v5891, 2
      %v5902 = vperm.slane %v5891, 3
      %v5903 = vperm.slane %v5891, 4
      %v5904 = vperm.slane %v5891, 5
      %v5905 = vperm.slane %v5891, 6
      %v5906 = vperm.slane %v5891, 7
      %v5907 = vperm.slane %v5892, 0
      %v5908 = vperm.slane %v5892, 1
      %v5909 = vperm.slane %v5892, 2
      %v5910 = vperm.slane %v5892, 3
      %v5911 = vperm.slane %v5892, 4
      %v5912 = vperm.slane %v5892, 5
      %v5913 = vperm.slane %v5892, 6
      %v5914 = vperm.slane %v5892, 7
      %v5915 = vperm.slane %v5893, 0
      %v5916 = vperm.slane %v5893, 1
      %v5917 = vperm.slane %v5893, 2
      %v5918 = vperm.slane %v5893, 3
      %v5919 = vperm.slane %v5893, 4
      %v5920 = vperm.slane %v5893, 5
      %v5921 = vperm.slane %v5893, 6
      %v5922 = vperm.slane %v5893, 7
      %v5923 = vperm.slane %v5894, 0
      %v5924 = vperm.slane %v5894, 1
      %v5925 = vperm.slane %v5894, 2
      %v5953 = vmul.f32 %v5837, %v5899
      %v5954 = vmul.f32 %v5838, %v5900
      %v5955 = vmul.f32 %v5839, %v5901
      %v5956 = vmul.f32 %v5840, %v5902
      %v5957 = vmul.f32 %v5841, %v5903
      %v5958 = vmul.f32 %v5842, %v5904
      %v5959 = vmul.f32 %v5843, %v5905
      %v5960 = vmul.f32 %v5844, %v5906
      %v5961 = vmul.f32 %v5845, %v5907
      %v5962 = vmul.f32 %v5846, %v5908
      %v5963 = vmul.f32 %v5847, %v5909
      %v5964 = vmul.f32 %v5848, %v5910
      %v5965 = vmul.f32 %v5849, %v5911
      %v5966 = vmul.f32 %v5850, %v5912
      %v5967 = vmul.f32 %v5851, %v5913
      %v5968 = vmul.f32 %v5852, %v5914
      %v5969 = vmul.f32 %v5853, %v5915
      %v5970 = vmul.f32 %v5854, %v5916
      %v5971 = vmul.f32 %v5855, %v5917
      %v5972 = vmul.f32 %v5856, %v5918
      %v5973 = vmul.f32 %v5857, %v5919
      %v5974 = vmul.f32 %v5858, %v5920
      %v5975 = vmul.f32 %v5859, %v5921
      %v5976 = vmul.f32 %v5860, %v5922
      %v5977 = vmul.f32 %v5861, %v5923
      %v5978 = vmul.f32 %v5862, %v5924
      %v5979 = vmul.f32 %v5863, %v5925
      %v5980 = vmul.f32 %v5864, %v5899
      %v5981 = vmul.f32 %v5865, %v5900
      %v5982 = vmul.f32 %v5866, %v5901
      %v5983 = vmul.f32 %v5867, %v5902
      %v5984 = vmul.f32 %v5868, %v5903
      %v5985 = vmul.f32 %v5869, %v5904
      %v5986 = vmul.f32 %v5870, %v5905
      %v5987 = vmul.f32 %v5871, %v5906
      %v5988 = vmul.f32 %v5872, %v5907
      %v5989 = vmul.f32 %v5873, %v5908
      %v5990 = vmul.f32 %v5874, %v5909
      %v5991 = vmul.f32 %v5875, %v5910
      %v5992 = vmul.f32 %v5876, %v5911
      %v5993 = vmul.f32 %v5877, %v5912
      %v5994 = vmul.f32 %v5878, %v5913
      %v5995 = vmul.f32 %v5879, %v5914
      %v5996 = vmul.f32 %v5880, %v5915
      %v5997 = vmul.f32 %v5881, %v5916
      %v5998 = vmul.f32 %v5882, %v5917
      %v5999 = vmul.f32 %v5883, %v5918
      %v6000 = vmul.f32 %v5884, %v5919
      %v6001 = vmul.f32 %v5885, %v5920
      %v6002 = vmul.f32 %v5886, %v5921
      %v6003 = vmul.f32 %v5887, %v5922
      %v6004 = vmul.f32 %v5888, %v5923
      %v6005 = vmul.f32 %v5889, %v5924
      %v6006 = vmul.f32 %v5890, %v5925
      %v6007 = vld [vmem:[%s10] sm:$0xff]
      %v6008 = vld [vmem:[%s10 + $0x8] sm:$0xff]
      %v6009 = vld [vmem:[%s10 + $0x10] sm:$0xff]
      %v6010 = vld [vmem:[%s10 + $0x18] sm:$0x7]
      %v6015 = vperm.slane %v6007, 0
      %v6016 = vperm.slane %v6007, 1
      %v6017 = vperm.slane %v6007, 2
      %v6018 = vperm.slane %v6007, 3
      %v6019 = vperm.slane %v6007, 4
      %v6020 = vperm.slane %v6007, 5
      %v6021 = vperm.slane %v6007, 6
      %v6022 = vperm.slane %v6007, 7
      %v6023 = vperm.slane %v6008, 0
      %v6024 = vperm.slane %v6008, 1
      %v6025 = vperm.slane %v6008, 2
      %v6026 = vperm.slane %v6008, 3
      %v6027 = vperm.slane %v6008, 4
      %v6028 = vperm.slane %v6008, 5
      %v6029 = vperm.slane %v6008, 6
      %v6030 = vperm.slane %v6008, 7
      %v6031 = vperm.slane %v6009, 0
      %v6032 = vperm.slane %v6009, 1
      %v6033 = vperm.slane %v6009, 2
      %v6034 = vperm.slane %v6009, 3
      %v6035 = vperm.slane %v6009, 4
      %v6036 = vperm.slane %v6009, 5
      %v6037 = vperm.slane %v6009, 6
      %v6038 = vperm.slane %v6009, 7
      %v6039 = vperm.slane %v6010, 0
      %v6040 = vperm.slane %v6010, 1
      %v6041 = vperm.slane %v6010, 2
      %v6069 = vadd.f32 %v5953, %v6015
      %v6070 = vadd.f32 %v5954, %v6016
      %v6071 = vadd.f32 %v5955, %v6017
      %v6072 = vadd.f32 %v5956, %v6018
      %v6073 = vadd.f32 %v5957, %v6019
      %v6074 = vadd.f32 %v5958, %v6020
      %v6075 = vadd.f32 %v5959, %v6021
      %v6076 = vadd.f32 %v5960, %v6022
      %v6077 = vadd.f32 %v5961, %v6023
      %v6078 = vadd.f32 %v5962, %v6024
      %v6079 = vadd.f32 %v5963, %v6025
      %v6080 = vadd.f32 %v5964, %v6026
      %v6081 = vadd.f32 %v5965, %v6027
      %v6082 = vadd.f32 %v5966, %v6028
      %v6083 = vadd.f32 %v5967, %v6029
      %v6084 = vadd.f32 %v5968, %v6030
      %v6085 = vadd.f32 %v5969, %v6031
      %v6086 = vadd.f32 %v5970, %v6032
      %v6087 = vadd.f32 %v5971, %v6033
      %v6088 = vadd.f32 %v5972, %v6034
      %v6089 = vadd.f32 %v5973, %v6035
      %v6090 = vadd.f32 %v5974, %v6036
      %v6091 = vadd.f32 %v5975, %v6037
      %v6092 = vadd.f32 %v5976, %v6038
      %v6093 = vadd.f32 %v5977, %v6039
      %v6094 = vadd.f32 %v5978, %v6040
      %v6095 = vadd.f32 %v5979, %v6041
      %v6096 = vadd.f32 %v5980, %v6015
      %v6097 = vadd.f32 %v5981, %v6016
      %v6098 = vadd.f32 %v5982, %v6017
      %v6099 = vadd.f32 %v5983, %v6018
      %v6100 = vadd.f32 %v5984, %v6019
      %v6101 = vadd.f32 %v5985, %v6020
      %v6102 = vadd.f32 %v5986, %v6021
      %v6103 = vadd.f32 %v5987, %v6022
      %v6104 = vadd.f32 %v5988, %v6023
      %v6105 = vadd.f32 %v5989, %v6024
      %v6106 = vadd.f32 %v5990, %v6025
      %v6107 = vadd.f32 %v5991, %v6026
      %v6108 = vadd.f32 %v5992, %v6027
      %v6109 = vadd.f32 %v5993, %v6028
      %v6110 = vadd.f32 %v5994, %v6029
      %v6111 = vadd.f32 %v5995, %v6030
      %v6112 = vadd.f32 %v5996, %v6031
      %v6113 = vadd.f32 %v5997, %v6032
      %v6114 = vadd.f32 %v5998, %v6033
      %v6115 = vadd.f32 %v5999, %v6034
      %v6116 = vadd.f32 %v6000, %v6035
      %v6117 = vadd.f32 %v6001, %v6036
      %v6118 = vadd.f32 %v6002, %v6037
      %v6119 = vadd.f32 %v6003, %v6038
      %v6120 = vadd.f32 %v6004, %v6039
      %v6121 = vadd.f32 %v6005, %v6040
      %v6122 = vadd.f32 %v6006, %v6041
      %6123 = vst [vmem:[#allocation3] sm:$0xff] %v6069
      %6124 = vst [vmem:[#allocation3 + $0x8] sm:$0xff] %v6070
      %6125 = vst [vmem:[#allocation3 + $0x10] sm:$0xff] %v6071
      %6126 = vst [vmem:[#allocation3 + $0x18] sm:$0xff] %v6072
      %6127 = vst [vmem:[#allocation3 + $0x20] sm:$0xff] %v6073
      %6128 = vst [vmem:[#allocation3 + $0x28] sm:$0xff] %v6074
      %6129 = vst [vmem:[#allocation3 + $0x30] sm:$0xff] %v6075
      %6130 = vst [vmem:[#allocation3 + $0x38] sm:$0xff] %v6076
      %6131 = vst [vmem:[#allocation3 + $0x40] sm:$0xff] %v6077
      %6132 = vst [vmem:[#allocation3 + $0x48] sm:$0xff] %v6078
      %6133 = vst [vmem:[#allocation3 + $0x50] sm:$0xff] %v6079
      %6134 = vst [vmem:[#allocation3 + $0x58] sm:$0xff] %v6080
      %6135 = vst [vmem:[#allocation3 + $0x60] sm:$0xff] %v6081
      %6136 = vst [vmem:[#allocation3 + $0x68] sm:$0xff] %v6082
      %6137 = vst [vmem:[#allocation3 + $0x70] sm:$0xff] %v6083
      %6138 = vst [vmem:[#allocation3 + $0x78] sm:$0xff] %v6084
      %6139 = vst [vmem:[#allocation3 + $0x80] sm:$0xff] %v6085
      %6140 = vst [vmem:[#allocation3 + $0x88] sm:$0xff] %v6086
      %6141 = vst [vmem:[#allocation3 + $0x90] sm:$0xff] %v6087
      %6142 = vst [vmem:[#allocation3 + $0x98] sm:$0xff] %v6088
      %6143 = vst [vmem:[#allocation3 + $0xa0] sm:$0xff] %v6089
      %6144 = vst [vmem:[#allocation3 + $0xa8] sm:$0xff] %v6090
      %6145 = vst [vmem:[#allocation3 + $0xb0] sm:$0xff] %v6091
      %6146 = vst [vmem:[#allocation3 + $0xb8] sm:$0xff] %v6092
      %6147 = vst [vmem:[#allocation3 + $0xc0] sm:$0xff] %v6093
      %6148 = vst [vmem:[#allocation3 + $0xc8] sm:$0xff] %v6094
      %6149 = vst [vmem:[#allocation3 + $0xd0] sm:$0xff] %v6095
      %6150 = vst [vmem:[#allocation3 + $0xd8] sm:$0xff] %v6096
      %6151 = vst [vmem:[#allocation3 + $0xe0] sm:$0xff] %v6097
      %6152 = vst [vmem:[#allocation3 + $0xe8] sm:$0xff] %v6098
      %6153 = vst [vmem:[#allocation3 + $0xf0] sm:$0xff] %v6099
      %6154 = vst [vmem:[#allocation3 + $0xf8] sm:$0xff] %v6100
      %6155 = vst [vmem:[#allocation3 + $0x100] sm:$0xff] %v6101
      %6156 = vst [vmem:[#allocation3 + $0x108] sm:$0xff] %v6102
      %6157 = vst [vmem:[#allocation3 + $0x110] sm:$0xff] %v6103
      %6158 = vst [vmem:[#allocation3 + $0x118] sm:$0xff] %v6104
      %6159 = vst [vmem:[#allocation3 + $0x120] sm:$0xff] %v6105
      %6160 = vst [vmem:[#allocation3 + $0x128] sm:$0xff] %v6106
      %6161 = vst [vmem:[#allocation3 + $0x130] sm:$0xff] %v6107
      %6162 = vst [vmem:[#allocation3 + $0x138] sm:$0xff] %v6108
      %6163 = vst [vmem:[#allocation3 + $0x140] sm:$0xff] %v6109
      %6164 = vst [vmem:[#allocation3 + $0x148] sm:$0xff] %v6110
      %6165 = vst [vmem:[#allocation3 + $0x150] sm:$0xff] %v6111
      %6166 = vst [vmem:[#allocation3 + $0x158] sm:$0xff] %v6112
      %6167 = vst [vmem:[#allocation3 + $0x160] sm:$0xff] %v6113
      %6168 = vst [vmem:[#allocation3 + $0x168] sm:$0xff] %v6114
      %6169 = vst [vmem:[#allocation3 + $0x170] sm:$0xff] %v6115
      %6170 = vst [vmem:[#allocation3 + $0x178] sm:$0xff] %v6116
      %6171 = vst [vmem:[#allocation3 + $0x180] sm:$0xff] %v6117
      %6172 = vst [vmem:[#allocation3 + $0x188] sm:$0xff] %v6118
      %6173 = vst [vmem:[#allocation3 + $0x190] sm:$0xff] %v6119
      %6174 = vst [vmem:[#allocation3 + $0x198] sm:$0xff] %v6120
      %6175 = vst [vmem:[#allocation3 + $0x1a0] sm:$0xff] %v6121
      %6176 = vst [vmem:[#allocation3 + $0x1a8] sm:$0xff] %v6122
      %v6177 = vld [vmem:[%s3] sm:$0xff]
      %v6178 = vld [vmem:[%s3 + $0x8] sm:$0xf]
      %v6179 = vld [vmem:[%s3 + $0xc] sm:$0xff]
      %v6180 = vld [vmem:[%s3 + $0x14] sm:$0xf]
      %v6181 = vld [vmem:[%s3 + $0x18] sm:$0xff]
      %v6182 = vld [vmem:[%s3 + $0x20] sm:$0xf]
      %v6183 = vld [vmem:[%s3 + $0x24] sm:$0xff]
      %v6184 = vld [vmem:[%s3 + $0x2c] sm:$0xf]
      %v6185 = vld [vmem:[%s3 + $0x30] sm:$0xff]
      %v6186 = vld [vmem:[%s3 + $0x38] sm:$0xf]
      %v6187 = vld [vmem:[%s3 + $0x3c] sm:$0xff]
      %v6188 = vld [vmem:[%s3 + $0x44] sm:$0xf]
      %v6189 = vld [vmem:[%s3 + $0x48] sm:$0xff]
      %v6190 = vld [vmem:[%s3 + $0x50] sm:$0xf]
      %v6191 = vld [vmem:[%s3 + $0x54] sm:$0xff]
      %v6192 = vld [vmem:[%s3 + $0x5c] sm:$0xf]
      %v6193 = vld [vmem:[%s3 + $0x60] sm:$0xff]
      %v6194 = vld [vmem:[%s3 + $0x68] sm:$0xf]
      %v6195 = vld [vmem:[%s3 + $0x6c] sm:$0xff]
      %v6196 = vld [vmem:[%s3 + $0x74] sm:$0xf]
      %v6197 = vld [vmem:[%s3 + $0x78] sm:$0xff]
      %v6198 = vld [vmem:[%s3 + $0x80] sm:$0xf]
      %v6199 = vld [vmem:[%s3 + $0x84] sm:$0xff]
      %v6200 = vld [vmem:[%s3 + $0x8c] sm:$0xf]
      %v6201 = vld [vmem:[%s3 + $0x90] sm:$0xff]
      %v6202 = vld [vmem:[%s3 + $0x98] sm:$0xf]
      %v6203 = vld [vmem:[%s3 + $0x9c] sm:$0xff]
      %v6204 = vld [vmem:[%s3 + $0xa4] sm:$0xf]
      %v6205 = vld [vmem:[%s3 + $0xa8] sm:$0xff]
      %v6206 = vld [vmem:[%s3 + $0xb0] sm:$0xf]
      %v6207 = vld [vmem:[%s3 + $0xb4] sm:$0xff]
      %v6208 = vld [vmem:[%s3 + $0xbc] sm:$0xf]
      %v6209 = vld [vmem:[%s3 + $0xc0] sm:$0xff]
      %v6210 = vld [vmem:[%s3 + $0xc8] sm:$0xf]
      %v6211 = vld [vmem:[%s3 + $0xcc] sm:$0xff]
      %v6212 = vld [vmem:[%s3 + $0xd4] sm:$0xf]
      %v6213 = vld [vmem:[%s3 + $0xd8] sm:$0xff]
      %v6214 = vld [vmem:[%s3 + $0xe0] sm:$0xf]
      %v6215 = vld [vmem:[%s3 + $0xe4] sm:$0xff]
      %v6216 = vld [vmem:[%s3 + $0xec] sm:$0xf]
      %v6217 = vld [vmem:[%s3 + $0xf0] sm:$0xff]
      %v6218 = vld [vmem:[%s3 + $0xf8] sm:$0xf]
      %v6219 = vld [vmem:[%s3 + $0xfc] sm:$0xff]
      %v6220 = vld [vmem:[%s3 + $0x104] sm:$0xf]
      %v6221 = vld [vmem:[%s3 + $0x108] sm:$0xff]
      %v6222 = vld [vmem:[%s3 + $0x110] sm:$0xf]
      %v6223 = vld [vmem:[%s3 + $0x114] sm:$0xff]
      %v6224 = vld [vmem:[%s3 + $0x11c] sm:$0xf]
      %v6225 = vld [vmem:[%s3 + $0x120] sm:$0xff]
      %v6226 = vld [vmem:[%s3 + $0x128] sm:$0xf]
      %v6227 = vld [vmem:[%s3 + $0x12c] sm:$0xff]
      %v6228 = vld [vmem:[%s3 + $0x134] sm:$0xf]
      %v6229 = vld [vmem:[%s3 + $0x138] sm:$0xff]
      %v6230 = vld [vmem:[%s3 + $0x140] sm:$0xf]
      %v6231 = vld [vmem:[%s3 + $0x144] sm:$0xff]
      %v6232 = vld [vmem:[%s3 + $0x14c] sm:$0xf]
      %v6233 = vld [vmem:[%s3 + $0x150] sm:$0xff]
      %v6234 = vld [vmem:[%s3 + $0x158] sm:$0xf]
      %v6235 = vld [vmem:[%s3 + $0x15c] sm:$0xff]
      %v6236 = vld [vmem:[%s3 + $0x164] sm:$0xf]
      %v6237 = vld [vmem:[%s3 + $0x168] sm:$0xff]
      %v6238 = vld [vmem:[%s3 + $0x170] sm:$0xf]
      %v6239 = vld [vmem:[%s3 + $0x174] sm:$0xff]
      %v6240 = vld [vmem:[%s3 + $0x17c] sm:$0xf]
      %v6241 = vld [vmem:[%s3 + $0x180] sm:$0xff]
      %v6242 = vld [vmem:[%s3 + $0x188] sm:$0xf]
      %v6243 = vld [vmem:[%s3 + $0x18c] sm:$0xff]
      %v6244 = vld [vmem:[%s3 + $0x194] sm:$0xf]
      %v6245 = vld [vmem:[%s3 + $0x198] sm:$0xff]
      %v6246 = vld [vmem:[%s3 + $0x1a0] sm:$0xf]
      %v6247 = vld [vmem:[%s3 + $0x1a4] sm:$0xff]
      %v6248 = vld [vmem:[%s3 + $0x1ac] sm:$0xf]
      %v6249 = vld [vmem:[%s3 + $0x1b0] sm:$0xff]
      %v6250 = vld [vmem:[%s3 + $0x1b8] sm:$0xf]
      %v6251 = vld [vmem:[%s3 + $0x1bc] sm:$0xff]
      %v6252 = vld [vmem:[%s3 + $0x1c4] sm:$0xf]
      %v6253 = vld [vmem:[%s3 + $0x1c8] sm:$0xff]
      %v6254 = vld [vmem:[%s3 + $0x1d0] sm:$0xf]
      %v6255 = vld [vmem:[%s3 + $0x1d4] sm:$0xff]
      %v6256 = vld [vmem:[%s3 + $0x1dc] sm:$0xf]
      %v6257 = vld [vmem:[%s3 + $0x1e0] sm:$0xff]
      %v6258 = vld [vmem:[%s3 + $0x1e8] sm:$0xf]
      %v6259 = vld [vmem:[%s3 + $0x1ec] sm:$0xff]
      %v6260 = vld [vmem:[%s3 + $0x1f4] sm:$0xf]
      %v6261 = vld [vmem:[%s3 + $0x1f8] sm:$0xff]
      %v6262 = vld [vmem:[%s3 + $0x200] sm:$0xf]
      %v6263 = vld [vmem:[%s3 + $0x204] sm:$0xff]
      %v6264 = vld [vmem:[%s3 + $0x20c] sm:$0xf]
      %v6265 = vld [vmem:[%s3 + $0x210] sm:$0xff]
      %v6266 = vld [vmem:[%s3 + $0x218] sm:$0xf]
      %v6267 = vld [vmem:[%s3 + $0x21c] sm:$0xff]
      %v6268 = vld [vmem:[%s3 + $0x224] sm:$0xf]
      %v6269 = vld [vmem:[%s3 + $0x228] sm:$0xff]
      %v6270 = vld [vmem:[%s3 + $0x230] sm:$0xf]
      %v6271 = vld [vmem:[%s3 + $0x234] sm:$0xff]
      %v6272 = vld [vmem:[%s3 + $0x23c] sm:$0xf]
      %v6273 = vld [vmem:[%s3 + $0x240] sm:$0xff]
      %v6274 = vld [vmem:[%s3 + $0x248] sm:$0xf]
      %v6275 = vld [vmem:[%s3 + $0x24c] sm:$0xff]
      %v6276 = vld [vmem:[%s3 + $0x254] sm:$0xf]
      %v6277 = vld [vmem:[%s3 + $0x258] sm:$0xff]
      %v6278 = vld [vmem:[%s3 + $0x260] sm:$0xf]
      %v6279 = vld [vmem:[%s3 + $0x264] sm:$0xff]
      %v6280 = vld [vmem:[%s3 + $0x26c] sm:$0xf]
      %v6281 = vld [vmem:[%s3 + $0x270] sm:$0xff]
      %v6282 = vld [vmem:[%s3 + $0x278] sm:$0xf]
      %v6283 = vld [vmem:[%s3 + $0x27c] sm:$0xff]
      %v6284 = vld [vmem:[%s3 + $0x284] sm:$0xf]
      %v6285 = vld [vmem:[%s3 + $0x288] sm:$0xff]
      %v6286 = vld [vmem:[%s3 + $0x290] sm:$0xf]
      %v6287 = vld [vmem:[%s3 + $0x294] sm:$0xff]
      %v6288 = vld [vmem:[%s3 + $0x29c] sm:$0xf]
      %v6289 = vld [vmem:[%s3 + $0x2a0] sm:$0xff]
      %v6290 = vld [vmem:[%s3 + $0x2a8] sm:$0xf]
      %v6291 = vld [vmem:[%s3 + $0x2ac] sm:$0xff]
      %v6292 = vld [vmem:[%s3 + $0x2b4] sm:$0xf]
      %v6293 = vld [vmem:[%s3 + $0x2b8] sm:$0xff]
      %v6294 = vld [vmem:[%s3 + $0x2c0] sm:$0xf]
      %v6295 = vld [vmem:[%s3 + $0x2c4] sm:$0xff]
      %v6296 = vld [vmem:[%s3 + $0x2cc] sm:$0xf]
      %v6297 = vld [vmem:[%s3 + $0x2d0] sm:$0xff]
      %v6298 = vld [vmem:[%s3 + $0x2d8] sm:$0xf]
      %v6299 = vld [vmem:[%s3 + $0x2dc] sm:$0xff]
      %v6300 = vld [vmem:[%s3 + $0x2e4] sm:$0xf]
      %v6301 = vld [vmem:[%s3 + $0x2e8] sm:$0xff]
      %v6302 = vld [vmem:[%s3 + $0x2f0] sm:$0xf]
      %v6303 = vld [vmem:[%s3 + $0x2f4] sm:$0xff]
      %v6304 = vld [vmem:[%s3 + $0x2fc] sm:$0xf]
      %v6305 = vld [vmem:[%s3 + $0x300] sm:$0xff]
      %v6306 = vld [vmem:[%s3 + $0x308] sm:$0xf]
      %v6307 = vld [vmem:[%s3 + $0x30c] sm:$0xff]
      %v6308 = vld [vmem:[%s3 + $0x314] sm:$0xf]
      %v6309 = vld [vmem:[%s3 + $0x318] sm:$0xff]
      %v6310 = vld [vmem:[%s3 + $0x320] sm:$0xf]
      %v6311 = vld [vmem:[%s3 + $0x324] sm:$0xff]
      %v6312 = vld [vmem:[%s3 + $0x32c] sm:$0xf]
      %v6313 = vld [vmem:[%s3 + $0x330] sm:$0xff]
      %v6314 = vld [vmem:[%s3 + $0x338] sm:$0xf]
      %v6315 = vld [vmem:[%s3 + $0x33c] sm:$0xff]
      %v6316 = vld [vmem:[%s3 + $0x344] sm:$0xf]
      %v6317 = vld [vmem:[%s3 + $0x348] sm:$0xff]
      %v6318 = vld [vmem:[%s3 + $0x350] sm:$0xf]
      %v6319 = vld [vmem:[%s3 + $0x354] sm:$0xff]
      %v6320 = vld [vmem:[%s3 + $0x35c] sm:$0xf]
      %v6321 = vld [vmem:[%s3 + $0x360] sm:$0xff]
      %v6322 = vld [vmem:[%s3 + $0x368] sm:$0xf]
      %v6323 = vld [vmem:[%s3 + $0x36c] sm:$0xff]
      %v6324 = vld [vmem:[%s3 + $0x374] sm:$0xf]
      %v6325 = vld [vmem:[%s3 + $0x378] sm:$0xff]
      %v6326 = vld [vmem:[%s3 + $0x380] sm:$0xf]
      %v6327 = vld [vmem:[%s3 + $0x384] sm:$0xff]
      %v6328 = vld [vmem:[%s3 + $0x38c] sm:$0xf]
      %v6329 = vld [vmem:[%s3 + $0x390] sm:$0xff]
      %v6330 = vld [vmem:[%s3 + $0x398] sm:$0xf]
      %v6331 = vld [vmem:[%s3 + $0x39c] sm:$0xff]
      %v6332 = vld [vmem:[%s3 + $0x3a4] sm:$0xf]
      %v6333 = vld [vmem:[%s3 + $0x3a8] sm:$0xff]
      %v6334 = vld [vmem:[%s3 + $0x3b0] sm:$0xf]
      %v6335 = vld [vmem:[%s3 + $0x3b4] sm:$0xff]
      %v6336 = vld [vmem:[%s3 + $0x3bc] sm:$0xf]
      %v6337 = vld [vmem:[%s3 + $0x3c0] sm:$0xff]
      %v6338 = vld [vmem:[%s3 + $0x3c8] sm:$0xf]
      %v6339 = vld [vmem:[%s3 + $0x3cc] sm:$0xff]
      %v6340 = vld [vmem:[%s3 + $0x3d4] sm:$0xf]
      %v6341 = vld [vmem:[%s3 + $0x3d8] sm:$0xff]
      %v6342 = vld [vmem:[%s3 + $0x3e0] sm:$0xf]
      %v6343 = vld [vmem:[%s3 + $0x3e4] sm:$0xff]
      %v6344 = vld [vmem:[%s3 + $0x3ec] sm:$0xf]
      %v6345 = vld [vmem:[%s3 + $0x3f0] sm:$0xff]
      %v6346 = vld [vmem:[%s3 + $0x3f8] sm:$0xf]
      %v6347 = vld [vmem:[%s3 + $0x3fc] sm:$0xff]
      %v6348 = vld [vmem:[%s3 + $0x404] sm:$0xf]
      %v6349 = vld [vmem:[%s3 + $0x408] sm:$0xff]
      %v6350 = vld [vmem:[%s3 + $0x410] sm:$0xf]
      %v6351 = vld [vmem:[%s3 + $0x414] sm:$0xff]
      %v6352 = vld [vmem:[%s3 + $0x41c] sm:$0xf]
      %v6353 = vld [vmem:[%s3 + $0x420] sm:$0xff]
      %v6354 = vld [vmem:[%s3 + $0x428] sm:$0xf]
      %v6355 = vld [vmem:[%s3 + $0x42c] sm:$0xff]
      %v6356 = vld [vmem:[%s3 + $0x434] sm:$0xf]
      %v6357 = vld [vmem:[%s3 + $0x438] sm:$0xff]
      %v6358 = vld [vmem:[%s3 + $0x440] sm:$0xf]
      %v6359 = vld [vmem:[%s3 + $0x444] sm:$0xff]
      %v6360 = vld [vmem:[%s3 + $0x44c] sm:$0xf]
      %v6361 = vld [vmem:[%s3 + $0x450] sm:$0xff]
      %v6362 = vld [vmem:[%s3 + $0x458] sm:$0xf]
      %v6363 = vld [vmem:[%s3 + $0x45c] sm:$0xff]
      %v6364 = vld [vmem:[%s3 + $0x464] sm:$0xf]
      %v6365 = vld [vmem:[%s3 + $0x468] sm:$0xff]
      %v6366 = vld [vmem:[%s3 + $0x470] sm:$0xf]
      %v6367 = vld [vmem:[%s3 + $0x474] sm:$0xff]
      %v6368 = vld [vmem:[%s3 + $0x47c] sm:$0xf]
      %v6369 = vld [vmem:[%s3 + $0x480] sm:$0xff]
      %v6370 = vld [vmem:[%s3 + $0x488] sm:$0xf]
      %v6371 = vld [vmem:[%s3 + $0x48c] sm:$0xff]
      %v6372 = vld [vmem:[%s3 + $0x494] sm:$0xf]
      %v6373 = vld [vmem:[%s3 + $0x498] sm:$0xff]
      %v6374 = vld [vmem:[%s3 + $0x4a0] sm:$0xf]
      %v6375 = vld [vmem:[%s3 + $0x4a4] sm:$0xff]
      %v6376 = vld [vmem:[%s3 + $0x4ac] sm:$0xf]
      %v6377 = vld [vmem:[%s3 + $0x4b0] sm:$0xff]
      %v6378 = vld [vmem:[%s3 + $0x4b8] sm:$0xf]
      %v6379 = vld [vmem:[%s3 + $0x4bc] sm:$0xff]
      %v6380 = vld [vmem:[%s3 + $0x4c4] sm:$0xf]
      %v6381 = vld [vmem:[%s3 + $0x4c8] sm:$0xff]
      %v6382 = vld [vmem:[%s3 + $0x4d0] sm:$0xf]
      %v6383 = vld [vmem:[%s3 + $0x4d4] sm:$0xff]
      %v6384 = vld [vmem:[%s3 + $0x4dc] sm:$0xf]
      %v6385 = vld [vmem:[%s3 + $0x4e0] sm:$0xff]
      %v6386 = vld [vmem:[%s3 + $0x4e8] sm:$0xf]
      %v6387 = vld [vmem:[%s3 + $0x4ec] sm:$0xff]
      %v6388 = vld [vmem:[%s3 + $0x4f4] sm:$0xf]
      %v6389 = vld [vmem:[%s3 + $0x4f8] sm:$0xff]
      %v6390 = vld [vmem:[%s3 + $0x500] sm:$0xf]
      %v6391 = vld [vmem:[%s3 + $0x504] sm:$0xff]
      %v6392 = vld [vmem:[%s3 + $0x50c] sm:$0xf]
      %v6393 = vld [vmem:[%s3 + $0x510] sm:$0xff]
      %v6394 = vld [vmem:[%s3 + $0x518] sm:$0xf]
      %v6395 = vld [vmem:[%s3 + $0x51c] sm:$0xff]
      %v6396 = vld [vmem:[%s3 + $0x524] sm:$0xf]
      %v6397 = vld [vmem:[%s3 + $0x528] sm:$0xff]
      %v6398 = vld [vmem:[%s3 + $0x530] sm:$0xf]
      %v6399 = vld [vmem:[%s3 + $0x534] sm:$0xff]
      %v6400 = vld [vmem:[%s3 + $0x53c] sm:$0xf]
      %v6401 = vld [vmem:[%s3 + $0x540] sm:$0xff]
      %v6402 = vld [vmem:[%s3 + $0x548] sm:$0xf]
      %v6403 = vld [vmem:[%s3 + $0x54c] sm:$0xff]
      %v6404 = vld [vmem:[%s3 + $0x554] sm:$0xf]
      %v6405 = vld [vmem:[%s3 + $0x558] sm:$0xff]
      %v6406 = vld [vmem:[%s3 + $0x560] sm:$0xf]
      %v6407 = vld [vmem:[%s3 + $0x564] sm:$0xff]
      %v6408 = vld [vmem:[%s3 + $0x56c] sm:$0xf]
      %v6409 = vld [vmem:[%s3 + $0x570] sm:$0xff]
      %v6410 = vld [vmem:[%s3 + $0x578] sm:$0xf]
      %v6411 = vld [vmem:[%s3 + $0x57c] sm:$0xff]
      %v6412 = vld [vmem:[%s3 + $0x584] sm:$0xf]
      %v6413 = vld [vmem:[%s3 + $0x588] sm:$0xff]
      %v6414 = vld [vmem:[%s3 + $0x590] sm:$0xf]
      %v6415 = vld [vmem:[%s3 + $0x594] sm:$0xff]
      %v6416 = vld [vmem:[%s3 + $0x59c] sm:$0xf]
      %v6417 = vld [vmem:[%s3 + $0x5a0] sm:$0xff]
      %v6418 = vld [vmem:[%s3 + $0x5a8] sm:$0xf]
      %v6419 = vld [vmem:[%s3 + $0x5ac] sm:$0xff]
      %v6420 = vld [vmem:[%s3 + $0x5b4] sm:$0xf]
      %v6421 = vld [vmem:[%s3 + $0x5b8] sm:$0xff]
      %v6422 = vld [vmem:[%s3 + $0x5c0] sm:$0xf]
      %v6423 = vld [vmem:[%s3 + $0x5c4] sm:$0xff]
      %v6424 = vld [vmem:[%s3 + $0x5cc] sm:$0xf]
      %v6425 = vld [vmem:[%s3 + $0x5d0] sm:$0xff]
      %v6426 = vld [vmem:[%s3 + $0x5d8] sm:$0xf]
      %v6427 = vld [vmem:[%s3 + $0x5dc] sm:$0xff]
      %v6428 = vld [vmem:[%s3 + $0x5e4] sm:$0xf]
      %v6429 = vld [vmem:[%s3 + $0x5e8] sm:$0xff]
      %v6430 = vld [vmem:[%s3 + $0x5f0] sm:$0xf]
      %v6431 = vld [vmem:[%s3 + $0x5f4] sm:$0xff]
      %v6432 = vld [vmem:[%s3 + $0x5fc] sm:$0xf]
      %v6433 = vld [vmem:[%s3 + $0x600] sm:$0xff]
      %v6434 = vld [vmem:[%s3 + $0x608] sm:$0xf]
      %v6435 = vld [vmem:[%s3 + $0x60c] sm:$0xff]
      %v6436 = vld [vmem:[%s3 + $0x614] sm:$0xf]
      %v6437 = vld [vmem:[%s3 + $0x618] sm:$0xff]
      %v6438 = vld [vmem:[%s3 + $0x620] sm:$0xf]
      %v6439 = vld [vmem:[%s3 + $0x624] sm:$0xff]
      %v6440 = vld [vmem:[%s3 + $0x62c] sm:$0xf]
      %v6441 = vld [vmem:[%s3 + $0x630] sm:$0xff]
      %v6442 = vld [vmem:[%s3 + $0x638] sm:$0xf]
      %v6443 = vld [vmem:[%s3 + $0x63c] sm:$0xff]
      %v6444 = vld [vmem:[%s3 + $0x644] sm:$0xf]
      %v6445 = vld [vmem:[%s3 + $0x648] sm:$0xff]
      %v6446 = vld [vmem:[%s3 + $0x650] sm:$0xf]
      %v6447 = vld [vmem:[%s3 + $0x654] sm:$0xff]
      %v6448 = vld [vmem:[%s3 + $0x65c] sm:$0xf]
      %v6449 = vld [vmem:[%s3 + $0x660] sm:$0xff]
      %v6450 = vld [vmem:[%s3 + $0x668] sm:$0xf]
      %v6451 = vld [vmem:[%s3 + $0x66c] sm:$0xff]
      %v6452 = vld [vmem:[%s3 + $0x674] sm:$0xf]
      %v6453 = vld [vmem:[%s3 + $0x678] sm:$0xff]
      %v6454 = vld [vmem:[%s3 + $0x680] sm:$0xf]
      %v6455 = vld [vmem:[%s3 + $0x684] sm:$0xff]
      %v6456 = vld [vmem:[%s3 + $0x68c] sm:$0xf]
      %v6457 = vld [vmem:[%s3 + $0x690] sm:$0xff]
      %v6458 = vld [vmem:[%s3 + $0x698] sm:$0xf]
      %v6459 = vld [vmem:[%s3 + $0x69c] sm:$0xff]
      %v6460 = vld [vmem:[%s3 + $0x6a4] sm:$0xf]
      %v6461 = vld [vmem:[%s3 + $0x6a8] sm:$0xff]
      %v6462 = vld [vmem:[%s3 + $0x6b0] sm:$0xf]
      %v6463 = vld [vmem:[%s3 + $0x6b4] sm:$0xff]
      %v6464 = vld [vmem:[%s3 + $0x6bc] sm:$0xf]
      %v6465 = vld [vmem:[%s7] sm:$0x7]
      %v6466 = vld [vmem:[#allocation3] sm:$0xff]
      %v6467 = vld [vmem:[#allocation3 + $0x8] sm:$0xff]
      %v6468 = vld [vmem:[#allocation3 + $0x10] sm:$0xff]
      %v6469 = vld [vmem:[#allocation3 + $0x18] sm:$0xff]
      %v6470 = vld [vmem:[#allocation3 + $0x20] sm:$0xff]
      %v6471 = vld [vmem:[#allocation3 + $0x28] sm:$0xff]
      %v6472 = vld [vmem:[#allocation3 + $0x30] sm:$0xff]
      %v6473 = vld [vmem:[#allocation3 + $0x38] sm:$0xff]
      %v6474 = vld [vmem:[#allocation3 + $0x40] sm:$0xff]
      %v6475 = vld [vmem:[#allocation3 + $0xd8] sm:$0xff]
      %v6476 = vld [vmem:[#allocation3 + $0xe0] sm:$0xff]
      %v6477 = vld [vmem:[#allocation3 + $0xe8] sm:$0xff]
      %v6478 = vld [vmem:[#allocation3 + $0xf0] sm:$0xff]
      %v6479 = vld [vmem:[#allocation3 + $0xf8] sm:$0xff]
      %v6480 = vld [vmem:[#allocation3 + $0x100] sm:$0xff]
      %v6481 = vld [vmem:[#allocation3 + $0x108] sm:$0xff]
      %v6482 = vld [vmem:[#allocation3 + $0x110] sm:$0xff]
      %v6483 = vld [vmem:[#allocation3 + $0x118] sm:$0xff]
      %v6484 = vpack.c.bf16 %v6475, %v6466
      %v6485 = vpack.c.bf16 %v6476, %v6467
      %v6486 = vpack.c.bf16 %v6477, %v6468
      %v6487 = vpack.c.bf16 %v6478, %v6469
      %v6488 = vpack.c.bf16 %v6479, %v6470
      %v6489 = vpack.c.bf16 %v6480, %v6471
      %v6490 = vpack.c.bf16 %v6481, %v6472
      %v6491 = vpack.c.bf16 %v6482, %v6473
      %v6492 = vpack.c.bf16 %v6483, %v6474
      %v6494 = vperm.slane %v6465, 0
      %v6495 = vperm.slane %v6465, 1
      %v6496 = vperm.slane %v6465, 2
      %v6788 = vunpack.c.l.b16 %v6177
      %v6789 = vunpack.c.h.b16 %v6177
      %v6790 = vunpack.c.l.b16 %v6178
      %v6791 = vunpack.c.l.b16 %v6179
      %v6792 = vunpack.c.h.b16 %v6179
      %v6793 = vunpack.c.l.b16 %v6180
      %v6794 = vunpack.c.l.b16 %v6181
      %v6795 = vunpack.c.h.b16 %v6181
      %v6796 = vunpack.c.l.b16 %v6182
      %v6797 = vunpack.c.l.b16 %v6183
      %v6798 = vunpack.c.h.b16 %v6183
      %v6799 = vunpack.c.l.b16 %v6184
      %v6800 = vunpack.c.l.b16 %v6185
      %v6801 = vunpack.c.h.b16 %v6185
      %v6802 = vunpack.c.l.b16 %v6186
      %v6803 = vunpack.c.l.b16 %v6187
      %v6804 = vunpack.c.h.b16 %v6187
      %v6805 = vunpack.c.l.b16 %v6188
      %v6806 = vunpack.c.l.b16 %v6189
      %v6807 = vunpack.c.h.b16 %v6189
      %v6808 = vunpack.c.l.b16 %v6190
      %v6809 = vunpack.c.l.b16 %v6191
      %v6810 = vunpack.c.h.b16 %v6191
      %v6811 = vunpack.c.l.b16 %v6192
      %v6812 = vunpack.c.l.b16 %v6193
      %v6813 = vunpack.c.h.b16 %v6193
      %v6814 = vunpack.c.l.b16 %v6194
      %v6815 = vunpack.c.l.b16 %v6195
      %v6816 = vunpack.c.h.b16 %v6195
      %v6817 = vunpack.c.l.b16 %v6196
      %v6818 = vunpack.c.l.b16 %v6197
      %v6819 = vunpack.c.h.b16 %v6197
      %v6820 = vunpack.c.l.b16 %v6198
      %v6821 = vunpack.c.l.b16 %v6199
      %v6822 = vunpack.c.h.b16 %v6199
      %v6823 = vunpack.c.l.b16 %v6200
      %v6824 = vunpack.c.l.b16 %v6201
      %v6825 = vunpack.c.h.b16 %v6201
      %v6826 = vunpack.c.l.b16 %v6202
      %v6827 = vunpack.c.l.b16 %v6203
      %v6828 = vunpack.c.h.b16 %v6203
      %v6829 = vunpack.c.l.b16 %v6204
      %v6830 = vunpack.c.l.b16 %v6205
      %v6831 = vunpack.c.h.b16 %v6205
      %v6832 = vunpack.c.l.b16 %v6206
      %v6833 = vunpack.c.l.b16 %v6207
      %v6834 = vunpack.c.h.b16 %v6207
      %v6835 = vunpack.c.l.b16 %v6208
      %v6836 = vunpack.c.l.b16 %v6209
      %v6837 = vunpack.c.h.b16 %v6209
      %v6838 = vunpack.c.l.b16 %v6210
      %v6839 = vunpack.c.l.b16 %v6211
      %v6840 = vunpack.c.h.b16 %v6211
      %v6841 = vunpack.c.l.b16 %v6212
      %v6842 = vunpack.c.l.b16 %v6213
      %v6843 = vunpack.c.h.b16 %v6213
      %v6844 = vunpack.c.l.b16 %v6214
      %v6845 = vunpack.c.l.b16 %v6215
      %v6846 = vunpack.c.h.b16 %v6215
      %v6847 = vunpack.c.l.b16 %v6216
      %v6848 = vunpack.c.l.b16 %v6217
      %v6849 = vunpack.c.h.b16 %v6217
      %v6850 = vunpack.c.l.b16 %v6218
      %v6851 = vunpack.c.l.b16 %v6219
      %v6852 = vunpack.c.h.b16 %v6219
      %v6853 = vunpack.c.l.b16 %v6220
      %v6854 = vunpack.c.l.b16 %v6221
      %v6855 = vunpack.c.h.b16 %v6221
      %v6856 = vunpack.c.l.b16 %v6222
      %v6857 = vunpack.c.l.b16 %v6223
      %v6858 = vunpack.c.h.b16 %v6223
      %v6859 = vunpack.c.l.b16 %v6224
      %v6860 = vunpack.c.l.b16 %v6225
      %v6861 = vunpack.c.h.b16 %v6225
      %v6862 = vunpack.c.l.b16 %v6226
      %v6863 = vunpack.c.l.b16 %v6227
      %v6864 = vunpack.c.h.b16 %v6227
      %v6865 = vunpack.c.l.b16 %v6228
      %v6866 = vunpack.c.l.b16 %v6229
      %v6867 = vunpack.c.h.b16 %v6229
      %v6868 = vunpack.c.l.b16 %v6230
      %v6869 = vunpack.c.l.b16 %v6231
      %v6870 = vunpack.c.h.b16 %v6231
      %v6871 = vunpack.c.l.b16 %v6232
      %v6872 = vunpack.c.l.b16 %v6233
      %v6873 = vunpack.c.h.b16 %v6233
      %v6874 = vunpack.c.l.b16 %v6234
      %v6875 = vunpack.c.l.b16 %v6235
      %v6876 = vunpack.c.h.b16 %v6235
      %v6877 = vunpack.c.l.b16 %v6236
      %v6878 = vunpack.c.l.b16 %v6237
      %v6879 = vunpack.c.h.b16 %v6237
      %v6880 = vunpack.c.l.b16 %v6238
      %v6881 = vunpack.c.l.b16 %v6239
      %v6882 = vunpack.c.h.b16 %v6239
      %v6883 = vunpack.c.l.b16 %v6240
      %v6884 = vunpack.c.l.b16 %v6241
      %v6885 = vunpack.c.h.b16 %v6241
      %v6886 = vunpack.c.l.b16 %v6242
      %v6887 = vunpack.c.l.b16 %v6243
      %v6888 = vunpack.c.h.b16 %v6243
      %v6889 = vunpack.c.l.b16 %v6244
      %v6890 = vunpack.c.l.b16 %v6245
      %v6891 = vunpack.c.h.b16 %v6245
      %v6892 = vunpack.c.l.b16 %v6246
      %v6893 = vunpack.c.l.b16 %v6247
      %v6894 = vunpack.c.h.b16 %v6247
      %v6895 = vunpack.c.l.b16 %v6248
      %v6896 = vunpack.c.l.b16 %v6249
      %v6897 = vunpack.c.h.b16 %v6249
      %v6898 = vunpack.c.l.b16 %v6250
      %v6899 = vunpack.c.l.b16 %v6251
      %v6900 = vunpack.c.h.b16 %v6251
      %v6901 = vunpack.c.l.b16 %v6252
      %v6902 = vunpack.c.l.b16 %v6253
      %v6903 = vunpack.c.h.b16 %v6253
      %v6904 = vunpack.c.l.b16 %v6254
      %v6905 = vunpack.c.l.b16 %v6255
      %v6906 = vunpack.c.h.b16 %v6255
      %v6907 = vunpack.c.l.b16 %v6256
      %v6908 = vunpack.c.l.b16 %v6257
      %v6909 = vunpack.c.h.b16 %v6257
      %v6910 = vunpack.c.l.b16 %v6258
      %v6911 = vunpack.c.l.b16 %v6259
      %v6912 = vunpack.c.h.b16 %v6259
      %v6913 = vunpack.c.l.b16 %v6260
      %v6914 = vunpack.c.l.b16 %v6261
      %v6915 = vunpack.c.h.b16 %v6261
      %v6916 = vunpack.c.l.b16 %v6262
      %v6917 = vunpack.c.l.b16 %v6263
      %v6918 = vunpack.c.h.b16 %v6263
      %v6919 = vunpack.c.l.b16 %v6264
      %v6920 = vunpack.c.l.b16 %v6265
      %v6921 = vunpack.c.h.b16 %v6265
      %v6922 = vunpack.c.l.b16 %v6266
      %v6923 = vunpack.c.l.b16 %v6267
      %v6924 = vunpack.c.h.b16 %v6267
      %v6925 = vunpack.c.l.b16 %v6268
      %v6926 = vunpack.c.l.b16 %v6269
      %v6927 = vunpack.c.h.b16 %v6269
      %v6928 = vunpack.c.l.b16 %v6270
      %v6929 = vunpack.c.l.b16 %v6271
      %v6930 = vunpack.c.h.b16 %v6271
      %v6931 = vunpack.c.l.b16 %v6272
      %v6932 = vunpack.c.l.b16 %v6273
      %v6933 = vunpack.c.h.b16 %v6273
      %v6934 = vunpack.c.l.b16 %v6274
      %v6935 = vunpack.c.l.b16 %v6275
      %v6936 = vunpack.c.h.b16 %v6275
      %v6937 = vunpack.c.l.b16 %v6276
      %v6938 = vunpack.c.l.b16 %v6277
      %v6939 = vunpack.c.h.b16 %v6277
      %v6940 = vunpack.c.l.b16 %v6278
      %v6941 = vunpack.c.l.b16 %v6279
      %v6942 = vunpack.c.h.b16 %v6279
      %v6943 = vunpack.c.l.b16 %v6280
      %v6944 = vunpack.c.l.b16 %v6281
      %v6945 = vunpack.c.h.b16 %v6281
      %v6946 = vunpack.c.l.b16 %v6282
      %v6947 = vunpack.c.l.b16 %v6283
      %v6948 = vunpack.c.h.b16 %v6283
      %v6949 = vunpack.c.l.b16 %v6284
      %v6950 = vunpack.c.l.b16 %v6285
      %v6951 = vunpack.c.h.b16 %v6285
      %v6952 = vunpack.c.l.b16 %v6286
      %v6953 = vunpack.c.l.b16 %v6287
      %v6954 = vunpack.c.h.b16 %v6287
      %v6955 = vunpack.c.l.b16 %v6288
      %v6956 = vunpack.c.l.b16 %v6289
      %v6957 = vunpack.c.h.b16 %v6289
      %v6958 = vunpack.c.l.b16 %v6290
      %v6959 = vunpack.c.l.b16 %v6291
      %v6960 = vunpack.c.h.b16 %v6291
      %v6961 = vunpack.c.l.b16 %v6292
      %v6962 = vunpack.c.l.b16 %v6293
      %v6963 = vunpack.c.h.b16 %v6293
      %v6964 = vunpack.c.l.b16 %v6294
      %v6965 = vunpack.c.l.b16 %v6295
      %v6966 = vunpack.c.h.b16 %v6295
      %v6967 = vunpack.c.l.b16 %v6296
      %v6968 = vunpack.c.l.b16 %v6297
      %v6969 = vunpack.c.h.b16 %v6297
      %v6970 = vunpack.c.l.b16 %v6298
      %v6971 = vunpack.c.l.b16 %v6299
      %v6972 = vunpack.c.h.b16 %v6299
      %v6973 = vunpack.c.l.b16 %v6300
      %v6974 = vunpack.c.l.b16 %v6301
      %v6975 = vunpack.c.h.b16 %v6301
      %v6976 = vunpack.c.l.b16 %v6302
      %v6977 = vunpack.c.l.b16 %v6303
      %v6978 = vunpack.c.h.b16 %v6303
      %v6979 = vunpack.c.l.b16 %v6304
      %v6980 = vunpack.c.l.b16 %v6305
      %v6981 = vunpack.c.h.b16 %v6305
      %v6982 = vunpack.c.l.b16 %v6306
      %v6983 = vunpack.c.l.b16 %v6307
      %v6984 = vunpack.c.h.b16 %v6307
      %v6985 = vunpack.c.l.b16 %v6308
      %v6986 = vunpack.c.l.b16 %v6309
      %v6987 = vunpack.c.h.b16 %v6309
      %v6988 = vunpack.c.l.b16 %v6310
      %v6989 = vunpack.c.l.b16 %v6311
      %v6990 = vunpack.c.h.b16 %v6311
      %v6991 = vunpack.c.l.b16 %v6312
      %v6992 = vunpack.c.l.b16 %v6313
      %v6993 = vunpack.c.h.b16 %v6313
      %v6994 = vunpack.c.l.b16 %v6314
      %v6995 = vunpack.c.l.b16 %v6315
      %v6996 = vunpack.c.h.b16 %v6315
      %v6997 = vunpack.c.l.b16 %v6316
      %v6998 = vunpack.c.l.b16 %v6317
      %v6999 = vunpack.c.h.b16 %v6317
      %v7000 = vunpack.c.l.b16 %v6318
      %v7001 = vunpack.c.l.b16 %v6319
      %v7002 = vunpack.c.h.b16 %v6319
      %v7003 = vunpack.c.l.b16 %v6320
      %v7004 = vunpack.c.l.b16 %v6321
      %v7005 = vunpack.c.h.b16 %v6321
      %v7006 = vunpack.c.l.b16 %v6322
      %v7007 = vunpack.c.l.b16 %v6323
      %v7008 = vunpack.c.h.b16 %v6323
      %v7009 = vunpack.c.l.b16 %v6324
      %v7010 = vunpack.c.l.b16 %v6325
      %v7011 = vunpack.c.h.b16 %v6325
      %v7012 = vunpack.c.l.b16 %v6326
      %v7013 = vunpack.c.l.b16 %v6327
      %v7014 = vunpack.c.h.b16 %v6327
      %v7015 = vunpack.c.l.b16 %v6328
      %v7016 = vunpack.c.l.b16 %v6329
      %v7017 = vunpack.c.h.b16 %v6329
      %v7018 = vunpack.c.l.b16 %v6330
      %v7019 = vunpack.c.l.b16 %v6331
      %v7020 = vunpack.c.h.b16 %v6331
      %v7021 = vunpack.c.l.b16 %v6332
      %v7022 = vunpack.c.l.b16 %v6333
      %v7023 = vunpack.c.h.b16 %v6333
      %v7024 = vunpack.c.l.b16 %v6334
      %v7025 = vunpack.c.l.b16 %v6335
      %v7026 = vunpack.c.h.b16 %v6335
      %v7027 = vunpack.c.l.b16 %v6336
      %v7028 = vunpack.c.l.b16 %v6337
      %v7029 = vunpack.c.h.b16 %v6337
      %v7030 = vunpack.c.l.b16 %v6338
      %v7031 = vunpack.c.l.b16 %v6339
      %v7032 = vunpack.c.h.b16 %v6339
      %v7033 = vunpack.c.l.b16 %v6340
      %v7034 = vunpack.c.l.b16 %v6341
      %v7035 = vunpack.c.h.b16 %v6341
      %v7036 = vunpack.c.l.b16 %v6342
      %v7037 = vunpack.c.l.b16 %v6343
      %v7038 = vunpack.c.h.b16 %v6343
      %v7039 = vunpack.c.l.b16 %v6344
      %v7040 = vunpack.c.l.b16 %v6345
      %v7041 = vunpack.c.h.b16 %v6345
      %v7042 = vunpack.c.l.b16 %v6346
      %v7043 = vunpack.c.l.b16 %v6347
      %v7044 = vunpack.c.h.b16 %v6347
      %v7045 = vunpack.c.l.b16 %v6348
      %v7046 = vunpack.c.l.b16 %v6349
      %v7047 = vunpack.c.h.b16 %v6349
      %v7048 = vunpack.c.l.b16 %v6350
      %v7049 = vunpack.c.l.b16 %v6351
      %v7050 = vunpack.c.h.b16 %v6351
      %v7051 = vunpack.c.l.b16 %v6352
      %v7052 = vunpack.c.l.b16 %v6353
      %v7053 = vunpack.c.h.b16 %v6353
      %v7054 = vunpack.c.l.b16 %v6354
      %v7055 = vunpack.c.l.b16 %v6355
      %v7056 = vunpack.c.h.b16 %v6355
      %v7057 = vunpack.c.l.b16 %v6356
      %v7058 = vunpack.c.l.b16 %v6357
      %v7059 = vunpack.c.h.b16 %v6357
      %v7060 = vunpack.c.l.b16 %v6358
      %v7061 = vunpack.c.l.b16 %v6359
      %v7062 = vunpack.c.h.b16 %v6359
      %v7063 = vunpack.c.l.b16 %v6360
      %v7064 = vunpack.c.l.b16 %v6361
      %v7065 = vunpack.c.h.b16 %v6361
      %v7066 = vunpack.c.l.b16 %v6362
      %v7067 = vunpack.c.l.b16 %v6363
      %v7068 = vunpack.c.h.b16 %v6363
      %v7069 = vunpack.c.l.b16 %v6364
      %v7070 = vunpack.c.l.b16 %v6365
      %v7071 = vunpack.c.h.b16 %v6365
      %v7072 = vunpack.c.l.b16 %v6366
      %v7073 = vunpack.c.l.b16 %v6367
      %v7074 = vunpack.c.h.b16 %v6367
      %v7075 = vunpack.c.l.b16 %v6368
      %v7076 = vunpack.c.l.b16 %v6369
      %v7077 = vunpack.c.h.b16 %v6369
      %v7078 = vunpack.c.l.b16 %v6370
      %v7079 = vunpack.c.l.b16 %v6371
      %v7080 = vunpack.c.h.b16 %v6371
      %v7081 = vunpack.c.l.b16 %v6372
      %v7082 = vunpack.c.l.b16 %v6373
      %v7083 = vunpack.c.h.b16 %v6373
      %v7084 = vunpack.c.l.b16 %v6374
      %v7085 = vunpack.c.l.b16 %v6375
      %v7086 = vunpack.c.h.b16 %v6375
      %v7087 = vunpack.c.l.b16 %v6376
      %v7088 = vunpack.c.l.b16 %v6377
      %v7089 = vunpack.c.h.b16 %v6377
      %v7090 = vunpack.c.l.b16 %v6378
      %v7091 = vunpack.c.l.b16 %v6379
      %v7092 = vunpack.c.h.b16 %v6379
      %v7093 = vunpack.c.l.b16 %v6380
      %v7094 = vunpack.c.l.b16 %v6381
      %v7095 = vunpack.c.h.b16 %v6381
      %v7096 = vunpack.c.l.b16 %v6382
      %v7097 = vunpack.c.l.b16 %v6383
      %v7098 = vunpack.c.h.b16 %v6383
      %v7099 = vunpack.c.l.b16 %v6384
      %v7100 = vunpack.c.l.b16 %v6385
      %v7101 = vunpack.c.h.b16 %v6385
      %v7102 = vunpack.c.l.b16 %v6386
      %v7103 = vunpack.c.l.b16 %v6387
      %v7104 = vunpack.c.h.b16 %v6387
      %v7105 = vunpack.c.l.b16 %v6388
      %v7106 = vunpack.c.l.b16 %v6389
      %v7107 = vunpack.c.h.b16 %v6389
      %v7108 = vunpack.c.l.b16 %v6390
      %v7109 = vunpack.c.l.b16 %v6391
      %v7110 = vunpack.c.h.b16 %v6391
      %v7111 = vunpack.c.l.b16 %v6392
      %v7112 = vunpack.c.l.b16 %v6393
      %v7113 = vunpack.c.h.b16 %v6393
      %v7114 = vunpack.c.l.b16 %v6394
      %v7115 = vunpack.c.l.b16 %v6395
      %v7116 = vunpack.c.h.b16 %v6395
      %v7117 = vunpack.c.l.b16 %v6396
      %v7118 = vunpack.c.l.b16 %v6397
      %v7119 = vunpack.c.h.b16 %v6397
      %v7120 = vunpack.c.l.b16 %v6398
      %v7121 = vunpack.c.l.b16 %v6399
      %v7122 = vunpack.c.h.b16 %v6399
      %v7123 = vunpack.c.l.b16 %v6400
      %v7124 = vunpack.c.l.b16 %v6401
      %v7125 = vunpack.c.h.b16 %v6401
      %v7126 = vunpack.c.l.b16 %v6402
      %v7127 = vunpack.c.l.b16 %v6403
      %v7128 = vunpack.c.h.b16 %v6403
      %v7129 = vunpack.c.l.b16 %v6404
      %v7130 = vunpack.c.l.b16 %v6405
      %v7131 = vunpack.c.h.b16 %v6405
      %v7132 = vunpack.c.l.b16 %v6406
      %v7133 = vunpack.c.l.b16 %v6407
      %v7134 = vunpack.c.h.b16 %v6407
      %v7135 = vunpack.c.l.b16 %v6408
      %v7136 = vunpack.c.l.b16 %v6409
      %v7137 = vunpack.c.h.b16 %v6409
      %v7138 = vunpack.c.l.b16 %v6410
      %v7139 = vunpack.c.l.b16 %v6411
      %v7140 = vunpack.c.h.b16 %v6411
      %v7141 = vunpack.c.l.b16 %v6412
      %v7142 = vunpack.c.l.b16 %v6413
      %v7143 = vunpack.c.h.b16 %v6413
      %v7144 = vunpack.c.l.b16 %v6414
      %v7145 = vunpack.c.l.b16 %v6415
      %v7146 = vunpack.c.h.b16 %v6415
      %v7147 = vunpack.c.l.b16 %v6416
      %v7148 = vunpack.c.l.b16 %v6417
      %v7149 = vunpack.c.h.b16 %v6417
      %v7150 = vunpack.c.l.b16 %v6418
      %v7151 = vunpack.c.l.b16 %v6419
      %v7152 = vunpack.c.h.b16 %v6419
      %v7153 = vunpack.c.l.b16 %v6420
      %v7154 = vunpack.c.l.b16 %v6421
      %v7155 = vunpack.c.h.b16 %v6421
      %v7156 = vunpack.c.l.b16 %v6422
      %v7157 = vunpack.c.l.b16 %v6423
      %v7158 = vunpack.c.h.b16 %v6423
      %v7159 = vunpack.c.l.b16 %v6424
      %v7160 = vunpack.c.l.b16 %v6425
      %v7161 = vunpack.c.h.b16 %v6425
      %v7162 = vunpack.c.l.b16 %v6426
      %v7163 = vunpack.c.l.b16 %v6427
      %v7164 = vunpack.c.h.b16 %v6427
      %v7165 = vunpack.c.l.b16 %v6428
      %v7166 = vunpack.c.l.b16 %v6429
      %v7167 = vunpack.c.h.b16 %v6429
      %v7168 = vunpack.c.l.b16 %v6430
      %v7169 = vunpack.c.l.b16 %v6431
      %v7170 = vunpack.c.h.b16 %v6431
      %v7171 = vunpack.c.l.b16 %v6432
      %v7172 = vunpack.c.l.b16 %v6433
      %v7173 = vunpack.c.h.b16 %v6433
      %v7174 = vunpack.c.l.b16 %v6434
      %v7175 = vunpack.c.l.b16 %v6435
      %v7176 = vunpack.c.h.b16 %v6435
      %v7177 = vunpack.c.l.b16 %v6436
      %v7178 = vunpack.c.l.b16 %v6437
      %v7179 = vunpack.c.h.b16 %v6437
      %v7180 = vunpack.c.l.b16 %v6438
      %v7181 = vunpack.c.l.b16 %v6439
      %v7182 = vunpack.c.h.b16 %v6439
      %v7183 = vunpack.c.l.b16 %v6440
      %v7184 = vunpack.c.l.b16 %v6441
      %v7185 = vunpack.c.h.b16 %v6441
      %v7186 = vunpack.c.l.b16 %v6442
      %v7187 = vunpack.c.l.b16 %v6443
      %v7188 = vunpack.c.h.b16 %v6443
      %v7189 = vunpack.c.l.b16 %v6444
      %v7190 = vunpack.c.l.b16 %v6445
      %v7191 = vunpack.c.h.b16 %v6445
      %v7192 = vunpack.c.l.b16 %v6446
      %v7193 = vunpack.c.l.b16 %v6447
      %v7194 = vunpack.c.h.b16 %v6447
      %v7195 = vunpack.c.l.b16 %v6448
      %v7196 = vunpack.c.l.b16 %v6449
      %v7197 = vunpack.c.h.b16 %v6449
      %v7198 = vunpack.c.l.b16 %v6450
      %v7199 = vunpack.c.l.b16 %v6451
      %v7200 = vunpack.c.h.b16 %v6451
      %v7201 = vunpack.c.l.b16 %v6452
      %v7202 = vunpack.c.l.b16 %v6453
      %v7203 = vunpack.c.h.b16 %v6453
      %v7204 = vunpack.c.l.b16 %v6454
      %v7205 = vunpack.c.l.b16 %v6455
      %v7206 = vunpack.c.h.b16 %v6455
      %v7207 = vunpack.c.l.b16 %v6456
      %v7208 = vunpack.c.l.b16 %v6457
      %v7209 = vunpack.c.h.b16 %v6457
      %v7210 = vunpack.c.l.b16 %v6458
      %v7211 = vunpack.c.l.b16 %v6459
      %v7212 = vunpack.c.h.b16 %v6459
      %v7213 = vunpack.c.l.b16 %v6460
      %v7214 = vunpack.c.l.b16 %v6461
      %v7215 = vunpack.c.h.b16 %v6461
      %v7216 = vunpack.c.l.b16 %v6462
      %v7217 = vunpack.c.l.b16 %v6463
      %v7218 = vunpack.c.h.b16 %v6463
      %v7219 = vunpack.c.l.b16 %v6464
      %v7220 = vpack.c.b16 %v6791, %v6788
      %v7221 = vpack.c.b16 %v6792, %v6789
      %v7222 = vpack.c.b16 %v6793, %v6790
      %v7223 = vpack.c.b16 %v6797, %v6794
      %v7224 = vpack.c.b16 %v6798, %v6795
      %v7225 = vpack.c.b16 %v6799, %v6796
      %v7226 = vpack.c.b16 %v6803, %v6800
      %v7227 = vpack.c.b16 %v6804, %v6801
      %v7228 = vpack.c.b16 %v6805, %v6802
      %v7229 = vpack.c.b16 %v6809, %v6806
      %v7230 = vpack.c.b16 %v6810, %v6807
      %v7231 = vpack.c.b16 %v6811, %v6808
      %v7232 = vpack.c.b16 %v6815, %v6812
      %v7233 = vpack.c.b16 %v6816, %v6813
      %v7234 = vpack.c.b16 %v6817, %v6814
      %v7235 = vpack.c.b16 %v6821, %v6818
      %v7236 = vpack.c.b16 %v6822, %v6819
      %v7237 = vpack.c.b16 %v6823, %v6820
      %v7238 = vpack.c.b16 %v6827, %v6824
      %v7239 = vpack.c.b16 %v6828, %v6825
      %v7240 = vpack.c.b16 %v6829, %v6826
      %v7241 = vpack.c.b16 %v6833, %v6830
      %v7242 = vpack.c.b16 %v6834, %v6831
      %v7243 = vpack.c.b16 %v6835, %v6832
      %v7244 = vpack.c.b16 %v6839, %v6836
      %v7245 = vpack.c.b16 %v6840, %v6837
      %v7246 = vpack.c.b16 %v6841, %v6838
      %v7247 = vpack.c.b16 %v6845, %v6842
      %v7248 = vpack.c.b16 %v6846, %v6843
      %v7249 = vpack.c.b16 %v6847, %v6844
      %v7250 = vpack.c.b16 %v6851, %v6848
      %v7251 = vpack.c.b16 %v6852, %v6849
      %v7252 = vpack.c.b16 %v6853, %v6850
      %v7253 = vpack.c.b16 %v6857, %v6854
      %v7254 = vpack.c.b16 %v6858, %v6855
      %v7255 = vpack.c.b16 %v6859, %v6856
      %v7256 = vpack.c.b16 %v6863, %v6860
      %v7257 = vpack.c.b16 %v6864, %v6861
      %v7258 = vpack.c.b16 %v6865, %v6862
      %v7259 = vpack.c.b16 %v6869, %v6866
      %v7260 = vpack.c.b16 %v6870, %v6867
      %v7261 = vpack.c.b16 %v6871, %v6868
      %v7262 = vpack.c.b16 %v6875, %v6872
      %v7263 = vpack.c.b16 %v6876, %v6873
      %v7264 = vpack.c.b16 %v6877, %v6874
      %v7265 = vpack.c.b16 %v6881, %v6878
      %v7266 = vpack.c.b16 %v6882, %v6879
      %v7267 = vpack.c.b16 %v6883, %v6880
      %v7268 = vpack.c.b16 %v6887, %v6884
      %v7269 = vpack.c.b16 %v6888, %v6885
      %v7270 = vpack.c.b16 %v6889, %v6886
      %v7271 = vpack.c.b16 %v6893, %v6890
      %v7272 = vpack.c.b16 %v6894, %v6891
      %v7273 = vpack.c.b16 %v6895, %v6892
      %v7274 = vpack.c.b16 %v6899, %v6896
      %v7275 = vpack.c.b16 %v6900, %v6897
      %v7276 = vpack.c.b16 %v6901, %v6898
      %v7277 = vpack.c.b16 %v6905, %v6902
      %v7278 = vpack.c.b16 %v6906, %v6903
      %v7279 = vpack.c.b16 %v6907, %v6904
      %v7280 = vpack.c.b16 %v6911, %v6908
      %v7281 = vpack.c.b16 %v6912, %v6909
      %v7282 = vpack.c.b16 %v6913, %v6910
      %v7283 = vpack.c.b16 %v6917, %v6914
      %v7284 = vpack.c.b16 %v6918, %v6915
      %v7285 = vpack.c.b16 %v6919, %v6916
      %v7286 = vpack.c.b16 %v6923, %v6920
      %v7287 = vpack.c.b16 %v6924, %v6921
      %v7288 = vpack.c.b16 %v6925, %v6922
      %v7289 = vpack.c.b16 %v6929, %v6926
      %v7290 = vpack.c.b16 %v6930, %v6927
      %v7291 = vpack.c.b16 %v6931, %v6928
      %v7292 = vpack.c.b16 %v6935, %v6932
      %v7293 = vpack.c.b16 %v6936, %v6933
      %v7294 = vpack.c.b16 %v6937, %v6934
      %v7295 = vpack.c.b16 %v6941, %v6938
      %v7296 = vpack.c.b16 %v6942, %v6939
      %v7297 = vpack.c.b16 %v6943, %v6940
      %v7298 = vpack.c.b16 %v6947, %v6944
      %v7299 = vpack.c.b16 %v6948, %v6945
      %v7300 = vpack.c.b16 %v6949, %v6946
      %v7301 = vpack.c.b16 %v6953, %v6950
      %v7302 = vpack.c.b16 %v6954, %v6951
      %v7303 = vpack.c.b16 %v6955, %v6952
      %v7304 = vpack.c.b16 %v6959, %v6956
      %v7305 = vpack.c.b16 %v6960, %v6957
      %v7306 = vpack.c.b16 %v6961, %v6958
      %v7307 = vpack.c.b16 %v6965, %v6962
      %v7308 = vpack.c.b16 %v6966, %v6963
      %v7309 = vpack.c.b16 %v6967, %v6964
      %v7310 = vpack.c.b16 %v6971, %v6968
      %v7311 = vpack.c.b16 %v6972, %v6969
      %v7312 = vpack.c.b16 %v6973, %v6970
      %v7313 = vpack.c.b16 %v6977, %v6974
      %v7314 = vpack.c.b16 %v6978, %v6975
      %v7315 = vpack.c.b16 %v6979, %v6976
      %v7316 = vpack.c.b16 %v6983, %v6980
      %v7317 = vpack.c.b16 %v6984, %v6981
      %v7318 = vpack.c.b16 %v6985, %v6982
      %v7319 = vpack.c.b16 %v6989, %v6986
      %v7320 = vpack.c.b16 %v6990, %v6987
      %v7321 = vpack.c.b16 %v6991, %v6988
      %v7322 = vpack.c.b16 %v6995, %v6992
      %v7323 = vpack.c.b16 %v6996, %v6993
      %v7324 = vpack.c.b16 %v6997, %v6994
      %v7325 = vpack.c.b16 %v7001, %v6998
      %v7326 = vpack.c.b16 %v7002, %v6999
      %v7327 = vpack.c.b16 %v7003, %v7000
      %v7328 = vpack.c.b16 %v7007, %v7004
      %v7329 = vpack.c.b16 %v7008, %v7005
      %v7330 = vpack.c.b16 %v7009, %v7006
      %v7331 = vpack.c.b16 %v7013, %v7010
      %v7332 = vpack.c.b16 %v7014, %v7011
      %v7333 = vpack.c.b16 %v7015, %v7012
      %v7334 = vpack.c.b16 %v7019, %v7016
      %v7335 = vpack.c.b16 %v7020, %v7017
      %v7336 = vpack.c.b16 %v7021, %v7018
      %v7337 = vpack.c.b16 %v7025, %v7022
      %v7338 = vpack.c.b16 %v7026, %v7023
      %v7339 = vpack.c.b16 %v7027, %v7024
      %v7340 = vpack.c.b16 %v7031, %v7028
      %v7341 = vpack.c.b16 %v7032, %v7029
      %v7342 = vpack.c.b16 %v7033, %v7030
      %v7343 = vpack.c.b16 %v7037, %v7034
      %v7344 = vpack.c.b16 %v7038, %v7035
      %v7345 = vpack.c.b16 %v7039, %v7036
      %v7346 = vpack.c.b16 %v7043, %v7040
      %v7347 = vpack.c.b16 %v7044, %v7041
      %v7348 = vpack.c.b16 %v7045, %v7042
      %v7349 = vpack.c.b16 %v7049, %v7046
      %v7350 = vpack.c.b16 %v7050, %v7047
      %v7351 = vpack.c.b16 %v7051, %v7048
      %v7352 = vpack.c.b16 %v7055, %v7052
      %v7353 = vpack.c.b16 %v7056, %v7053
      %v7354 = vpack.c.b16 %v7057, %v7054
      %v7355 = vpack.c.b16 %v7061, %v7058
      %v7356 = vpack.c.b16 %v7062, %v7059
      %v7357 = vpack.c.b16 %v7063, %v7060
      %v7358 = vpack.c.b16 %v7067, %v7064
      %v7359 = vpack.c.b16 %v7068, %v7065
      %v7360 = vpack.c.b16 %v7069, %v7066
      %v7361 = vpack.c.b16 %v7073, %v7070
      %v7362 = vpack.c.b16 %v7074, %v7071
      %v7363 = vpack.c.b16 %v7075, %v7072
      %v7364 = vpack.c.b16 %v7079, %v7076
      %v7365 = vpack.c.b16 %v7080, %v7077
      %v7366 = vpack.c.b16 %v7081, %v7078
      %v7367 = vpack.c.b16 %v7085, %v7082
      %v7368 = vpack.c.b16 %v7086, %v7083
      %v7369 = vpack.c.b16 %v7087, %v7084
      %v7370 = vpack.c.b16 %v7091, %v7088
      %v7371 = vpack.c.b16 %v7092, %v7089
      %v7372 = vpack.c.b16 %v7093, %v7090
      %v7373 = vpack.c.b16 %v7097, %v7094
      %v7374 = vpack.c.b16 %v7098, %v7095
      %v7375 = vpack.c.b16 %v7099, %v7096
      %v7376 = vpack.c.b16 %v7103, %v7100
      %v7377 = vpack.c.b16 %v7104, %v7101
      %v7378 = vpack.c.b16 %v7105, %v7102
      %v7379 = vpack.c.b16 %v7109, %v7106
      %v7380 = vpack.c.b16 %v7110, %v7107
      %v7381 = vpack.c.b16 %v7111, %v7108
      %v7382 = vpack.c.b16 %v7115, %v7112
      %v7383 = vpack.c.b16 %v7116, %v7113
      %v7384 = vpack.c.b16 %v7117, %v7114
      %v7385 = vpack.c.b16 %v7121, %v7118
      %v7386 = vpack.c.b16 %v7122, %v7119
      %v7387 = vpack.c.b16 %v7123, %v7120
      %v7388 = vpack.c.b16 %v7127, %v7124
      %v7389 = vpack.c.b16 %v7128, %v7125
      %v7390 = vpack.c.b16 %v7129, %v7126
      %v7391 = vpack.c.b16 %v7133, %v7130
      %v7392 = vpack.c.b16 %v7134, %v7131
      %v7393 = vpack.c.b16 %v7135, %v7132
      %v7394 = vpack.c.b16 %v7139, %v7136
      %v7395 = vpack.c.b16 %v7140, %v7137
      %v7396 = vpack.c.b16 %v7141, %v7138
      %v7397 = vpack.c.b16 %v7145, %v7142
      %v7398 = vpack.c.b16 %v7146, %v7143
      %v7399 = vpack.c.b16 %v7147, %v7144
      %v7400 = vpack.c.b16 %v7151, %v7148
      %v7401 = vpack.c.b16 %v7152, %v7149
      %v7402 = vpack.c.b16 %v7153, %v7150
      %v7403 = vpack.c.b16 %v7157, %v7154
      %v7404 = vpack.c.b16 %v7158, %v7155
      %v7405 = vpack.c.b16 %v7159, %v7156
      %v7406 = vpack.c.b16 %v7163, %v7160
      %v7407 = vpack.c.b16 %v7164, %v7161
      %v7408 = vpack.c.b16 %v7165, %v7162
      %v7409 = vpack.c.b16 %v7169, %v7166
      %v7410 = vpack.c.b16 %v7170, %v7167
      %v7411 = vpack.c.b16 %v7171, %v7168
      %v7412 = vpack.c.b16 %v7175, %v7172
      %v7413 = vpack.c.b16 %v7176, %v7173
      %v7414 = vpack.c.b16 %v7177, %v7174
      %v7415 = vpack.c.b16 %v7181, %v7178
      %v7416 = vpack.c.b16 %v7182, %v7179
      %v7417 = vpack.c.b16 %v7183, %v7180
      %v7418 = vpack.c.b16 %v7187, %v7184
      %v7419 = vpack.c.b16 %v7188, %v7185
      %v7420 = vpack.c.b16 %v7189, %v7186
      %v7421 = vpack.c.b16 %v7193, %v7190
      %v7422 = vpack.c.b16 %v7194, %v7191
      %v7423 = vpack.c.b16 %v7195, %v7192
      %v7424 = vpack.c.b16 %v7199, %v7196
      %v7425 = vpack.c.b16 %v7200, %v7197
      %v7426 = vpack.c.b16 %v7201, %v7198
      %v7427 = vpack.c.b16 %v7205, %v7202
      %v7428 = vpack.c.b16 %v7206, %v7203
      %v7429 = vpack.c.b16 %v7207, %v7204
      %v7430 = vpack.c.b16 %v7211, %v7208
      %v7431 = vpack.c.b16 %v7212, %v7209
      %v7432 = vpack.c.b16 %v7213, %v7210
      %v7433 = vpack.c.b16 %v7217, %v7214
      %v7434 = vpack.c.b16 %v7218, %v7215
      %v7435 = vpack.c.b16 %v7219, %v7216
      %7652 = vmatpush.bf16.msra.mxu0 %v7241
      %7653 = vmatpush.bf16.msra.mxu0 %v7238
      %7654 = vmatpush.bf16.msra.mxu0 %v7235
      %7655 = vmatpush.bf16.msra.mxu0 %v7232
      %7656 = vmatpush.bf16.msra.mxu0 %v7229
      %7657 = vmatpush.bf16.msra.mxu0 %v7226
      %7658 = vmatpush.bf16.msra.mxu0 %v7223
      %7659 = vmatpush.bf16.msra.mxu0 %v7220
      %7660 = vmatmul.bf16.gmra.mxu0 %v6484
      %v7661 = vpop.f32.mrf.mxu0
      %v7662 = vadd.f32 %v6494, %v7661
      %v7663 = vpop.f32.mrf.mxu0
      %v7664 = vadd.f32 %v6494, %v7663
      %7665 = vdwg.mxu0
      %7666 = vmatpush.bf16.msra.mxu0 %v7265
      %7667 = vmatpush.bf16.msra.mxu0 %v7262
      %7668 = vmatpush.bf16.msra.mxu0 %v7259
      %7669 = vmatpush.bf16.msra.mxu0 %v7256
      %7670 = vmatpush.bf16.msra.mxu0 %v7253
      %7671 = vmatpush.bf16.msra.mxu0 %v7250
      %7672 = vmatpush.bf16.msra.mxu0 %v7247
      %7673 = vmatpush.bf16.msra.mxu0 %v7244
      %7674 = vmatmul.bf16.gmra.mxu0 %v6485
      %v7675 = vpop.f32.mrf.mxu0
      %v7676 = vadd.f32 %v7662, %v7675
      %v7677 = vpop.f32.mrf.mxu0
      %v7678 = vadd.f32 %v7664, %v7677
      %7679 = vdwg.mxu0
      %7680 = vmatpush.bf16.msra.mxu0 %v7289
      %7681 = vmatpush.bf16.msra.mxu0 %v7286
      %7682 = vmatpush.bf16.msra.mxu0 %v7283
      %7683 = vmatpush.bf16.msra.mxu0 %v7280
      %7684 = vmatpush.bf16.msra.mxu0 %v7277
      %7685 = vmatpush.bf16.msra.mxu0 %v7274
      %7686 = vmatpush.bf16.msra.mxu0 %v7271
      %7687 = vmatpush.bf16.msra.mxu0 %v7268
      %7688 = vmatmul.bf16.gmra.mxu0 %v6486
      %v7689 = vpop.f32.mrf.mxu0
      %v7690 = vadd.f32 %v7676, %v7689
      %v7691 = vpop.f32.mrf.mxu0
      %v7692 = vadd.f32 %v7678, %v7691
      %7693 = vdwg.mxu0
      %7694 = vmatpush.bf16.msra.mxu0 %v7313
      %7695 = vmatpush.bf16.msra.mxu0 %v7310
      %7696 = vmatpush.bf16.msra.mxu0 %v7307
      %7697 = vmatpush.bf16.msra.mxu0 %v7304
      %7698 = vmatpush.bf16.msra.mxu0 %v7301
      %7699 = vmatpush.bf16.msra.mxu0 %v7298
      %7700 = vmatpush.bf16.msra.mxu0 %v7295
      %7701 = vmatpush.bf16.msra.mxu0 %v7292
      %7702 = vmatmul.bf16.gmra.mxu0 %v6487
      %v7703 = vpop.f32.mrf.mxu0
      %v7704 = vadd.f32 %v7690, %v7703
      %v7705 = vpop.f32.mrf.mxu0
      %v7706 = vadd.f32 %v7692, %v7705
      %7707 = vdwg.mxu0
      %7708 = vmatpush.bf16.msra.mxu0 %v7337
      %7709 = vmatpush.bf16.msra.mxu0 %v7334
      %7710 = vmatpush.bf16.msra.mxu0 %v7331
      %7711 = vmatpush.bf16.msra.mxu0 %v7328
      %7712 = vmatpush.bf16.msra.mxu0 %v7325
      %7713 = vmatpush.bf16.msra.mxu0 %v7322
      %7714 = vmatpush.bf16.msra.mxu0 %v7319
      %7715 = vmatpush.bf16.msra.mxu0 %v7316
      %7716 = vmatmul.bf16.gmra.mxu0 %v6488
      %v7717 = vpop.f32.mrf.mxu0
      %v7718 = vadd.f32 %v7704, %v7717
      %v7719 = vpop.f32.mrf.mxu0
      %v7720 = vadd.f32 %v7706, %v7719
      %7721 = vdwg.mxu0
      %7722 = vmatpush.bf16.msra.mxu0 %v7361
      %7723 = vmatpush.bf16.msra.mxu0 %v7358
      %7724 = vmatpush.bf16.msra.mxu0 %v7355
      %7725 = vmatpush.bf16.msra.mxu0 %v7352
      %7726 = vmatpush.bf16.msra.mxu0 %v7349
      %7727 = vmatpush.bf16.msra.mxu0 %v7346
      %7728 = vmatpush.bf16.msra.mxu0 %v7343
      %7729 = vmatpush.bf16.msra.mxu0 %v7340
      %7730 = vmatmul.bf16.gmra.mxu0 %v6489
      %v7731 = vpop.f32.mrf.mxu0
      %v7732 = vadd.f32 %v7718, %v7731
      %v7733 = vpop.f32.mrf.mxu0
      %v7734 = vadd.f32 %v7720, %v7733
      %7735 = vdwg.mxu0
      %7736 = vmatpush.bf16.msra.mxu0 %v7385
      %7737 = vmatpush.bf16.msra.mxu0 %v7382
      %7738 = vmatpush.bf16.msra.mxu0 %v7379
      %7739 = vmatpush.bf16.msra.mxu0 %v7376
      %7740 = vmatpush.bf16.msra.mxu0 %v7373
      %7741 = vmatpush.bf16.msra.mxu0 %v7370
      %7742 = vmatpush.bf16.msra.mxu0 %v7367
      %7743 = vmatpush.bf16.msra.mxu0 %v7364
      %7744 = vmatmul.bf16.gmra.mxu0 %v6490
      %v7745 = vpop.f32.mrf.mxu0
      %v7746 = vadd.f32 %v7732, %v7745
      %v7747 = vpop.f32.mrf.mxu0
      %v7748 = vadd.f32 %v7734, %v7747
      %7749 = vdwg.mxu0
      %7750 = vmatpush.bf16.msra.mxu0 %v7409
      %7751 = vmatpush.bf16.msra.mxu0 %v7406
      %7752 = vmatpush.bf16.msra.mxu0 %v7403
      %7753 = vmatpush.bf16.msra.mxu0 %v7400
      %7754 = vmatpush.bf16.msra.mxu0 %v7397
      %7755 = vmatpush.bf16.msra.mxu0 %v7394
      %7756 = vmatpush.bf16.msra.mxu0 %v7391
      %7757 = vmatpush.bf16.msra.mxu0 %v7388
      %7758 = vmatmul.bf16.gmra.mxu0 %v6491
      %v7759 = vpop.f32.mrf.mxu0
      %v7760 = vadd.f32 %v7746, %v7759
      %v7761 = vpop.f32.mrf.mxu0
      %v7762 = vadd.f32 %v7748, %v7761
      %7763 = vdwg.mxu0
      %7764 = vmatpush.bf16.msra.mxu0 %v7433
      %7765 = vmatpush.bf16.msra.mxu0 %v7430
      %7766 = vmatpush.bf16.msra.mxu0 %v7427
      %7767 = vmatpush.bf16.msra.mxu0 %v7424
      %7768 = vmatpush.bf16.msra.mxu0 %v7421
      %7769 = vmatpush.bf16.msra.mxu0 %v7418
      %7770 = vmatpush.bf16.msra.mxu0 %v7415
      %7771 = vmatpush.bf16.msra.mxu0 %v7412
      %7772 = vmatmul.bf16.gmra.mxu0 %v6492
      %v7773 = vpop.f32.mrf.mxu0
      %v7774 = vadd.f32 %v7760, %v7773
      %v7775 = vpop.f32.mrf.mxu0
      %v7776 = vadd.f32 %v7762, %v7775
      %7777 = vdwg.mxu0
      %7778 = vmatpush.bf16.msra.mxu0 %v7242
      %7779 = vmatpush.bf16.msra.mxu0 %v7239
      %7780 = vmatpush.bf16.msra.mxu0 %v7236
      %7781 = vmatpush.bf16.msra.mxu0 %v7233
      %7782 = vmatpush.bf16.msra.mxu0 %v7230
      %7783 = vmatpush.bf16.msra.mxu0 %v7227
      %7784 = vmatpush.bf16.msra.mxu0 %v7224
      %7785 = vmatpush.bf16.msra.mxu0 %v7221
      %7786 = vmatmul.bf16.gmra.mxu0 %v6484
      %v7787 = vpop.f32.mrf.mxu0
      %v7788 = vadd.f32 %v6495, %v7787
      %v7789 = vpop.f32.mrf.mxu0
      %v7790 = vadd.f32 %v6495, %v7789
      %7791 = vdwg.mxu0
      %7792 = vmatpush.bf16.msra.mxu0 %v7266
      %7793 = vmatpush.bf16.msra.mxu0 %v7263
      %7794 = vmatpush.bf16.msra.mxu0 %v7260
      %7795 = vmatpush.bf16.msra.mxu0 %v7257
      %7796 = vmatpush.bf16.msra.mxu0 %v7254
      %7797 = vmatpush.bf16.msra.mxu0 %v7251
      %7798 = vmatpush.bf16.msra.mxu0 %v7248
      %7799 = vmatpush.bf16.msra.mxu0 %v7245
      %7800 = vmatmul.bf16.gmra.mxu0 %v6485
      %v7801 = vpop.f32.mrf.mxu0
      %v7802 = vadd.f32 %v7788, %v7801
      %v7803 = vpop.f32.mrf.mxu0
      %v7804 = vadd.f32 %v7790, %v7803
      %7805 = vdwg.mxu0
      %7806 = vmatpush.bf16.msra.mxu0 %v7290
      %7807 = vmatpush.bf16.msra.mxu0 %v7287
      %7808 = vmatpush.bf16.msra.mxu0 %v7284
      %7809 = vmatpush.bf16.msra.mxu0 %v7281
      %7810 = vmatpush.bf16.msra.mxu0 %v7278
      %7811 = vmatpush.bf16.msra.mxu0 %v7275
      %7812 = vmatpush.bf16.msra.mxu0 %v7272
      %7813 = vmatpush.bf16.msra.mxu0 %v7269
      %7814 = vmatmul.bf16.gmra.mxu0 %v6486
      %v7815 = vpop.f32.mrf.mxu0
      %v7816 = vadd.f32 %v7802, %v7815
      %v7817 = vpop.f32.mrf.mxu0
      %v7818 = vadd.f32 %v7804, %v7817
      %7819 = vdwg.mxu0
      %7820 = vmatpush.bf16.msra.mxu0 %v7314
      %7821 = vmatpush.bf16.msra.mxu0 %v7311
      %7822 = vmatpush.bf16.msra.mxu0 %v7308
      %7823 = vmatpush.bf16.msra.mxu0 %v7305
      %7824 = vmatpush.bf16.msra.mxu0 %v7302
      %7825 = vmatpush.bf16.msra.mxu0 %v7299
      %7826 = vmatpush.bf16.msra.mxu0 %v7296
      %7827 = vmatpush.bf16.msra.mxu0 %v7293
      %7828 = vmatmul.bf16.gmra.mxu0 %v6487
      %v7829 = vpop.f32.mrf.mxu0
      %v7830 = vadd.f32 %v7816, %v7829
      %v7831 = vpop.f32.mrf.mxu0
      %v7832 = vadd.f32 %v7818, %v7831
      %7833 = vdwg.mxu0
      %7834 = vmatpush.bf16.msra.mxu0 %v7338
      %7835 = vmatpush.bf16.msra.mxu0 %v7335
      %7836 = vmatpush.bf16.msra.mxu0 %v7332
      %7837 = vmatpush.bf16.msra.mxu0 %v7329
      %7838 = vmatpush.bf16.msra.mxu0 %v7326
      %7839 = vmatpush.bf16.msra.mxu0 %v7323
      %7840 = vmatpush.bf16.msra.mxu0 %v7320
      %7841 = vmatpush.bf16.msra.mxu0 %v7317
      %7842 = vmatmul.bf16.gmra.mxu0 %v6488
      %v7843 = vpop.f32.mrf.mxu0
      %v7844 = vadd.f32 %v7830, %v7843
      %v7845 = vpop.f32.mrf.mxu0
      %v7846 = vadd.f32 %v7832, %v7845
      %7847 = vdwg.mxu0
      %7848 = vmatpush.bf16.msra.mxu0 %v7362
      %7849 = vmatpush.bf16.msra.mxu0 %v7359
      %7850 = vmatpush.bf16.msra.mxu0 %v7356
      %7851 = vmatpush.bf16.msra.mxu0 %v7353
      %7852 = vmatpush.bf16.msra.mxu0 %v7350
      %7853 = vmatpush.bf16.msra.mxu0 %v7347
      %7854 = vmatpush.bf16.msra.mxu0 %v7344
      %7855 = vmatpush.bf16.msra.mxu0 %v7341
      %7856 = vmatmul.bf16.gmra.mxu0 %v6489
      %v7857 = vpop.f32.mrf.mxu0
      %v7858 = vadd.f32 %v7844, %v7857
      %v7859 = vpop.f32.mrf.mxu0
      %v7860 = vadd.f32 %v7846, %v7859
      %7861 = vdwg.mxu0
      %7862 = vmatpush.bf16.msra.mxu0 %v7386
      %7863 = vmatpush.bf16.msra.mxu0 %v7383
      %7864 = vmatpush.bf16.msra.mxu0 %v7380
      %7865 = vmatpush.bf16.msra.mxu0 %v7377
      %7866 = vmatpush.bf16.msra.mxu0 %v7374
      %7867 = vmatpush.bf16.msra.mxu0 %v7371
      %7868 = vmatpush.bf16.msra.mxu0 %v7368
      %7869 = vmatpush.bf16.msra.mxu0 %v7365
      %7870 = vmatmul.bf16.gmra.mxu0 %v6490
      %v7871 = vpop.f32.mrf.mxu0
      %v7872 = vadd.f32 %v7858, %v7871
      %v7873 = vpop.f32.mrf.mxu0
      %v7874 = vadd.f32 %v7860, %v7873
      %7875 = vdwg.mxu0
      %7876 = vmatpush.bf16.msra.mxu0 %v7410
      %7877 = vmatpush.bf16.msra.mxu0 %v7407
      %7878 = vmatpush.bf16.msra.mxu0 %v7404
      %7879 = vmatpush.bf16.msra.mxu0 %v7401
      %7880 = vmatpush.bf16.msra.mxu0 %v7398
      %7881 = vmatpush.bf16.msra.mxu0 %v7395
      %7882 = vmatpush.bf16.msra.mxu0 %v7392
      %7883 = vmatpush.bf16.msra.mxu0 %v7389
      %7884 = vmatmul.bf16.gmra.mxu0 %v6491
      %v7885 = vpop.f32.mrf.mxu0
      %v7886 = vadd.f32 %v7872, %v7885
      %v7887 = vpop.f32.mrf.mxu0
      %v7888 = vadd.f32 %v7874, %v7887
      %7889 = vdwg.mxu0
      %7890 = vmatpush.bf16.msra.mxu0 %v7434
      %7891 = vmatpush.bf16.msra.mxu0 %v7431
      %7892 = vmatpush.bf16.msra.mxu0 %v7428
      %7893 = vmatpush.bf16.msra.mxu0 %v7425
      %7894 = vmatpush.bf16.msra.mxu0 %v7422
      %7895 = vmatpush.bf16.msra.mxu0 %v7419
      %7896 = vmatpush.bf16.msra.mxu0 %v7416
      %7897 = vmatpush.bf16.msra.mxu0 %v7413
      %7898 = vmatmul.bf16.gmra.mxu0 %v6492
      %v7899 = vpop.f32.mrf.mxu0
      %v7900 = vadd.f32 %v7886, %v7899
      %v7901 = vpop.f32.mrf.mxu0
      %v7902 = vadd.f32 %v7888, %v7901
      %7903 = vdwg.mxu0
      %7904 = vmatpush.bf16.msra.mxu0 %v7243
      %7905 = vmatpush.bf16.msra.mxu0 %v7240
      %7906 = vmatpush.bf16.msra.mxu0 %v7237
      %7907 = vmatpush.bf16.msra.mxu0 %v7234
      %7908 = vmatpush.bf16.msra.mxu0 %v7231
      %7909 = vmatpush.bf16.msra.mxu0 %v7228
      %7910 = vmatpush.bf16.msra.mxu0 %v7225
      %7911 = vmatpush.bf16.msra.mxu0 %v7222
      %7912 = vmatmul.bf16.gmra.mxu0 %v6484
      %v7913 = vpop.f32.mrf.mxu0
      %v7914 = vadd.f32 %v6496, %v7913
      %v7915 = vpop.f32.mrf.mxu0
      %v7916 = vadd.f32 %v6496, %v7915
      %7917 = vdwg.mxu0
      %7918 = vmatpush.bf16.msra.mxu0 %v7267
      %7919 = vmatpush.bf16.msra.mxu0 %v7264
      %7920 = vmatpush.bf16.msra.mxu0 %v7261
      %7921 = vmatpush.bf16.msra.mxu0 %v7258
      %7922 = vmatpush.bf16.msra.mxu0 %v7255
      %7923 = vmatpush.bf16.msra.mxu0 %v7252
      %7924 = vmatpush.bf16.msra.mxu0 %v7249
      %7925 = vmatpush.bf16.msra.mxu0 %v7246
      %7926 = vmatmul.bf16.gmra.mxu0 %v6485
      %v7927 = vpop.f32.mrf.mxu0
      %v7928 = vadd.f32 %v7914, %v7927
      %v7929 = vpop.f32.mrf.mxu0
      %v7930 = vadd.f32 %v7916, %v7929
      %7931 = vdwg.mxu0
      %7932 = vmatpush.bf16.msra.mxu0 %v7291
      %7933 = vmatpush.bf16.msra.mxu0 %v7288
      %7934 = vmatpush.bf16.msra.mxu0 %v7285
      %7935 = vmatpush.bf16.msra.mxu0 %v7282
      %7936 = vmatpush.bf16.msra.mxu0 %v7279
      %7937 = vmatpush.bf16.msra.mxu0 %v7276
      %7938 = vmatpush.bf16.msra.mxu0 %v7273
      %7939 = vmatpush.bf16.msra.mxu0 %v7270
      %7940 = vmatmul.bf16.gmra.mxu0 %v6486
      %v7941 = vpop.f32.mrf.mxu0
      %v7942 = vadd.f32 %v7928, %v7941
      %v7943 = vpop.f32.mrf.mxu0
      %v7944 = vadd.f32 %v7930, %v7943
      %7945 = vdwg.mxu0
      %7946 = vmatpush.bf16.msra.mxu0 %v7315
      %7947 = vmatpush.bf16.msra.mxu0 %v7312
      %7948 = vmatpush.bf16.msra.mxu0 %v7309
      %7949 = vmatpush.bf16.msra.mxu0 %v7306
      %7950 = vmatpush.bf16.msra.mxu0 %v7303
      %7951 = vmatpush.bf16.msra.mxu0 %v7300
      %7952 = vmatpush.bf16.msra.mxu0 %v7297
      %7953 = vmatpush.bf16.msra.mxu0 %v7294
      %7954 = vmatmul.bf16.gmra.mxu0 %v6487
      %v7955 = vpop.f32.mrf.mxu0
      %v7956 = vadd.f32 %v7942, %v7955
      %v7957 = vpop.f32.mrf.mxu0
      %v7958 = vadd.f32 %v7944, %v7957
      %7959 = vdwg.mxu0
      %7960 = vmatpush.bf16.msra.mxu0 %v7339
      %7961 = vmatpush.bf16.msra.mxu0 %v7336
      %7962 = vmatpush.bf16.msra.mxu0 %v7333
      %7963 = vmatpush.bf16.msra.mxu0 %v7330
      %7964 = vmatpush.bf16.msra.mxu0 %v7327
      %7965 = vmatpush.bf16.msra.mxu0 %v7324
      %7966 = vmatpush.bf16.msra.mxu0 %v7321
      %7967 = vmatpush.bf16.msra.mxu0 %v7318
      %7968 = vmatmul.bf16.gmra.mxu0 %v6488
      %v7969 = vpop.f32.mrf.mxu0
      %v7970 = vadd.f32 %v7956, %v7969
      %v7971 = vpop.f32.mrf.mxu0
      %v7972 = vadd.f32 %v7958, %v7971
      %7973 = vdwg.mxu0
      %7974 = vmatpush.bf16.msra.mxu0 %v7363
      %7975 = vmatpush.bf16.msra.mxu0 %v7360
      %7976 = vmatpush.bf16.msra.mxu0 %v7357
      %7977 = vmatpush.bf16.msra.mxu0 %v7354
      %7978 = vmatpush.bf16.msra.mxu0 %v7351
      %7979 = vmatpush.bf16.msra.mxu0 %v7348
      %7980 = vmatpush.bf16.msra.mxu0 %v7345
      %7981 = vmatpush.bf16.msra.mxu0 %v7342
      %7982 = vmatmul.bf16.gmra.mxu0 %v6489
      %v7983 = vpop.f32.mrf.mxu0
      %v7984 = vadd.f32 %v7970, %v7983
      %v7985 = vpop.f32.mrf.mxu0
      %v7986 = vadd.f32 %v7972, %v7985
      %7987 = vdwg.mxu0
      %7988 = vmatpush.bf16.msra.mxu0 %v7387
      %7989 = vmatpush.bf16.msra.mxu0 %v7384
      %7990 = vmatpush.bf16.msra.mxu0 %v7381
      %7991 = vmatpush.bf16.msra.mxu0 %v7378
      %7992 = vmatpush.bf16.msra.mxu0 %v7375
      %7993 = vmatpush.bf16.msra.mxu0 %v7372
      %7994 = vmatpush.bf16.msra.mxu0 %v7369
      %7995 = vmatpush.bf16.msra.mxu0 %v7366
      %7996 = vmatmul.bf16.gmra.mxu0 %v6490
      %v7997 = vpop.f32.mrf.mxu0
      %v7998 = vadd.f32 %v7984, %v7997
      %v7999 = vpop.f32.mrf.mxu0
      %v8000 = vadd.f32 %v7986, %v7999
      %8001 = vdwg.mxu0
      %8002 = vmatpush.bf16.msra.mxu0 %v7411
      %8003 = vmatpush.bf16.msra.mxu0 %v7408
      %8004 = vmatpush.bf16.msra.mxu0 %v7405
      %8005 = vmatpush.bf16.msra.mxu0 %v7402
      %8006 = vmatpush.bf16.msra.mxu0 %v7399
      %8007 = vmatpush.bf16.msra.mxu0 %v7396
      %8008 = vmatpush.bf16.msra.mxu0 %v7393
      %8009 = vmatpush.bf16.msra.mxu0 %v7390
      %8010 = vmatmul.bf16.gmra.mxu0 %v6491
      %v8011 = vpop.f32.mrf.mxu0
      %v8012 = vadd.f32 %v7998, %v8011
      %v8013 = vpop.f32.mrf.mxu0
      %v8014 = vadd.f32 %v8000, %v8013
      %8015 = vdwg.mxu0
      %8016 = vmatpush.bf16.msra.mxu0 %v7435
      %8017 = vmatpush.bf16.msra.mxu0 %v7432
      %8018 = vmatpush.bf16.msra.mxu0 %v7429
      %8019 = vmatpush.bf16.msra.mxu0 %v7426
      %8020 = vmatpush.bf16.msra.mxu0 %v7423
      %8021 = vmatpush.bf16.msra.mxu0 %v7420
      %8022 = vmatpush.bf16.msra.mxu0 %v7417
      %8023 = vmatpush.bf16.msra.mxu0 %v7414
      %8024 = vmatmul.bf16.gmra.mxu0 %v6492
      %v8025 = vpop.f32.mrf.mxu0
      %v8026 = vadd.f32 %v8012, %v8025
      %v8027 = vpop.f32.mrf.mxu0
      %v8028 = vadd.f32 %v8014, %v8027
      %8029 = vdwg.mxu0
      %vm8030 = vcmp.gt.f32.partialorder %v7774, 0.0
      %vm8031 = vcmp.gt.f32.partialorder %v7900, 0.0
      %vm8032 = vcmp.gt.f32.partialorder %v8026, 0.0
      %vm8033 = vcmp.gt.f32.partialorder %v7776, 0.0
      %vm8034 = vcmp.gt.f32.partialorder %v7902, 0.0
      %vm8035 = vcmp.gt.f32.partialorder %v8028, 0.0
      %v8036 = vmul.f32 %v7774, 0.2
      %v8037 = vmul.f32 %v7900, 0.2
      %v8038 = vmul.f32 %v8026, 0.2
      %v8039 = vmul.f32 %v7776, 0.2
      %v8040 = vmul.f32 %v7902, 0.2
      %v8041 = vmul.f32 %v8028, 0.2
      %v8042 = vsel %vm8030, %v7774, %v8036
      %v8043 = vsel %vm8031, %v7900, %v8037
      %v8044 = vsel %vm8032, %v8026, %v8038
      %v8045 = vsel %vm8033, %v7776, %v8039
      %v8046 = vsel %vm8034, %v7902, %v8040
      %v8047 = vsel %vm8035, %v8028, %v8041
      %8048 = vst [vmem:[#allocation4 + $0x18] sm:$0xff] %v8042
      %8049 = vst [vmem:[#allocation4 + $0x20] sm:$0xff] %v8043
      %8050 = vst [vmem:[#allocation4 + $0x28] sm:$0xff] %v8044
      %8051 = vst [vmem:[#allocation4 + $0xa8] sm:$0xff] %v8045
      %8052 = vst [vmem:[#allocation4 + $0xb0] sm:$0xff] %v8046
      %8053 = vst [vmem:[#allocation4 + $0xb8] sm:$0xff] %v8047
      %v8054 = vld [vmem:[#allocation3 + $0x30] sm:$0xff]
      %v8055 = vld [vmem:[#allocation3 + $0x38] sm:$0xff]
      %v8056 = vld [vmem:[#allocation3 + $0x40] sm:$0xff]
      %v8057 = vld [vmem:[#allocation3 + $0x48] sm:$0xff]
      %v8058 = vld [vmem:[#allocation3 + $0x50] sm:$0xff]
      %v8059 = vld [vmem:[#allocation3 + $0x58] sm:$0xff]
      %v8060 = vld [vmem:[#allocation3 + $0x60] sm:$0xff]
      %v8061 = vld [vmem:[#allocation3 + $0x68] sm:$0xff]
      %v8062 = vld [vmem:[#allocation3 + $0x70] sm:$0xff]
      %v8063 = vld [vmem:[#allocation3 + $0x108] sm:$0xff]
      %v8064 = vld [vmem:[#allocation3 + $0x110] sm:$0xff]
      %v8065 = vld [vmem:[#allocation3 + $0x118] sm:$0xff]
      %v8066 = vld [vmem:[#allocation3 + $0x120] sm:$0xff]
      %v8067 = vld [vmem:[#allocation3 + $0x128] sm:$0xff]
      %v8068 = vld [vmem:[#allocation3 + $0x130] sm:$0xff]
      %v8069 = vld [vmem:[#allocation3 + $0x138] sm:$0xff]
      %v8070 = vld [vmem:[#allocation3 + $0x140] sm:$0xff]
      %v8071 = vld [vmem:[#allocation3 + $0x148] sm:$0xff]
      %v8072 = vpack.c.bf16 %v8063, %v8054
      %v8073 = vpack.c.bf16 %v8064, %v8055
      %v8074 = vpack.c.bf16 %v8065, %v8056
      %v8075 = vpack.c.bf16 %v8066, %v8057
      %v8076 = vpack.c.bf16 %v8067, %v8058
      %v8077 = vpack.c.bf16 %v8068, %v8059
      %v8078 = vpack.c.bf16 %v8069, %v8060
      %v8079 = vpack.c.bf16 %v8070, %v8061
      %v8080 = vpack.c.bf16 %v8071, %v8062
      %8081 = vmatpush.bf16.msra.mxu0 %v7241
      %8082 = vmatpush.bf16.msra.mxu0 %v7238
      %8083 = vmatpush.bf16.msra.mxu0 %v7235
      %8084 = vmatpush.bf16.msra.mxu0 %v7232
      %8085 = vmatpush.bf16.msra.mxu0 %v7229
      %8086 = vmatpush.bf16.msra.mxu0 %v7226
      %8087 = vmatpush.bf16.msra.mxu0 %v7223
      %8088 = vmatpush.bf16.msra.mxu0 %v7220
      %8089 = vmatmul.bf16.gmra.mxu0 %v8072
      %v8090 = vpop.f32.mrf.mxu0
      %v8091 = vadd.f32 %v6494, %v8090
      %v8092 = vpop.f32.mrf.mxu0
      %v8093 = vadd.f32 %v6494, %v8092
      %8094 = vdwg.mxu0
      %8095 = vmatpush.bf16.msra.mxu0 %v7265
      %8096 = vmatpush.bf16.msra.mxu0 %v7262
      %8097 = vmatpush.bf16.msra.mxu0 %v7259
      %8098 = vmatpush.bf16.msra.mxu0 %v7256
      %8099 = vmatpush.bf16.msra.mxu0 %v7253
      %8100 = vmatpush.bf16.msra.mxu0 %v7250
      %8101 = vmatpush.bf16.msra.mxu0 %v7247
      %8102 = vmatpush.bf16.msra.mxu0 %v7244
      %8103 = vmatmul.bf16.gmra.mxu0 %v8073
      %v8104 = vpop.f32.mrf.mxu0
      %v8105 = vadd.f32 %v8091, %v8104
      %v8106 = vpop.f32.mrf.mxu0
      %v8107 = vadd.f32 %v8093, %v8106
      %8108 = vdwg.mxu0
      %8109 = vmatpush.bf16.msra.mxu0 %v7289
      %8110 = vmatpush.bf16.msra.mxu0 %v7286
      %8111 = vmatpush.bf16.msra.mxu0 %v7283
      %8112 = vmatpush.bf16.msra.mxu0 %v7280
      %8113 = vmatpush.bf16.msra.mxu0 %v7277
      %8114 = vmatpush.bf16.msra.mxu0 %v7274
      %8115 = vmatpush.bf16.msra.mxu0 %v7271
      %8116 = vmatpush.bf16.msra.mxu0 %v7268
      %8117 = vmatmul.bf16.gmra.mxu0 %v8074
      %v8118 = vpop.f32.mrf.mxu0
      %v8119 = vadd.f32 %v8105, %v8118
      %v8120 = vpop.f32.mrf.mxu0
      %v8121 = vadd.f32 %v8107, %v8120
      %8122 = vdwg.mxu0
      %8123 = vmatpush.bf16.msra.mxu0 %v7313
      %8124 = vmatpush.bf16.msra.mxu0 %v7310
      %8125 = vmatpush.bf16.msra.mxu0 %v7307
      %8126 = vmatpush.bf16.msra.mxu0 %v7304
      %8127 = vmatpush.bf16.msra.mxu0 %v7301
      %8128 = vmatpush.bf16.msra.mxu0 %v7298
      %8129 = vmatpush.bf16.msra.mxu0 %v7295
      %8130 = vmatpush.bf16.msra.mxu0 %v7292
      %8131 = vmatmul.bf16.gmra.mxu0 %v8075
      %v8132 = vpop.f32.mrf.mxu0
      %v8133 = vadd.f32 %v8119, %v8132
      %v8134 = vpop.f32.mrf.mxu0
      %v8135 = vadd.f32 %v8121, %v8134
      %8136 = vdwg.mxu0
      %8137 = vmatpush.bf16.msra.mxu0 %v7337
      %8138 = vmatpush.bf16.msra.mxu0 %v7334
      %8139 = vmatpush.bf16.msra.mxu0 %v7331
      %8140 = vmatpush.bf16.msra.mxu0 %v7328
      %8141 = vmatpush.bf16.msra.mxu0 %v7325
      %8142 = vmatpush.bf16.msra.mxu0 %v7322
      %8143 = vmatpush.bf16.msra.mxu0 %v7319
      %8144 = vmatpush.bf16.msra.mxu0 %v7316
      %8145 = vmatmul.bf16.gmra.mxu0 %v8076
      %v8146 = vpop.f32.mrf.mxu0
      %v8147 = vadd.f32 %v8133, %v8146
      %v8148 = vpop.f32.mrf.mxu0
      %v8149 = vadd.f32 %v8135, %v8148
      %8150 = vdwg.mxu0
      %8151 = vmatpush.bf16.msra.mxu0 %v7361
      %8152 = vmatpush.bf16.msra.mxu0 %v7358
      %8153 = vmatpush.bf16.msra.mxu0 %v7355
      %8154 = vmatpush.bf16.msra.mxu0 %v7352
      %8155 = vmatpush.bf16.msra.mxu0 %v7349
      %8156 = vmatpush.bf16.msra.mxu0 %v7346
      %8157 = vmatpush.bf16.msra.mxu0 %v7343
      %8158 = vmatpush.bf16.msra.mxu0 %v7340
      %8159 = vmatmul.bf16.gmra.mxu0 %v8077
      %v8160 = vpop.f32.mrf.mxu0
      %v8161 = vadd.f32 %v8147, %v8160
      %v8162 = vpop.f32.mrf.mxu0
      %v8163 = vadd.f32 %v8149, %v8162
      %8164 = vdwg.mxu0
      %8165 = vmatpush.bf16.msra.mxu0 %v7385
      %8166 = vmatpush.bf16.msra.mxu0 %v7382
      %8167 = vmatpush.bf16.msra.mxu0 %v7379
      %8168 = vmatpush.bf16.msra.mxu0 %v7376
      %8169 = vmatpush.bf16.msra.mxu0 %v7373
      %8170 = vmatpush.bf16.msra.mxu0 %v7370
      %8171 = vmatpush.bf16.msra.mxu0 %v7367
      %8172 = vmatpush.bf16.msra.mxu0 %v7364
      %8173 = vmatmul.bf16.gmra.mxu0 %v8078
      %v8174 = vpop.f32.mrf.mxu0
      %v8175 = vadd.f32 %v8161, %v8174
      %v8176 = vpop.f32.mrf.mxu0
      %v8177 = vadd.f32 %v8163, %v8176
      %8178 = vdwg.mxu0
      %8179 = vmatpush.bf16.msra.mxu0 %v7409
      %8180 = vmatpush.bf16.msra.mxu0 %v7406
      %8181 = vmatpush.bf16.msra.mxu0 %v7403
      %8182 = vmatpush.bf16.msra.mxu0 %v7400
      %8183 = vmatpush.bf16.msra.mxu0 %v7397
      %8184 = vmatpush.bf16.msra.mxu0 %v7394
      %8185 = vmatpush.bf16.msra.mxu0 %v7391
      %8186 = vmatpush.bf16.msra.mxu0 %v7388
      %8187 = vmatmul.bf16.gmra.mxu0 %v8079
      %v8188 = vpop.f32.mrf.mxu0
      %v8189 = vadd.f32 %v8175, %v8188
      %v8190 = vpop.f32.mrf.mxu0
      %v8191 = vadd.f32 %v8177, %v8190
      %8192 = vdwg.mxu0
      %8193 = vmatpush.bf16.msra.mxu0 %v7433
      %8194 = vmatpush.bf16.msra.mxu0 %v7430
      %8195 = vmatpush.bf16.msra.mxu0 %v7427
      %8196 = vmatpush.bf16.msra.mxu0 %v7424
      %8197 = vmatpush.bf16.msra.mxu0 %v7421
      %8198 = vmatpush.bf16.msra.mxu0 %v7418
      %8199 = vmatpush.bf16.msra.mxu0 %v7415
      %8200 = vmatpush.bf16.msra.mxu0 %v7412
      %8201 = vmatmul.bf16.gmra.mxu0 %v8080
      %v8202 = vpop.f32.mrf.mxu0
      %v8203 = vadd.f32 %v8189, %v8202
      %v8204 = vpop.f32.mrf.mxu0
      %v8205 = vadd.f32 %v8191, %v8204
      %8206 = vdwg.mxu0
      %8207 = vmatpush.bf16.msra.mxu0 %v7242
      %8208 = vmatpush.bf16.msra.mxu0 %v7239
      %8209 = vmatpush.bf16.msra.mxu0 %v7236
      %8210 = vmatpush.bf16.msra.mxu0 %v7233
      %8211 = vmatpush.bf16.msra.mxu0 %v7230
      %8212 = vmatpush.bf16.msra.mxu0 %v7227
      %8213 = vmatpush.bf16.msra.mxu0 %v7224
      %8214 = vmatpush.bf16.msra.mxu0 %v7221
      %8215 = vmatmul.bf16.gmra.mxu0 %v8072
      %v8216 = vpop.f32.mrf.mxu0
      %v8217 = vadd.f32 %v6495, %v8216
      %v8218 = vpop.f32.mrf.mxu0
      %v8219 = vadd.f32 %v6495, %v8218
      %8220 = vdwg.mxu0
      %8221 = vmatpush.bf16.msra.mxu0 %v7266
      %8222 = vmatpush.bf16.msra.mxu0 %v7263
      %8223 = vmatpush.bf16.msra.mxu0 %v7260
      %8224 = vmatpush.bf16.msra.mxu0 %v7257
      %8225 = vmatpush.bf16.msra.mxu0 %v7254
      %8226 = vmatpush.bf16.msra.mxu0 %v7251
      %8227 = vmatpush.bf16.msra.mxu0 %v7248
      %8228 = vmatpush.bf16.msra.mxu0 %v7245
      %8229 = vmatmul.bf16.gmra.mxu0 %v8073
      %v8230 = vpop.f32.mrf.mxu0
      %v8231 = vadd.f32 %v8217, %v8230
      %v8232 = vpop.f32.mrf.mxu0
      %v8233 = vadd.f32 %v8219, %v8232
      %8234 = vdwg.mxu0
      %8235 = vmatpush.bf16.msra.mxu0 %v7290
      %8236 = vmatpush.bf16.msra.mxu0 %v7287
      %8237 = vmatpush.bf16.msra.mxu0 %v7284
      %8238 = vmatpush.bf16.msra.mxu0 %v7281
      %8239 = vmatpush.bf16.msra.mxu0 %v7278
      %8240 = vmatpush.bf16.msra.mxu0 %v7275
      %8241 = vmatpush.bf16.msra.mxu0 %v7272
      %8242 = vmatpush.bf16.msra.mxu0 %v7269
      %8243 = vmatmul.bf16.gmra.mxu0 %v8074
      %v8244 = vpop.f32.mrf.mxu0
      %v8245 = vadd.f32 %v8231, %v8244
      %v8246 = vpop.f32.mrf.mxu0
      %v8247 = vadd.f32 %v8233, %v8246
      %8248 = vdwg.mxu0
      %8249 = vmatpush.bf16.msra.mxu0 %v7314
      %8250 = vmatpush.bf16.msra.mxu0 %v7311
      %8251 = vmatpush.bf16.msra.mxu0 %v7308
      %8252 = vmatpush.bf16.msra.mxu0 %v7305
      %8253 = vmatpush.bf16.msra.mxu0 %v7302
      %8254 = vmatpush.bf16.msra.mxu0 %v7299
      %8255 = vmatpush.bf16.msra.mxu0 %v7296
      %8256 = vmatpush.bf16.msra.mxu0 %v7293
      %8257 = vmatmul.bf16.gmra.mxu0 %v8075
      %v8258 = vpop.f32.mrf.mxu0
      %v8259 = vadd.f32 %v8245, %v8258
      %v8260 = vpop.f32.mrf.mxu0
      %v8261 = vadd.f32 %v8247, %v8260
      %8262 = vdwg.mxu0
      %8263 = vmatpush.bf16.msra.mxu0 %v7338
      %8264 = vmatpush.bf16.msra.mxu0 %v7335
      %8265 = vmatpush.bf16.msra.mxu0 %v7332
      %8266 = vmatpush.bf16.msra.mxu0 %v7329
      %8267 = vmatpush.bf16.msra.mxu0 %v7326
      %8268 = vmatpush.bf16.msra.mxu0 %v7323
      %8269 = vmatpush.bf16.msra.mxu0 %v7320
      %8270 = vmatpush.bf16.msra.mxu0 %v7317
      %8271 = vmatmul.bf16.gmra.mxu0 %v8076
      %v8272 = vpop.f32.mrf.mxu0
      %v8273 = vadd.f32 %v8259, %v8272
      %v8274 = vpop.f32.mrf.mxu0
      %v8275 = vadd.f32 %v8261, %v8274
      %8276 = vdwg.mxu0
      %8277 = vmatpush.bf16.msra.mxu0 %v7362
      %8278 = vmatpush.bf16.msra.mxu0 %v7359
      %8279 = vmatpush.bf16.msra.mxu0 %v7356
      %8280 = vmatpush.bf16.msra.mxu0 %v7353
      %8281 = vmatpush.bf16.msra.mxu0 %v7350
      %8282 = vmatpush.bf16.msra.mxu0 %v7347
      %8283 = vmatpush.bf16.msra.mxu0 %v7344
      %8284 = vmatpush.bf16.msra.mxu0 %v7341
      %8285 = vmatmul.bf16.gmra.mxu0 %v8077
      %v8286 = vpop.f32.mrf.mxu0
      %v8287 = vadd.f32 %v8273, %v8286
      %v8288 = vpop.f32.mrf.mxu0
      %v8289 = vadd.f32 %v8275, %v8288
      %8290 = vdwg.mxu0
      %8291 = vmatpush.bf16.msra.mxu0 %v7386
      %8292 = vmatpush.bf16.msra.mxu0 %v7383
      %8293 = vmatpush.bf16.msra.mxu0 %v7380
      %8294 = vmatpush.bf16.msra.mxu0 %v7377
      %8295 = vmatpush.bf16.msra.mxu0 %v7374
      %8296 = vmatpush.bf16.msra.mxu0 %v7371
      %8297 = vmatpush.bf16.msra.mxu0 %v7368
      %8298 = vmatpush.bf16.msra.mxu0 %v7365
      %8299 = vmatmul.bf16.gmra.mxu0 %v8078
      %v8300 = vpop.f32.mrf.mxu0
      %v8301 = vadd.f32 %v8287, %v8300
      %v8302 = vpop.f32.mrf.mxu0
      %v8303 = vadd.f32 %v8289, %v8302
      %8304 = vdwg.mxu0
      %8305 = vmatpush.bf16.msra.mxu0 %v7410
      %8306 = vmatpush.bf16.msra.mxu0 %v7407
      %8307 = vmatpush.bf16.msra.mxu0 %v7404
      %8308 = vmatpush.bf16.msra.mxu0 %v7401
      %8309 = vmatpush.bf16.msra.mxu0 %v7398
      %8310 = vmatpush.bf16.msra.mxu0 %v7395
      %8311 = vmatpush.bf16.msra.mxu0 %v7392
      %8312 = vmatpush.bf16.msra.mxu0 %v7389
      %8313 = vmatmul.bf16.gmra.mxu0 %v8079
      %v8314 = vpop.f32.mrf.mxu0
      %v8315 = vadd.f32 %v8301, %v8314
      %v8316 = vpop.f32.mrf.mxu0
      %v8317 = vadd.f32 %v8303, %v8316
      %8318 = vdwg.mxu0
      %8319 = vmatpush.bf16.msra.mxu0 %v7434
      %8320 = vmatpush.bf16.msra.mxu0 %v7431
      %8321 = vmatpush.bf16.msra.mxu0 %v7428
      %8322 = vmatpush.bf16.msra.mxu0 %v7425
      %8323 = vmatpush.bf16.msra.mxu0 %v7422
      %8324 = vmatpush.bf16.msra.mxu0 %v7419
      %8325 = vmatpush.bf16.msra.mxu0 %v7416
      %8326 = vmatpush.bf16.msra.mxu0 %v7413
      %8327 = vmatmul.bf16.gmra.mxu0 %v8080
      %v8328 = vpop.f32.mrf.mxu0
      %v8329 = vadd.f32 %v8315, %v8328
      %v8330 = vpop.f32.mrf.mxu0
      %v8331 = vadd.f32 %v8317, %v8330
      %8332 = vdwg.mxu0
      %8333 = vmatpush.bf16.msra.mxu0 %v7243
      %8334 = vmatpush.bf16.msra.mxu0 %v7240
      %8335 = vmatpush.bf16.msra.mxu0 %v7237
      %8336 = vmatpush.bf16.msra.mxu0 %v7234
      %8337 = vmatpush.bf16.msra.mxu0 %v7231
      %8338 = vmatpush.bf16.msra.mxu0 %v7228
      %8339 = vmatpush.bf16.msra.mxu0 %v7225
      %8340 = vmatpush.bf16.msra.mxu0 %v7222
      %8341 = vmatmul.bf16.gmra.mxu0 %v8072
      %v8342 = vpop.f32.mrf.mxu0
      %v8343 = vadd.f32 %v6496, %v8342
      %v8344 = vpop.f32.mrf.mxu0
      %v8345 = vadd.f32 %v6496, %v8344
      %8346 = vdwg.mxu0
      %8347 = vmatpush.bf16.msra.mxu0 %v7267
      %8348 = vmatpush.bf16.msra.mxu0 %v7264
      %8349 = vmatpush.bf16.msra.mxu0 %v7261
      %8350 = vmatpush.bf16.msra.mxu0 %v7258
      %8351 = vmatpush.bf16.msra.mxu0 %v7255
      %8352 = vmatpush.bf16.msra.mxu0 %v7252
      %8353 = vmatpush.bf16.msra.mxu0 %v7249
      %8354 = vmatpush.bf16.msra.mxu0 %v7246
      %8355 = vmatmul.bf16.gmra.mxu0 %v8073
      %v8356 = vpop.f32.mrf.mxu0
      %v8357 = vadd.f32 %v8343, %v8356
      %v8358 = vpop.f32.mrf.mxu0
      %v8359 = vadd.f32 %v8345, %v8358
      %8360 = vdwg.mxu0
      %8361 = vmatpush.bf16.msra.mxu0 %v7291
      %8362 = vmatpush.bf16.msra.mxu0 %v7288
      %8363 = vmatpush.bf16.msra.mxu0 %v7285
      %8364 = vmatpush.bf16.msra.mxu0 %v7282
      %8365 = vmatpush.bf16.msra.mxu0 %v7279
      %8366 = vmatpush.bf16.msra.mxu0 %v7276
      %8367 = vmatpush.bf16.msra.mxu0 %v7273
      %8368 = vmatpush.bf16.msra.mxu0 %v7270
      %8369 = vmatmul.bf16.gmra.mxu0 %v8074
      %v8370 = vpop.f32.mrf.mxu0
      %v8371 = vadd.f32 %v8357, %v8370
      %v8372 = vpop.f32.mrf.mxu0
      %v8373 = vadd.f32 %v8359, %v8372
      %8374 = vdwg.mxu0
      %8375 = vmatpush.bf16.msra.mxu0 %v7315
      %8376 = vmatpush.bf16.msra.mxu0 %v7312
      %8377 = vmatpush.bf16.msra.mxu0 %v7309
      %8378 = vmatpush.bf16.msra.mxu0 %v7306
      %8379 = vmatpush.bf16.msra.mxu0 %v7303
      %8380 = vmatpush.bf16.msra.mxu0 %v7300
      %8381 = vmatpush.bf16.msra.mxu0 %v7297
      %8382 = vmatpush.bf16.msra.mxu0 %v7294
      %8383 = vmatmul.bf16.gmra.mxu0 %v8075
      %v8384 = vpop.f32.mrf.mxu0
      %v8385 = vadd.f32 %v8371, %v8384
      %v8386 = vpop.f32.mrf.mxu0
      %v8387 = vadd.f32 %v8373, %v8386
      %8388 = vdwg.mxu0
      %8389 = vmatpush.bf16.msra.mxu0 %v7339
      %8390 = vmatpush.bf16.msra.mxu0 %v7336
      %8391 = vmatpush.bf16.msra.mxu0 %v7333
      %8392 = vmatpush.bf16.msra.mxu0 %v7330
      %8393 = vmatpush.bf16.msra.mxu0 %v7327
      %8394 = vmatpush.bf16.msra.mxu0 %v7324
      %8395 = vmatpush.bf16.msra.mxu0 %v7321
      %8396 = vmatpush.bf16.msra.mxu0 %v7318
      %8397 = vmatmul.bf16.gmra.mxu0 %v8076
      %v8398 = vpop.f32.mrf.mxu0
      %v8399 = vadd.f32 %v8385, %v8398
      %v8400 = vpop.f32.mrf.mxu0
      %v8401 = vadd.f32 %v8387, %v8400
      %8402 = vdwg.mxu0
      %8403 = vmatpush.bf16.msra.mxu0 %v7363
      %8404 = vmatpush.bf16.msra.mxu0 %v7360
      %8405 = vmatpush.bf16.msra.mxu0 %v7357
      %8406 = vmatpush.bf16.msra.mxu0 %v7354
      %8407 = vmatpush.bf16.msra.mxu0 %v7351
      %8408 = vmatpush.bf16.msra.mxu0 %v7348
      %8409 = vmatpush.bf16.msra.mxu0 %v7345
      %8410 = vmatpush.bf16.msra.mxu0 %v7342
      %8411 = vmatmul.bf16.gmra.mxu0 %v8077
      %v8412 = vpop.f32.mrf.mxu0
      %v8413 = vadd.f32 %v8399, %v8412
      %v8414 = vpop.f32.mrf.mxu0
      %v8415 = vadd.f32 %v8401, %v8414
      %8416 = vdwg.mxu0
      %8417 = vmatpush.bf16.msra.mxu0 %v7387
      %8418 = vmatpush.bf16.msra.mxu0 %v7384
      %8419 = vmatpush.bf16.msra.mxu0 %v7381
      %8420 = vmatpush.bf16.msra.mxu0 %v7378
      %8421 = vmatpush.bf16.msra.mxu0 %v7375
      %8422 = vmatpush.bf16.msra.mxu0 %v7372
      %8423 = vmatpush.bf16.msra.mxu0 %v7369
      %8424 = vmatpush.bf16.msra.mxu0 %v7366
      %8425 = vmatmul.bf16.gmra.mxu0 %v8078
      %v8426 = vpop.f32.mrf.mxu0
      %v8427 = vadd.f32 %v8413, %v8426
      %v8428 = vpop.f32.mrf.mxu0
      %v8429 = vadd.f32 %v8415, %v8428
      %8430 = vdwg.mxu0
      %8431 = vmatpush.bf16.msra.mxu0 %v7411
      %8432 = vmatpush.bf16.msra.mxu0 %v7408
      %8433 = vmatpush.bf16.msra.mxu0 %v7405
      %8434 = vmatpush.bf16.msra.mxu0 %v7402
      %8435 = vmatpush.bf16.msra.mxu0 %v7399
      %8436 = vmatpush.bf16.msra.mxu0 %v7396
      %8437 = vmatpush.bf16.msra.mxu0 %v7393
      %8438 = vmatpush.bf16.msra.mxu0 %v7390
      %8439 = vmatmul.bf16.gmra.mxu0 %v8079
      %v8440 = vpop.f32.mrf.mxu0
      %v8441 = vadd.f32 %v8427, %v8440
      %v8442 = vpop.f32.mrf.mxu0
      %v8443 = vadd.f32 %v8429, %v8442
      %8444 = vdwg.mxu0
      %8445 = vmatpush.bf16.msra.mxu0 %v7435
      %8446 = vmatpush.bf16.msra.mxu0 %v7432
      %8447 = vmatpush.bf16.msra.mxu0 %v7429
      %8448 = vmatpush.bf16.msra.mxu0 %v7426
      %8449 = vmatpush.bf16.msra.mxu0 %v7423
      %8450 = vmatpush.bf16.msra.mxu0 %v7420
      %8451 = vmatpush.bf16.msra.mxu0 %v7417
      %8452 = vmatpush.bf16.msra.mxu0 %v7414
      %8453 = vmatmul.bf16.gmra.mxu0 %v8080
      %v8454 = vpop.f32.mrf.mxu0
      %v8455 = vadd.f32 %v8441, %v8454
      %v8456 = vpop.f32.mrf.mxu0
      %v8457 = vadd.f32 %v8443, %v8456
      %8458 = vdwg.mxu0
      %vm8459 = vcmp.gt.f32.partialorder %v8203, 0.0
      %vm8460 = vcmp.gt.f32.partialorder %v8329, 0.0
      %vm8461 = vcmp.gt.f32.partialorder %v8455, 0.0
      %vm8462 = vcmp.gt.f32.partialorder %v8205, 0.0
      %vm8463 = vcmp.gt.f32.partialorder %v8331, 0.0
      %vm8464 = vcmp.gt.f32.partialorder %v8457, 0.0
      %v8465 = vmul.f32 %v8203, 0.2
      %v8466 = vmul.f32 %v8329, 0.2
      %v8467 = vmul.f32 %v8455, 0.2
      %v8468 = vmul.f32 %v8205, 0.2
      %v8469 = vmul.f32 %v8331, 0.2
      %v8470 = vmul.f32 %v8457, 0.2
      %v8471 = vsel %vm8459, %v8203, %v8465
      %v8472 = vsel %vm8460, %v8329, %v8466
      %v8473 = vsel %vm8461, %v8455, %v8467
      %v8474 = vsel %vm8462, %v8205, %v8468
      %v8475 = vsel %vm8463, %v8331, %v8469
      %v8476 = vsel %vm8464, %v8457, %v8470
      %8477 = vst [vmem:[#allocation4 + $0x30] sm:$0xff] %v8471
      %8478 = vst [vmem:[#allocation4 + $0x38] sm:$0xff] %v8472
      %8479 = vst [vmem:[#allocation4 + $0x40] sm:$0xff] %v8473
      %8480 = vst [vmem:[#allocation4 + $0xc0] sm:$0xff] %v8474
      %8481 = vst [vmem:[#allocation4 + $0xc8] sm:$0xff] %v8475
      %8482 = vst [vmem:[#allocation4 + $0xd0] sm:$0xff] %v8476
      %v8483 = vld [vmem:[#allocation3 + $0x60] sm:$0xff]
      %v8484 = vld [vmem:[#allocation3 + $0x68] sm:$0xff]
      %v8485 = vld [vmem:[#allocation3 + $0x70] sm:$0xff]
      %v8486 = vld [vmem:[#allocation3 + $0x78] sm:$0xff]
      %v8487 = vld [vmem:[#allocation3 + $0x80] sm:$0xff]
      %v8488 = vld [vmem:[#allocation3 + $0x88] sm:$0xff]
      %v8489 = vld [vmem:[#allocation3 + $0x90] sm:$0xff]
      %v8490 = vld [vmem:[#allocation3 + $0x98] sm:$0xff]
      %v8491 = vld [vmem:[#allocation3 + $0xa0] sm:$0xff]
      %v8492 = vld [vmem:[#allocation3 + $0x138] sm:$0xff]
      %v8493 = vld [vmem:[#allocation3 + $0x140] sm:$0xff]
      %v8494 = vld [vmem:[#allocation3 + $0x148] sm:$0xff]
      %v8495 = vld [vmem:[#allocation3 + $0x150] sm:$0xff]
      %v8496 = vld [vmem:[#allocation3 + $0x158] sm:$0xff]
      %v8497 = vld [vmem:[#allocation3 + $0x160] sm:$0xff]
      %v8498 = vld [vmem:[#allocation3 + $0x168] sm:$0xff]
      %v8499 = vld [vmem:[#allocation3 + $0x170] sm:$0xff]
      %v8500 = vld [vmem:[#allocation3 + $0x178] sm:$0xff]
      %v8501 = vpack.c.bf16 %v8492, %v8483
      %v8502 = vpack.c.bf16 %v8493, %v8484
      %v8503 = vpack.c.bf16 %v8494, %v8485
      %v8504 = vpack.c.bf16 %v8495, %v8486
      %v8505 = vpack.c.bf16 %v8496, %v8487
      %v8506 = vpack.c.bf16 %v8497, %v8488
      %v8507 = vpack.c.bf16 %v8498, %v8489
      %v8508 = vpack.c.bf16 %v8499, %v8490
      %v8509 = vpack.c.bf16 %v8500, %v8491
      %8510 = vmatpush.bf16.msra.mxu0 %v7241
      %8511 = vmatpush.bf16.msra.mxu0 %v7238
      %8512 = vmatpush.bf16.msra.mxu0 %v7235
      %8513 = vmatpush.bf16.msra.mxu0 %v7232
      %8514 = vmatpush.bf16.msra.mxu0 %v7229
      %8515 = vmatpush.bf16.msra.mxu0 %v7226
      %8516 = vmatpush.bf16.msra.mxu0 %v7223
      %8517 = vmatpush.bf16.msra.mxu0 %v7220
      %8518 = vmatmul.bf16.gmra.mxu0 %v8501
      %v8519 = vpop.f32.mrf.mxu0
      %v8520 = vadd.f32 %v6494, %v8519
      %v8521 = vpop.f32.mrf.mxu0
      %v8522 = vadd.f32 %v6494, %v8521
      %8523 = vdwg.mxu0
      %8524 = vmatpush.bf16.msra.mxu0 %v7265
      %8525 = vmatpush.bf16.msra.mxu0 %v7262
      %8526 = vmatpush.bf16.msra.mxu0 %v7259
      %8527 = vmatpush.bf16.msra.mxu0 %v7256
      %8528 = vmatpush.bf16.msra.mxu0 %v7253
      %8529 = vmatpush.bf16.msra.mxu0 %v7250
      %8530 = vmatpush.bf16.msra.mxu0 %v7247
      %8531 = vmatpush.bf16.msra.mxu0 %v7244
      %8532 = vmatmul.bf16.gmra.mxu0 %v8502
      %v8533 = vpop.f32.mrf.mxu0
      %v8534 = vadd.f32 %v8520, %v8533
      %v8535 = vpop.f32.mrf.mxu0
      %v8536 = vadd.f32 %v8522, %v8535
      %8537 = vdwg.mxu0
      %8538 = vmatpush.bf16.msra.mxu0 %v7289
      %8539 = vmatpush.bf16.msra.mxu0 %v7286
      %8540 = vmatpush.bf16.msra.mxu0 %v7283
      %8541 = vmatpush.bf16.msra.mxu0 %v7280
      %8542 = vmatpush.bf16.msra.mxu0 %v7277
      %8543 = vmatpush.bf16.msra.mxu0 %v7274
      %8544 = vmatpush.bf16.msra.mxu0 %v7271
      %8545 = vmatpush.bf16.msra.mxu0 %v7268
      %8546 = vmatmul.bf16.gmra.mxu0 %v8503
      %v8547 = vpop.f32.mrf.mxu0
      %v8548 = vadd.f32 %v8534, %v8547
      %v8549 = vpop.f32.mrf.mxu0
      %v8550 = vadd.f32 %v8536, %v8549
      %8551 = vdwg.mxu0
      %8552 = vmatpush.bf16.msra.mxu0 %v7313
      %8553 = vmatpush.bf16.msra.mxu0 %v7310
      %8554 = vmatpush.bf16.msra.mxu0 %v7307
      %8555 = vmatpush.bf16.msra.mxu0 %v7304
      %8556 = vmatpush.bf16.msra.mxu0 %v7301
      %8557 = vmatpush.bf16.msra.mxu0 %v7298
      %8558 = vmatpush.bf16.msra.mxu0 %v7295
      %8559 = vmatpush.bf16.msra.mxu0 %v7292
      %8560 = vmatmul.bf16.gmra.mxu0 %v8504
      %v8561 = vpop.f32.mrf.mxu0
      %v8562 = vadd.f32 %v8548, %v8561
      %v8563 = vpop.f32.mrf.mxu0
      %v8564 = vadd.f32 %v8550, %v8563
      %8565 = vdwg.mxu0
      %8566 = vmatpush.bf16.msra.mxu0 %v7337
      %8567 = vmatpush.bf16.msra.mxu0 %v7334
      %8568 = vmatpush.bf16.msra.mxu0 %v7331
      %8569 = vmatpush.bf16.msra.mxu0 %v7328
      %8570 = vmatpush.bf16.msra.mxu0 %v7325
      %8571 = vmatpush.bf16.msra.mxu0 %v7322
      %8572 = vmatpush.bf16.msra.mxu0 %v7319
      %8573 = vmatpush.bf16.msra.mxu0 %v7316
      %8574 = vmatmul.bf16.gmra.mxu0 %v8505
      %v8575 = vpop.f32.mrf.mxu0
      %v8576 = vadd.f32 %v8562, %v8575
      %v8577 = vpop.f32.mrf.mxu0
      %v8578 = vadd.f32 %v8564, %v8577
      %8579 = vdwg.mxu0
      %8580 = vmatpush.bf16.msra.mxu0 %v7361
      %8581 = vmatpush.bf16.msra.mxu0 %v7358
      %8582 = vmatpush.bf16.msra.mxu0 %v7355
      %8583 = vmatpush.bf16.msra.mxu0 %v7352
      %8584 = vmatpush.bf16.msra.mxu0 %v7349
      %8585 = vmatpush.bf16.msra.mxu0 %v7346
      %8586 = vmatpush.bf16.msra.mxu0 %v7343
      %8587 = vmatpush.bf16.msra.mxu0 %v7340
      %8588 = vmatmul.bf16.gmra.mxu0 %v8506
      %v8589 = vpop.f32.mrf.mxu0
      %v8590 = vadd.f32 %v8576, %v8589
      %v8591 = vpop.f32.mrf.mxu0
      %v8592 = vadd.f32 %v8578, %v8591
      %8593 = vdwg.mxu0
      %8594 = vmatpush.bf16.msra.mxu0 %v7385
      %8595 = vmatpush.bf16.msra.mxu0 %v7382
      %8596 = vmatpush.bf16.msra.mxu0 %v7379
      %8597 = vmatpush.bf16.msra.mxu0 %v7376
      %8598 = vmatpush.bf16.msra.mxu0 %v7373
      %8599 = vmatpush.bf16.msra.mxu0 %v7370
      %8600 = vmatpush.bf16.msra.mxu0 %v7367
      %8601 = vmatpush.bf16.msra.mxu0 %v7364
      %8602 = vmatmul.bf16.gmra.mxu0 %v8507
      %v8603 = vpop.f32.mrf.mxu0
      %v8604 = vadd.f32 %v8590, %v8603
      %v8605 = vpop.f32.mrf.mxu0
      %v8606 = vadd.f32 %v8592, %v8605
      %8607 = vdwg.mxu0
      %8608 = vmatpush.bf16.msra.mxu0 %v7409
      %8609 = vmatpush.bf16.msra.mxu0 %v7406
      %8610 = vmatpush.bf16.msra.mxu0 %v7403
      %8611 = vmatpush.bf16.msra.mxu0 %v7400
      %8612 = vmatpush.bf16.msra.mxu0 %v7397
      %8613 = vmatpush.bf16.msra.mxu0 %v7394
      %8614 = vmatpush.bf16.msra.mxu0 %v7391
      %8615 = vmatpush.bf16.msra.mxu0 %v7388
      %8616 = vmatmul.bf16.gmra.mxu0 %v8508
      %v8617 = vpop.f32.mrf.mxu0
      %v8618 = vadd.f32 %v8604, %v8617
      %v8619 = vpop.f32.mrf.mxu0
      %v8620 = vadd.f32 %v8606, %v8619
      %8621 = vdwg.mxu0
      %8622 = vmatpush.bf16.msra.mxu0 %v7433
      %8623 = vmatpush.bf16.msra.mxu0 %v7430
      %8624 = vmatpush.bf16.msra.mxu0 %v7427
      %8625 = vmatpush.bf16.msra.mxu0 %v7424
      %8626 = vmatpush.bf16.msra.mxu0 %v7421
      %8627 = vmatpush.bf16.msra.mxu0 %v7418
      %8628 = vmatpush.bf16.msra.mxu0 %v7415
      %8629 = vmatpush.bf16.msra.mxu0 %v7412
      %8630 = vmatmul.bf16.gmra.mxu0 %v8509
      %v8631 = vpop.f32.mrf.mxu0
      %v8632 = vadd.f32 %v8618, %v8631
      %v8633 = vpop.f32.mrf.mxu0
      %v8634 = vadd.f32 %v8620, %v8633
      %8635 = vdwg.mxu0
      %8636 = vmatpush.bf16.msra.mxu0 %v7242
      %8637 = vmatpush.bf16.msra.mxu0 %v7239
      %8638 = vmatpush.bf16.msra.mxu0 %v7236
      %8639 = vmatpush.bf16.msra.mxu0 %v7233
      %8640 = vmatpush.bf16.msra.mxu0 %v7230
      %8641 = vmatpush.bf16.msra.mxu0 %v7227
      %8642 = vmatpush.bf16.msra.mxu0 %v7224
      %8643 = vmatpush.bf16.msra.mxu0 %v7221
      %8644 = vmatmul.bf16.gmra.mxu0 %v8501
      %v8645 = vpop.f32.mrf.mxu0
      %v8646 = vadd.f32 %v6495, %v8645
      %v8647 = vpop.f32.mrf.mxu0
      %v8648 = vadd.f32 %v6495, %v8647
      %8649 = vdwg.mxu0
      %8650 = vmatpush.bf16.msra.mxu0 %v7266
      %8651 = vmatpush.bf16.msra.mxu0 %v7263
      %8652 = vmatpush.bf16.msra.mxu0 %v7260
      %8653 = vmatpush.bf16.msra.mxu0 %v7257
      %8654 = vmatpush.bf16.msra.mxu0 %v7254
      %8655 = vmatpush.bf16.msra.mxu0 %v7251
      %8656 = vmatpush.bf16.msra.mxu0 %v7248
      %8657 = vmatpush.bf16.msra.mxu0 %v7245
      %8658 = vmatmul.bf16.gmra.mxu0 %v8502
      %v8659 = vpop.f32.mrf.mxu0
      %v8660 = vadd.f32 %v8646, %v8659
      %v8661 = vpop.f32.mrf.mxu0
      %v8662 = vadd.f32 %v8648, %v8661
      %8663 = vdwg.mxu0
      %8664 = vmatpush.bf16.msra.mxu0 %v7290
      %8665 = vmatpush.bf16.msra.mxu0 %v7287
      %8666 = vmatpush.bf16.msra.mxu0 %v7284
      %8667 = vmatpush.bf16.msra.mxu0 %v7281
      %8668 = vmatpush.bf16.msra.mxu0 %v7278
      %8669 = vmatpush.bf16.msra.mxu0 %v7275
      %8670 = vmatpush.bf16.msra.mxu0 %v7272
      %8671 = vmatpush.bf16.msra.mxu0 %v7269
      %8672 = vmatmul.bf16.gmra.mxu0 %v8503
      %v8673 = vpop.f32.mrf.mxu0
      %v8674 = vadd.f32 %v8660, %v8673
      %v8675 = vpop.f32.mrf.mxu0
      %v8676 = vadd.f32 %v8662, %v8675
      %8677 = vdwg.mxu0
      %8678 = vmatpush.bf16.msra.mxu0 %v7314
      %8679 = vmatpush.bf16.msra.mxu0 %v7311
      %8680 = vmatpush.bf16.msra.mxu0 %v7308
      %8681 = vmatpush.bf16.msra.mxu0 %v7305
      %8682 = vmatpush.bf16.msra.mxu0 %v7302
      %8683 = vmatpush.bf16.msra.mxu0 %v7299
      %8684 = vmatpush.bf16.msra.mxu0 %v7296
      %8685 = vmatpush.bf16.msra.mxu0 %v7293
      %8686 = vmatmul.bf16.gmra.mxu0 %v8504
      %v8687 = vpop.f32.mrf.mxu0
      %v8688 = vadd.f32 %v8674, %v8687
      %v8689 = vpop.f32.mrf.mxu0
      %v8690 = vadd.f32 %v8676, %v8689
      %8691 = vdwg.mxu0
      %8692 = vmatpush.bf16.msra.mxu0 %v7338
      %8693 = vmatpush.bf16.msra.mxu0 %v7335
      %8694 = vmatpush.bf16.msra.mxu0 %v7332
      %8695 = vmatpush.bf16.msra.mxu0 %v7329
      %8696 = vmatpush.bf16.msra.mxu0 %v7326
      %8697 = vmatpush.bf16.msra.mxu0 %v7323
      %8698 = vmatpush.bf16.msra.mxu0 %v7320
      %8699 = vmatpush.bf16.msra.mxu0 %v7317
      %8700 = vmatmul.bf16.gmra.mxu0 %v8505
      %v8701 = vpop.f32.mrf.mxu0
      %v8702 = vadd.f32 %v8688, %v8701
      %v8703 = vpop.f32.mrf.mxu0
      %v8704 = vadd.f32 %v8690, %v8703
      %8705 = vdwg.mxu0
      %8706 = vmatpush.bf16.msra.mxu0 %v7362
      %8707 = vmatpush.bf16.msra.mxu0 %v7359
      %8708 = vmatpush.bf16.msra.mxu0 %v7356
      %8709 = vmatpush.bf16.msra.mxu0 %v7353
      %8710 = vmatpush.bf16.msra.mxu0 %v7350
      %8711 = vmatpush.bf16.msra.mxu0 %v7347
      %8712 = vmatpush.bf16.msra.mxu0 %v7344
      %8713 = vmatpush.bf16.msra.mxu0 %v7341
      %8714 = vmatmul.bf16.gmra.mxu0 %v8506
      %v8715 = vpop.f32.mrf.mxu0
      %v8716 = vadd.f32 %v8702, %v8715
      %v8717 = vpop.f32.mrf.mxu0
      %v8718 = vadd.f32 %v8704, %v8717
      %8719 = vdwg.mxu0
      %8720 = vmatpush.bf16.msra.mxu0 %v7386
      %8721 = vmatpush.bf16.msra.mxu0 %v7383
      %8722 = vmatpush.bf16.msra.mxu0 %v7380
      %8723 = vmatpush.bf16.msra.mxu0 %v7377
      %8724 = vmatpush.bf16.msra.mxu0 %v7374
      %8725 = vmatpush.bf16.msra.mxu0 %v7371
      %8726 = vmatpush.bf16.msra.mxu0 %v7368
      %8727 = vmatpush.bf16.msra.mxu0 %v7365
      %8728 = vmatmul.bf16.gmra.mxu0 %v8507
      %v8729 = vpop.f32.mrf.mxu0
      %v8730 = vadd.f32 %v8716, %v8729
      %v8731 = vpop.f32.mrf.mxu0
      %v8732 = vadd.f32 %v8718, %v8731
      %8733 = vdwg.mxu0
      %8734 = vmatpush.bf16.msra.mxu0 %v7410
      %8735 = vmatpush.bf16.msra.mxu0 %v7407
      %8736 = vmatpush.bf16.msra.mxu0 %v7404
      %8737 = vmatpush.bf16.msra.mxu0 %v7401
      %8738 = vmatpush.bf16.msra.mxu0 %v7398
      %8739 = vmatpush.bf16.msra.mxu0 %v7395
      %8740 = vmatpush.bf16.msra.mxu0 %v7392
      %8741 = vmatpush.bf16.msra.mxu0 %v7389
      %8742 = vmatmul.bf16.gmra.mxu0 %v8508
      %v8743 = vpop.f32.mrf.mxu0
      %v8744 = vadd.f32 %v8730, %v8743
      %v8745 = vpop.f32.mrf.mxu0
      %v8746 = vadd.f32 %v8732, %v8745
      %8747 = vdwg.mxu0
      %8748 = vmatpush.bf16.msra.mxu0 %v7434
      %8749 = vmatpush.bf16.msra.mxu0 %v7431
      %8750 = vmatpush.bf16.msra.mxu0 %v7428
      %8751 = vmatpush.bf16.msra.mxu0 %v7425
      %8752 = vmatpush.bf16.msra.mxu0 %v7422
      %8753 = vmatpush.bf16.msra.mxu0 %v7419
      %8754 = vmatpush.bf16.msra.mxu0 %v7416
      %8755 = vmatpush.bf16.msra.mxu0 %v7413
      %8756 = vmatmul.bf16.gmra.mxu0 %v8509
      %v8757 = vpop.f32.mrf.mxu0
      %v8758 = vadd.f32 %v8744, %v8757
      %v8759 = vpop.f32.mrf.mxu0
      %v8760 = vadd.f32 %v8746, %v8759
      %8761 = vdwg.mxu0
      %8762 = vmatpush.bf16.msra.mxu0 %v7243
      %8763 = vmatpush.bf16.msra.mxu0 %v7240
      %8764 = vmatpush.bf16.msra.mxu0 %v7237
      %8765 = vmatpush.bf16.msra.mxu0 %v7234
      %8766 = vmatpush.bf16.msra.mxu0 %v7231
      %8767 = vmatpush.bf16.msra.mxu0 %v7228
      %8768 = vmatpush.bf16.msra.mxu0 %v7225
      %8769 = vmatpush.bf16.msra.mxu0 %v7222
      %8770 = vmatmul.bf16.gmra.mxu0 %v8501
      %v8771 = vpop.f32.mrf.mxu0
      %v8772 = vadd.f32 %v6496, %v8771
      %v8773 = vpop.f32.mrf.mxu0
      %v8774 = vadd.f32 %v6496, %v8773
      %8775 = vdwg.mxu0
      %8776 = vmatpush.bf16.msra.mxu0 %v7267
      %8777 = vmatpush.bf16.msra.mxu0 %v7264
      %8778 = vmatpush.bf16.msra.mxu0 %v7261
      %8779 = vmatpush.bf16.msra.mxu0 %v7258
      %8780 = vmatpush.bf16.msra.mxu0 %v7255
      %8781 = vmatpush.bf16.msra.mxu0 %v7252
      %8782 = vmatpush.bf16.msra.mxu0 %v7249
      %8783 = vmatpush.bf16.msra.mxu0 %v7246
      %8784 = vmatmul.bf16.gmra.mxu0 %v8502
      %v8785 = vpop.f32.mrf.mxu0
      %v8786 = vadd.f32 %v8772, %v8785
      %v8787 = vpop.f32.mrf.mxu0
      %v8788 = vadd.f32 %v8774, %v8787
      %8789 = vdwg.mxu0
      %8790 = vmatpush.bf16.msra.mxu0 %v7291
      %8791 = vmatpush.bf16.msra.mxu0 %v7288
      %8792 = vmatpush.bf16.msra.mxu0 %v7285
      %8793 = vmatpush.bf16.msra.mxu0 %v7282
      %8794 = vmatpush.bf16.msra.mxu0 %v7279
      %8795 = vmatpush.bf16.msra.mxu0 %v7276
      %8796 = vmatpush.bf16.msra.mxu0 %v7273
      %8797 = vmatpush.bf16.msra.mxu0 %v7270
      %8798 = vmatmul.bf16.gmra.mxu0 %v8503
      %v8799 = vpop.f32.mrf.mxu0
      %v8800 = vadd.f32 %v8786, %v8799
      %v8801 = vpop.f32.mrf.mxu0
      %v8802 = vadd.f32 %v8788, %v8801
      %8803 = vdwg.mxu0
      %8804 = vmatpush.bf16.msra.mxu0 %v7315
      %8805 = vmatpush.bf16.msra.mxu0 %v7312
      %8806 = vmatpush.bf16.msra.mxu0 %v7309
      %8807 = vmatpush.bf16.msra.mxu0 %v7306
      %8808 = vmatpush.bf16.msra.mxu0 %v7303
      %8809 = vmatpush.bf16.msra.mxu0 %v7300
      %8810 = vmatpush.bf16.msra.mxu0 %v7297
      %8811 = vmatpush.bf16.msra.mxu0 %v7294
      %8812 = vmatmul.bf16.gmra.mxu0 %v8504
      %v8813 = vpop.f32.mrf.mxu0
      %v8814 = vadd.f32 %v8800, %v8813
      %v8815 = vpop.f32.mrf.mxu0
      %v8816 = vadd.f32 %v8802, %v8815
      %8817 = vdwg.mxu0
      %8818 = vmatpush.bf16.msra.mxu0 %v7339
      %8819 = vmatpush.bf16.msra.mxu0 %v7336
      %8820 = vmatpush.bf16.msra.mxu0 %v7333
      %8821 = vmatpush.bf16.msra.mxu0 %v7330
      %8822 = vmatpush.bf16.msra.mxu0 %v7327
      %8823 = vmatpush.bf16.msra.mxu0 %v7324
      %8824 = vmatpush.bf16.msra.mxu0 %v7321
      %8825 = vmatpush.bf16.msra.mxu0 %v7318
      %8826 = vmatmul.bf16.gmra.mxu0 %v8505
      %v8827 = vpop.f32.mrf.mxu0
      %v8828 = vadd.f32 %v8814, %v8827
      %v8829 = vpop.f32.mrf.mxu0
      %v8830 = vadd.f32 %v8816, %v8829
      %8831 = vdwg.mxu0
      %8832 = vmatpush.bf16.msra.mxu0 %v7363
      %8833 = vmatpush.bf16.msra.mxu0 %v7360
      %8834 = vmatpush.bf16.msra.mxu0 %v7357
      %8835 = vmatpush.bf16.msra.mxu0 %v7354
      %8836 = vmatpush.bf16.msra.mxu0 %v7351
      %8837 = vmatpush.bf16.msra.mxu0 %v7348
      %8838 = vmatpush.bf16.msra.mxu0 %v7345
      %8839 = vmatpush.bf16.msra.mxu0 %v7342
      %8840 = vmatmul.bf16.gmra.mxu0 %v8506
      %v8841 = vpop.f32.mrf.mxu0
      %v8842 = vadd.f32 %v8828, %v8841
      %v8843 = vpop.f32.mrf.mxu0
      %v8844 = vadd.f32 %v8830, %v8843
      %8845 = vdwg.mxu0
      %8846 = vmatpush.bf16.msra.mxu0 %v7387
      %8847 = vmatpush.bf16.msra.mxu0 %v7384
      %8848 = vmatpush.bf16.msra.mxu0 %v7381
      %8849 = vmatpush.bf16.msra.mxu0 %v7378
      %8850 = vmatpush.bf16.msra.mxu0 %v7375
      %8851 = vmatpush.bf16.msra.mxu0 %v7372
      %8852 = vmatpush.bf16.msra.mxu0 %v7369
      %8853 = vmatpush.bf16.msra.mxu0 %v7366
      %8854 = vmatmul.bf16.gmra.mxu0 %v8507
      %v8855 = vpop.f32.mrf.mxu0
      %v8856 = vadd.f32 %v8842, %v8855
      %v8857 = vpop.f32.mrf.mxu0
      %v8858 = vadd.f32 %v8844, %v8857
      %8859 = vdwg.mxu0
      %8860 = vmatpush.bf16.msra.mxu0 %v7411
      %8861 = vmatpush.bf16.msra.mxu0 %v7408
      %8862 = vmatpush.bf16.msra.mxu0 %v7405
      %8863 = vmatpush.bf16.msra.mxu0 %v7402
      %8864 = vmatpush.bf16.msra.mxu0 %v7399
      %8865 = vmatpush.bf16.msra.mxu0 %v7396
      %8866 = vmatpush.bf16.msra.mxu0 %v7393
      %8867 = vmatpush.bf16.msra.mxu0 %v7390
      %8868 = vmatmul.bf16.gmra.mxu0 %v8508
      %v8869 = vpop.f32.mrf.mxu0
      %v8870 = vadd.f32 %v8856, %v8869
      %v8871 = vpop.f32.mrf.mxu0
      %v8872 = vadd.f32 %v8858, %v8871
      %8873 = vdwg.mxu0
      %8874 = vmatpush.bf16.msra.mxu0 %v7435
      %8875 = vmatpush.bf16.msra.mxu0 %v7432
      %8876 = vmatpush.bf16.msra.mxu0 %v7429
      %8877 = vmatpush.bf16.msra.mxu0 %v7426
      %8878 = vmatpush.bf16.msra.mxu0 %v7423
      %8879 = vmatpush.bf16.msra.mxu0 %v7420
      %8880 = vmatpush.bf16.msra.mxu0 %v7417
      %8881 = vmatpush.bf16.msra.mxu0 %v7414
      %8882 = vmatmul.bf16.gmra.mxu0 %v8509
      %v8883 = vpop.f32.mrf.mxu0
      %v8884 = vadd.f32 %v8870, %v8883
      %v8885 = vpop.f32.mrf.mxu0
      %v8886 = vadd.f32 %v8872, %v8885
      %8887 = vdwg.mxu0
      %vm8888 = vcmp.gt.f32.partialorder %v8632, 0.0
      %vm8889 = vcmp.gt.f32.partialorder %v8758, 0.0
      %vm8890 = vcmp.gt.f32.partialorder %v8884, 0.0
      %vm8891 = vcmp.gt.f32.partialorder %v8634, 0.0
      %vm8892 = vcmp.gt.f32.partialorder %v8760, 0.0
      %vm8893 = vcmp.gt.f32.partialorder %v8886, 0.0
      %v8894 = vmul.f32 %v8632, 0.2
      %v8895 = vmul.f32 %v8758, 0.2
      %v8896 = vmul.f32 %v8884, 0.2
      %v8897 = vmul.f32 %v8634, 0.2
      %v8898 = vmul.f32 %v8760, 0.2
      %v8899 = vmul.f32 %v8886, 0.2
      %v8900 = vsel %vm8888, %v8632, %v8894
      %v8901 = vsel %vm8889, %v8758, %v8895
      %v8902 = vsel %vm8890, %v8884, %v8896
      %v8903 = vsel %vm8891, %v8634, %v8897
      %v8904 = vsel %vm8892, %v8760, %v8898
      %v8905 = vsel %vm8893, %v8886, %v8899
      %8906 = vst [vmem:[#allocation4 + $0x48] sm:$0xff] %v8900
      %8907 = vst [vmem:[#allocation4 + $0x50] sm:$0xff] %v8901
      %8908 = vst [vmem:[#allocation4 + $0x58] sm:$0xff] %v8902
      %8909 = vst [vmem:[#allocation4 + $0xd8] sm:$0xff] %v8903
      %8910 = vst [vmem:[#allocation4 + $0xe0] sm:$0xff] %v8904
      %8911 = vst [vmem:[#allocation4 + $0xe8] sm:$0xff] %v8905
      %v8912 = vld [vmem:[#allocation3 + $0x90] sm:$0xff]
      %v8913 = vld [vmem:[#allocation3 + $0x98] sm:$0xff]
      %v8914 = vld [vmem:[#allocation3 + $0xa0] sm:$0xff]
      %v8915 = vld [vmem:[#allocation3 + $0xa8] sm:$0xff]
      %v8916 = vld [vmem:[#allocation3 + $0xb0] sm:$0xff]
      %v8917 = vld [vmem:[#allocation3 + $0xb8] sm:$0xff]
      %v8918 = vld [vmem:[#allocation3 + $0xc0] sm:$0xff]
      %v8919 = vld [vmem:[#allocation3 + $0xc8] sm:$0xff]
      %v8920 = vld [vmem:[#allocation3 + $0xd0] sm:$0xff]
      %v8921 = vld [vmem:[#allocation3 + $0x168] sm:$0xff]
      %v8922 = vld [vmem:[#allocation3 + $0x170] sm:$0xff]
      %v8923 = vld [vmem:[#allocation3 + $0x178] sm:$0xff]
      %v8924 = vld [vmem:[#allocation3 + $0x180] sm:$0xff]
      %v8925 = vld [vmem:[#allocation3 + $0x188] sm:$0xff]
      %v8926 = vld [vmem:[#allocation3 + $0x190] sm:$0xff]
      %v8927 = vld [vmem:[#allocation3 + $0x198] sm:$0xff]
      %v8928 = vld [vmem:[#allocation3 + $0x1a0] sm:$0xff]
      %v8929 = vld [vmem:[#allocation3 + $0x1a8] sm:$0xff]
      %v8930 = vpack.c.bf16 %v8921, %v8912
      %v8931 = vpack.c.bf16 %v8922, %v8913
      %v8932 = vpack.c.bf16 %v8923, %v8914
      %v8933 = vpack.c.bf16 %v8924, %v8915
      %v8934 = vpack.c.bf16 %v8925, %v8916
      %v8935 = vpack.c.bf16 %v8926, %v8917
      %v8936 = vpack.c.bf16 %v8927, %v8918
      %v8937 = vpack.c.bf16 %v8928, %v8919
      %v8938 = vpack.c.bf16 %v8929, %v8920
      %8939 = vmatpush.bf16.msra.mxu0 %v7241
      %8940 = vmatpush.bf16.msra.mxu0 %v7238
      %8941 = vmatpush.bf16.msra.mxu0 %v7235
      %8942 = vmatpush.bf16.msra.mxu0 %v7232
      %8943 = vmatpush.bf16.msra.mxu0 %v7229
      %8944 = vmatpush.bf16.msra.mxu0 %v7226
      %8945 = vmatpush.bf16.msra.mxu0 %v7223
      %8946 = vmatpush.bf16.msra.mxu0 %v7220
      %8947 = vmatmul.bf16.gmra.mxu0 %v8930
      %v8948 = vpop.f32.mrf.mxu0
      %v8949 = vadd.f32 %v6494, %v8948
      %v8950 = vpop.f32.mrf.mxu0
      %v8951 = vadd.f32 %v6494, %v8950
      %8952 = vdwg.mxu0
      %8953 = vmatpush.bf16.msra.mxu0 %v7265
      %8954 = vmatpush.bf16.msra.mxu0 %v7262
      %8955 = vmatpush.bf16.msra.mxu0 %v7259
      %8956 = vmatpush.bf16.msra.mxu0 %v7256
      %8957 = vmatpush.bf16.msra.mxu0 %v7253
      %8958 = vmatpush.bf16.msra.mxu0 %v7250
      %8959 = vmatpush.bf16.msra.mxu0 %v7247
      %8960 = vmatpush.bf16.msra.mxu0 %v7244
      %8961 = vmatmul.bf16.gmra.mxu0 %v8931
      %v8962 = vpop.f32.mrf.mxu0
      %v8963 = vadd.f32 %v8949, %v8962
      %v8964 = vpop.f32.mrf.mxu0
      %v8965 = vadd.f32 %v8951, %v8964
      %8966 = vdwg.mxu0
      %8967 = vmatpush.bf16.msra.mxu0 %v7289
      %8968 = vmatpush.bf16.msra.mxu0 %v7286
      %8969 = vmatpush.bf16.msra.mxu0 %v7283
      %8970 = vmatpush.bf16.msra.mxu0 %v7280
      %8971 = vmatpush.bf16.msra.mxu0 %v7277
      %8972 = vmatpush.bf16.msra.mxu0 %v7274
      %8973 = vmatpush.bf16.msra.mxu0 %v7271
      %8974 = vmatpush.bf16.msra.mxu0 %v7268
      %8975 = vmatmul.bf16.gmra.mxu0 %v8932
      %v8976 = vpop.f32.mrf.mxu0
      %v8977 = vadd.f32 %v8963, %v8976
      %v8978 = vpop.f32.mrf.mxu0
      %v8979 = vadd.f32 %v8965, %v8978
      %8980 = vdwg.mxu0
      %8981 = vmatpush.bf16.msra.mxu0 %v7313
      %8982 = vmatpush.bf16.msra.mxu0 %v7310
      %8983 = vmatpush.bf16.msra.mxu0 %v7307
      %8984 = vmatpush.bf16.msra.mxu0 %v7304
      %8985 = vmatpush.bf16.msra.mxu0 %v7301
      %8986 = vmatpush.bf16.msra.mxu0 %v7298
      %8987 = vmatpush.bf16.msra.mxu0 %v7295
      %8988 = vmatpush.bf16.msra.mxu0 %v7292
      %8989 = vmatmul.bf16.gmra.mxu0 %v8933
      %v8990 = vpop.f32.mrf.mxu0
      %v8991 = vadd.f32 %v8977, %v8990
      %v8992 = vpop.f32.mrf.mxu0
      %v8993 = vadd.f32 %v8979, %v8992
      %8994 = vdwg.mxu0
      %8995 = vmatpush.bf16.msra.mxu0 %v7337
      %8996 = vmatpush.bf16.msra.mxu0 %v7334
      %8997 = vmatpush.bf16.msra.mxu0 %v7331
      %8998 = vmatpush.bf16.msra.mxu0 %v7328
      %8999 = vmatpush.bf16.msra.mxu0 %v7325
      %9000 = vmatpush.bf16.msra.mxu0 %v7322
      %9001 = vmatpush.bf16.msra.mxu0 %v7319
      %9002 = vmatpush.bf16.msra.mxu0 %v7316
      %9003 = vmatmul.bf16.gmra.mxu0 %v8934
      %v9004 = vpop.f32.mrf.mxu0
      %v9005 = vadd.f32 %v8991, %v9004
      %v9006 = vpop.f32.mrf.mxu0
      %v9007 = vadd.f32 %v8993, %v9006
      %9008 = vdwg.mxu0
      %9009 = vmatpush.bf16.msra.mxu0 %v7361
      %9010 = vmatpush.bf16.msra.mxu0 %v7358
      %9011 = vmatpush.bf16.msra.mxu0 %v7355
      %9012 = vmatpush.bf16.msra.mxu0 %v7352
      %9013 = vmatpush.bf16.msra.mxu0 %v7349
      %9014 = vmatpush.bf16.msra.mxu0 %v7346
      %9015 = vmatpush.bf16.msra.mxu0 %v7343
      %9016 = vmatpush.bf16.msra.mxu0 %v7340
      %9017 = vmatmul.bf16.gmra.mxu0 %v8935
      %v9018 = vpop.f32.mrf.mxu0
      %v9019 = vadd.f32 %v9005, %v9018
      %v9020 = vpop.f32.mrf.mxu0
      %v9021 = vadd.f32 %v9007, %v9020
      %9022 = vdwg.mxu0
      %9023 = vmatpush.bf16.msra.mxu0 %v7385
      %9024 = vmatpush.bf16.msra.mxu0 %v7382
      %9025 = vmatpush.bf16.msra.mxu0 %v7379
      %9026 = vmatpush.bf16.msra.mxu0 %v7376
      %9027 = vmatpush.bf16.msra.mxu0 %v7373
      %9028 = vmatpush.bf16.msra.mxu0 %v7370
      %9029 = vmatpush.bf16.msra.mxu0 %v7367
      %9030 = vmatpush.bf16.msra.mxu0 %v7364
      %9031 = vmatmul.bf16.gmra.mxu0 %v8936
      %v9032 = vpop.f32.mrf.mxu0
      %v9033 = vadd.f32 %v9019, %v9032
      %v9034 = vpop.f32.mrf.mxu0
      %v9035 = vadd.f32 %v9021, %v9034
      %9036 = vdwg.mxu0
      %9037 = vmatpush.bf16.msra.mxu0 %v7409
      %9038 = vmatpush.bf16.msra.mxu0 %v7406
      %9039 = vmatpush.bf16.msra.mxu0 %v7403
      %9040 = vmatpush.bf16.msra.mxu0 %v7400
      %9041 = vmatpush.bf16.msra.mxu0 %v7397
      %9042 = vmatpush.bf16.msra.mxu0 %v7394
      %9043 = vmatpush.bf16.msra.mxu0 %v7391
      %9044 = vmatpush.bf16.msra.mxu0 %v7388
      %9045 = vmatmul.bf16.gmra.mxu0 %v8937
      %v9046 = vpop.f32.mrf.mxu0
      %v9047 = vadd.f32 %v9033, %v9046
      %v9048 = vpop.f32.mrf.mxu0
      %v9049 = vadd.f32 %v9035, %v9048
      %9050 = vdwg.mxu0
      %9051 = vmatpush.bf16.msra.mxu0 %v7433
      %9052 = vmatpush.bf16.msra.mxu0 %v7430
      %9053 = vmatpush.bf16.msra.mxu0 %v7427
      %9054 = vmatpush.bf16.msra.mxu0 %v7424
      %9055 = vmatpush.bf16.msra.mxu0 %v7421
      %9056 = vmatpush.bf16.msra.mxu0 %v7418
      %9057 = vmatpush.bf16.msra.mxu0 %v7415
      %9058 = vmatpush.bf16.msra.mxu0 %v7412
      %9059 = vmatmul.bf16.gmra.mxu0 %v8938
      %v9060 = vpop.f32.mrf.mxu0
      %v9061 = vadd.f32 %v9047, %v9060
      %v9062 = vpop.f32.mrf.mxu0
      %v9063 = vadd.f32 %v9049, %v9062
      %9064 = vdwg.mxu0
      %9065 = vmatpush.bf16.msra.mxu0 %v7242
      %9066 = vmatpush.bf16.msra.mxu0 %v7239
      %9067 = vmatpush.bf16.msra.mxu0 %v7236
      %9068 = vmatpush.bf16.msra.mxu0 %v7233
      %9069 = vmatpush.bf16.msra.mxu0 %v7230
      %9070 = vmatpush.bf16.msra.mxu0 %v7227
      %9071 = vmatpush.bf16.msra.mxu0 %v7224
      %9072 = vmatpush.bf16.msra.mxu0 %v7221
      %9073 = vmatmul.bf16.gmra.mxu0 %v8930
      %v9074 = vpop.f32.mrf.mxu0
      %v9075 = vadd.f32 %v6495, %v9074
      %v9076 = vpop.f32.mrf.mxu0
      %v9077 = vadd.f32 %v6495, %v9076
      %9078 = vdwg.mxu0
      %9079 = vmatpush.bf16.msra.mxu0 %v7266
      %9080 = vmatpush.bf16.msra.mxu0 %v7263
      %9081 = vmatpush.bf16.msra.mxu0 %v7260
      %9082 = vmatpush.bf16.msra.mxu0 %v7257
      %9083 = vmatpush.bf16.msra.mxu0 %v7254
      %9084 = vmatpush.bf16.msra.mxu0 %v7251
      %9085 = vmatpush.bf16.msra.mxu0 %v7248
      %9086 = vmatpush.bf16.msra.mxu0 %v7245
      %9087 = vmatmul.bf16.gmra.mxu0 %v8931
      %v9088 = vpop.f32.mrf.mxu0
      %v9089 = vadd.f32 %v9075, %v9088
      %v9090 = vpop.f32.mrf.mxu0
      %v9091 = vadd.f32 %v9077, %v9090
      %9092 = vdwg.mxu0
      %9093 = vmatpush.bf16.msra.mxu0 %v7290
      %9094 = vmatpush.bf16.msra.mxu0 %v7287
      %9095 = vmatpush.bf16.msra.mxu0 %v7284
      %9096 = vmatpush.bf16.msra.mxu0 %v7281
      %9097 = vmatpush.bf16.msra.mxu0 %v7278
      %9098 = vmatpush.bf16.msra.mxu0 %v7275
      %9099 = vmatpush.bf16.msra.mxu0 %v7272
      %9100 = vmatpush.bf16.msra.mxu0 %v7269
      %9101 = vmatmul.bf16.gmra.mxu0 %v8932
      %v9102 = vpop.f32.mrf.mxu0
      %v9103 = vadd.f32 %v9089, %v9102
      %v9104 = vpop.f32.mrf.mxu0
      %v9105 = vadd.f32 %v9091, %v9104
      %9106 = vdwg.mxu0
      %9107 = vmatpush.bf16.msra.mxu0 %v7314
      %9108 = vmatpush.bf16.msra.mxu0 %v7311
      %9109 = vmatpush.bf16.msra.mxu0 %v7308
      %9110 = vmatpush.bf16.msra.mxu0 %v7305
      %9111 = vmatpush.bf16.msra.mxu0 %v7302
      %9112 = vmatpush.bf16.msra.mxu0 %v7299
      %9113 = vmatpush.bf16.msra.mxu0 %v7296
      %9114 = vmatpush.bf16.msra.mxu0 %v7293
      %9115 = vmatmul.bf16.gmra.mxu0 %v8933
      %v9116 = vpop.f32.mrf.mxu0
      %v9117 = vadd.f32 %v9103, %v9116
      %v9118 = vpop.f32.mrf.mxu0
      %v9119 = vadd.f32 %v9105, %v9118
      %9120 = vdwg.mxu0
      %9121 = vmatpush.bf16.msra.mxu0 %v7338
      %9122 = vmatpush.bf16.msra.mxu0 %v7335
      %9123 = vmatpush.bf16.msra.mxu0 %v7332
      %9124 = vmatpush.bf16.msra.mxu0 %v7329
      %9125 = vmatpush.bf16.msra.mxu0 %v7326
      %9126 = vmatpush.bf16.msra.mxu0 %v7323
      %9127 = vmatpush.bf16.msra.mxu0 %v7320
      %9128 = vmatpush.bf16.msra.mxu0 %v7317
      %9129 = vmatmul.bf16.gmra.mxu0 %v8934
      %v9130 = vpop.f32.mrf.mxu0
      %v9131 = vadd.f32 %v9117, %v9130
      %v9132 = vpop.f32.mrf.mxu0
      %v9133 = vadd.f32 %v9119, %v9132
      %9134 = vdwg.mxu0
      %9135 = vmatpush.bf16.msra.mxu0 %v7362
      %9136 = vmatpush.bf16.msra.mxu0 %v7359
      %9137 = vmatpush.bf16.msra.mxu0 %v7356
      %9138 = vmatpush.bf16.msra.mxu0 %v7353
      %9139 = vmatpush.bf16.msra.mxu0 %v7350
      %9140 = vmatpush.bf16.msra.mxu0 %v7347
      %9141 = vmatpush.bf16.msra.mxu0 %v7344
      %9142 = vmatpush.bf16.msra.mxu0 %v7341
      %9143 = vmatmul.bf16.gmra.mxu0 %v8935
      %v9144 = vpop.f32.mrf.mxu0
      %v9145 = vadd.f32 %v9131, %v9144
      %v9146 = vpop.f32.mrf.mxu0
      %v9147 = vadd.f32 %v9133, %v9146
      %9148 = vdwg.mxu0
      %9149 = vmatpush.bf16.msra.mxu0 %v7386
      %9150 = vmatpush.bf16.msra.mxu0 %v7383
      %9151 = vmatpush.bf16.msra.mxu0 %v7380
      %9152 = vmatpush.bf16.msra.mxu0 %v7377
      %9153 = vmatpush.bf16.msra.mxu0 %v7374
      %9154 = vmatpush.bf16.msra.mxu0 %v7371
      %9155 = vmatpush.bf16.msra.mxu0 %v7368
      %9156 = vmatpush.bf16.msra.mxu0 %v7365
      %9157 = vmatmul.bf16.gmra.mxu0 %v8936
      %v9158 = vpop.f32.mrf.mxu0
      %v9159 = vadd.f32 %v9145, %v9158
      %v9160 = vpop.f32.mrf.mxu0
      %v9161 = vadd.f32 %v9147, %v9160
      %9162 = vdwg.mxu0
      %9163 = vmatpush.bf16.msra.mxu0 %v7410
      %9164 = vmatpush.bf16.msra.mxu0 %v7407
      %9165 = vmatpush.bf16.msra.mxu0 %v7404
      %9166 = vmatpush.bf16.msra.mxu0 %v7401
      %9167 = vmatpush.bf16.msra.mxu0 %v7398
      %9168 = vmatpush.bf16.msra.mxu0 %v7395
      %9169 = vmatpush.bf16.msra.mxu0 %v7392
      %9170 = vmatpush.bf16.msra.mxu0 %v7389
      %9171 = vmatmul.bf16.gmra.mxu0 %v8937
      %v9172 = vpop.f32.mrf.mxu0
      %v9173 = vadd.f32 %v9159, %v9172
      %v9174 = vpop.f32.mrf.mxu0
      %v9175 = vadd.f32 %v9161, %v9174
      %9176 = vdwg.mxu0
      %9177 = vmatpush.bf16.msra.mxu0 %v7434
      %9178 = vmatpush.bf16.msra.mxu0 %v7431
      %9179 = vmatpush.bf16.msra.mxu0 %v7428
      %9180 = vmatpush.bf16.msra.mxu0 %v7425
      %9181 = vmatpush.bf16.msra.mxu0 %v7422
      %9182 = vmatpush.bf16.msra.mxu0 %v7419
      %9183 = vmatpush.bf16.msra.mxu0 %v7416
      %9184 = vmatpush.bf16.msra.mxu0 %v7413
      %9185 = vmatmul.bf16.gmra.mxu0 %v8938
      %v9186 = vpop.f32.mrf.mxu0
      %v9187 = vadd.f32 %v9173, %v9186
      %v9188 = vpop.f32.mrf.mxu0
      %v9189 = vadd.f32 %v9175, %v9188
      %9190 = vdwg.mxu0
      %9191 = vmatpush.bf16.msra.mxu0 %v7243
      %9192 = vmatpush.bf16.msra.mxu0 %v7240
      %9193 = vmatpush.bf16.msra.mxu0 %v7237
      %9194 = vmatpush.bf16.msra.mxu0 %v7234
      %9195 = vmatpush.bf16.msra.mxu0 %v7231
      %9196 = vmatpush.bf16.msra.mxu0 %v7228
      %9197 = vmatpush.bf16.msra.mxu0 %v7225
      %9198 = vmatpush.bf16.msra.mxu0 %v7222
      %9199 = vmatmul.bf16.gmra.mxu0 %v8930
      %v9200 = vpop.f32.mrf.mxu0
      %v9201 = vadd.f32 %v6496, %v9200
      %v9202 = vpop.f32.mrf.mxu0
      %v9203 = vadd.f32 %v6496, %v9202
      %9204 = vdwg.mxu0
      %9205 = vmatpush.bf16.msra.mxu0 %v7267
      %9206 = vmatpush.bf16.msra.mxu0 %v7264
      %9207 = vmatpush.bf16.msra.mxu0 %v7261
      %9208 = vmatpush.bf16.msra.mxu0 %v7258
      %9209 = vmatpush.bf16.msra.mxu0 %v7255
      %9210 = vmatpush.bf16.msra.mxu0 %v7252
      %9211 = vmatpush.bf16.msra.mxu0 %v7249
      %9212 = vmatpush.bf16.msra.mxu0 %v7246
      %9213 = vmatmul.bf16.gmra.mxu0 %v8931
      %v9214 = vpop.f32.mrf.mxu0
      %v9215 = vadd.f32 %v9201, %v9214
      %v9216 = vpop.f32.mrf.mxu0
      %v9217 = vadd.f32 %v9203, %v9216
      %9218 = vdwg.mxu0
      %9219 = vmatpush.bf16.msra.mxu0 %v7291
      %9220 = vmatpush.bf16.msra.mxu0 %v7288
      %9221 = vmatpush.bf16.msra.mxu0 %v7285
      %9222 = vmatpush.bf16.msra.mxu0 %v7282
      %9223 = vmatpush.bf16.msra.mxu0 %v7279
      %9224 = vmatpush.bf16.msra.mxu0 %v7276
      %9225 = vmatpush.bf16.msra.mxu0 %v7273
      %9226 = vmatpush.bf16.msra.mxu0 %v7270
      %9227 = vmatmul.bf16.gmra.mxu0 %v8932
      %v9228 = vpop.f32.mrf.mxu0
      %v9229 = vadd.f32 %v9215, %v9228
      %v9230 = vpop.f32.mrf.mxu0
      %v9231 = vadd.f32 %v9217, %v9230
      %9232 = vdwg.mxu0
      %9233 = vmatpush.bf16.msra.mxu0 %v7315
      %9234 = vmatpush.bf16.msra.mxu0 %v7312
      %9235 = vmatpush.bf16.msra.mxu0 %v7309
      %9236 = vmatpush.bf16.msra.mxu0 %v7306
      %9237 = vmatpush.bf16.msra.mxu0 %v7303
      %9238 = vmatpush.bf16.msra.mxu0 %v7300
      %9239 = vmatpush.bf16.msra.mxu0 %v7297
      %9240 = vmatpush.bf16.msra.mxu0 %v7294
      %9241 = vmatmul.bf16.gmra.mxu0 %v8933
      %v9242 = vpop.f32.mrf.mxu0
      %v9243 = vadd.f32 %v9229, %v9242
      %v9244 = vpop.f32.mrf.mxu0
      %v9245 = vadd.f32 %v9231, %v9244
      %9246 = vdwg.mxu0
      %9247 = vmatpush.bf16.msra.mxu0 %v7339
      %9248 = vmatpush.bf16.msra.mxu0 %v7336
      %9249 = vmatpush.bf16.msra.mxu0 %v7333
      %9250 = vmatpush.bf16.msra.mxu0 %v7330
      %9251 = vmatpush.bf16.msra.mxu0 %v7327
      %9252 = vmatpush.bf16.msra.mxu0 %v7324
      %9253 = vmatpush.bf16.msra.mxu0 %v7321
      %9254 = vmatpush.bf16.msra.mxu0 %v7318
      %9255 = vmatmul.bf16.gmra.mxu0 %v8934
      %v9256 = vpop.f32.mrf.mxu0
      %v9257 = vadd.f32 %v9243, %v9256
      %v9258 = vpop.f32.mrf.mxu0
      %v9259 = vadd.f32 %v9245, %v9258
      %9260 = vdwg.mxu0
      %9261 = vmatpush.bf16.msra.mxu0 %v7363
      %9262 = vmatpush.bf16.msra.mxu0 %v7360
      %9263 = vmatpush.bf16.msra.mxu0 %v7357
      %9264 = vmatpush.bf16.msra.mxu0 %v7354
      %9265 = vmatpush.bf16.msra.mxu0 %v7351
      %9266 = vmatpush.bf16.msra.mxu0 %v7348
      %9267 = vmatpush.bf16.msra.mxu0 %v7345
      %9268 = vmatpush.bf16.msra.mxu0 %v7342
      %9269 = vmatmul.bf16.gmra.mxu0 %v8935
      %v9270 = vpop.f32.mrf.mxu0
      %v9271 = vadd.f32 %v9257, %v9270
      %v9272 = vpop.f32.mrf.mxu0
      %v9273 = vadd.f32 %v9259, %v9272
      %9274 = vdwg.mxu0
      %9275 = vmatpush.bf16.msra.mxu0 %v7387
      %9276 = vmatpush.bf16.msra.mxu0 %v7384
      %9277 = vmatpush.bf16.msra.mxu0 %v7381
      %9278 = vmatpush.bf16.msra.mxu0 %v7378
      %9279 = vmatpush.bf16.msra.mxu0 %v7375
      %9280 = vmatpush.bf16.msra.mxu0 %v7372
      %9281 = vmatpush.bf16.msra.mxu0 %v7369
      %9282 = vmatpush.bf16.msra.mxu0 %v7366
      %9283 = vmatmul.bf16.gmra.mxu0 %v8936
      %v9284 = vpop.f32.mrf.mxu0
      %v9285 = vadd.f32 %v9271, %v9284
      %v9286 = vpop.f32.mrf.mxu0
      %v9287 = vadd.f32 %v9273, %v9286
      %9288 = vdwg.mxu0
      %9289 = vmatpush.bf16.msra.mxu0 %v7411
      %9290 = vmatpush.bf16.msra.mxu0 %v7408
      %9291 = vmatpush.bf16.msra.mxu0 %v7405
      %9292 = vmatpush.bf16.msra.mxu0 %v7402
      %9293 = vmatpush.bf16.msra.mxu0 %v7399
      %9294 = vmatpush.bf16.msra.mxu0 %v7396
      %9295 = vmatpush.bf16.msra.mxu0 %v7393
      %9296 = vmatpush.bf16.msra.mxu0 %v7390
      %9297 = vmatmul.bf16.gmra.mxu0 %v8937
      %v9298 = vpop.f32.mrf.mxu0
      %v9299 = vadd.f32 %v9285, %v9298
      %v9300 = vpop.f32.mrf.mxu0
      %v9301 = vadd.f32 %v9287, %v9300
      %9302 = vdwg.mxu0
      %9303 = vmatpush.bf16.msra.mxu0 %v7435
      %9304 = vmatpush.bf16.msra.mxu0 %v7432
      %9305 = vmatpush.bf16.msra.mxu0 %v7429
      %9306 = vmatpush.bf16.msra.mxu0 %v7426
      %9307 = vmatpush.bf16.msra.mxu0 %v7423
      %9308 = vmatpush.bf16.msra.mxu0 %v7420
      %9309 = vmatpush.bf16.msra.mxu0 %v7417
      %9310 = vmatpush.bf16.msra.mxu0 %v7414
      %9311 = vmatmul.bf16.gmra.mxu0 %v8938
      %v9312 = vpop.f32.mrf.mxu0
      %v9313 = vadd.f32 %v9299, %v9312
      %v9314 = vpop.f32.mrf.mxu0
      %v9315 = vadd.f32 %v9301, %v9314
      %9316 = vdwg.mxu0
      %vm9317 = vcmp.gt.f32.partialorder %v9061, 0.0
      %vm9318 = vcmp.gt.f32.partialorder %v9187, 0.0
      %vm9319 = vcmp.gt.f32.partialorder %v9313, 0.0
      %vm9320 = vcmp.gt.f32.partialorder %v9063, 0.0
      %vm9321 = vcmp.gt.f32.partialorder %v9189, 0.0
      %vm9322 = vcmp.gt.f32.partialorder %v9315, 0.0
      %v9323 = vmul.f32 %v9061, 0.2
      %v9324 = vmul.f32 %v9187, 0.2
      %v9325 = vmul.f32 %v9313, 0.2
      %v9326 = vmul.f32 %v9063, 0.2
      %v9327 = vmul.f32 %v9189, 0.2
      %v9328 = vmul.f32 %v9315, 0.2
      %v9329 = vsel %vm9317, %v9061, %v9323
      %v9330 = vsel %vm9318, %v9187, %v9324
      %v9331 = vsel %vm9319, %v9313, %v9325
      %v9332 = vsel %vm9320, %v9063, %v9326
      %v9333 = vsel %vm9321, %v9189, %v9327
      %v9334 = vsel %vm9322, %v9315, %v9328
      %9335 = vst [vmem:[#allocation4 + $0x60] sm:$0xff] %v9329
      %9336 = vst [vmem:[#allocation4 + $0x68] sm:$0xff] %v9330
      %9337 = vst [vmem:[#allocation4 + $0x70] sm:$0xff] %v9331
      %9338 = vst [vmem:[#allocation4 + $0xf0] sm:$0xff] %v9332
      %9339 = vst [vmem:[#allocation4 + $0xf8] sm:$0xff] %v9333
      %9340 = vst [vmem:[#allocation4 + $0x100] sm:$0xff] %v9334
      %v9341 = vld [vmem:[#allocation4] sm:$0xff]
      %v9342 = vld [vmem:[#allocation4 + $0x8] sm:$0xff]
      %v9343 = vld [vmem:[#allocation4 + $0x10] sm:$0xff]
      %v9344 = vld [vmem:[#allocation4 + $0x18] sm:$0xff]
      %v9345 = vld [vmem:[#allocation4 + $0x20] sm:$0xff]
      %v9346 = vld [vmem:[#allocation4 + $0x28] sm:$0xff]
      %v9347 = vld [vmem:[#allocation4 + $0x30] sm:$0xff]
      %v9348 = vld [vmem:[#allocation4 + $0x38] sm:$0xff]
      %v9349 = vld [vmem:[#allocation4 + $0x40] sm:$0xff]
      %v9350 = vld [vmem:[#allocation4 + $0x48] sm:$0xff]
      %v9351 = vld [vmem:[#allocation4 + $0x50] sm:$0xff]
      %v9352 = vld [vmem:[#allocation4 + $0x58] sm:$0xff]
      %v9353 = vld [vmem:[#allocation4 + $0x60] sm:$0xff]
      %v9354 = vld [vmem:[#allocation4 + $0x68] sm:$0xff]
      %v9355 = vld [vmem:[#allocation4 + $0x70] sm:$0xff]
      %v9356 = vld [vmem:[#allocation4 + $0x78] sm:$0xff]
      %v9357 = vld [vmem:[#allocation4 + $0x80] sm:$0xff]
      %v9358 = vld [vmem:[#allocation4 + $0x88] sm:$0xff]
      %v9359 = vld [vmem:[#allocation4 + $0x90] sm:$0xff]
      %v9360 = vld [vmem:[#allocation4 + $0x98] sm:$0xff]
      %v9361 = vld [vmem:[#allocation4 + $0xa0] sm:$0xff]
      %v9362 = vld [vmem:[#allocation4 + $0xa8] sm:$0xff]
      %v9363 = vld [vmem:[#allocation4 + $0xb0] sm:$0xff]
      %v9364 = vld [vmem:[#allocation4 + $0xb8] sm:$0xff]
      %v9365 = vld [vmem:[#allocation4 + $0xc0] sm:$0xff]
      %v9366 = vld [vmem:[#allocation4 + $0xc8] sm:$0xff]
      %v9367 = vld [vmem:[#allocation4 + $0xd0] sm:$0xff]
      %v9368 = vld [vmem:[#allocation4 + $0xd8] sm:$0xff]
      %v9369 = vld [vmem:[#allocation4 + $0xe0] sm:$0xff]
      %v9370 = vld [vmem:[#allocation4 + $0xe8] sm:$0xff]
      %v9371 = vld [vmem:[#allocation4 + $0xf0] sm:$0xff]
      %v9372 = vld [vmem:[#allocation4 + $0xf8] sm:$0xff]
      %v9373 = vld [vmem:[#allocation4 + $0x100] sm:$0xff]
      %v9374 = vld [vmem:[#allocation4 + $0x108] sm:$0xff]
      %v9375 = vld [vmem:[#allocation4 + $0x110] sm:$0xff]
      %v9376 = vld [vmem:[#allocation4 + $0x118] sm:$0xff]
      %v9377 = vadd.f32 %v9341, %v9342
      %v9378 = vadd.f32 %v9377, %v9343
      %v9379 = vadd.f32 %v9378, %v9344
      %v9380 = vadd.f32 %v9379, %v9345
      %v9381 = vadd.f32 %v9380, %v9346
      %v9382 = vadd.f32 %v9381, %v9347
      %v9383 = vadd.f32 %v9382, %v9348
      %v9384 = vadd.f32 %v9383, %v9349
      %v9385 = vadd.f32 %v9384, %v9350
      %v9386 = vadd.f32 %v9385, %v9351
      %v9387 = vadd.f32 %v9386, %v9352
      %v9388 = vadd.f32 %v9387, %v9353
      %v9389 = vadd.f32 %v9388, %v9354
      %v9390 = vadd.f32 %v9389, %v9355
      %v9391 = vadd.f32 %v9390, %v9356
      %v9392 = vadd.f32 %v9391, %v9357
      %v9393 = vadd.f32 %v9392, %v9358
      %9394 = vadd.xlane.f32.xlu0 %v9393
      %v9395 = vpop.xlane.xlu0 %9394
      %v9396 = vadd.f32 %v9359, %v9360
      %v9397 = vadd.f32 %v9396, %v9361
      %v9398 = vadd.f32 %v9397, %v9362
      %v9399 = vadd.f32 %v9398, %v9363
      %v9400 = vadd.f32 %v9399, %v9364
      %v9401 = vadd.f32 %v9400, %v9365
      %v9402 = vadd.f32 %v9401, %v9366
      %v9403 = vadd.f32 %v9402, %v9367
      %v9404 = vadd.f32 %v9403, %v9368
      %v9405 = vadd.f32 %v9404, %v9369
      %v9406 = vadd.f32 %v9405, %v9370
      %v9407 = vadd.f32 %v9406, %v9371
      %v9408 = vadd.f32 %v9407, %v9372
      %v9409 = vadd.f32 %v9408, %v9373
      %v9410 = vadd.f32 %v9409, %v9374
      %v9411 = vadd.f32 %v9410, %v9375
      %v9412 = vadd.f32 %v9411, %v9376
      %9413 = vadd.xlane.f32.xlu0 %v9412
      %v9414 = vpop.xlane.xlu0 %9413
      %v9415 = vmul.f32 %v9395, 0.0009765625
      %v9416 = vmul.f32 %v9414, 0.0009765625
      %v9417 = vmul.f32 %v9341, %v9341
      %v9418 = vmul.f32 %v9342, %v9342
      %v9419 = vmul.f32 %v9343, %v9343
      %v9420 = vmul.f32 %v9344, %v9344
      %v9421 = vmul.f32 %v9345, %v9345
      %v9422 = vmul.f32 %v9346, %v9346
      %v9423 = vmul.f32 %v9347, %v9347
      %v9424 = vmul.f32 %v9348, %v9348
      %v9425 = vmul.f32 %v9349, %v9349
      %v9426 = vmul.f32 %v9350, %v9350
      %v9427 = vmul.f32 %v9351, %v9351
      %v9428 = vmul.f32 %v9352, %v9352
      %v9429 = vmul.f32 %v9353, %v9353
      %v9430 = vmul.f32 %v9354, %v9354
      %v9431 = vmul.f32 %v9355, %v9355
      %v9432 = vmul.f32 %v9356, %v9356
      %v9433 = vmul.f32 %v9357, %v9357
      %v9434 = vmul.f32 %v9358, %v9358
      %v9435 = vmul.f32 %v9359, %v9359
      %v9436 = vmul.f32 %v9360, %v9360
      %v9437 = vmul.f32 %v9361, %v9361
      %v9438 = vmul.f32 %v9362, %v9362
      %v9439 = vmul.f32 %v9363, %v9363
      %v9440 = vmul.f32 %v9364, %v9364
      %v9441 = vmul.f32 %v9365, %v9365
      %v9442 = vmul.f32 %v9366, %v9366
      %v9443 = vmul.f32 %v9367, %v9367
      %v9444 = vmul.f32 %v9368, %v9368
      %v9445 = vmul.f32 %v9369, %v9369
      %v9446 = vmul.f32 %v9370, %v9370
      %v9447 = vmul.f32 %v9371, %v9371
      %v9448 = vmul.f32 %v9372, %v9372
      %v9449 = vmul.f32 %v9373, %v9373
      %v9450 = vmul.f32 %v9374, %v9374
      %v9451 = vmul.f32 %v9375, %v9375
      %v9452 = vmul.f32 %v9376, %v9376
      %v9453 = vadd.f32 %v9417, %v9418
      %v9454 = vadd.f32 %v9453, %v9419
      %v9455 = vadd.f32 %v9454, %v9420
      %v9456 = vadd.f32 %v9455, %v9421
      %v9457 = vadd.f32 %v9456, %v9422
      %v9458 = vadd.f32 %v9457, %v9423
      %v9459 = vadd.f32 %v9458, %v9424
      %v9460 = vadd.f32 %v9459, %v9425
      %v9461 = vadd.f32 %v9460, %v9426
      %v9462 = vadd.f32 %v9461, %v9427
      %v9463 = vadd.f32 %v9462, %v9428
      %v9464 = vadd.f32 %v9463, %v9429
      %v9465 = vadd.f32 %v9464, %v9430
      %v9466 = vadd.f32 %v9465, %v9431
      %v9467 = vadd.f32 %v9466, %v9432
      %v9468 = vadd.f32 %v9467, %v9433
      %v9469 = vadd.f32 %v9468, %v9434
      %9470 = vadd.xlane.f32.xlu0 %v9469
      %v9471 = vpop.xlane.xlu0 %9470
      %v9472 = vadd.f32 %v9435, %v9436
      %v9473 = vadd.f32 %v9472, %v9437
      %v9474 = vadd.f32 %v9473, %v9438
      %v9475 = vadd.f32 %v9474, %v9439
      %v9476 = vadd.f32 %v9475, %v9440
      %v9477 = vadd.f32 %v9476, %v9441
      %v9478 = vadd.f32 %v9477, %v9442
      %v9479 = vadd.f32 %v9478, %v9443
      %v9480 = vadd.f32 %v9479, %v9444
      %v9481 = vadd.f32 %v9480, %v9445
      %v9482 = vadd.f32 %v9481, %v9446
      %v9483 = vadd.f32 %v9482, %v9447
      %v9484 = vadd.f32 %v9483, %v9448
      %v9485 = vadd.f32 %v9484, %v9449
      %v9486 = vadd.f32 %v9485, %v9450
      %v9487 = vadd.f32 %v9486, %v9451
      %v9488 = vadd.f32 %v9487, %v9452
      %9489 = vadd.xlane.f32.xlu0 %v9488
      %v9490 = vpop.xlane.xlu0 %9489
      %v9491 = vmul.f32 %v9471, 0.0009765625
      %v9492 = vmul.f32 %v9490, 0.0009765625
      %v9493 = vmul.f32 %v9415, %v9415
      %v9494 = vmul.f32 %v9416, %v9416
      %v9495 = vsub.f32 %v9491, %v9493
      %v9496 = vsub.f32 %v9492, %v9494
      %v9497 = vmax.f32 %v9495, 0.0
      %v9498 = vmax.f32 %v9496, 0.0
      %v9499 = vadd.f32 %v9497, 1e-05
      %v9500 = vadd.f32 %v9498, 1e-05
      %v9501 = vrsqrt.pop %v9499
      %v9502 = vmul.f32 %v9501, %v9499
      %v9503 = vmul.f32 %v9502, %v9501
      %v9504 = vmul.f32 0.5, %v9503
      %v9505 = vsub.f32 1.5, %v9504
      %v9506 = vmul.f32 %v9501, %v9505
      %vm9507 = vweird.f32 %v9499
      %vm9508 = vweird.f32 %v9501
      %vm9509 = vmor %vm9507, %vm9508
      %v9510 = vsel %vm9509, %v9501, %v9506
      %v9511 = vrsqrt.pop %v9500
      %v9512 = vmul.f32 %v9511, %v9500
      %v9513 = vmul.f32 %v9512, %v9511
      %v9514 = vmul.f32 0.5, %v9513
      %v9515 = vsub.f32 1.5, %v9514
      %v9516 = vmul.f32 %v9511, %v9515
      %vm9517 = vweird.f32 %v9500
      %vm9518 = vweird.f32 %v9511
      %vm9519 = vmor %vm9517, %vm9518
      %v9520 = vsel %vm9519, %v9511, %v9516
      %v9521 = vsub.f32 %v9341, %v9415
      %v9522 = vsub.f32 %v9342, %v9415
      %v9523 = vsub.f32 %v9343, %v9415
      %v9524 = vsub.f32 %v9344, %v9415
      %v9525 = vsub.f32 %v9345, %v9415
      %v9526 = vsub.f32 %v9346, %v9415
      %v9527 = vsub.f32 %v9347, %v9415
      %v9528 = vsub.f32 %v9348, %v9415
      %v9529 = vsub.f32 %v9349, %v9415
      %v9530 = vsub.f32 %v9350, %v9415
      %v9531 = vsub.f32 %v9351, %v9415
      %v9532 = vsub.f32 %v9352, %v9415
      %v9533 = vsub.f32 %v9353, %v9415
      %v9534 = vsub.f32 %v9354, %v9415
      %v9535 = vsub.f32 %v9355, %v9415
      %v9536 = vsub.f32 %v9356, %v9415
      %v9537 = vsub.f32 %v9357, %v9415
      %v9538 = vsub.f32 %v9358, %v9415
      %v9539 = vsub.f32 %v9359, %v9416
      %v9540 = vsub.f32 %v9360, %v9416
      %v9541 = vsub.f32 %v9361, %v9416
      %v9542 = vsub.f32 %v9362, %v9416
      %v9543 = vsub.f32 %v9363, %v9416
      %v9544 = vsub.f32 %v9364, %v9416
      %v9545 = vsub.f32 %v9365, %v9416
      %v9546 = vsub.f32 %v9366, %v9416
      %v9547 = vsub.f32 %v9367, %v9416
      %v9548 = vsub.f32 %v9368, %v9416
      %v9549 = vsub.f32 %v9369, %v9416
      %v9550 = vsub.f32 %v9370, %v9416
      %v9551 = vsub.f32 %v9371, %v9416
      %v9552 = vsub.f32 %v9372, %v9416
      %v9553 = vsub.f32 %v9373, %v9416
      %v9554 = vsub.f32 %v9374, %v9416
      %v9555 = vsub.f32 %v9375, %v9416
      %v9556 = vsub.f32 %v9376, %v9416
      %v9557 = vmul.f32 %v9521, %v9510
      %v9558 = vmul.f32 %v9522, %v9510
      %v9559 = vmul.f32 %v9523, %v9510
      %v9560 = vmul.f32 %v9524, %v9510
      %v9561 = vmul.f32 %v9525, %v9510
      %v9562 = vmul.f32 %v9526, %v9510
      %v9563 = vmul.f32 %v9527, %v9510
      %v9564 = vmul.f32 %v9528, %v9510
      %v9565 = vmul.f32 %v9529, %v9510
      %v9566 = vmul.f32 %v9530, %v9510
      %v9567 = vmul.f32 %v9531, %v9510
      %v9568 = vmul.f32 %v9532, %v9510
      %v9569 = vmul.f32 %v9533, %v9510
      %v9570 = vmul.f32 %v9534, %v9510
      %v9571 = vmul.f32 %v9535, %v9510
      %v9572 = vmul.f32 %v9536, %v9510
      %v9573 = vmul.f32 %v9537, %v9510
      %v9574 = vmul.f32 %v9538, %v9510
      %v9575 = vmul.f32 %v9539, %v9520
      %v9576 = vmul.f32 %v9540, %v9520
      %v9577 = vmul.f32 %v9541, %v9520
      %v9578 = vmul.f32 %v9542, %v9520
      %v9579 = vmul.f32 %v9543, %v9520
      %v9580 = vmul.f32 %v9544, %v9520
      %v9581 = vmul.f32 %v9545, %v9520
      %v9582 = vmul.f32 %v9546, %v9520
      %v9583 = vmul.f32 %v9547, %v9520
      %v9584 = vmul.f32 %v9548, %v9520
      %v9585 = vmul.f32 %v9549, %v9520
      %v9586 = vmul.f32 %v9550, %v9520
      %v9587 = vmul.f32 %v9551, %v9520
      %v9588 = vmul.f32 %v9552, %v9520
      %v9589 = vmul.f32 %v9553, %v9520
      %v9590 = vmul.f32 %v9554, %v9520
      %v9591 = vmul.f32 %v9555, %v9520
      %v9592 = vmul.f32 %v9556, %v9520
      %v9593 = vld [vmem:[%s11] sm:$0xff]
      %v9594 = vld [vmem:[%s11 + $0x8] sm:$0xff]
      %v9595 = vld [vmem:[%s11 + $0x10] sm:$0x3]
      %v9599 = vperm.slane %v9593, 0
      %v9600 = vperm.slane %v9593, 1
      %v9601 = vperm.slane %v9593, 2
      %v9602 = vperm.slane %v9593, 3
      %v9603 = vperm.slane %v9593, 4
      %v9604 = vperm.slane %v9593, 5
      %v9605 = vperm.slane %v9593, 6
      %v9606 = vperm.slane %v9593, 7
      %v9607 = vperm.slane %v9594, 0
      %v9608 = vperm.slane %v9594, 1
      %v9609 = vperm.slane %v9594, 2
      %v9610 = vperm.slane %v9594, 3
      %v9611 = vperm.slane %v9594, 4
      %v9612 = vperm.slane %v9594, 5
      %v9613 = vperm.slane %v9594, 6
      %v9614 = vperm.slane %v9594, 7
      %v9615 = vperm.slane %v9595, 0
      %v9616 = vperm.slane %v9595, 1
      %v9635 = vmul.f32 %v9557, %v9599
      %v9636 = vmul.f32 %v9558, %v9600
      %v9637 = vmul.f32 %v9559, %v9601
      %v9638 = vmul.f32 %v9560, %v9602
      %v9639 = vmul.f32 %v9561, %v9603
      %v9640 = vmul.f32 %v9562, %v9604
      %v9641 = vmul.f32 %v9563, %v9605
      %v9642 = vmul.f32 %v9564, %v9606
      %v9643 = vmul.f32 %v9565, %v9607
      %v9644 = vmul.f32 %v9566, %v9608
      %v9645 = vmul.f32 %v9567, %v9609
      %v9646 = vmul.f32 %v9568, %v9610
      %v9647 = vmul.f32 %v9569, %v9611
      %v9648 = vmul.f32 %v9570, %v9612
      %v9649 = vmul.f32 %v9571, %v9613
      %v9650 = vmul.f32 %v9572, %v9614
      %v9651 = vmul.f32 %v9573, %v9615
      %v9652 = vmul.f32 %v9574, %v9616
      %v9653 = vmul.f32 %v9575, %v9599
      %v9654 = vmul.f32 %v9576, %v9600
      %v9655 = vmul.f32 %v9577, %v9601
      %v9656 = vmul.f32 %v9578, %v9602
      %v9657 = vmul.f32 %v9579, %v9603
      %v9658 = vmul.f32 %v9580, %v9604
      %v9659 = vmul.f32 %v9581, %v9605
      %v9660 = vmul.f32 %v9582, %v9606
      %v9661 = vmul.f32 %v9583, %v9607
      %v9662 = vmul.f32 %v9584, %v9608
      %v9663 = vmul.f32 %v9585, %v9609
      %v9664 = vmul.f32 %v9586, %v9610
      %v9665 = vmul.f32 %v9587, %v9611
      %v9666 = vmul.f32 %v9588, %v9612
      %v9667 = vmul.f32 %v9589, %v9613
      %v9668 = vmul.f32 %v9590, %v9614
      %v9669 = vmul.f32 %v9591, %v9615
      %v9670 = vmul.f32 %v9592, %v9616
      %v9671 = vld [vmem:[%s12] sm:$0xff]
      %v9672 = vld [vmem:[%s12 + $0x8] sm:$0xff]
      %v9673 = vld [vmem:[%s12 + $0x10] sm:$0x3]
      %v9677 = vperm.slane %v9671, 0
      %v9678 = vperm.slane %v9671, 1
      %v9679 = vperm.slane %v9671, 2
      %v9680 = vperm.slane %v9671, 3
      %v9681 = vperm.slane %v9671, 4
      %v9682 = vperm.slane %v9671, 5
      %v9683 = vperm.slane %v9671, 6
      %v9684 = vperm.slane %v9671, 7
      %v9685 = vperm.slane %v9672, 0
      %v9686 = vperm.slane %v9672, 1
      %v9687 = vperm.slane %v9672, 2
      %v9688 = vperm.slane %v9672, 3
      %v9689 = vperm.slane %v9672, 4
      %v9690 = vperm.slane %v9672, 5
      %v9691 = vperm.slane %v9672, 6
      %v9692 = vperm.slane %v9672, 7
      %v9693 = vperm.slane %v9673, 0
      %v9694 = vperm.slane %v9673, 1
      %v9713 = vadd.f32 %v9635, %v9677
      %v9714 = vadd.f32 %v9636, %v9678
      %v9715 = vadd.f32 %v9637, %v9679
      %v9716 = vadd.f32 %v9638, %v9680
      %v9717 = vadd.f32 %v9639, %v9681
      %v9718 = vadd.f32 %v9640, %v9682
      %v9719 = vadd.f32 %v9641, %v9683
      %v9720 = vadd.f32 %v9642, %v9684
      %v9721 = vadd.f32 %v9643, %v9685
      %v9722 = vadd.f32 %v9644, %v9686
      %v9723 = vadd.f32 %v9645, %v9687
      %v9724 = vadd.f32 %v9646, %v9688
      %v9725 = vadd.f32 %v9647, %v9689
      %v9726 = vadd.f32 %v9648, %v9690
      %v9727 = vadd.f32 %v9649, %v9691
      %v9728 = vadd.f32 %v9650, %v9692
      %v9729 = vadd.f32 %v9651, %v9693
      %v9730 = vadd.f32 %v9652, %v9694
      %v9731 = vadd.f32 %v9653, %v9677
      %v9732 = vadd.f32 %v9654, %v9678
      %v9733 = vadd.f32 %v9655, %v9679
      %v9734 = vadd.f32 %v9656, %v9680
      %v9735 = vadd.f32 %v9657, %v9681
      %v9736 = vadd.f32 %v9658, %v9682
      %v9737 = vadd.f32 %v9659, %v9683
      %v9738 = vadd.f32 %v9660, %v9684
      %v9739 = vadd.f32 %v9661, %v9685
      %v9740 = vadd.f32 %v9662, %v9686
      %v9741 = vadd.f32 %v9663, %v9687
      %v9742 = vadd.f32 %v9664, %v9688
      %v9743 = vadd.f32 %v9665, %v9689
      %v9744 = vadd.f32 %v9666, %v9690
      %v9745 = vadd.f32 %v9667, %v9691
      %v9746 = vadd.f32 %v9668, %v9692
      %v9747 = vadd.f32 %v9669, %v9693
      %v9748 = vadd.f32 %v9670, %v9694
      %9749 = vst [vmem:[#allocation4] sm:$0xff] %v9713
      %9750 = vst [vmem:[#allocation4 + $0x8] sm:$0xff] %v9714
      %9751 = vst [vmem:[#allocation4 + $0x10] sm:$0xff] %v9715
      %9752 = vst [vmem:[#allocation4 + $0x18] sm:$0xff] %v9716
      %9753 = vst [vmem:[#allocation4 + $0x20] sm:$0xff] %v9717
      %9754 = vst [vmem:[#allocation4 + $0x28] sm:$0xff] %v9718
      %9755 = vst [vmem:[#allocation4 + $0x30] sm:$0xff] %v9719
      %9756 = vst [vmem:[#allocation4 + $0x38] sm:$0xff] %v9720
      %9757 = vst [vmem:[#allocation4 + $0x40] sm:$0xff] %v9721
      %9758 = vst [vmem:[#allocation4 + $0x48] sm:$0xff] %v9722
      %9759 = vst [vmem:[#allocation4 + $0x50] sm:$0xff] %v9723
      %9760 = vst [vmem:[#allocation4 + $0x58] sm:$0xff] %v9724
      %9761 = vst [vmem:[#allocation4 + $0x60] sm:$0xff] %v9725
      %9762 = vst [vmem:[#allocation4 + $0x68] sm:$0xff] %v9726
      %9763 = vst [vmem:[#allocation4 + $0x70] sm:$0xff] %v9727
      %9764 = vst [vmem:[#allocation4 + $0x78] sm:$0xff] %v9728
      %9765 = vst [vmem:[#allocation4 + $0x80] sm:$0xff] %v9729
      %9766 = vst [vmem:[#allocation4 + $0x88] sm:$0xff] %v9730
      %9767 = vst [vmem:[#allocation4 + $0x90] sm:$0xff] %v9731
      %9768 = vst [vmem:[#allocation4 + $0x98] sm:$0xff] %v9732
      %9769 = vst [vmem:[#allocation4 + $0xa0] sm:$0xff] %v9733
      %9770 = vst [vmem:[#allocation4 + $0xa8] sm:$0xff] %v9734
      %9771 = vst [vmem:[#allocation4 + $0xb0] sm:$0xff] %v9735
      %9772 = vst [vmem:[#allocation4 + $0xb8] sm:$0xff] %v9736
      %9773 = vst [vmem:[#allocation4 + $0xc0] sm:$0xff] %v9737
      %9774 = vst [vmem:[#allocation4 + $0xc8] sm:$0xff] %v9738
      %9775 = vst [vmem:[#allocation4 + $0xd0] sm:$0xff] %v9739
      %9776 = vst [vmem:[#allocation4 + $0xd8] sm:$0xff] %v9740
      %9777 = vst [vmem:[#allocation4 + $0xe0] sm:$0xff] %v9741
      %9778 = vst [vmem:[#allocation4 + $0xe8] sm:$0xff] %v9742
      %9779 = vst [vmem:[#allocation4 + $0xf0] sm:$0xff] %v9743
      %9780 = vst [vmem:[#allocation4 + $0xf8] sm:$0xff] %v9744
      %9781 = vst [vmem:[#allocation4 + $0x100] sm:$0xff] %v9745
      %9782 = vst [vmem:[#allocation4 + $0x108] sm:$0xff] %v9746
      %9783 = vst [vmem:[#allocation4 + $0x110] sm:$0xff] %v9747
      %9784 = vst [vmem:[#allocation4 + $0x118] sm:$0xff] %v9748
      %v9785 = vld [vmem:[%s4] sm:$0xff]
      %v9786 = vld [vmem:[%s4 + $0x8] sm:$0xff]
      %v9787 = vld [vmem:[%s4 + $0x10] sm:$0xff]
      %v9788 = vld [vmem:[%s4 + $0x18] sm:$0xff]
      %v9789 = vld [vmem:[%s4 + $0x20] sm:$0xff]
      %v9790 = vld [vmem:[%s4 + $0x28] sm:$0xff]
      %v9791 = vld [vmem:[%s4 + $0x30] sm:$0xff]
      %v9792 = vld [vmem:[%s4 + $0x38] sm:$0xff]
      %v9793 = vld [vmem:[%s4 + $0x40] sm:$0xff]
      %v9794 = vld [vmem:[%s4 + $0x48] sm:$0xff]
      %v9795 = vld [vmem:[%s4 + $0x50] sm:$0xff]
      %v9796 = vld [vmem:[%s4 + $0x58] sm:$0xff]
      %v9797 = vld [vmem:[%s4 + $0x60] sm:$0xff]
      %v9798 = vld [vmem:[%s4 + $0x68] sm:$0xff]
      %v9799 = vld [vmem:[%s4 + $0x70] sm:$0xff]
      %v9800 = vld [vmem:[%s4 + $0x78] sm:$0xff]
      %v9801 = vld [vmem:[%s4 + $0x80] sm:$0xff]
      %v9802 = vld [vmem:[%s4 + $0x88] sm:$0xff]
      %v9803 = vld [vmem:[%s4 + $0x90] sm:$0xff]
      %v9804 = vld [vmem:[%s4 + $0x98] sm:$0xff]
      %v9805 = vld [vmem:[%s4 + $0xa0] sm:$0xff]
      %v9806 = vld [vmem:[%s4 + $0xa8] sm:$0xff]
      %v9807 = vld [vmem:[%s4 + $0xb0] sm:$0xff]
      %v9808 = vld [vmem:[%s4 + $0xb8] sm:$0xff]
      %v9809 = vld [vmem:[%s4 + $0xc0] sm:$0xff]
      %v9810 = vld [vmem:[%s4 + $0xc8] sm:$0xff]
      %v9811 = vld [vmem:[%s4 + $0xd0] sm:$0xff]
      %v9812 = vld [vmem:[%s4 + $0xd8] sm:$0xff]
      %v9813 = vld [vmem:[%s4 + $0xe0] sm:$0xff]
      %v9814 = vld [vmem:[%s4 + $0xe8] sm:$0xff]
      %v9815 = vld [vmem:[%s4 + $0xf0] sm:$0xff]
      %v9816 = vld [vmem:[%s4 + $0xf8] sm:$0xff]
      %v9817 = vld [vmem:[%s4 + $0x100] sm:$0xff]
      %v9818 = vld [vmem:[%s4 + $0x108] sm:$0xff]
      %v9819 = vld [vmem:[%s4 + $0x110] sm:$0xff]
      %v9820 = vld [vmem:[%s4 + $0x118] sm:$0xff]
      %v9821 = vld [vmem:[%s4 + $0x120] sm:$0xff]
      %v9822 = vld [vmem:[%s4 + $0x128] sm:$0xff]
      %v9823 = vld [vmem:[%s4 + $0x130] sm:$0xff]
      %v9824 = vld [vmem:[%s4 + $0x138] sm:$0xff]
      %v9825 = vld [vmem:[%s4 + $0x140] sm:$0xff]
      %v9826 = vld [vmem:[%s4 + $0x148] sm:$0xff]
      %v9827 = vld [vmem:[%s4 + $0x150] sm:$0xff]
      %v9828 = vld [vmem:[%s4 + $0x158] sm:$0xff]
      %v9829 = vld [vmem:[%s4 + $0x160] sm:$0xff]
      %v9830 = vld [vmem:[%s4 + $0x168] sm:$0xff]
      %v9831 = vld [vmem:[%s4 + $0x170] sm:$0xff]
      %v9832 = vld [vmem:[%s4 + $0x178] sm:$0xff]
      %v9833 = vld [vmem:[%s4 + $0x180] sm:$0xff]
      %v9834 = vld [vmem:[%s4 + $0x188] sm:$0xff]
      %v9835 = vld [vmem:[%s4 + $0x190] sm:$0xff]
      %v9836 = vld [vmem:[%s4 + $0x198] sm:$0xff]
      %v9837 = vld [vmem:[%s4 + $0x1a0] sm:$0xff]
      %v9838 = vld [vmem:[%s4 + $0x1a8] sm:$0xff]
      %v9839 = vld [vmem:[%s4 + $0x1b0] sm:$0xff]
      %v9840 = vld [vmem:[%s4 + $0x1b8] sm:$0xff]
      %v9841 = vld [vmem:[%s4 + $0x1c0] sm:$0xff]
      %v9842 = vld [vmem:[%s4 + $0x1c8] sm:$0xff]
      %v9843 = vld [vmem:[%s4 + $0x1d0] sm:$0xff]
      %v9844 = vld [vmem:[%s4 + $0x1d8] sm:$0xff]
      %v9845 = vld [vmem:[%s4 + $0x1e0] sm:$0xff]
      %v9846 = vld [vmem:[%s4 + $0x1e8] sm:$0xff]
      %v9847 = vld [vmem:[%s4 + $0x1f0] sm:$0xff]
      %v9848 = vld [vmem:[%s4 + $0x1f8] sm:$0xff]
      %v9849 = vld [vmem:[%s4 + $0x200] sm:$0xff]
      %v9850 = vld [vmem:[%s4 + $0x208] sm:$0xff]
      %v9851 = vld [vmem:[%s4 + $0x210] sm:$0xff]
      %v9852 = vld [vmem:[%s4 + $0x218] sm:$0xff]
      %v9853 = vld [vmem:[%s4 + $0x220] sm:$0xff]
      %v9854 = vld [vmem:[%s4 + $0x228] sm:$0xff]
      %v9855 = vld [vmem:[%s4 + $0x230] sm:$0xff]
      %v9856 = vld [vmem:[%s4 + $0x238] sm:$0xff]
      %v9857 = vld [vmem:[%s4 + $0x240] sm:$0xff]
      %v9858 = vld [vmem:[%s4 + $0x248] sm:$0xff]
      %v9859 = vld [vmem:[%s4 + $0x250] sm:$0xff]
      %v9860 = vld [vmem:[%s4 + $0x258] sm:$0xff]
      %v9861 = vld [vmem:[%s4 + $0x260] sm:$0xff]
      %v9862 = vld [vmem:[%s4 + $0x268] sm:$0xff]
      %v9863 = vld [vmem:[%s4 + $0x270] sm:$0xff]
      %v9864 = vld [vmem:[%s4 + $0x278] sm:$0xff]
      %v9865 = vld [vmem:[%s4 + $0x280] sm:$0xff]
      %v9866 = vld [vmem:[%s4 + $0x288] sm:$0xff]
      %v9867 = vld [vmem:[%s4 + $0x290] sm:$0xff]
      %v9868 = vld [vmem:[%s4 + $0x298] sm:$0xff]
      %v9869 = vld [vmem:[%s4 + $0x2a0] sm:$0xff]
      %v9870 = vld [vmem:[%s4 + $0x2a8] sm:$0xff]
      %v9871 = vld [vmem:[%s4 + $0x2b0] sm:$0xff]
      %v9872 = vld [vmem:[%s4 + $0x2b8] sm:$0xff]
      %v9873 = vld [vmem:[%s4 + $0x2c0] sm:$0xff]
      %v9874 = vld [vmem:[%s4 + $0x2c8] sm:$0xff]
      %v9875 = vld [vmem:[%s4 + $0x2d0] sm:$0xff]
      %v9876 = vld [vmem:[%s4 + $0x2d8] sm:$0xff]
      %v9877 = vld [vmem:[%s4 + $0x2e0] sm:$0xff]
      %v9878 = vld [vmem:[%s4 + $0x2e8] sm:$0xff]
      %v9879 = vld [vmem:[%s4 + $0x2f0] sm:$0xff]
      %v9880 = vld [vmem:[%s4 + $0x2f8] sm:$0xff]
      %v9881 = vld [vmem:[%s4 + $0x300] sm:$0xff]
      %v9882 = vld [vmem:[%s4 + $0x308] sm:$0xff]
      %v9883 = vld [vmem:[%s4 + $0x310] sm:$0xff]
      %v9884 = vld [vmem:[%s4 + $0x318] sm:$0xff]
      %v9885 = vld [vmem:[%s4 + $0x320] sm:$0xff]
      %v9886 = vld [vmem:[%s4 + $0x328] sm:$0xff]
      %v9887 = vld [vmem:[%s4 + $0x330] sm:$0xff]
      %v9888 = vld [vmem:[%s4 + $0x338] sm:$0xff]
      %v9889 = vld [vmem:[%s4 + $0x340] sm:$0xff]
      %v9890 = vld [vmem:[%s4 + $0x348] sm:$0xff]
      %v9891 = vld [vmem:[%s4 + $0x350] sm:$0xff]
      %v9892 = vld [vmem:[%s4 + $0x358] sm:$0xff]
      %v9893 = vld [vmem:[%s4 + $0x360] sm:$0xff]
      %v9894 = vld [vmem:[%s4 + $0x368] sm:$0xff]
      %v9895 = vld [vmem:[%s4 + $0x370] sm:$0xff]
      %v9896 = vld [vmem:[%s4 + $0x378] sm:$0xff]
      %v9897 = vld [vmem:[%s4 + $0x380] sm:$0xff]
      %v9898 = vld [vmem:[%s4 + $0x388] sm:$0xff]
      %v9899 = vld [vmem:[%s4 + $0x390] sm:$0xff]
      %v9900 = vld [vmem:[%s4 + $0x398] sm:$0xff]
      %v9901 = vld [vmem:[%s4 + $0x3a0] sm:$0xff]
      %v9902 = vld [vmem:[%s4 + $0x3a8] sm:$0xff]
      %v9903 = vld [vmem:[%s4 + $0x3b0] sm:$0xff]
      %v9904 = vld [vmem:[%s4 + $0x3b8] sm:$0xff]
      %v9905 = vld [vmem:[%s4 + $0x3c0] sm:$0xff]
      %v9906 = vld [vmem:[%s4 + $0x3c8] sm:$0xff]
      %v9907 = vld [vmem:[%s4 + $0x3d0] sm:$0xff]
      %v9908 = vld [vmem:[%s4 + $0x3d8] sm:$0xff]
      %v9909 = vld [vmem:[%s4 + $0x3e0] sm:$0xff]
      %v9910 = vld [vmem:[%s4 + $0x3e8] sm:$0xff]
      %v9911 = vld [vmem:[%s4 + $0x3f0] sm:$0xff]
      %v9912 = vld [vmem:[%s4 + $0x3f8] sm:$0xff]
      %v9913 = vld [vmem:[%s4 + $0x400] sm:$0xff]
      %v9914 = vld [vmem:[%s4 + $0x408] sm:$0xff]
      %v9915 = vld [vmem:[%s4 + $0x410] sm:$0xff]
      %v9916 = vld [vmem:[%s4 + $0x418] sm:$0xff]
      %v9917 = vld [vmem:[%s4 + $0x420] sm:$0xff]
      %v9918 = vld [vmem:[%s4 + $0x428] sm:$0xff]
      %v9919 = vld [vmem:[%s4 + $0x430] sm:$0xff]
      %v9920 = vld [vmem:[%s4 + $0x438] sm:$0xff]
      %v9921 = vld [vmem:[%s4 + $0x440] sm:$0xff]
      %v9922 = vld [vmem:[%s4 + $0x448] sm:$0xff]
      %v9923 = vld [vmem:[%s4 + $0x450] sm:$0xff]
      %v9924 = vld [vmem:[%s4 + $0x458] sm:$0xff]
      %v9925 = vld [vmem:[%s4 + $0x460] sm:$0xff]
      %v9926 = vld [vmem:[%s4 + $0x468] sm:$0xff]
      %v9927 = vld [vmem:[%s4 + $0x470] sm:$0xff]
      %v9928 = vld [vmem:[%s4 + $0x478] sm:$0xff]
      %v9929 = vld [vmem:[%s8] sm:$0x3]
      %v9930 = vld [vmem:[#allocation4] sm:$0xff]
      %v9931 = vld [vmem:[#allocation4 + $0x8] sm:$0xff]
      %v9932 = vld [vmem:[#allocation4 + $0x10] sm:$0xff]
      %v9933 = vld [vmem:[#allocation4 + $0x18] sm:$0xff]
      %v9934 = vld [vmem:[#allocation4 + $0x20] sm:$0xff]
      %v9935 = vld [vmem:[#allocation4 + $0x28] sm:$0xff]
      %v9936 = vld [vmem:[#allocation4 + $0x30] sm:$0xff]
      %v9937 = vld [vmem:[#allocation4 + $0x38] sm:$0xff]
      %v9938 = vld [vmem:[#allocation4 + $0x40] sm:$0xff]
      %v9939 = vld [vmem:[#allocation4 + $0x90] sm:$0xff]
      %v9940 = vld [vmem:[#allocation4 + $0x98] sm:$0xff]
      %v9941 = vld [vmem:[#allocation4 + $0xa0] sm:$0xff]
      %v9942 = vld [vmem:[#allocation4 + $0xa8] sm:$0xff]
      %v9943 = vld [vmem:[#allocation4 + $0xb0] sm:$0xff]
      %v9944 = vld [vmem:[#allocation4 + $0xb8] sm:$0xff]
      %v9945 = vld [vmem:[#allocation4 + $0xc0] sm:$0xff]
      %v9946 = vld [vmem:[#allocation4 + $0xc8] sm:$0xff]
      %v9947 = vld [vmem:[#allocation4 + $0xd0] sm:$0xff]
      %v9948 = vpack.c.bf16 %v9939, %v9930
      %v9949 = vpack.c.bf16 %v9940, %v9931
      %v9950 = vpack.c.bf16 %v9941, %v9932
      %v9951 = vpack.c.bf16 %v9942, %v9933
      %v9952 = vpack.c.bf16 %v9943, %v9934
      %v9953 = vpack.c.bf16 %v9944, %v9935
      %v9954 = vpack.c.bf16 %v9945, %v9936
      %v9955 = vpack.c.bf16 %v9946, %v9937
      %v9956 = vpack.c.bf16 %v9947, %v9938
      %v9958 = vperm.slane %v9929, 0
      %v9959 = vperm.slane %v9929, 1
      %v10106 = vunpack.c.l.b16 %v9785
      %v10107 = vunpack.c.h.b16 %v9785
      %v10108 = vunpack.c.l.b16 %v9786
      %v10109 = vunpack.c.h.b16 %v9786
      %v10110 = vunpack.c.l.b16 %v9787
      %v10111 = vunpack.c.h.b16 %v9787
      %v10112 = vunpack.c.l.b16 %v9788
      %v10113 = vunpack.c.h.b16 %v9788
      %v10114 = vunpack.c.l.b16 %v9789
      %v10115 = vunpack.c.h.b16 %v9789
      %v10116 = vunpack.c.l.b16 %v9790
      %v10117 = vunpack.c.h.b16 %v9790
      %v10118 = vunpack.c.l.b16 %v9791
      %v10119 = vunpack.c.h.b16 %v9791
      %v10120 = vunpack.c.l.b16 %v9792
      %v10121 = vunpack.c.h.b16 %v9792
      %v10122 = vunpack.c.l.b16 %v9793
      %v10123 = vunpack.c.h.b16 %v9793
      %v10124 = vunpack.c.l.b16 %v9794
      %v10125 = vunpack.c.h.b16 %v9794
      %v10126 = vunpack.c.l.b16 %v9795
      %v10127 = vunpack.c.h.b16 %v9795
      %v10128 = vunpack.c.l.b16 %v9796
      %v10129 = vunpack.c.h.b16 %v9796
      %v10130 = vunpack.c.l.b16 %v9797
      %v10131 = vunpack.c.h.b16 %v9797
      %v10132 = vunpack.c.l.b16 %v9798
      %v10133 = vunpack.c.h.b16 %v9798
      %v10134 = vunpack.c.l.b16 %v9799
      %v10135 = vunpack.c.h.b16 %v9799
      %v10136 = vunpack.c.l.b16 %v9800
      %v10137 = vunpack.c.h.b16 %v9800
      %v10138 = vunpack.c.l.b16 %v9801
      %v10139 = vunpack.c.h.b16 %v9801
      %v10140 = vunpack.c.l.b16 %v9802
      %v10141 = vunpack.c.h.b16 %v9802
      %v10142 = vunpack.c.l.b16 %v9803
      %v10143 = vunpack.c.h.b16 %v9803
      %v10144 = vunpack.c.l.b16 %v9804
      %v10145 = vunpack.c.h.b16 %v9804
      %v10146 = vunpack.c.l.b16 %v9805
      %v10147 = vunpack.c.h.b16 %v9805
      %v10148 = vunpack.c.l.b16 %v9806
      %v10149 = vunpack.c.h.b16 %v9806
      %v10150 = vunpack.c.l.b16 %v9807
      %v10151 = vunpack.c.h.b16 %v9807
      %v10152 = vunpack.c.l.b16 %v9808
      %v10153 = vunpack.c.h.b16 %v9808
      %v10154 = vunpack.c.l.b16 %v9809
      %v10155 = vunpack.c.h.b16 %v9809
      %v10156 = vunpack.c.l.b16 %v9810
      %v10157 = vunpack.c.h.b16 %v9810
      %v10158 = vunpack.c.l.b16 %v9811
      %v10159 = vunpack.c.h.b16 %v9811
      %v10160 = vunpack.c.l.b16 %v9812
      %v10161 = vunpack.c.h.b16 %v9812
      %v10162 = vunpack.c.l.b16 %v9813
      %v10163 = vunpack.c.h.b16 %v9813
      %v10164 = vunpack.c.l.b16 %v9814
      %v10165 = vunpack.c.h.b16 %v9814
      %v10166 = vunpack.c.l.b16 %v9815
      %v10167 = vunpack.c.h.b16 %v9815
      %v10168 = vunpack.c.l.b16 %v9816
      %v10169 = vunpack.c.h.b16 %v9816
      %v10170 = vunpack.c.l.b16 %v9817
      %v10171 = vunpack.c.h.b16 %v9817
      %v10172 = vunpack.c.l.b16 %v9818
      %v10173 = vunpack.c.h.b16 %v9818
      %v10174 = vunpack.c.l.b16 %v9819
      %v10175 = vunpack.c.h.b16 %v9819
      %v10176 = vunpack.c.l.b16 %v9820
      %v10177 = vunpack.c.h.b16 %v9820
      %v10178 = vunpack.c.l.b16 %v9821
      %v10179 = vunpack.c.h.b16 %v9821
      %v10180 = vunpack.c.l.b16 %v9822
      %v10181 = vunpack.c.h.b16 %v9822
      %v10182 = vunpack.c.l.b16 %v9823
      %v10183 = vunpack.c.h.b16 %v9823
      %v10184 = vunpack.c.l.b16 %v9824
      %v10185 = vunpack.c.h.b16 %v9824
      %v10186 = vunpack.c.l.b16 %v9825
      %v10187 = vunpack.c.h.b16 %v9825
      %v10188 = vunpack.c.l.b16 %v9826
      %v10189 = vunpack.c.h.b16 %v9826
      %v10190 = vunpack.c.l.b16 %v9827
      %v10191 = vunpack.c.h.b16 %v9827
      %v10192 = vunpack.c.l.b16 %v9828
      %v10193 = vunpack.c.h.b16 %v9828
      %v10194 = vunpack.c.l.b16 %v9829
      %v10195 = vunpack.c.h.b16 %v9829
      %v10196 = vunpack.c.l.b16 %v9830
      %v10197 = vunpack.c.h.b16 %v9830
      %v10198 = vunpack.c.l.b16 %v9831
      %v10199 = vunpack.c.h.b16 %v9831
      %v10200 = vunpack.c.l.b16 %v9832
      %v10201 = vunpack.c.h.b16 %v9832
      %v10202 = vunpack.c.l.b16 %v9833
      %v10203 = vunpack.c.h.b16 %v9833
      %v10204 = vunpack.c.l.b16 %v9834
      %v10205 = vunpack.c.h.b16 %v9834
      %v10206 = vunpack.c.l.b16 %v9835
      %v10207 = vunpack.c.h.b16 %v9835
      %v10208 = vunpack.c.l.b16 %v9836
      %v10209 = vunpack.c.h.b16 %v9836
      %v10210 = vunpack.c.l.b16 %v9837
      %v10211 = vunpack.c.h.b16 %v9837
      %v10212 = vunpack.c.l.b16 %v9838
      %v10213 = vunpack.c.h.b16 %v9838
      %v10214 = vunpack.c.l.b16 %v9839
      %v10215 = vunpack.c.h.b16 %v9839
      %v10216 = vunpack.c.l.b16 %v9840
      %v10217 = vunpack.c.h.b16 %v9840
      %v10218 = vunpack.c.l.b16 %v9841
      %v10219 = vunpack.c.h.b16 %v9841
      %v10220 = vunpack.c.l.b16 %v9842
      %v10221 = vunpack.c.h.b16 %v9842
      %v10222 = vunpack.c.l.b16 %v9843
      %v10223 = vunpack.c.h.b16 %v9843
      %v10224 = vunpack.c.l.b16 %v9844
      %v10225 = vunpack.c.h.b16 %v9844
      %v10226 = vunpack.c.l.b16 %v9845
      %v10227 = vunpack.c.h.b16 %v9845
      %v10228 = vunpack.c.l.b16 %v9846
      %v10229 = vunpack.c.h.b16 %v9846
      %v10230 = vunpack.c.l.b16 %v9847
      %v10231 = vunpack.c.h.b16 %v9847
      %v10232 = vunpack.c.l.b16 %v9848
      %v10233 = vunpack.c.h.b16 %v9848
      %v10234 = vunpack.c.l.b16 %v9849
      %v10235 = vunpack.c.h.b16 %v9849
      %v10236 = vunpack.c.l.b16 %v9850
      %v10237 = vunpack.c.h.b16 %v9850
      %v10238 = vunpack.c.l.b16 %v9851
      %v10239 = vunpack.c.h.b16 %v9851
      %v10240 = vunpack.c.l.b16 %v9852
      %v10241 = vunpack.c.h.b16 %v9852
      %v10242 = vunpack.c.l.b16 %v9853
      %v10243 = vunpack.c.h.b16 %v9853
      %v10244 = vunpack.c.l.b16 %v9854
      %v10245 = vunpack.c.h.b16 %v9854
      %v10246 = vunpack.c.l.b16 %v9855
      %v10247 = vunpack.c.h.b16 %v9855
      %v10248 = vunpack.c.l.b16 %v9856
      %v10249 = vunpack.c.h.b16 %v9856
      %v10250 = vunpack.c.l.b16 %v9857
      %v10251 = vunpack.c.h.b16 %v9857
      %v10252 = vunpack.c.l.b16 %v9858
      %v10253 = vunpack.c.h.b16 %v9858
      %v10254 = vunpack.c.l.b16 %v9859
      %v10255 = vunpack.c.h.b16 %v9859
      %v10256 = vunpack.c.l.b16 %v9860
      %v10257 = vunpack.c.h.b16 %v9860
      %v10258 = vunpack.c.l.b16 %v9861
      %v10259 = vunpack.c.h.b16 %v9861
      %v10260 = vunpack.c.l.b16 %v9862
      %v10261 = vunpack.c.h.b16 %v9862
      %v10262 = vunpack.c.l.b16 %v9863
      %v10263 = vunpack.c.h.b16 %v9863
      %v10264 = vunpack.c.l.b16 %v9864
      %v10265 = vunpack.c.h.b16 %v9864
      %v10266 = vunpack.c.l.b16 %v9865
      %v10267 = vunpack.c.h.b16 %v9865
      %v10268 = vunpack.c.l.b16 %v9866
      %v10269 = vunpack.c.h.b16 %v9866
      %v10270 = vunpack.c.l.b16 %v9867
      %v10271 = vunpack.c.h.b16 %v9867
      %v10272 = vunpack.c.l.b16 %v9868
      %v10273 = vunpack.c.h.b16 %v9868
      %v10274 = vunpack.c.l.b16 %v9869
      %v10275 = vunpack.c.h.b16 %v9869
      %v10276 = vunpack.c.l.b16 %v9870
      %v10277 = vunpack.c.h.b16 %v9870
      %v10278 = vunpack.c.l.b16 %v9871
      %v10279 = vunpack.c.h.b16 %v9871
      %v10280 = vunpack.c.l.b16 %v9872
      %v10281 = vunpack.c.h.b16 %v9872
      %v10282 = vunpack.c.l.b16 %v9873
      %v10283 = vunpack.c.h.b16 %v9873
      %v10284 = vunpack.c.l.b16 %v9874
      %v10285 = vunpack.c.h.b16 %v9874
      %v10286 = vunpack.c.l.b16 %v9875
      %v10287 = vunpack.c.h.b16 %v9875
      %v10288 = vunpack.c.l.b16 %v9876
      %v10289 = vunpack.c.h.b16 %v9876
      %v10290 = vunpack.c.l.b16 %v9877
      %v10291 = vunpack.c.h.b16 %v9877
      %v10292 = vunpack.c.l.b16 %v9878
      %v10293 = vunpack.c.h.b16 %v9878
      %v10294 = vunpack.c.l.b16 %v9879
      %v10295 = vunpack.c.h.b16 %v9879
      %v10296 = vunpack.c.l.b16 %v9880
      %v10297 = vunpack.c.h.b16 %v9880
      %v10298 = vunpack.c.l.b16 %v9881
      %v10299 = vunpack.c.h.b16 %v9881
      %v10300 = vunpack.c.l.b16 %v9882
      %v10301 = vunpack.c.h.b16 %v9882
      %v10302 = vunpack.c.l.b16 %v9883
      %v10303 = vunpack.c.h.b16 %v9883
      %v10304 = vunpack.c.l.b16 %v9884
      %v10305 = vunpack.c.h.b16 %v9884
      %v10306 = vunpack.c.l.b16 %v9885
      %v10307 = vunpack.c.h.b16 %v9885
      %v10308 = vunpack.c.l.b16 %v9886
      %v10309 = vunpack.c.h.b16 %v9886
      %v10310 = vunpack.c.l.b16 %v9887
      %v10311 = vunpack.c.h.b16 %v9887
      %v10312 = vunpack.c.l.b16 %v9888
      %v10313 = vunpack.c.h.b16 %v9888
      %v10314 = vunpack.c.l.b16 %v9889
      %v10315 = vunpack.c.h.b16 %v9889
      %v10316 = vunpack.c.l.b16 %v9890
      %v10317 = vunpack.c.h.b16 %v9890
      %v10318 = vunpack.c.l.b16 %v9891
      %v10319 = vunpack.c.h.b16 %v9891
      %v10320 = vunpack.c.l.b16 %v9892
      %v10321 = vunpack.c.h.b16 %v9892
      %v10322 = vunpack.c.l.b16 %v9893
      %v10323 = vunpack.c.h.b16 %v9893
      %v10324 = vunpack.c.l.b16 %v9894
      %v10325 = vunpack.c.h.b16 %v9894
      %v10326 = vunpack.c.l.b16 %v9895
      %v10327 = vunpack.c.h.b16 %v9895
      %v10328 = vunpack.c.l.b16 %v9896
      %v10329 = vunpack.c.h.b16 %v9896
      %v10330 = vunpack.c.l.b16 %v9897
      %v10331 = vunpack.c.h.b16 %v9897
      %v10332 = vunpack.c.l.b16 %v9898
      %v10333 = vunpack.c.h.b16 %v9898
      %v10334 = vunpack.c.l.b16 %v9899
      %v10335 = vunpack.c.h.b16 %v9899
      %v10336 = vunpack.c.l.b16 %v9900
      %v10337 = vunpack.c.h.b16 %v9900
      %v10338 = vunpack.c.l.b16 %v9901
      %v10339 = vunpack.c.h.b16 %v9901
      %v10340 = vunpack.c.l.b16 %v9902
      %v10341 = vunpack.c.h.b16 %v9902
      %v10342 = vunpack.c.l.b16 %v9903
      %v10343 = vunpack.c.h.b16 %v9903
      %v10344 = vunpack.c.l.b16 %v9904
      %v10345 = vunpack.c.h.b16 %v9904
      %v10346 = vunpack.c.l.b16 %v9905
      %v10347 = vunpack.c.h.b16 %v9905
      %v10348 = vunpack.c.l.b16 %v9906
      %v10349 = vunpack.c.h.b16 %v9906
      %v10350 = vunpack.c.l.b16 %v9907
      %v10351 = vunpack.c.h.b16 %v9907
      %v10352 = vunpack.c.l.b16 %v9908
      %v10353 = vunpack.c.h.b16 %v9908
      %v10354 = vunpack.c.l.b16 %v9909
      %v10355 = vunpack.c.h.b16 %v9909
      %v10356 = vunpack.c.l.b16 %v9910
      %v10357 = vunpack.c.h.b16 %v9910
      %v10358 = vunpack.c.l.b16 %v9911
      %v10359 = vunpack.c.h.b16 %v9911
      %v10360 = vunpack.c.l.b16 %v9912
      %v10361 = vunpack.c.h.b16 %v9912
      %v10362 = vunpack.c.l.b16 %v9913
      %v10363 = vunpack.c.h.b16 %v9913
      %v10364 = vunpack.c.l.b16 %v9914
      %v10365 = vunpack.c.h.b16 %v9914
      %v10366 = vunpack.c.l.b16 %v9915
      %v10367 = vunpack.c.h.b16 %v9915
      %v10368 = vunpack.c.l.b16 %v9916
      %v10369 = vunpack.c.h.b16 %v9916
      %v10370 = vunpack.c.l.b16 %v9917
      %v10371 = vunpack.c.h.b16 %v9917
      %v10372 = vunpack.c.l.b16 %v9918
      %v10373 = vunpack.c.h.b16 %v9918
      %v10374 = vunpack.c.l.b16 %v9919
      %v10375 = vunpack.c.h.b16 %v9919
      %v10376 = vunpack.c.l.b16 %v9920
      %v10377 = vunpack.c.h.b16 %v9920
      %v10378 = vunpack.c.l.b16 %v9921
      %v10379 = vunpack.c.h.b16 %v9921
      %v10380 = vunpack.c.l.b16 %v9922
      %v10381 = vunpack.c.h.b16 %v9922
      %v10382 = vunpack.c.l.b16 %v9923
      %v10383 = vunpack.c.h.b16 %v9923
      %v10384 = vunpack.c.l.b16 %v9924
      %v10385 = vunpack.c.h.b16 %v9924
      %v10386 = vunpack.c.l.b16 %v9925
      %v10387 = vunpack.c.h.b16 %v9925
      %v10388 = vunpack.c.l.b16 %v9926
      %v10389 = vunpack.c.h.b16 %v9926
      %v10390 = vunpack.c.l.b16 %v9927
      %v10391 = vunpack.c.h.b16 %v9927
      %v10392 = vunpack.c.l.b16 %v9928
      %v10393 = vunpack.c.h.b16 %v9928
      %v10394 = vpack.c.b16 %v10108, %v10106
      %v10395 = vpack.c.b16 %v10109, %v10107
      %v10396 = vpack.c.b16 %v10112, %v10110
      %v10397 = vpack.c.b16 %v10113, %v10111
      %v10398 = vpack.c.b16 %v10116, %v10114
      %v10399 = vpack.c.b16 %v10117, %v10115
      %v10400 = vpack.c.b16 %v10120, %v10118
      %v10401 = vpack.c.b16 %v10121, %v10119
      %v10402 = vpack.c.b16 %v10124, %v10122
      %v10403 = vpack.c.b16 %v10125, %v10123
      %v10404 = vpack.c.b16 %v10128, %v10126
      %v10405 = vpack.c.b16 %v10129, %v10127
      %v10406 = vpack.c.b16 %v10132, %v10130
      %v10407 = vpack.c.b16 %v10133, %v10131
      %v10408 = vpack.c.b16 %v10136, %v10134
      %v10409 = vpack.c.b16 %v10137, %v10135
      %v10410 = vpack.c.b16 %v10140, %v10138
      %v10411 = vpack.c.b16 %v10141, %v10139
      %v10412 = vpack.c.b16 %v10144, %v10142
      %v10413 = vpack.c.b16 %v10145, %v10143
      %v10414 = vpack.c.b16 %v10148, %v10146
      %v10415 = vpack.c.b16 %v10149, %v10147
      %v10416 = vpack.c.b16 %v10152, %v10150
      %v10417 = vpack.c.b16 %v10153, %v10151
      %v10418 = vpack.c.b16 %v10156, %v10154
      %v10419 = vpack.c.b16 %v10157, %v10155
      %v10420 = vpack.c.b16 %v10160, %v10158
      %v10421 = vpack.c.b16 %v10161, %v10159
      %v10422 = vpack.c.b16 %v10164, %v10162
      %v10423 = vpack.c.b16 %v10165, %v10163
      %v10424 = vpack.c.b16 %v10168, %v10166
      %v10425 = vpack.c.b16 %v10169, %v10167
      %v10426 = vpack.c.b16 %v10172, %v10170
      %v10427 = vpack.c.b16 %v10173, %v10171
      %v10428 = vpack.c.b16 %v10176, %v10174
      %v10429 = vpack.c.b16 %v10177, %v10175
      %v10430 = vpack.c.b16 %v10180, %v10178
      %v10431 = vpack.c.b16 %v10181, %v10179
      %v10432 = vpack.c.b16 %v10184, %v10182
      %v10433 = vpack.c.b16 %v10185, %v10183
      %v10434 = vpack.c.b16 %v10188, %v10186
      %v10435 = vpack.c.b16 %v10189, %v10187
      %v10436 = vpack.c.b16 %v10192, %v10190
      %v10437 = vpack.c.b16 %v10193, %v10191
      %v10438 = vpack.c.b16 %v10196, %v10194
      %v10439 = vpack.c.b16 %v10197, %v10195
      %v10440 = vpack.c.b16 %v10200, %v10198
      %v10441 = vpack.c.b16 %v10201, %v10199
      %v10442 = vpack.c.b16 %v10204, %v10202
      %v10443 = vpack.c.b16 %v10205, %v10203
      %v10444 = vpack.c.b16 %v10208, %v10206
      %v10445 = vpack.c.b16 %v10209, %v10207
      %v10446 = vpack.c.b16 %v10212, %v10210
      %v10447 = vpack.c.b16 %v10213, %v10211
      %v10448 = vpack.c.b16 %v10216, %v10214
      %v10449 = vpack.c.b16 %v10217, %v10215
      %v10450 = vpack.c.b16 %v10220, %v10218
      %v10451 = vpack.c.b16 %v10221, %v10219
      %v10452 = vpack.c.b16 %v10224, %v10222
      %v10453 = vpack.c.b16 %v10225, %v10223
      %v10454 = vpack.c.b16 %v10228, %v10226
      %v10455 = vpack.c.b16 %v10229, %v10227
      %v10456 = vpack.c.b16 %v10232, %v10230
      %v10457 = vpack.c.b16 %v10233, %v10231
      %v10458 = vpack.c.b16 %v10236, %v10234
      %v10459 = vpack.c.b16 %v10237, %v10235
      %v10460 = vpack.c.b16 %v10240, %v10238
      %v10461 = vpack.c.b16 %v10241, %v10239
      %v10462 = vpack.c.b16 %v10244, %v10242
      %v10463 = vpack.c.b16 %v10245, %v10243
      %v10464 = vpack.c.b16 %v10248, %v10246
      %v10465 = vpack.c.b16 %v10249, %v10247
      %v10466 = vpack.c.b16 %v10252, %v10250
      %v10467 = vpack.c.b16 %v10253, %v10251
      %v10468 = vpack.c.b16 %v10256, %v10254
      %v10469 = vpack.c.b16 %v10257, %v10255
      %v10470 = vpack.c.b16 %v10260, %v10258
      %v10471 = vpack.c.b16 %v10261, %v10259
      %v10472 = vpack.c.b16 %v10264, %v10262
      %v10473 = vpack.c.b16 %v10265, %v10263
      %v10474 = vpack.c.b16 %v10268, %v10266
      %v10475 = vpack.c.b16 %v10269, %v10267
      %v10476 = vpack.c.b16 %v10272, %v10270
      %v10477 = vpack.c.b16 %v10273, %v10271
      %v10478 = vpack.c.b16 %v10276, %v10274
      %v10479 = vpack.c.b16 %v10277, %v10275
      %v10480 = vpack.c.b16 %v10280, %v10278
      %v10481 = vpack.c.b16 %v10281, %v10279
      %v10482 = vpack.c.b16 %v10284, %v10282
      %v10483 = vpack.c.b16 %v10285, %v10283
      %v10484 = vpack.c.b16 %v10288, %v10286
      %v10485 = vpack.c.b16 %v10289, %v10287
      %v10486 = vpack.c.b16 %v10292, %v10290
      %v10487 = vpack.c.b16 %v10293, %v10291
      %v10488 = vpack.c.b16 %v10296, %v10294
      %v10489 = vpack.c.b16 %v10297, %v10295
      %v10490 = vpack.c.b16 %v10300, %v10298
      %v10491 = vpack.c.b16 %v10301, %v10299
      %v10492 = vpack.c.b16 %v10304, %v10302
      %v10493 = vpack.c.b16 %v10305, %v10303
      %v10494 = vpack.c.b16 %v10308, %v10306
      %v10495 = vpack.c.b16 %v10309, %v10307
      %v10496 = vpack.c.b16 %v10312, %v10310
      %v10497 = vpack.c.b16 %v10313, %v10311
      %v10498 = vpack.c.b16 %v10316, %v10314
      %v10499 = vpack.c.b16 %v10317, %v10315
      %v10500 = vpack.c.b16 %v10320, %v10318
      %v10501 = vpack.c.b16 %v10321, %v10319
      %v10502 = vpack.c.b16 %v10324, %v10322
      %v10503 = vpack.c.b16 %v10325, %v10323
      %v10504 = vpack.c.b16 %v10328, %v10326
      %v10505 = vpack.c.b16 %v10329, %v10327
      %v10506 = vpack.c.b16 %v10332, %v10330
      %v10507 = vpack.c.b16 %v10333, %v10331
      %v10508 = vpack.c.b16 %v10336, %v10334
      %v10509 = vpack.c.b16 %v10337, %v10335
      %v10510 = vpack.c.b16 %v10340, %v10338
      %v10511 = vpack.c.b16 %v10341, %v10339
      %v10512 = vpack.c.b16 %v10344, %v10342
      %v10513 = vpack.c.b16 %v10345, %v10343
      %v10514 = vpack.c.b16 %v10348, %v10346
      %v10515 = vpack.c.b16 %v10349, %v10347
      %v10516 = vpack.c.b16 %v10352, %v10350
      %v10517 = vpack.c.b16 %v10353, %v10351
      %v10518 = vpack.c.b16 %v10356, %v10354
      %v10519 = vpack.c.b16 %v10357, %v10355
      %v10520 = vpack.c.b16 %v10360, %v10358
      %v10521 = vpack.c.b16 %v10361, %v10359
      %v10522 = vpack.c.b16 %v10364, %v10362
      %v10523 = vpack.c.b16 %v10365, %v10363
      %v10524 = vpack.c.b16 %v10368, %v10366
      %v10525 = vpack.c.b16 %v10369, %v10367
      %v10526 = vpack.c.b16 %v10372, %v10370
      %v10527 = vpack.c.b16 %v10373, %v10371
      %v10528 = vpack.c.b16 %v10376, %v10374
      %v10529 = vpack.c.b16 %v10377, %v10375
      %v10530 = vpack.c.b16 %v10380, %v10378
      %v10531 = vpack.c.b16 %v10381, %v10379
      %v10532 = vpack.c.b16 %v10384, %v10382
      %v10533 = vpack.c.b16 %v10385, %v10383
      %v10534 = vpack.c.b16 %v10388, %v10386
      %v10535 = vpack.c.b16 %v10389, %v10387
      %v10536 = vpack.c.b16 %v10392, %v10390
      %v10537 = vpack.c.b16 %v10393, %v10391
      %10682 = vmatpush.bf16.msra.mxu0 %v10408
      %10683 = vmatpush.bf16.msra.mxu0 %v10406
      %10684 = vmatpush.bf16.msra.mxu0 %v10404
      %10685 = vmatpush.bf16.msra.mxu0 %v10402
      %10686 = vmatpush.bf16.msra.mxu0 %v10400
      %10687 = vmatpush.bf16.msra.mxu0 %v10398
      %10688 = vmatpush.bf16.msra.mxu0 %v10396
      %10689 = vmatpush.bf16.msra.mxu0 %v10394
      %10690 = vmatmul.bf16.gmra.mxu0 %v9948
      %v10691 = vpop.f32.mrf.mxu0
      %v10692 = vadd.f32 %v9958, %v10691
      %v10693 = vpop.f32.mrf.mxu0
      %v10694 = vadd.f32 %v9958, %v10693
      %10695 = vdwg.mxu0
      %10696 = vmatpush.bf16.msra.mxu0 %v10424
      %10697 = vmatpush.bf16.msra.mxu0 %v10422
      %10698 = vmatpush.bf16.msra.mxu0 %v10420
      %10699 = vmatpush.bf16.msra.mxu0 %v10418
      %10700 = vmatpush.bf16.msra.mxu0 %v10416
      %10701 = vmatpush.bf16.msra.mxu0 %v10414
      %10702 = vmatpush.bf16.msra.mxu0 %v10412
      %10703 = vmatpush.bf16.msra.mxu0 %v10410
      %10704 = vmatmul.bf16.gmra.mxu0 %v9949
      %v10705 = vpop.f32.mrf.mxu0
      %v10706 = vadd.f32 %v10692, %v10705
      %v10707 = vpop.f32.mrf.mxu0
      %v10708 = vadd.f32 %v10694, %v10707
      %10709 = vdwg.mxu0
      %10710 = vmatpush.bf16.msra.mxu0 %v10440
      %10711 = vmatpush.bf16.msra.mxu0 %v10438
      %10712 = vmatpush.bf16.msra.mxu0 %v10436
      %10713 = vmatpush.bf16.msra.mxu0 %v10434
      %10714 = vmatpush.bf16.msra.mxu0 %v10432
      %10715 = vmatpush.bf16.msra.mxu0 %v10430
      %10716 = vmatpush.bf16.msra.mxu0 %v10428
      %10717 = vmatpush.bf16.msra.mxu0 %v10426
      %10718 = vmatmul.bf16.gmra.mxu0 %v9950
      %v10719 = vpop.f32.mrf.mxu0
      %v10720 = vadd.f32 %v10706, %v10719
      %v10721 = vpop.f32.mrf.mxu0
      %v10722 = vadd.f32 %v10708, %v10721
      %10723 = vdwg.mxu0
      %10724 = vmatpush.bf16.msra.mxu0 %v10456
      %10725 = vmatpush.bf16.msra.mxu0 %v10454
      %10726 = vmatpush.bf16.msra.mxu0 %v10452
      %10727 = vmatpush.bf16.msra.mxu0 %v10450
      %10728 = vmatpush.bf16.msra.mxu0 %v10448
      %10729 = vmatpush.bf16.msra.mxu0 %v10446
      %10730 = vmatpush.bf16.msra.mxu0 %v10444
      %10731 = vmatpush.bf16.msra.mxu0 %v10442
      %10732 = vmatmul.bf16.gmra.mxu0 %v9951
      %v10733 = vpop.f32.mrf.mxu0
      %v10734 = vadd.f32 %v10720, %v10733
      %v10735 = vpop.f32.mrf.mxu0
      %v10736 = vadd.f32 %v10722, %v10735
      %10737 = vdwg.mxu0
      %10738 = vmatpush.bf16.msra.mxu0 %v10472
      %10739 = vmatpush.bf16.msra.mxu0 %v10470
      %10740 = vmatpush.bf16.msra.mxu0 %v10468
      %10741 = vmatpush.bf16.msra.mxu0 %v10466
      %10742 = vmatpush.bf16.msra.mxu0 %v10464
      %10743 = vmatpush.bf16.msra.mxu0 %v10462
      %10744 = vmatpush.bf16.msra.mxu0 %v10460
      %10745 = vmatpush.bf16.msra.mxu0 %v10458
      %10746 = vmatmul.bf16.gmra.mxu0 %v9952
      %v10747 = vpop.f32.mrf.mxu0
      %v10748 = vadd.f32 %v10734, %v10747
      %v10749 = vpop.f32.mrf.mxu0
      %v10750 = vadd.f32 %v10736, %v10749
      %10751 = vdwg.mxu0
      %10752 = vmatpush.bf16.msra.mxu0 %v10488
      %10753 = vmatpush.bf16.msra.mxu0 %v10486
      %10754 = vmatpush.bf16.msra.mxu0 %v10484
      %10755 = vmatpush.bf16.msra.mxu0 %v10482
      %10756 = vmatpush.bf16.msra.mxu0 %v10480
      %10757 = vmatpush.bf16.msra.mxu0 %v10478
      %10758 = vmatpush.bf16.msra.mxu0 %v10476
      %10759 = vmatpush.bf16.msra.mxu0 %v10474
      %10760 = vmatmul.bf16.gmra.mxu0 %v9953
      %v10761 = vpop.f32.mrf.mxu0
      %v10762 = vadd.f32 %v10748, %v10761
      %v10763 = vpop.f32.mrf.mxu0
      %v10764 = vadd.f32 %v10750, %v10763
      %10765 = vdwg.mxu0
      %10766 = vmatpush.bf16.msra.mxu0 %v10504
      %10767 = vmatpush.bf16.msra.mxu0 %v10502
      %10768 = vmatpush.bf16.msra.mxu0 %v10500
      %10769 = vmatpush.bf16.msra.mxu0 %v10498
      %10770 = vmatpush.bf16.msra.mxu0 %v10496
      %10771 = vmatpush.bf16.msra.mxu0 %v10494
      %10772 = vmatpush.bf16.msra.mxu0 %v10492
      %10773 = vmatpush.bf16.msra.mxu0 %v10490
      %10774 = vmatmul.bf16.gmra.mxu0 %v9954
      %v10775 = vpop.f32.mrf.mxu0
      %v10776 = vadd.f32 %v10762, %v10775
      %v10777 = vpop.f32.mrf.mxu0
      %v10778 = vadd.f32 %v10764, %v10777
      %10779 = vdwg.mxu0
      %10780 = vmatpush.bf16.msra.mxu0 %v10520
      %10781 = vmatpush.bf16.msra.mxu0 %v10518
      %10782 = vmatpush.bf16.msra.mxu0 %v10516
      %10783 = vmatpush.bf16.msra.mxu0 %v10514
      %10784 = vmatpush.bf16.msra.mxu0 %v10512
      %10785 = vmatpush.bf16.msra.mxu0 %v10510
      %10786 = vmatpush.bf16.msra.mxu0 %v10508
      %10787 = vmatpush.bf16.msra.mxu0 %v10506
      %10788 = vmatmul.bf16.gmra.mxu0 %v9955
      %v10789 = vpop.f32.mrf.mxu0
      %v10790 = vadd.f32 %v10776, %v10789
      %v10791 = vpop.f32.mrf.mxu0
      %v10792 = vadd.f32 %v10778, %v10791
      %10793 = vdwg.mxu0
      %10794 = vmatpush.bf16.msra.mxu0 %v10536
      %10795 = vmatpush.bf16.msra.mxu0 %v10534
      %10796 = vmatpush.bf16.msra.mxu0 %v10532
      %10797 = vmatpush.bf16.msra.mxu0 %v10530
      %10798 = vmatpush.bf16.msra.mxu0 %v10528
      %10799 = vmatpush.bf16.msra.mxu0 %v10526
      %10800 = vmatpush.bf16.msra.mxu0 %v10524
      %10801 = vmatpush.bf16.msra.mxu0 %v10522
      %10802 = vmatmul.bf16.gmra.mxu0 %v9956
      %v10803 = vpop.f32.mrf.mxu0
      %v10804 = vadd.f32 %v10790, %v10803
      %v10805 = vpop.f32.mrf.mxu0
      %v10806 = vadd.f32 %v10792, %v10805
      %10807 = vdwg.mxu0
      %10808 = vmatpush.bf16.msra.mxu0 %v10409
      %10809 = vmatpush.bf16.msra.mxu0 %v10407
      %10810 = vmatpush.bf16.msra.mxu0 %v10405
      %10811 = vmatpush.bf16.msra.mxu0 %v10403
      %10812 = vmatpush.bf16.msra.mxu0 %v10401
      %10813 = vmatpush.bf16.msra.mxu0 %v10399
      %10814 = vmatpush.bf16.msra.mxu0 %v10397
      %10815 = vmatpush.bf16.msra.mxu0 %v10395
      %10816 = vmatmul.bf16.gmra.mxu0 %v9948
      %v10817 = vpop.f32.mrf.mxu0
      %v10818 = vadd.f32 %v9959, %v10817
      %v10819 = vpop.f32.mrf.mxu0
      %v10820 = vadd.f32 %v9959, %v10819
      %10821 = vdwg.mxu0
      %10822 = vmatpush.bf16.msra.mxu0 %v10425
      %10823 = vmatpush.bf16.msra.mxu0 %v10423
      %10824 = vmatpush.bf16.msra.mxu0 %v10421
      %10825 = vmatpush.bf16.msra.mxu0 %v10419
      %10826 = vmatpush.bf16.msra.mxu0 %v10417
      %10827 = vmatpush.bf16.msra.mxu0 %v10415
      %10828 = vmatpush.bf16.msra.mxu0 %v10413
      %10829 = vmatpush.bf16.msra.mxu0 %v10411
      %10830 = vmatmul.bf16.gmra.mxu0 %v9949
      %v10831 = vpop.f32.mrf.mxu0
      %v10832 = vadd.f32 %v10818, %v10831
      %v10833 = vpop.f32.mrf.mxu0
      %v10834 = vadd.f32 %v10820, %v10833
      %10835 = vdwg.mxu0
      %10836 = vmatpush.bf16.msra.mxu0 %v10441
      %10837 = vmatpush.bf16.msra.mxu0 %v10439
      %10838 = vmatpush.bf16.msra.mxu0 %v10437
      %10839 = vmatpush.bf16.msra.mxu0 %v10435
      %10840 = vmatpush.bf16.msra.mxu0 %v10433
      %10841 = vmatpush.bf16.msra.mxu0 %v10431
      %10842 = vmatpush.bf16.msra.mxu0 %v10429
      %10843 = vmatpush.bf16.msra.mxu0 %v10427
      %10844 = vmatmul.bf16.gmra.mxu0 %v9950
      %v10845 = vpop.f32.mrf.mxu0
      %v10846 = vadd.f32 %v10832, %v10845
      %v10847 = vpop.f32.mrf.mxu0
      %v10848 = vadd.f32 %v10834, %v10847
      %10849 = vdwg.mxu0
      %10850 = vmatpush.bf16.msra.mxu0 %v10457
      %10851 = vmatpush.bf16.msra.mxu0 %v10455
      %10852 = vmatpush.bf16.msra.mxu0 %v10453
      %10853 = vmatpush.bf16.msra.mxu0 %v10451
      %10854 = vmatpush.bf16.msra.mxu0 %v10449
      %10855 = vmatpush.bf16.msra.mxu0 %v10447
      %10856 = vmatpush.bf16.msra.mxu0 %v10445
      %10857 = vmatpush.bf16.msra.mxu0 %v10443
      %10858 = vmatmul.bf16.gmra.mxu0 %v9951
      %v10859 = vpop.f32.mrf.mxu0
      %v10860 = vadd.f32 %v10846, %v10859
      %v10861 = vpop.f32.mrf.mxu0
      %v10862 = vadd.f32 %v10848, %v10861
      %10863 = vdwg.mxu0
      %10864 = vmatpush.bf16.msra.mxu0 %v10473
      %10865 = vmatpush.bf16.msra.mxu0 %v10471
      %10866 = vmatpush.bf16.msra.mxu0 %v10469
      %10867 = vmatpush.bf16.msra.mxu0 %v10467
      %10868 = vmatpush.bf16.msra.mxu0 %v10465
      %10869 = vmatpush.bf16.msra.mxu0 %v10463
      %10870 = vmatpush.bf16.msra.mxu0 %v10461
      %10871 = vmatpush.bf16.msra.mxu0 %v10459
      %10872 = vmatmul.bf16.gmra.mxu0 %v9952
      %v10873 = vpop.f32.mrf.mxu0
      %v10874 = vadd.f32 %v10860, %v10873
      %v10875 = vpop.f32.mrf.mxu0
      %v10876 = vadd.f32 %v10862, %v10875
      %10877 = vdwg.mxu0
      %10878 = vmatpush.bf16.msra.mxu0 %v10489
      %10879 = vmatpush.bf16.msra.mxu0 %v10487
      %10880 = vmatpush.bf16.msra.mxu0 %v10485
      %10881 = vmatpush.bf16.msra.mxu0 %v10483
      %10882 = vmatpush.bf16.msra.mxu0 %v10481
      %10883 = vmatpush.bf16.msra.mxu0 %v10479
      %10884 = vmatpush.bf16.msra.mxu0 %v10477
      %10885 = vmatpush.bf16.msra.mxu0 %v10475
      %10886 = vmatmul.bf16.gmra.mxu0 %v9953
      %v10887 = vpop.f32.mrf.mxu0
      %v10888 = vadd.f32 %v10874, %v10887
      %v10889 = vpop.f32.mrf.mxu0
      %v10890 = vadd.f32 %v10876, %v10889
      %10891 = vdwg.mxu0
      %10892 = vmatpush.bf16.msra.mxu0 %v10505
      %10893 = vmatpush.bf16.msra.mxu0 %v10503
      %10894 = vmatpush.bf16.msra.mxu0 %v10501
      %10895 = vmatpush.bf16.msra.mxu0 %v10499
      %10896 = vmatpush.bf16.msra.mxu0 %v10497
      %10897 = vmatpush.bf16.msra.mxu0 %v10495
      %10898 = vmatpush.bf16.msra.mxu0 %v10493
      %10899 = vmatpush.bf16.msra.mxu0 %v10491
      %10900 = vmatmul.bf16.gmra.mxu0 %v9954
      %v10901 = vpop.f32.mrf.mxu0
      %v10902 = vadd.f32 %v10888, %v10901
      %v10903 = vpop.f32.mrf.mxu0
      %v10904 = vadd.f32 %v10890, %v10903
      %10905 = vdwg.mxu0
      %10906 = vmatpush.bf16.msra.mxu0 %v10521
      %10907 = vmatpush.bf16.msra.mxu0 %v10519
      %10908 = vmatpush.bf16.msra.mxu0 %v10517
      %10909 = vmatpush.bf16.msra.mxu0 %v10515
      %10910 = vmatpush.bf16.msra.mxu0 %v10513
      %10911 = vmatpush.bf16.msra.mxu0 %v10511
      %10912 = vmatpush.bf16.msra.mxu0 %v10509
      %10913 = vmatpush.bf16.msra.mxu0 %v10507
      %10914 = vmatmul.bf16.gmra.mxu0 %v9955
      %v10915 = vpop.f32.mrf.mxu0
      %v10916 = vadd.f32 %v10902, %v10915
      %v10917 = vpop.f32.mrf.mxu0
      %v10918 = vadd.f32 %v10904, %v10917
      %10919 = vdwg.mxu0
      %10920 = vmatpush.bf16.msra.mxu0 %v10537
      %10921 = vmatpush.bf16.msra.mxu0 %v10535
      %10922 = vmatpush.bf16.msra.mxu0 %v10533
      %10923 = vmatpush.bf16.msra.mxu0 %v10531
      %10924 = vmatpush.bf16.msra.mxu0 %v10529
      %10925 = vmatpush.bf16.msra.mxu0 %v10527
      %10926 = vmatpush.bf16.msra.mxu0 %v10525
      %10927 = vmatpush.bf16.msra.mxu0 %v10523
      %10928 = vmatmul.bf16.gmra.mxu0 %v9956
      %v10929 = vpop.f32.mrf.mxu0
      %v10930 = vadd.f32 %v10916, %v10929
      %v10931 = vpop.f32.mrf.mxu0
      %v10932 = vadd.f32 %v10918, %v10931
      %10933 = vdwg.mxu0
      %vm10934 = vcmp.gt.f32.partialorder %v10804, 0.0
      %vm10935 = vcmp.gt.f32.partialorder %v10930, 0.0
      %vm10936 = vcmp.gt.f32.partialorder %v10806, 0.0
      %vm10937 = vcmp.gt.f32.partialorder %v10932, 0.0
      %v10938 = vmul.f32 %v10804, 0.2
      %v10939 = vmul.f32 %v10930, 0.2
      %v10940 = vmul.f32 %v10806, 0.2
      %v10941 = vmul.f32 %v10932, 0.2
      %v10942 = vsel %vm10934, %v10804, %v10938
      %v10943 = vsel %vm10935, %v10930, %v10939
      %v10944 = vsel %vm10936, %v10806, %v10940
      %v10945 = vsel %vm10937, %v10932, %v10941
      %10946 = vst [vmem:[#allocation5] sm:$0xff] %v10942
      %10947 = vst [vmem:[#allocation5 + $0x8] sm:$0xff] %v10943
      %10948 = vst [vmem:[#allocation5 + $0x20] sm:$0xff] %v10944
      %10949 = vst [vmem:[#allocation5 + $0x28] sm:$0xff] %v10945
      %v10950 = vld [vmem:[#allocation4 + $0x30] sm:$0xff]
      %v10951 = vld [vmem:[#allocation4 + $0x38] sm:$0xff]
      %v10952 = vld [vmem:[#allocation4 + $0x40] sm:$0xff]
      %v10953 = vld [vmem:[#allocation4 + $0x48] sm:$0xff]
      %v10954 = vld [vmem:[#allocation4 + $0x50] sm:$0xff]
      %v10955 = vld [vmem:[#allocation4 + $0x58] sm:$0xff]
      %v10956 = vld [vmem:[#allocation4 + $0x60] sm:$0xff]
      %v10957 = vld [vmem:[#allocation4 + $0x68] sm:$0xff]
      %v10958 = vld [vmem:[#allocation4 + $0x70] sm:$0xff]
      %v10959 = vld [vmem:[#allocation4 + $0xc0] sm:$0xff]
      %v10960 = vld [vmem:[#allocation4 + $0xc8] sm:$0xff]
      %v10961 = vld [vmem:[#allocation4 + $0xd0] sm:$0xff]
      %v10962 = vld [vmem:[#allocation4 + $0xd8] sm:$0xff]
      %v10963 = vld [vmem:[#allocation4 + $0xe0] sm:$0xff]
      %v10964 = vld [vmem:[#allocation4 + $0xe8] sm:$0xff]
      %v10965 = vld [vmem:[#allocation4 + $0xf0] sm:$0xff]
      %v10966 = vld [vmem:[#allocation4 + $0xf8] sm:$0xff]
      %v10967 = vld [vmem:[#allocation4 + $0x100] sm:$0xff]
      %v10968 = vpack.c.bf16 %v10959, %v10950
      %v10969 = vpack.c.bf16 %v10960, %v10951
      %v10970 = vpack.c.bf16 %v10961, %v10952
      %v10971 = vpack.c.bf16 %v10962, %v10953
      %v10972 = vpack.c.bf16 %v10963, %v10954
      %v10973 = vpack.c.bf16 %v10964, %v10955
      %v10974 = vpack.c.bf16 %v10965, %v10956
      %v10975 = vpack.c.bf16 %v10966, %v10957
      %v10976 = vpack.c.bf16 %v10967, %v10958
      %10977 = vmatpush.bf16.msra.mxu0 %v10408
      %10978 = vmatpush.bf16.msra.mxu0 %v10406
      %10979 = vmatpush.bf16.msra.mxu0 %v10404
      %10980 = vmatpush.bf16.msra.mxu0 %v10402
      %10981 = vmatpush.bf16.msra.mxu0 %v10400
      %10982 = vmatpush.bf16.msra.mxu0 %v10398
      %10983 = vmatpush.bf16.msra.mxu0 %v10396
      %10984 = vmatpush.bf16.msra.mxu0 %v10394
      %10985 = vmatmul.bf16.gmra.mxu0 %v10968
      %v10986 = vpop.f32.mrf.mxu0
      %v10987 = vadd.f32 %v9958, %v10986
      %v10988 = vpop.f32.mrf.mxu0
      %v10989 = vadd.f32 %v9958, %v10988
      %10990 = vdwg.mxu0
      %10991 = vmatpush.bf16.msra.mxu0 %v10424
      %10992 = vmatpush.bf16.msra.mxu0 %v10422
      %10993 = vmatpush.bf16.msra.mxu0 %v10420
      %10994 = vmatpush.bf16.msra.mxu0 %v10418
      %10995 = vmatpush.bf16.msra.mxu0 %v10416
      %10996 = vmatpush.bf16.msra.mxu0 %v10414
      %10997 = vmatpush.bf16.msra.mxu0 %v10412
      %10998 = vmatpush.bf16.msra.mxu0 %v10410
      %10999 = vmatmul.bf16.gmra.mxu0 %v10969
      %v11000 = vpop.f32.mrf.mxu0
      %v11001 = vadd.f32 %v10987, %v11000
      %v11002 = vpop.f32.mrf.mxu0
      %v11003 = vadd.f32 %v10989, %v11002
      %11004 = vdwg.mxu0
      %11005 = vmatpush.bf16.msra.mxu0 %v10440
      %11006 = vmatpush.bf16.msra.mxu0 %v10438
      %11007 = vmatpush.bf16.msra.mxu0 %v10436
      %11008 = vmatpush.bf16.msra.mxu0 %v10434
      %11009 = vmatpush.bf16.msra.mxu0 %v10432
      %11010 = vmatpush.bf16.msra.mxu0 %v10430
      %11011 = vmatpush.bf16.msra.mxu0 %v10428
      %11012 = vmatpush.bf16.msra.mxu0 %v10426
      %11013 = vmatmul.bf16.gmra.mxu0 %v10970
      %v11014 = vpop.f32.mrf.mxu0
      %v11015 = vadd.f32 %v11001, %v11014
      %v11016 = vpop.f32.mrf.mxu0
      %v11017 = vadd.f32 %v11003, %v11016
      %11018 = vdwg.mxu0
      %11019 = vmatpush.bf16.msra.mxu0 %v10456
      %11020 = vmatpush.bf16.msra.mxu0 %v10454
      %11021 = vmatpush.bf16.msra.mxu0 %v10452
      %11022 = vmatpush.bf16.msra.mxu0 %v10450
      %11023 = vmatpush.bf16.msra.mxu0 %v10448
      %11024 = vmatpush.bf16.msra.mxu0 %v10446
      %11025 = vmatpush.bf16.msra.mxu0 %v10444
      %11026 = vmatpush.bf16.msra.mxu0 %v10442
      %11027 = vmatmul.bf16.gmra.mxu0 %v10971
      %v11028 = vpop.f32.mrf.mxu0
      %v11029 = vadd.f32 %v11015, %v11028
      %v11030 = vpop.f32.mrf.mxu0
      %v11031 = vadd.f32 %v11017, %v11030
      %11032 = vdwg.mxu0
      %11033 = vmatpush.bf16.msra.mxu0 %v10472
      %11034 = vmatpush.bf16.msra.mxu0 %v10470
      %11035 = vmatpush.bf16.msra.mxu0 %v10468
      %11036 = vmatpush.bf16.msra.mxu0 %v10466
      %11037 = vmatpush.bf16.msra.mxu0 %v10464
      %11038 = vmatpush.bf16.msra.mxu0 %v10462
      %11039 = vmatpush.bf16.msra.mxu0 %v10460
      %11040 = vmatpush.bf16.msra.mxu0 %v10458
      %11041 = vmatmul.bf16.gmra.mxu0 %v10972
      %v11042 = vpop.f32.mrf.mxu0
      %v11043 = vadd.f32 %v11029, %v11042
      %v11044 = vpop.f32.mrf.mxu0
      %v11045 = vadd.f32 %v11031, %v11044
      %11046 = vdwg.mxu0
      %11047 = vmatpush.bf16.msra.mxu0 %v10488
      %11048 = vmatpush.bf16.msra.mxu0 %v10486
      %11049 = vmatpush.bf16.msra.mxu0 %v10484
      %11050 = vmatpush.bf16.msra.mxu0 %v10482
      %11051 = vmatpush.bf16.msra.mxu0 %v10480
      %11052 = vmatpush.bf16.msra.mxu0 %v10478
      %11053 = vmatpush.bf16.msra.mxu0 %v10476
      %11054 = vmatpush.bf16.msra.mxu0 %v10474
      %11055 = vmatmul.bf16.gmra.mxu0 %v10973
      %v11056 = vpop.f32.mrf.mxu0
      %v11057 = vadd.f32 %v11043, %v11056
      %v11058 = vpop.f32.mrf.mxu0
      %v11059 = vadd.f32 %v11045, %v11058
      %11060 = vdwg.mxu0
      %11061 = vmatpush.bf16.msra.mxu0 %v10504
      %11062 = vmatpush.bf16.msra.mxu0 %v10502
      %11063 = vmatpush.bf16.msra.mxu0 %v10500
      %11064 = vmatpush.bf16.msra.mxu0 %v10498
      %11065 = vmatpush.bf16.msra.mxu0 %v10496
      %11066 = vmatpush.bf16.msra.mxu0 %v10494
      %11067 = vmatpush.bf16.msra.mxu0 %v10492
      %11068 = vmatpush.bf16.msra.mxu0 %v10490
      %11069 = vmatmul.bf16.gmra.mxu0 %v10974
      %v11070 = vpop.f32.mrf.mxu0
      %v11071 = vadd.f32 %v11057, %v11070
      %v11072 = vpop.f32.mrf.mxu0
      %v11073 = vadd.f32 %v11059, %v11072
      %11074 = vdwg.mxu0
      %11075 = vmatpush.bf16.msra.mxu0 %v10520
      %11076 = vmatpush.bf16.msra.mxu0 %v10518
      %11077 = vmatpush.bf16.msra.mxu0 %v10516
      %11078 = vmatpush.bf16.msra.mxu0 %v10514
      %11079 = vmatpush.bf16.msra.mxu0 %v10512
      %11080 = vmatpush.bf16.msra.mxu0 %v10510
      %11081 = vmatpush.bf16.msra.mxu0 %v10508
      %11082 = vmatpush.bf16.msra.mxu0 %v10506
      %11083 = vmatmul.bf16.gmra.mxu0 %v10975
      %v11084 = vpop.f32.mrf.mxu0
      %v11085 = vadd.f32 %v11071, %v11084
      %v11086 = vpop.f32.mrf.mxu0
      %v11087 = vadd.f32 %v11073, %v11086
      %11088 = vdwg.mxu0
      %11089 = vmatpush.bf16.msra.mxu0 %v10536
      %11090 = vmatpush.bf16.msra.mxu0 %v10534
      %11091 = vmatpush.bf16.msra.mxu0 %v10532
      %11092 = vmatpush.bf16.msra.mxu0 %v10530
      %11093 = vmatpush.bf16.msra.mxu0 %v10528
      %11094 = vmatpush.bf16.msra.mxu0 %v10526
      %11095 = vmatpush.bf16.msra.mxu0 %v10524
      %11096 = vmatpush.bf16.msra.mxu0 %v10522
      %11097 = vmatmul.bf16.gmra.mxu0 %v10976
      %v11098 = vpop.f32.mrf.mxu0
      %v11099 = vadd.f32 %v11085, %v11098
      %v11100 = vpop.f32.mrf.mxu0
      %v11101 = vadd.f32 %v11087, %v11100
      %11102 = vdwg.mxu0
      %11103 = vmatpush.bf16.msra.mxu0 %v10409
      %11104 = vmatpush.bf16.msra.mxu0 %v10407
      %11105 = vmatpush.bf16.msra.mxu0 %v10405
      %11106 = vmatpush.bf16.msra.mxu0 %v10403
      %11107 = vmatpush.bf16.msra.mxu0 %v10401
      %11108 = vmatpush.bf16.msra.mxu0 %v10399
      %11109 = vmatpush.bf16.msra.mxu0 %v10397
      %11110 = vmatpush.bf16.msra.mxu0 %v10395
      %11111 = vmatmul.bf16.gmra.mxu0 %v10968
      %v11112 = vpop.f32.mrf.mxu0
      %v11113 = vadd.f32 %v9959, %v11112
      %v11114 = vpop.f32.mrf.mxu0
      %v11115 = vadd.f32 %v9959, %v11114
      %11116 = vdwg.mxu0
      %11117 = vmatpush.bf16.msra.mxu0 %v10425
      %11118 = vmatpush.bf16.msra.mxu0 %v10423
      %11119 = vmatpush.bf16.msra.mxu0 %v10421
      %11120 = vmatpush.bf16.msra.mxu0 %v10419
      %11121 = vmatpush.bf16.msra.mxu0 %v10417
      %11122 = vmatpush.bf16.msra.mxu0 %v10415
      %11123 = vmatpush.bf16.msra.mxu0 %v10413
      %11124 = vmatpush.bf16.msra.mxu0 %v10411
      %11125 = vmatmul.bf16.gmra.mxu0 %v10969
      %v11126 = vpop.f32.mrf.mxu0
      %v11127 = vadd.f32 %v11113, %v11126
      %v11128 = vpop.f32.mrf.mxu0
      %v11129 = vadd.f32 %v11115, %v11128
      %11130 = vdwg.mxu0
      %11131 = vmatpush.bf16.msra.mxu0 %v10441
      %11132 = vmatpush.bf16.msra.mxu0 %v10439
      %11133 = vmatpush.bf16.msra.mxu0 %v10437
      %11134 = vmatpush.bf16.msra.mxu0 %v10435
      %11135 = vmatpush.bf16.msra.mxu0 %v10433
      %11136 = vmatpush.bf16.msra.mxu0 %v10431
      %11137 = vmatpush.bf16.msra.mxu0 %v10429
      %11138 = vmatpush.bf16.msra.mxu0 %v10427
      %11139 = vmatmul.bf16.gmra.mxu0 %v10970
      %v11140 = vpop.f32.mrf.mxu0
      %v11141 = vadd.f32 %v11127, %v11140
      %v11142 = vpop.f32.mrf.mxu0
      %v11143 = vadd.f32 %v11129, %v11142
      %11144 = vdwg.mxu0
      %11145 = vmatpush.bf16.msra.mxu0 %v10457
      %11146 = vmatpush.bf16.msra.mxu0 %v10455
      %11147 = vmatpush.bf16.msra.mxu0 %v10453
      %11148 = vmatpush.bf16.msra.mxu0 %v10451
      %11149 = vmatpush.bf16.msra.mxu0 %v10449
      %11150 = vmatpush.bf16.msra.mxu0 %v10447
      %11151 = vmatpush.bf16.msra.mxu0 %v10445
      %11152 = vmatpush.bf16.msra.mxu0 %v10443
      %11153 = vmatmul.bf16.gmra.mxu0 %v10971
      %v11154 = vpop.f32.mrf.mxu0
      %v11155 = vadd.f32 %v11141, %v11154
      %v11156 = vpop.f32.mrf.mxu0
      %v11157 = vadd.f32 %v11143, %v11156
      %11158 = vdwg.mxu0
      %11159 = vmatpush.bf16.msra.mxu0 %v10473
      %11160 = vmatpush.bf16.msra.mxu0 %v10471
      %11161 = vmatpush.bf16.msra.mxu0 %v10469
      %11162 = vmatpush.bf16.msra.mxu0 %v10467
      %11163 = vmatpush.bf16.msra.mxu0 %v10465
      %11164 = vmatpush.bf16.msra.mxu0 %v10463
      %11165 = vmatpush.bf16.msra.mxu0 %v10461
      %11166 = vmatpush.bf16.msra.mxu0 %v10459
      %11167 = vmatmul.bf16.gmra.mxu0 %v10972
      %v11168 = vpop.f32.mrf.mxu0
      %v11169 = vadd.f32 %v11155, %v11168
      %v11170 = vpop.f32.mrf.mxu0
      %v11171 = vadd.f32 %v11157, %v11170
      %11172 = vdwg.mxu0
      %11173 = vmatpush.bf16.msra.mxu0 %v10489
      %11174 = vmatpush.bf16.msra.mxu0 %v10487
      %11175 = vmatpush.bf16.msra.mxu0 %v10485
      %11176 = vmatpush.bf16.msra.mxu0 %v10483
      %11177 = vmatpush.bf16.msra.mxu0 %v10481
      %11178 = vmatpush.bf16.msra.mxu0 %v10479
      %11179 = vmatpush.bf16.msra.mxu0 %v10477
      %11180 = vmatpush.bf16.msra.mxu0 %v10475
      %11181 = vmatmul.bf16.gmra.mxu0 %v10973
      %v11182 = vpop.f32.mrf.mxu0
      %v11183 = vadd.f32 %v11169, %v11182
      %v11184 = vpop.f32.mrf.mxu0
      %v11185 = vadd.f32 %v11171, %v11184
      %11186 = vdwg.mxu0
      %11187 = vmatpush.bf16.msra.mxu0 %v10505
      %11188 = vmatpush.bf16.msra.mxu0 %v10503
      %11189 = vmatpush.bf16.msra.mxu0 %v10501
      %11190 = vmatpush.bf16.msra.mxu0 %v10499
      %11191 = vmatpush.bf16.msra.mxu0 %v10497
      %11192 = vmatpush.bf16.msra.mxu0 %v10495
      %11193 = vmatpush.bf16.msra.mxu0 %v10493
      %11194 = vmatpush.bf16.msra.mxu0 %v10491
      %11195 = vmatmul.bf16.gmra.mxu0 %v10974
      %v11196 = vpop.f32.mrf.mxu0
      %v11197 = vadd.f32 %v11183, %v11196
      %v11198 = vpop.f32.mrf.mxu0
      %v11199 = vadd.f32 %v11185, %v11198
      %11200 = vdwg.mxu0
      %11201 = vmatpush.bf16.msra.mxu0 %v10521
      %11202 = vmatpush.bf16.msra.mxu0 %v10519
      %11203 = vmatpush.bf16.msra.mxu0 %v10517
      %11204 = vmatpush.bf16.msra.mxu0 %v10515
      %11205 = vmatpush.bf16.msra.mxu0 %v10513
      %11206 = vmatpush.bf16.msra.mxu0 %v10511
      %11207 = vmatpush.bf16.msra.mxu0 %v10509
      %11208 = vmatpush.bf16.msra.mxu0 %v10507
      %11209 = vmatmul.bf16.gmra.mxu0 %v10975
      %v11210 = vpop.f32.mrf.mxu0
      %v11211 = vadd.f32 %v11197, %v11210
      %v11212 = vpop.f32.mrf.mxu0
      %v11213 = vadd.f32 %v11199, %v11212
      %11214 = vdwg.mxu0
      %11215 = vmatpush.bf16.msra.mxu0 %v10537
      %11216 = vmatpush.bf16.msra.mxu0 %v10535
      %11217 = vmatpush.bf16.msra.mxu0 %v10533
      %11218 = vmatpush.bf16.msra.mxu0 %v10531
      %11219 = vmatpush.bf16.msra.mxu0 %v10529
      %11220 = vmatpush.bf16.msra.mxu0 %v10527
      %11221 = vmatpush.bf16.msra.mxu0 %v10525
      %11222 = vmatpush.bf16.msra.mxu0 %v10523
      %11223 = vmatmul.bf16.gmra.mxu0 %v10976
      %v11224 = vpop.f32.mrf.mxu0
      %v11225 = vadd.f32 %v11211, %v11224
      %v11226 = vpop.f32.mrf.mxu0
      %v11227 = vadd.f32 %v11213, %v11226
      %11228 = vdwg.mxu0
      %vm11229 = vcmp.gt.f32.partialorder %v11099, 0.0
      %vm11230 = vcmp.gt.f32.partialorder %v11225, 0.0
      %vm11231 = vcmp.gt.f32.partialorder %v11101, 0.0
      %vm11232 = vcmp.gt.f32.partialorder %v11227, 0.0
      %v11233 = vmul.f32 %v11099, 0.2
      %v11234 = vmul.f32 %v11225, 0.2
      %v11235 = vmul.f32 %v11101, 0.2
      %v11236 = vmul.f32 %v11227, 0.2
      %v11237 = vsel %vm11229, %v11099, %v11233
      %v11238 = vsel %vm11230, %v11225, %v11234
      %v11239 = vsel %vm11231, %v11101, %v11235
      %v11240 = vsel %vm11232, %v11227, %v11236
      %11241 = vst [vmem:[#allocation5 + $0x10] sm:$0xff] %v11237
      %11242 = vst [vmem:[#allocation5 + $0x18] sm:$0xff] %v11238
      %11243 = vst [vmem:[#allocation5 + $0x30] sm:$0xff] %v11239
      %11244 = vst [vmem:[#allocation5 + $0x38] sm:$0xff] %v11240
      %v11245 = vld [vmem:[#allocation5] sm:$0xff]
      %v11246 = vld [vmem:[#allocation5 + $0x8] sm:$0xff]
      %v11247 = vld [vmem:[#allocation5 + $0x10] sm:$0xff]
      %v11248 = vld [vmem:[#allocation5 + $0x18] sm:$0xff]
      %v11249 = vld [vmem:[#allocation5 + $0x20] sm:$0xff]
      %v11250 = vld [vmem:[#allocation5 + $0x28] sm:$0xff]
      %v11251 = vld [vmem:[#allocation5 + $0x30] sm:$0xff]
      %v11252 = vld [vmem:[#allocation5 + $0x38] sm:$0xff]
      %v11253 = vld [vmem:[%s13] sm:$0xf]
      %v11255 = vperm.slane %v11253, 0
      %v11256 = vperm.slane %v11253, 1
      %v11257 = vperm.slane %v11253, 2
      %v11258 = vperm.slane %v11253, 3
      %v11263 = vmul.f32 %v11245, %v11255
      %v11264 = vmul.f32 %v11246, %v11256
      %v11265 = vmul.f32 %v11247, %v11257
      %v11266 = vmul.f32 %v11248, %v11258
      %v11267 = vmul.f32 %v11249, %v11255
      %v11268 = vmul.f32 %v11250, %v11256
      %v11269 = vmul.f32 %v11251, %v11257
      %v11270 = vmul.f32 %v11252, %v11258
      %v11271 = vadd.f32 %v11263, %v11264
      %v11272 = vadd.f32 %v11271, %v11265
      %v11273 = vadd.f32 %v11272, %v11266
      %11274 = vadd.xlane.f32.xlu0 %v11273
      %v11275 = vpop.xlane.xlu0 %11274
      %v11276 = vadd.f32 %v11267, %v11268
      %v11277 = vadd.f32 %v11276, %v11269
      %v11278 = vadd.f32 %v11277, %v11270
      %11279 = vadd.xlane.f32.xlu0 %v11278
      %v11280 = vpop.xlane.xlu0 %11279
      %v11281 = vld [vmem:[#allocation6] sm:$0x1]
      %v11283 = vperm.slane %v11281, 0
      %v11285 = vadd.f32 %v11275, %v11283
      %v11286 = vadd.f32 %v11280, %v11283
      %v11287 = vand.u32 2147483647, %v11285
      %v11288 = vand.u32 2147483647, %v11286
      %v11289 = vsub.f32 0.0, %v11287
      %v11290 = vsub.f32 0.0, %v11288
      %vm11291 = vcmask 7168
      %11292 = vst.msk [vmem:[%s501] sm:$0xff] %vm11291, %v11289
      %11293 = vst.msk [vmem:[%s501 + $0x8] sm:$0xff] %vm11291, %v11290
      %s11294 = smul.u32 2, %s28
      %p11295 = scmp.lt.s32.totalorder %s11294, 3
      %s11296 = scalar_select %p11295, %s11294, 3
      %s11297 = smul.addr %s11296, 8
      %s11298 = scalar_lea.vmem %s15, %s11297
      // Predicated region
      $region81: #{_lambda_.1} parent=79 // pred_check
        %p11299 = pneg %p366
      $region82: #{_lambda_.1} parent=79 // pred_check_branch
        %11301 = sbr.rel (%p11299) target = $region84
      $region83: #{_lambda_.1} parent=79 // pred_region
        %s11302 = smul.u32 2, %s28
      $region84: #{_lambda_.1} parent=79 // pred_fallthru
        _
    $region80: #{_lambda_.1} parent=5 // pred_fallthru
      _
    %p11303 = scmp.le.s32.totalorder 2, %s23
    // Predicated region
    $region85: #{_lambda_.1} parent=5 // pred_check
      %p11304 = pneg %p11303
    $region86: #{_lambda_.1} parent=5 // pred_check_branch
      %11306 = sbr.rel (%p11304) target = $region88
    $region87: #{_lambda_.1} parent=5 // pred_region
      %s11307 = ssub.s32 %s23, 2
      // Predicated region
      $region89: #{_lambda_.1} parent=87 // pred_check
        %p11308 = pneg %p372
      $region90: #{_lambda_.1} parent=87 // pred_check_branch
        %11310 = sbr.rel (%p11308) target = $region92
      $region91: #{_lambda_.1} parent=87 // pred_region
        %s11311 = smul.u32 2, %s29
        %p11312 = scmp.lt.s32.totalorder %s11311, 3
        %s11313 = scalar_select %p11312, %s11311, 3
        %s11314 = smul.addr %s11313, 8
        %s11315 = scalar_lea.vmem %s15, %s11314
      $region92: #{_lambda_.1} parent=87 // pred_fallthru
        _
    $region88: #{_lambda_.1} parent=5 // pred_fallthru
      _
  $region6: #{_lambda_.1} parent=0 // loop_footer
    %s27 = sadd.s32 1, %s23
  $region7: #{_lambda_.1} parent=0 // loop_footer_branch
    %22 = sbr.rel target = $region3
  $region8: #{_lambda_.1} parent=0 // loop_exit
    _

</llo_original>
